<compile_context>
chip_gen: v7x
topology: tpu7x:2x2x1
jax: 0.10.0
libtpu: 0.0.40
codegen_flags: <defaults>
</compile_context>

<pallas_src>
import functools

import jax
import jax.numpy as jnp
from jax.experimental import pallas as pl
from jax.experimental.pallas import tpu as pltpu


# --------------------------------------------------------------------------
# Deterministic parameter initialization (PyTorch-native layouts)
# --------------------------------------------------------------------------
class _KeyGen:
    def __init__(self, key):
        self._key = key

    def __call__(self):
        self._key, sub = jax.random.split(self._key)
        return sub


def _conv_w(kg, shape):
    # shape = (out, in, kh, kw), PyTorch OIHW layout
    fan_in = shape[1] * shape[2] * shape[3]
    return jax.random.normal(kg(), shape, jnp.float32) / jnp.sqrt(float(fan_in))


def _bn_p(c):
    return dict(gamma=jnp.ones((c,), jnp.float32),
                beta=jnp.zeros((c,), jnp.float32),
                mean=jnp.zeros((c,), jnp.float32),
                var=jnp.ones((c,), jnp.float32))


def init_resnet18_params(key):
    kg = _KeyGen(key)
    params = {}
    params["conv1_w"] = _conv_w(kg, (64, 3, 7, 7))
    params["bn1"] = _bn_p(64)
    cfg = [(64, 64), (64, 128), (128, 256), (256, 512)]
    layers = []
    for li, (cin, cout) in enumerate(cfg):
        blocks = []
        for bi in range(2):
            stride = 2 if (li > 0 and bi == 0) else 1
            inc = cin if bi == 0 else cout
            blk = dict(conv1_w=_conv_w(kg, (cout, inc, 3, 3)), bn1=_bn_p(cout),
                       conv2_w=_conv_w(kg, (cout, cout, 3, 3)), bn2=_bn_p(cout))
            if stride != 1 or inc != cout:
                blk["down_w"] = _conv_w(kg, (cout, inc, 1, 1))
                blk["down_bn"] = _bn_p(cout)
            blocks.append(blk)
        layers.append(blocks)
    params["layers"] = layers
    return params


def init_head_params(key, backbone_dim=512, output_dim=512, num_classes=50):
    """Parameters in PyTorch-native layouts (Conv2d OIHW, Linear (out, in))."""
    kg = _KeyGen(key)
    C, C4, D = backbone_dim, backbone_dim // 4, output_dim
    s = 0.05

    def w(shape):
        return jax.random.normal(kg(), shape, jnp.float32) * s

    return dict(
        sa_conv1_w=w((C4, C, 3, 3)), sa_conv1_b=jnp.zeros((C4,), jnp.float32),
        sa_conv2_w=w((1, C4, 1, 1)), sa_conv2_b=jnp.zeros((1,), jnp.float32),
        ca_fc1_w=w((C4, C)), ca_fc1_b=jnp.zeros((C4,), jnp.float32),
        ca_fc2_w=w((C, C4)), ca_fc2_b=jnp.zeros((C,), jnp.float32),
        pj_fc1_w=w((D, C)), pj_fc1_b=jnp.zeros((D,), jnp.float32),
        pj_fc2_w=w((D, D)), pj_fc2_b=jnp.zeros((D,), jnp.float32),
        cl_w=w((num_classes, D)), cl_b=jnp.zeros((num_classes,), jnp.float32),
    )


def prepare_head_weights(hp, num_classes, lane=128):
    """Convert PyTorch layouts to kernel layouts, fold projector-2 into the
    classifier (exact: no nonlinearity between them, dropout=identity in eval),
    pad the classifier to a lane-dense width, cast MXU operands to bf16."""
    C4, C, _, _ = hp["sa_conv1_w"].shape
    D = hp["pj_fc1_w"].shape[0]
    ncp = ((num_classes + lane - 1) // lane) * lane

    # 3x3 conv weights -> (9, C, C4), tap order k = ky*3 + kx
    sa_w1 = jnp.transpose(hp["sa_conv1_w"], (2, 3, 1, 0)).reshape(9, C, C4)
    sa_b1 = hp["sa_conv1_b"].reshape(1, C4)
    sa_w2 = hp["sa_conv2_w"].reshape(1, C4)
    sa_b2 = hp["sa_conv2_b"].reshape(1, 1)

    ca_w1 = hp["ca_fc1_w"].T                      # (C, C4)
    ca_b1 = hp["ca_fc1_b"].reshape(1, C4)
    ca_w2 = hp["ca_fc2_w"].T                      # (C4, C)
    ca_b2 = hp["ca_fc2_b"].reshape(1, C)

    pj_w1 = hp["pj_fc1_w"].T                      # (C, D)
    pj_b1 = hp["pj_fc1_b"].reshape(1, D)

    # Fold projector Linear(D, D) into classifier Linear(D, num_classes).
    w2 = hp["pj_fc2_w"].T                         # (D, D)
    b2 = hp["pj_fc2_b"].reshape(1, D)
    clw = hp["cl_w"].T                            # (D, NC)
    clb = hp["cl_b"].reshape(1, num_classes)
    cl_w_fold = w2 @ clw                          # (D, NC)
    cl_b_fold = b2 @ clw + clb                    # (1, NC)
    cl_w_fold = jnp.pad(cl_w_fold, ((0, 0), (0, ncp - num_classes)))
    cl_b_fold = jnp.pad(cl_b_fold, ((0, 0), (0, ncp - num_classes)))

    bf16 = jnp.bfloat16
    return dict(
        sa_w1=sa_w1.astype(bf16), sa_b1=sa_b1, sa_w2=sa_w2, sa_b2=sa_b2,
        ca_w1=ca_w1.astype(bf16), ca_b1=ca_b1,
        ca_w2=ca_w2.astype(bf16), ca_b2=ca_b2,
        pj_w1=pj_w1.astype(bf16), pj_b1=pj_b1,
        cl_w=cl_w_fold.astype(bf16), cl_b=cl_b_fold,
    )


# --------------------------------------------------------------------------
# ResNet-18 backbone forward (plain JAX, NCHW, eval-mode BN)
# --------------------------------------------------------------------------
def _conv(x, w, stride, pad):
    return jax.lax.conv_general_dilated(
        x, w, (stride, stride), ((pad, pad), (pad, pad)),
        dimension_numbers=("NCHW", "OIHW", "NCHW"))


def _bn(x, p, eps=1e-5):
    scale = p["gamma"] / jnp.sqrt(p["var"] + eps)
    bias = p["beta"] - p["mean"] * scale
    return x * scale[None, :, None, None] + bias[None, :, None, None]


def _basic_block(x, blk, stride):
    out = jnp.maximum(_bn(_conv(x, blk["conv1_w"], stride, 1), blk["bn1"]), 0.0)
    out = _bn(_conv(out, blk["conv2_w"], 1, 1), blk["bn2"])
    if "down_w" in blk:
        identity = _bn(_conv(x, blk["down_w"], stride, 0), blk["down_bn"])
    else:
        identity = x
    return jnp.maximum(out + identity, 0.0)


def backbone_forward(params, x):
    x = _conv(x, params["conv1_w"], 2, 3)
    x = jnp.maximum(_bn(x, params["bn1"]), 0.0)
    x = jax.lax.reduce_window(x, -jnp.inf, jax.lax.max,
                              (1, 1, 3, 3), (1, 1, 2, 2),
                              ((0, 0), (0, 0), (1, 1), (1, 1)))
    for li, blocks in enumerate(params["layers"]):
        for bi, blk in enumerate(blocks):
            stride = 2 if (li > 0 and bi == 0) else 1
            x = _basic_block(x, blk, stride)
    return x  # (B, 512, H', W')


# --------------------------------------------------------------------------
# Pallas head kernel: one grid step per batch element.
#
# fpad_ref holds one batch's zero-padded feature map, row-flattened:
#   fpad[(yy)*(W+2) + xx, c] = features[b, c, yy-1, xx-1] (0 on the border).
# The 3x3 conv at unpadded position (y, x) reads flat rows
#   q0 + r + d_k,  r = y*(W+2) + x,  q0 = W+3,  d_k = (ky-1)*(W+2) + (kx-1),
# so each tap is one contiguous (nq, C) slice. The center-tap window's
# "gap" rows land exactly on the zero-padding columns, so plain sums over all
# nq rows reproduce the exact spatial means (no masking needed).
# --------------------------------------------------------------------------
def spca_head_kernel(fpad_ref,
                     sa_w1_ref, sa_b1_ref, sa_w2_ref, sa_b2_ref,
                     ca_w1_ref, ca_b1_ref, ca_w2_ref, ca_b2_ref,
                     pj_w1_ref, pj_b1_ref, cl_w_ref, cl_b_ref,
                     out_ref, *, H, W):
    HW = H * W
    Wp = W + 2
    q0 = Wp + 1                 # flat index of padded position (1, 1)
    nq = HW + 2 * H - 2         # window rows covering all valid positions
    c4 = sa_w1_ref.shape[-1]

    # ---- spatial attention: 3x3 conv as 9 shifted matmuls (bf16 in, f32 acc)
    h = jnp.zeros((nq, c4), jnp.float32)
    for ky in range(3):
        for kx in range(3):
            d = (ky - 1) * Wp + (kx - 1)
            f_shift = fpad_ref[pl.ds(q0 + d, nq), :]               # (nq, C) bf16
            h = h + jnp.dot(f_shift, sa_w1_ref[ky * 3 + kx],
                            preferred_element_type=jnp.float32)
    h = jnp.maximum(h + sa_b1_ref[...], 0.0)                       # (nq, C4) f32
    s_logit = jnp.sum(h * sa_w2_ref[...], axis=-1, keepdims=True) + sa_b2_ref[...]
    s_att = jax.nn.sigmoid(s_logit)                                # (nq, 1) f32

    # ---- center-tap window: valid rows = f[y, x]; gap rows read zero padding
    f_win = fpad_ref[pl.ds(q0, nq), :].astype(jnp.float32)         # (nq, C)
    inv_hw = 1.0 / float(HW)
    gap = jnp.sum(f_win, axis=0, keepdims=True) * inv_hw           # (1, C)

    # ---- channel attention: GAP -> Linear -> ReLU -> Linear -> Sigmoid
    c1 = jnp.dot(gap.astype(jnp.bfloat16), ca_w1_ref[...],
                 preferred_element_type=jnp.float32) + ca_b1_ref[...]
    c1 = jnp.maximum(c1, 0.0)
    c_att = jax.nn.sigmoid(
        jnp.dot(c1.astype(jnp.bfloat16), ca_w2_ref[...],
                preferred_element_type=jnp.float32) + ca_b2_ref[...])   # (1, C)

    # ---- attended spatial mean pool; channel attention applied post-pool
    # (exact: c_att is constant over spatial positions within a batch element)
    pooled = jnp.sum(f_win * s_att, axis=0, keepdims=True) * inv_hw * c_att  # (1, C)

    # ---- projector (dropout = identity in eval) + folded classifier
    x = jnp.dot(pooled.astype(jnp.bfloat16), pj_w1_ref[...],
                preferred_element_type=jnp.float32) + pj_b1_ref[...]
    x = jnp.maximum(x, 0.0)
    logits = jnp.dot(x.astype(jnp.bfloat16), cl_w_ref[...],
                     preferred_element_type=jnp.float32) + cl_b_ref[...]     # (1, NCp)

    # lane/sublane-dense unmasked store; wrapper slices row 0 / :num_classes
    out_ref[...] = jnp.broadcast_to(logits, out_ref.shape)


def spca_head(feats, hp, num_classes):
    """feats: (B, C, H, W) backbone features (NCHW); hp: prepared head weights."""
    B, C, H, W = feats.shape
    np_rows = (H + 2) * (W + 2)
    ncp = hp["cl_w"].shape[-1]

    # NHWC, zero-pad spatially by 1, flatten rows to (B, (H+2)*(W+2), C), bf16
    f_nhwc = jnp.transpose(feats, (0, 2, 3, 1))
    fpad = jnp.pad(f_nhwc, ((0, 0), (1, 1), (1, 1), (0, 0)))
    fpad = fpad.reshape(B, np_rows, C).astype(jnp.bfloat16)

    weight_names = ("sa_w1", "sa_b1", "sa_w2", "sa_b2",
                    "ca_w1", "ca_b1", "ca_w2", "ca_b2",
                    "pj_w1", "pj_b1", "cl_w", "cl_b")
    weights = tuple(hp[n] for n in weight_names)

    def _const_spec(arr):
        nd = arr.ndim
        return pl.BlockSpec(arr.shape, lambda b, _nd=nd: (0,) * _nd)

    kernel = functools.partial(spca_head_kernel, H=H, W=W)

    out = pl.pallas_call(
        kernel,
        out_shape=jax.ShapeDtypeStruct((B, 8, ncp), jnp.float32),
        grid=(B,),
        in_specs=[pl.BlockSpec((None, np_rows, C), lambda b: (b, 0, 0))]
                 + [_const_spec(w) for w in weights],
        out_specs=pl.BlockSpec((None, 8, ncp), lambda b: (b, 0, 0)),
        compiler_params=pltpu.CompilerParams(
            dimension_semantics=("parallel",),
            vmem_limit_bytes=32 * 1024 * 1024),
    )(fpad, *weights)

    return out[:, 0, :num_classes]


def spca_forward(backbone_params, head_params, x, num_classes=50):
    feats = backbone_forward(backbone_params, x)     # (B, 512, H', W')
    return spca_head(feats, head_params, num_classes)


# --------------------------------------------------------------------------
if __name__ == "__main__":
    key = jax.random.PRNGKey(0)
    k_bb, k_head, k_x = jax.random.split(key, 3)

    backbone_params = init_resnet18_params(k_bb)
    head_params_torch = init_head_params(k_head, backbone_dim=512,
                                         output_dim=512, num_classes=50)
    head_params = prepare_head_weights(head_params_torch, num_classes=50)

    # Small input consistent with the module: NCHW image, 3 channels,
    # 64x64 spatial -> backbone features (2, 512, 2, 2).
    x = jax.random.normal(k_x, (2, 3, 64, 64), jnp.float32)

    fwd = jax.jit(lambda bp, hp, xx: spca_forward(bp, hp, xx, num_classes=50))
    logits = jax.block_until_ready(fwd(backbone_params, head_params, x))

    assert logits.shape == (2, 50), logits.shape
    assert bool(jnp.all(jnp.isfinite(logits)))
    print("KERNEL_OK")
</pallas_src>

<mosaic_0001>
module attributes {stable_mosaic.version = 11 : i64} {
  func.func @spca_head_kernel(%arg0: i32, %arg1: memref<1x16x512xbf16, #tpu.memory_space<vmem>>, %arg2: memref<9x512x128xbf16, #tpu.memory_space<vmem>>, %arg3: memref<1x128xf32, #tpu.memory_space<vmem>>, %arg4: memref<1x128xf32, #tpu.memory_space<vmem>>, %arg5: memref<1x1xf32, #tpu.memory_space<vmem>>, %arg6: memref<512x128xbf16, #tpu.memory_space<vmem>>, %arg7: memref<1x128xf32, #tpu.memory_space<vmem>>, %arg8: memref<128x512xbf16, #tpu.memory_space<vmem>>, %arg9: memref<1x512xf32, #tpu.memory_space<vmem>>, %arg10: memref<512x512xbf16, #tpu.memory_space<vmem>>, %arg11: memref<1x512xf32, #tpu.memory_space<vmem>>, %arg12: memref<512x128xbf16, #tpu.memory_space<vmem>>, %arg13: memref<1x128xf32, #tpu.memory_space<vmem>>, %arg14: memref<1x8x128xf32, #tpu.memory_space<vmem>>) attributes {dimension_semantics = [#tpu.dimension_semantics<parallel>], iteration_bounds = array<i64: 2>, scalar_prefetch = 0 : i64, scratch_operands = 0 : i64, tpu.core_type = #tpu.core_type<tc>, window_params = [{transform_indices = @transform_0, window_bounds = array<i64: 1, 16, 512>}, {pipeline_mode = #tpu.pipeline_mode<synchronous>, transform_indices = @transform_1, window_bounds = array<i64: 9, 512, 128>}, {pipeline_mode = #tpu.pipeline_mode<synchronous>, transform_indices = @transform_2, window_bounds = array<i64: 1, 128>}, {pipeline_mode = #tpu.pipeline_mode<synchronous>, transform_indices = @transform_3, window_bounds = array<i64: 1, 128>}, {pipeline_mode = #tpu.pipeline_mode<synchronous>, transform_indices = @transform_4, window_bounds = array<i64: 1, 1>}, {pipeline_mode = #tpu.pipeline_mode<synchronous>, transform_indices = @transform_5, window_bounds = array<i64: 512, 128>}, {pipeline_mode = #tpu.pipeline_mode<synchronous>, transform_indices = @transform_6, window_bounds = array<i64: 1, 128>}, {pipeline_mode = #tpu.pipeline_mode<synchronous>, transform_indices = @transform_7, window_bounds = array<i64: 128, 512>}, {pipeline_mode = #tpu.pipeline_mode<synchronous>, transform_indices = @transform_8, window_bounds = array<i64: 1, 512>}, {pipeline_mode = #tpu.pipeline_mode<synchronous>, transform_indices = @transform_9, window_bounds = array<i64: 512, 512>}, {pipeline_mode = #tpu.pipeline_mode<synchronous>, transform_indices = @transform_10, window_bounds = array<i64: 1, 512>}, {pipeline_mode = #tpu.pipeline_mode<synchronous>, transform_indices = @transform_11, window_bounds = array<i64: 512, 128>}, {pipeline_mode = #tpu.pipeline_mode<synchronous>, transform_indices = @transform_12, window_bounds = array<i64: 1, 128>}, {transform_indices = @transform_13, window_bounds = array<i64: 1, 8, 128>}]} {
    %cst = arith.constant 0.000000e+00 : f32
    %0 = vector.broadcast %cst : f32 to vector<6x128xf32>
    %c0 = arith.constant 0 : index
    %c0_0 = arith.constant 0 : index
    %c0_1 = arith.constant 0 : index
    %1 = vector.load %arg1[%c0, %c0_0, %c0_1] : memref<1x16x512xbf16, #tpu.memory_space<vmem>>, vector<1x6x512xbf16>
    %2 = vector.shape_cast %1 : vector<1x6x512xbf16> to vector<6x512xbf16>
    %c0_2 = arith.constant 0 : index
    %c0_3 = arith.constant 0 : index
    %c0_4 = arith.constant 0 : index
    %3 = vector.load %arg2[%c0_2, %c0_3, %c0_4] : memref<9x512x128xbf16, #tpu.memory_space<vmem>>, vector<1x512x128xbf16>
    %4 = vector.shape_cast %3 : vector<1x512x128xbf16> to vector<512x128xbf16>
    %cst_5 = arith.constant dense<0.000000e+00> : vector<6x128xf32>
    %5 = tpu.matmul %2, %4, %cst_5 {dimension_numbers = #tpu.dot_dimension_numbers<[1], [0], [0], [1], [0, 0, 1, 1], [], []>} : vector<6x512xbf16>, vector<512x128xbf16>, vector<6x128xf32> -> vector<6x128xf32>
    %6 = arith.addf %0, %5 : vector<6x128xf32>
    %c0_6 = arith.constant 0 : index
    %c1 = arith.constant 1 : index
    %c0_7 = arith.constant 0 : index
    %7 = vector.load %arg1[%c0_6, %c1, %c0_7] : memref<1x16x512xbf16, #tpu.memory_space<vmem>>, vector<1x6x512xbf16>
    %8 = vector.shape_cast %7 : vector<1x6x512xbf16> to vector<6x512xbf16>
    %c1_8 = arith.constant 1 : index
    %c0_9 = arith.constant 0 : index
    %c0_10 = arith.constant 0 : index
    %9 = vector.load %arg2[%c1_8, %c0_9, %c0_10] : memref<9x512x128xbf16, #tpu.memory_space<vmem>>, vector<1x512x128xbf16>
    %10 = vector.shape_cast %9 : vector<1x512x128xbf16> to vector<512x128xbf16>
    %cst_11 = arith.constant dense<0.000000e+00> : vector<6x128xf32>
    %11 = tpu.matmul %8, %10, %cst_11 {dimension_numbers = #tpu.dot_dimension_numbers<[1], [0], [0], [1], [0, 0, 1, 1], [], []>} : vector<6x512xbf16>, vector<512x128xbf16>, vector<6x128xf32> -> vector<6x128xf32>
    %12 = arith.addf %6, %11 : vector<6x128xf32>
    %c0_12 = arith.constant 0 : index
    %c2 = arith.constant 2 : index
    %c0_13 = arith.constant 0 : index
    %13 = vector.load %arg1[%c0_12, %c2, %c0_13] : memref<1x16x512xbf16, #tpu.memory_space<vmem>>, vector<1x6x512xbf16>
    %14 = vector.shape_cast %13 : vector<1x6x512xbf16> to vector<6x512xbf16>
    %c2_14 = arith.constant 2 : index
    %c0_15 = arith.constant 0 : index
    %c0_16 = arith.constant 0 : index
    %15 = vector.load %arg2[%c2_14, %c0_15, %c0_16] : memref<9x512x128xbf16, #tpu.memory_space<vmem>>, vector<1x512x128xbf16>
    %16 = vector.shape_cast %15 : vector<1x512x128xbf16> to vector<512x128xbf16>
    %cst_17 = arith.constant dense<0.000000e+00> : vector<6x128xf32>
    %17 = tpu.matmul %14, %16, %cst_17 {dimension_numbers = #tpu.dot_dimension_numbers<[1], [0], [0], [1], [0, 0, 1, 1], [], []>} : vector<6x512xbf16>, vector<512x128xbf16>, vector<6x128xf32> -> vector<6x128xf32>
    %18 = arith.addf %12, %17 : vector<6x128xf32>
    %c0_18 = arith.constant 0 : index
    %c4 = arith.constant 4 : index
    %c0_19 = arith.constant 0 : index
    %19 = vector.load %arg1[%c0_18, %c4, %c0_19] : memref<1x16x512xbf16, #tpu.memory_space<vmem>>, vector<1x6x512xbf16>
    %20 = vector.shape_cast %19 : vector<1x6x512xbf16> to vector<6x512xbf16>
    %c3 = arith.constant 3 : index
    %c0_20 = arith.constant 0 : index
    %c0_21 = arith.constant 0 : index
    %21 = vector.load %arg2[%c3, %c0_20, %c0_21] : memref<9x512x128xbf16, #tpu.memory_space<vmem>>, vector<1x512x128xbf16>
    %22 = vector.shape_cast %21 : vector<1x512x128xbf16> to vector<512x128xbf16>
    %cst_22 = arith.constant dense<0.000000e+00> : vector<6x128xf32>
    %23 = tpu.matmul %20, %22, %cst_22 {dimension_numbers = #tpu.dot_dimension_numbers<[1], [0], [0], [1], [0, 0, 1, 1], [], []>} : vector<6x512xbf16>, vector<512x128xbf16>, vector<6x128xf32> -> vector<6x128xf32>
    %24 = arith.addf %18, %23 : vector<6x128xf32>
    %c0_23 = arith.constant 0 : index
    %c5 = arith.constant 5 : index
    %c0_24 = arith.constant 0 : index
    %25 = vector.load %arg1[%c0_23, %c5, %c0_24] : memref<1x16x512xbf16, #tpu.memory_space<vmem>>, vector<1x6x512xbf16>
    %26 = vector.shape_cast %25 : vector<1x6x512xbf16> to vector<6x512xbf16>
    %c4_25 = arith.constant 4 : index
    %c0_26 = arith.constant 0 : index
    %c0_27 = arith.constant 0 : index
    %27 = vector.load %arg2[%c4_25, %c0_26, %c0_27] : memref<9x512x128xbf16, #tpu.memory_space<vmem>>, vector<1x512x128xbf16>
    %28 = vector.shape_cast %27 : vector<1x512x128xbf16> to vector<512x128xbf16>
    %cst_28 = arith.constant dense<0.000000e+00> : vector<6x128xf32>
    %29 = tpu.matmul %26, %28, %cst_28 {dimension_numbers = #tpu.dot_dimension_numbers<[1], [0], [0], [1], [0, 0, 1, 1], [], []>} : vector<6x512xbf16>, vector<512x128xbf16>, vector<6x128xf32> -> vector<6x128xf32>
    %30 = arith.addf %24, %29 : vector<6x128xf32>
    %c0_29 = arith.constant 0 : index
    %c6 = arith.constant 6 : index
    %c0_30 = arith.constant 0 : index
    %31 = vector.load %arg1[%c0_29, %c6, %c0_30] : memref<1x16x512xbf16, #tpu.memory_space<vmem>>, vector<1x6x512xbf16>
    %32 = vector.shape_cast %31 : vector<1x6x512xbf16> to vector<6x512xbf16>
    %c5_31 = arith.constant 5 : index
    %c0_32 = arith.constant 0 : index
    %c0_33 = arith.constant 0 : index
    %33 = vector.load %arg2[%c5_31, %c0_32, %c0_33] : memref<9x512x128xbf16, #tpu.memory_space<vmem>>, vector<1x512x128xbf16>
    %34 = vector.shape_cast %33 : vector<1x512x128xbf16> to vector<512x128xbf16>
    %cst_34 = arith.constant dense<0.000000e+00> : vector<6x128xf32>
    %35 = tpu.matmul %32, %34, %cst_34 {dimension_numbers = #tpu.dot_dimension_numbers<[1], [0], [0], [1], [0, 0, 1, 1], [], []>} : vector<6x512xbf16>, vector<512x128xbf16>, vector<6x128xf32> -> vector<6x128xf32>
    %36 = arith.addf %30, %35 : vector<6x128xf32>
    %c0_35 = arith.constant 0 : index
    %c8 = arith.constant 8 : index
    %c0_36 = arith.constant 0 : index
    %37 = vector.load %arg1[%c0_35, %c8, %c0_36] : memref<1x16x512xbf16, #tpu.memory_space<vmem>>, vector<1x6x512xbf16>
    %38 = vector.shape_cast %37 : vector<1x6x512xbf16> to vector<6x512xbf16>
    %c6_37 = arith.constant 6 : index
    %c0_38 = arith.constant 0 : index
    %c0_39 = arith.constant 0 : index
    %39 = vector.load %arg2[%c6_37, %c0_38, %c0_39] : memref<9x512x128xbf16, #tpu.memory_space<vmem>>, vector<1x512x128xbf16>
    %40 = vector.shape_cast %39 : vector<1x512x128xbf16> to vector<512x128xbf16>
    %cst_40 = arith.constant dense<0.000000e+00> : vector<6x128xf32>
    %41 = tpu.matmul %38, %40, %cst_40 {dimension_numbers = #tpu.dot_dimension_numbers<[1], [0], [0], [1], [0, 0, 1, 1], [], []>} : vector<6x512xbf16>, vector<512x128xbf16>, vector<6x128xf32> -> vector<6x128xf32>
    %42 = arith.addf %36, %41 : vector<6x128xf32>
    %c0_41 = arith.constant 0 : index
    %c9 = arith.constant 9 : index
    %c0_42 = arith.constant 0 : index
    %43 = vector.load %arg1[%c0_41, %c9, %c0_42] : memref<1x16x512xbf16, #tpu.memory_space<vmem>>, vector<1x6x512xbf16>
    %44 = vector.shape_cast %43 : vector<1x6x512xbf16> to vector<6x512xbf16>
    %c7 = arith.constant 7 : index
    %c0_43 = arith.constant 0 : index
    %c0_44 = arith.constant 0 : index
    %45 = vector.load %arg2[%c7, %c0_43, %c0_44] : memref<9x512x128xbf16, #tpu.memory_space<vmem>>, vector<1x512x128xbf16>
    %46 = vector.shape_cast %45 : vector<1x512x128xbf16> to vector<512x128xbf16>
    %cst_45 = arith.constant dense<0.000000e+00> : vector<6x128xf32>
    %47 = tpu.matmul %44, %46, %cst_45 {dimension_numbers = #tpu.dot_dimension_numbers<[1], [0], [0], [1], [0, 0, 1, 1], [], []>} : vector<6x512xbf16>, vector<512x128xbf16>, vector<6x128xf32> -> vector<6x128xf32>
    %48 = arith.addf %42, %47 : vector<6x128xf32>
    %c0_46 = arith.constant 0 : index
    %c10 = arith.constant 10 : index
    %c0_47 = arith.constant 0 : index
    %49 = vector.load %arg1[%c0_46, %c10, %c0_47] : memref<1x16x512xbf16, #tpu.memory_space<vmem>>, vector<1x6x512xbf16>
    %50 = vector.shape_cast %49 : vector<1x6x512xbf16> to vector<6x512xbf16>
    %c8_48 = arith.constant 8 : index
    %c0_49 = arith.constant 0 : index
    %c0_50 = arith.constant 0 : index
    %51 = vector.load %arg2[%c8_48, %c0_49, %c0_50] : memref<9x512x128xbf16, #tpu.memory_space<vmem>>, vector<1x512x128xbf16>
    %52 = vector.shape_cast %51 : vector<1x512x128xbf16> to vector<512x128xbf16>
    %cst_51 = arith.constant dense<0.000000e+00> : vector<6x128xf32>
    %53 = tpu.matmul %50, %52, %cst_51 {dimension_numbers = #tpu.dot_dimension_numbers<[1], [0], [0], [1], [0, 0, 1, 1], [], []>} : vector<6x512xbf16>, vector<512x128xbf16>, vector<6x128xf32> -> vector<6x128xf32>
    %54 = arith.addf %48, %53 : vector<6x128xf32>
    %c0_52 = arith.constant 0 : index
    %c0_53 = arith.constant 0 : index
    %55 = vector.load %arg3[%c0_52, %c0_53] : memref<1x128xf32, #tpu.memory_space<vmem>>, vector<1x128xf32>
    %56 = vector.broadcast %55 : vector<1x128xf32> to vector<6x128xf32>
    %57 = arith.addf %54, %56 : vector<6x128xf32>
    %cst_54 = arith.constant 0.000000e+00 : f32
    %58 = vector.broadcast %cst_54 : f32 to vector<6x128xf32>
    %59 = arith.maximumf %57, %58 : vector<6x128xf32>
    %c0_55 = arith.constant 0 : index
    %c0_56 = arith.constant 0 : index
    %60 = vector.load %arg4[%c0_55, %c0_56] : memref<1x128xf32, #tpu.memory_space<vmem>>, vector<1x128xf32>
    %61 = vector.broadcast %60 : vector<1x128xf32> to vector<6x128xf32>
    %62 = arith.mulf %59, %61 : vector<6x128xf32>
    %cst_57 = arith.constant dense<0.000000e+00> : vector<6xf32>
    %63 = vector.multi_reduction <add>, %62, %cst_57 [1] : vector<6x128xf32> to vector<6xf32>
    %64 = vector.shape_cast %63 : vector<6xf32> to vector<6x1xf32>
    %c0_58 = arith.constant 0 : index
    %c0_59 = arith.constant 0 : index
    %65 = vector.load %arg5[%c0_58, %c0_59] : memref<1x1xf32, #tpu.memory_space<vmem>>, vector<1x1xf32>
    %66 = vector.broadcast %65 : vector<1x1xf32> to vector<6x1xf32>
    %67 = arith.addf %64, %66 : vector<6x1xf32>
    %68 = arith.negf %67 : vector<6x1xf32>
    %69 = math.exp %68 : vector<6x1xf32>
    %cst_60 = arith.constant 1.000000e+00 : f32
    %70 = vector.broadcast %cst_60 : f32 to vector<6x1xf32>
    %71 = arith.addf %70, %69 : vector<6x1xf32>
    %72 = arith.divf %70, %71 : vector<6x1xf32>
    %c0_61 = arith.constant 0 : index
    %c5_62 = arith.constant 5 : index
    %c0_63 = arith.constant 0 : index
    %73 = vector.load %arg1[%c0_61, %c5_62, %c0_63] : memref<1x16x512xbf16, #tpu.memory_space<vmem>>, vector<1x6x512xbf16>
    %74 = vector.shape_cast %73 : vector<1x6x512xbf16> to vector<6x512xbf16>
    %75 = arith.extf %74 : vector<6x512xbf16> to vector<6x512xf32>
    %cst_64 = arith.constant dense<0.000000e+00> : vector<512xf32>
    %76 = vector.multi_reduction <add>, %75, %cst_64 [0] : vector<6x512xf32> to vector<512xf32>
    %77 = vector.shape_cast %76 : vector<512xf32> to vector<1x512xf32>
    %cst_65 = arith.constant 2.500000e-01 : f32
    %78 = vector.broadcast %cst_65 : f32 to vector<1x512xf32>
    %79 = arith.mulf %77, %78 : vector<1x512xf32>
    %80 = arith.truncf %79 : vector<1x512xf32> to vector<1x512xbf16>
    %c0_66 = arith.constant 0 : index
    %c0_67 = arith.constant 0 : index
    %81 = vector.load %arg6[%c0_66, %c0_67] : memref<512x128xbf16, #tpu.memory_space<vmem>>, vector<512x128xbf16>
    %cst_68 = arith.constant dense<0.000000e+00> : vector<1x128xf32>
    %82 = tpu.matmul %80, %81, %cst_68 {dimension_numbers = #tpu.dot_dimension_numbers<[1], [0], [0], [1], [0, 0, 1, 1], [], []>} : vector<1x512xbf16>, vector<512x128xbf16>, vector<1x128xf32> -> vector<1x128xf32>
    %c0_69 = arith.constant 0 : index
    %c0_70 = arith.constant 0 : index
    %83 = vector.load %arg7[%c0_69, %c0_70] : memref<1x128xf32, #tpu.memory_space<vmem>>, vector<1x128xf32>
    %84 = arith.addf %82, %83 : vector<1x128xf32>
    %cst_71 = arith.constant 0.000000e+00 : f32
    %85 = vector.broadcast %cst_71 : f32 to vector<1x128xf32>
    %86 = arith.maximumf %84, %85 : vector<1x128xf32>
    %87 = arith.truncf %86 : vector<1x128xf32> to vector<1x128xbf16>
    %c0_72 = arith.constant 0 : index
    %c0_73 = arith.constant 0 : index
    %88 = vector.load %arg8[%c0_72, %c0_73] : memref<128x512xbf16, #tpu.memory_space<vmem>>, vector<128x512xbf16>
    %cst_74 = arith.constant dense<0.000000e+00> : vector<1x512xf32>
    %89 = tpu.matmul %87, %88, %cst_74 {dimension_numbers = #tpu.dot_dimension_numbers<[1], [0], [0], [1], [0, 0, 1, 1], [], []>} : vector<1x128xbf16>, vector<128x512xbf16>, vector<1x512xf32> -> vector<1x512xf32>
    %c0_75 = arith.constant 0 : index
    %c0_76 = arith.constant 0 : index
    %90 = vector.load %arg9[%c0_75, %c0_76] : memref<1x512xf32, #tpu.memory_space<vmem>>, vector<1x512xf32>
    %91 = arith.addf %89, %90 : vector<1x512xf32>
    %92 = arith.negf %91 : vector<1x512xf32>
    %93 = math.exp %92 : vector<1x512xf32>
    %cst_77 = arith.constant 1.000000e+00 : f32
    %94 = vector.broadcast %cst_77 : f32 to vector<1x512xf32>
    %95 = arith.addf %94, %93 : vector<1x512xf32>
    %96 = arith.divf %94, %95 : vector<1x512xf32>
    %97 = vector.broadcast %72 : vector<6x1xf32> to vector<6x512xf32>
    %98 = arith.mulf %75, %97 : vector<6x512xf32>
    %cst_78 = arith.constant dense<0.000000e+00> : vector<512xf32>
    %99 = vector.multi_reduction <add>, %98, %cst_78 [0] : vector<6x512xf32> to vector<512xf32>
    %100 = vector.shape_cast %99 : vector<512xf32> to vector<1x512xf32>
    %cst_79 = arith.constant 2.500000e-01 : f32
    %101 = vector.broadcast %cst_79 : f32 to vector<1x512xf32>
    %102 = arith.mulf %100, %101 : vector<1x512xf32>
    %103 = arith.mulf %102, %96 : vector<1x512xf32>
    %104 = arith.truncf %103 : vector<1x512xf32> to vector<1x512xbf16>
    %c0_80 = arith.constant 0 : index
    %c0_81 = arith.constant 0 : index
    %105 = vector.load %arg10[%c0_80, %c0_81] : memref<512x512xbf16, #tpu.memory_space<vmem>>, vector<512x512xbf16>
    %cst_82 = arith.constant dense<0.000000e+00> : vector<1x512xf32>
    %106 = tpu.matmul %104, %105, %cst_82 {dimension_numbers = #tpu.dot_dimension_numbers<[1], [0], [0], [1], [0, 0, 1, 1], [], []>} : vector<1x512xbf16>, vector<512x512xbf16>, vector<1x512xf32> -> vector<1x512xf32>
    %c0_83 = arith.constant 0 : index
    %c0_84 = arith.constant 0 : index
    %107 = vector.load %arg11[%c0_83, %c0_84] : memref<1x512xf32, #tpu.memory_space<vmem>>, vector<1x512xf32>
    %108 = arith.addf %106, %107 : vector<1x512xf32>
    %cst_85 = arith.constant 0.000000e+00 : f32
    %109 = vector.broadcast %cst_85 : f32 to vector<1x512xf32>
    %110 = arith.maximumf %108, %109 : vector<1x512xf32>
    %111 = arith.truncf %110 : vector<1x512xf32> to vector<1x512xbf16>
    %c0_86 = arith.constant 0 : index
    %c0_87 = arith.constant 0 : index
    %112 = vector.load %arg12[%c0_86, %c0_87] : memref<512x128xbf16, #tpu.memory_space<vmem>>, vector<512x128xbf16>
    %cst_88 = arith.constant dense<0.000000e+00> : vector<1x128xf32>
    %113 = tpu.matmul %111, %112, %cst_88 {dimension_numbers = #tpu.dot_dimension_numbers<[1], [0], [0], [1], [0, 0, 1, 1], [], []>} : vector<1x512xbf16>, vector<512x128xbf16>, vector<1x128xf32> -> vector<1x128xf32>
    %c0_89 = arith.constant 0 : index
    %c0_90 = arith.constant 0 : index
    %114 = vector.load %arg13[%c0_89, %c0_90] : memref<1x128xf32, #tpu.memory_space<vmem>>, vector<1x128xf32>
    %115 = arith.addf %113, %114 : vector<1x128xf32>
    %116 = vector.shape_cast %115 : vector<1x128xf32> to vector<1x128xf32>
    %117 = vector.broadcast %116 : vector<1x128xf32> to vector<8x128xf32>
    %c0_91 = arith.constant 0 : index
    %c0_92 = arith.constant 0 : index
    %c0_93 = arith.constant 0 : index
    %118 = vector.load %arg14[%c0_91, %c0_92, %c0_93] : memref<1x8x128xf32, #tpu.memory_space<vmem>>, vector<1x8x128xf32>
    %119 = vector.shape_cast %118 : vector<1x8x128xf32> to vector<8x128xf32>
    %120 = vector.shape_cast %117 : vector<8x128xf32> to vector<1x8x128xf32>
    tpu.vector_store %arg14[%c0_91, %c0_92, %c0_93], %120 {strides = array<i32>} : memref<1x8x128xf32, #tpu.memory_space<vmem>>, vector<1x8x128xf32>,
    return
  }
  func.func @transform_0(%arg0: i32) -> (i32, i32, i32) {
    %c0_i32 = arith.constant 0 : i32
    %c0_i32_0 = arith.constant 0 : i32
    %c0_i32_1 = arith.constant 0 : i32
    return %arg0, %c0_i32, %c0_i32_0 : i32, i32, i32
  }
  func.func @transform_1(%arg0: i32) -> (i32, i32, i32) {
    %c0_i32 = arith.constant 0 : i32
    %c0_i32_0 = arith.constant 0 : i32
    %c0_i32_1 = arith.constant 0 : i32
    %c0_i32_2 = arith.constant 0 : i32
    return %c0_i32, %c0_i32_0, %c0_i32_1 : i32, i32, i32
  }
  func.func @transform_2(%arg0: i32) -> (i32, i32) {
    %c0_i32 = arith.constant 0 : i32
    %c0_i32_0 = arith.constant 0 : i32
    %c0_i32_1 = arith.constant 0 : i32
    return %c0_i32, %c0_i32_0 : i32, i32
  }
  func.func @transform_3(%arg0: i32) -> (i32, i32) {
    %c0_i32 = arith.constant 0 : i32
    %c0_i32_0 = arith.constant 0 : i32
    %c0_i32_1 = arith.constant 0 : i32
    return %c0_i32, %c0_i32_0 : i32, i32
  }
  func.func @transform_4(%arg0: i32) -> (i32, i32) {
    %c0_i32 = arith.constant 0 : i32
    %c0_i32_0 = arith.constant 0 : i32
    %c0_i32_1 = arith.constant 0 : i32
    return %c0_i32, %c0_i32_0 : i32, i32
  }
  func.func @transform_5(%arg0: i32) -> (i32, i32) {
    %c0_i32 = arith.constant 0 : i32
    %c0_i32_0 = arith.constant 0 : i32
    %c0_i32_1 = arith.constant 0 : i32
    return %c0_i32, %c0_i32_0 : i32, i32
  }
  func.func @transform_6(%arg0: i32) -> (i32, i32) {
    %c0_i32 = arith.constant 0 : i32
    %c0_i32_0 = arith.constant 0 : i32
    %c0_i32_1 = arith.constant 0 : i32
    return %c0_i32, %c0_i32_0 : i32, i32
  }
  func.func @transform_7(%arg0: i32) -> (i32, i32) {
    %c0_i32 = arith.constant 0 : i32
    %c0_i32_0 = arith.constant 0 : i32
    %c0_i32_1 = arith.constant 0 : i32
    return %c0_i32, %c0_i32_0 : i32, i32
  }
  func.func @transform_8(%arg0: i32) -> (i32, i32) {
    %c0_i32 = arith.constant 0 : i32
    %c0_i32_0 = arith.constant 0 : i32
    %c0_i32_1 = arith.constant 0 : i32
    return %c0_i32, %c0_i32_0 : i32, i32
  }
  func.func @transform_9(%arg0: i32) -> (i32, i32) {
    %c0_i32 = arith.constant 0 : i32
    %c0_i32_0 = arith.constant 0 : i32
    %c0_i32_1 = arith.constant 0 : i32
    return %c0_i32, %c0_i32_0 : i32, i32
  }
  func.func @transform_10(%arg0: i32) -> (i32, i32) {
    %c0_i32 = arith.constant 0 : i32
    %c0_i32_0 = arith.constant 0 : i32
    %c0_i32_1 = arith.constant 0 : i32
    return %c0_i32, %c0_i32_0 : i32, i32
  }
  func.func @transform_11(%arg0: i32) -> (i32, i32) {
    %c0_i32 = arith.constant 0 : i32
    %c0_i32_0 = arith.constant 0 : i32
    %c0_i32_1 = arith.constant 0 : i32
    return %c0_i32, %c0_i32_0 : i32, i32
  }
  func.func @transform_12(%arg0: i32) -> (i32, i32) {
    %c0_i32 = arith.constant 0 : i32
    %c0_i32_0 = arith.constant 0 : i32
    %c0_i32_1 = arith.constant 0 : i32
    return %c0_i32, %c0_i32_0 : i32, i32
  }
  func.func @transform_13(%arg0: i32) -> (i32, i32, i32) {
    %c0_i32 = arith.constant 0 : i32
    %c0_i32_0 = arith.constant 0 : i32
    %c0_i32_1 = arith.constant 0 : i32
    return %arg0, %c0_i32, %c0_i32_0 : i32, i32, i32
  }
}

</mosaic_0001>

<llo_original>
// kernel: reverse
$region0: #{reverse}
  #allocation0 [shape = 's32[1]{0}', space=sflag, size = 0x4, scoped, tag = 'scoped memory for reverse']
  %s0 = inlined_call_operand.vmem [shape: f32[512,512,3,3], index: 0, kind: input, shape index: {}]
  %s1 = inlined_call_operand.vmem [shape: bf16[512,512,3,3], index: 1, kind: output, shape index: {}]
  loop: start=0, step=1, limit=4
  $region2: #{reverse} parent=0 // loop_pre_header
    _
  $region3: #{reverse} parent=0 // loop_header
    %s3 = sphi 0, %s7
    %p4 = scmp.ge.s32.totalorder %s3, 4
    %s10 = sphi 0, %s36
    %s11 = sphi 0, %s32
    %s12 = sphi 0, %s28
    %s13 = sphi 0, %s24
    %s14 = sphi 0, %s10
    %s15 = sphi 0, %s11
    %s16 = sphi 0, %s12
    %s17 = sphi 0, %s13
    %s18 = sphi 0, %s14
    %s19 = sphi 0, %s15
    %s20 = sphi 0, %s16
    %s21 = sphi 0, %s17
  $region4: #{reverse} parent=0 // loop_header_branch
    %6 = sbr.rel (%p4) target = $region8
  $region5: #{reverse} parent=0 // loop_body
    %s8 = ssub.s32 %s3, 1
    %s9 = ssub.s32 %s3, 2
    %s22 = sadd.s32 1, %s13
    %p23 = scmp.ge.s32.totalorder %s22, 1
    %s24 = scalar_select %p23, 0, %s22
    %s25 = sadd.s32 1, %s12
    %s26 = scalar_select %p23, %s25, %s12
    %p27 = scmp.ge.s32.totalorder %s26, 2
    %s28 = scalar_select %p27, 0, %s26
    %s29 = sadd.s32 1, %s11
    %s30 = scalar_select %p27, %s29, %s11
    %p31 = scmp.ge.s32.totalorder %s30, 1
    %s32 = scalar_select %p31, 0, %s30
    %s33 = sadd.s32 1, %s10
    %s34 = scalar_select %p31, %s33, %s10
    %p35 = scmp.ge.s32.totalorder %s34, 1
    %s36 = scalar_select %p35, 0, %s34
    %p37 = scmp.le.s32.totalorder 1, %s3
    %p38 = scmp.lt.s32.totalorder %s3, 3
    %p39 = pnand %p37, %p38
    %p40 = pneg %p39
    // Predicated region
    $region9: #{reverse} parent=5 // pred_check
      _
    $region10: #{reverse} parent=5 // pred_check_branch
      %42 = sbr.rel (%p39) target = $region12
    $region11: #{reverse} parent=5 // pred_region
      %s43 = ssub.s32 %s3, 1
    $region12: #{reverse} parent=5 // pred_fallthru
      _
    %p44 = scmp.lt.s32.totalorder %s3, 2
    // Predicated region
    $region13: #{reverse} parent=5 // pred_check
      %p45 = pneg %p44
    $region14: #{reverse} parent=5 // pred_check_branch
      %47 = sbr.rel (%p45) target = $region16
    $region15: #{reverse} parent=5 // pred_region
      %s48 = ssub.s32 0, %s10
      %s49 = ssub.s32 0, %s11
      %s50 = smul.u32 3, %s48
      %s51 = smul.u32 3, %s49
      %s52 = smul.u32 32, %s12
      %s53 = smul.u32 4, %s13
      %p54 = scmp.lt.s32.totalorder %s50, 2
      %s55 = scalar_select %p54, %s50, 2
      %p56 = scmp.lt.s32.totalorder %s51, 2
      %s57 = scalar_select %p56, %s51, 2
      %p58 = scmp.lt.s32.totalorder %s52, 63
      %s59 = scalar_select %p58, %s52, 63
      %p60 = scmp.lt.s32.totalorder %s53, 3
      %s61 = scalar_select %p60, %s53, 3
      %s62 = smul.addr %s59, 4
      %s63 = sadd.s32 %s61, %s62
      %s64 = smul.addr %s57, 256
      %s65 = sadd.s32 %s63, %s64
      %s66 = smul.addr %s55, 768
      %s67 = sadd.s32 %s65, %s66
      %s68 = smul.addr %s67, 8
      %s69 = scalar_lea.vmem %s0, %s68
      %s70 = ssub.s32 0, %s10
      %s71 = ssub.s32 0, %s11
      %s72 = smul.u32 3, %s70
      %s73 = smul.u32 3, %s71
      %s74 = smul.u32 32, %s12
      %s75 = smul.u32 4, %s13
    $region16: #{reverse} parent=5 // pred_fallthru
      _
    %p76 = scmp.le.s32.totalorder 1, %s3
    %p77 = scmp.lt.s32.totalorder %s3, 3
    %p78 = pnand %p76, %p77
    %p79 = pneg %p78
    // Predicated region
    $region17: #{reverse} parent=5 // pred_check
      _
    $region18: #{reverse} parent=5 // pred_check_branch
      %81 = sbr.rel (%p78) target = $region20
    $region19: #{reverse} parent=5 // pred_region
      %s82 = ssub.s32 %s3, 1
      %s83 = ssub.s32 0, %s14
      %s84 = ssub.s32 0, %s15
      %s85 = smul.u32 3, %s83
      %s86 = smul.u32 3, %s84
      %s87 = smul.u32 32, %s16
      %s88 = smul.u32 4, %s17
      %p89 = scmp.lt.s32.totalorder %s85, 2
      %s90 = scalar_select %p89, %s85, 2
      %p91 = scmp.lt.s32.totalorder %s86, 2
      %s92 = scalar_select %p91, %s86, 2
      %p93 = scmp.lt.s32.totalorder %s87, 63
      %s94 = scalar_select %p93, %s87, 63
      %p95 = scmp.lt.s32.totalorder %s88, 3
      %s96 = scalar_select %p95, %s88, 3
      %s97 = smul.addr %s94, 4
      %s98 = sadd.s32 %s96, %s97
      %s99 = smul.addr %s92, 256
      %s100 = sadd.s32 %s98, %s99
      %s101 = smul.addr %s90, 768
      %s102 = sadd.s32 %s100, %s101
      %s103 = smul.addr %s102, 8
      %s104 = scalar_lea.vmem %s0, %s103
      %s105 = smul.u32 3, %s14
      %s106 = smul.u32 3, %s15
      %s107 = smul.u32 32, %s16
      %s108 = smul.u32 4, %s17
      %p109 = scmp.lt.s32.totalorder %s105, 2
      %s110 = scalar_select %p109, %s105, 2
      %p111 = scmp.lt.s32.totalorder %s106, 2
      %s112 = scalar_select %p111, %s106, 2
      %p113 = scmp.lt.s32.totalorder %s107, 63
      %s114 = scalar_select %p113, %s107, 63
      %p115 = scmp.lt.s32.totalorder %s108, 3
      %s116 = scalar_select %p115, %s108, 3
      %s117 = smul.addr %s114, 4
      %s118 = sadd.s32 %s116, %s117
      %s119 = smul.addr %s112, 256
      %s120 = sadd.s32 %s118, %s119
      %s121 = smul.addr %s110, 768
      %s122 = sadd.s32 %s120, %s121
      %s123 = smul.addr %s122, 4
      %s124 = scalar_lea.vmem %s1, %s123
      %s125 = smul.u32 3, %s14
      %s126 = smul.u32 3, %s15
      %s127 = smul.u32 32, %s16
      %s128 = smul.u32 4, %s17
      %s129 = ssub.s32 0, %s14
      %s130 = ssub.s32 0, %s15
      %s131 = smul.u32 3, %s129
      %s132 = smul.u32 3, %s130
      %s133 = smul.u32 32, %s16
      %s134 = smul.u32 4, %s17
      %p135 = scmp.lt.s32.totalorder %s131, 2
      %s136 = scalar_select %p135, %s131, 2
      %p137 = scmp.lt.s32.totalorder %s132, 2
      %s138 = scalar_select %p137, %s132, 2
      %p139 = scmp.lt.s32.totalorder %s133, 63
      %s140 = scalar_select %p139, %s133, 63
      %p141 = scmp.lt.s32.totalorder %s134, 3
      %s142 = scalar_select %p141, %s134, 3
      %s143 = smul.addr %s140, 4
      %s144 = sadd.s32 %s142, %s143
      %s145 = smul.addr %s138, 256
      %s146 = sadd.s32 %s144, %s145
      %s147 = smul.addr %s136, 768
      %s148 = sadd.s32 %s146, %s147
      %s149 = smul.addr %s148, 8
      %s150 = scalar_lea.vmem %s0, %s149
      %s151 = ssub.s32 0, %s14
      %s152 = ssub.s32 0, %s15
      %s153 = smul.u32 3, %s151
      %s154 = smul.u32 3, %s152
      %s155 = smul.u32 32, %s16
      %s156 = smul.u32 4, %s17
      %s157 = smul.u32 3, %s14
      %s158 = smul.u32 3, %s15
      %s159 = smul.u32 32, %s16
      %s160 = smul.u32 4, %s17
      %p161 = scmp.lt.s32.totalorder %s157, 2
      %s162 = scalar_select %p161, %s157, 2
      %p163 = scmp.lt.s32.totalorder %s158, 2
      %s164 = scalar_select %p163, %s158, 2
      %p165 = scmp.lt.s32.totalorder %s159, 63
      %s166 = scalar_select %p165, %s159, 63
      %p167 = scmp.lt.s32.totalorder %s160, 3
      %s168 = scalar_select %p167, %s160, 3
      %s169 = smul.addr %s166, 4
      %s170 = sadd.s32 %s168, %s169
      %s171 = smul.addr %s164, 256
      %s172 = sadd.s32 %s170, %s171
      %s173 = smul.addr %s162, 768
      %s174 = sadd.s32 %s172, %s173
      %s175 = smul.addr %s174, 4
      %s176 = scalar_lea.vmem %s1, %s175
      %s177 = smul.u32 3, %s14
      %s178 = smul.u32 3, %s15
      %s179 = smul.u32 32, %s16
      %s180 = smul.u32 4, %s17
      %s181 = scalar_lea.vmem %s150, 16384
      %v182 = vld [vmem:[%s181] sm:$0xff]
      %s183 = scalar_lea.vmem %s150, 10240
      %v184 = vld [vmem:[%s183] sm:$0xff]
      %s185 = scalar_lea.vmem %s176, 3072
      %s186 = scalar_lea.vmem %s150, 4096
      %v187 = vld [vmem:[%s186] sm:$0xff]
      %s188 = scalar_lea.vmem %s176, 6144
      %s189 = scalar_lea.vmem %s150, 14336
      %v190 = vld [vmem:[%s189] sm:$0xff]
      %s191 = scalar_lea.vmem %s176, 1024
      %s192 = scalar_lea.vmem %s150, 8192
      %v193 = vld [vmem:[%s192] sm:$0xff]
      %s194 = scalar_lea.vmem %s176, 4096
      %s195 = scalar_lea.vmem %s150, 2048
      %v196 = vld [vmem:[%s195] sm:$0xff]
      %s197 = scalar_lea.vmem %s176, 7168
      %s198 = scalar_lea.vmem %s150, 12288
      %v199 = vld [vmem:[%s198] sm:$0xff]
      %s200 = scalar_lea.vmem %s176, 2048
      %s201 = scalar_lea.vmem %s150, 6144
      %v202 = vld [vmem:[%s201] sm:$0xff]
      %s203 = scalar_lea.vmem %s176, 5120
      %v204 = vld [vmem:[%s150] sm:$0xff]
      %s205 = scalar_lea.vmem %s176, 8192
      %s206 = scalar_lea.vmem %s150, 16416
      %v207 = vld [vmem:[%s206] sm:$0xff]
      %s208 = scalar_lea.vmem %s176, 16
      %s209 = scalar_lea.vmem %s150, 10272
      %v210 = vld [vmem:[%s209] sm:$0xff]
      %s211 = scalar_lea.vmem %s176, 3088
      %s212 = scalar_lea.vmem %s150, 4128
      %v213 = vld [vmem:[%s212] sm:$0xff]
      %s214 = scalar_lea.vmem %s176, 6160
      %s215 = scalar_lea.vmem %s150, 14368
      %v216 = vld [vmem:[%s215] sm:$0xff]
      %s217 = scalar_lea.vmem %s176, 1040
      %s218 = scalar_lea.vmem %s150, 8224
      %v219 = vld [vmem:[%s218] sm:$0xff]
      %s220 = scalar_lea.vmem %s176, 4112
      %s221 = scalar_lea.vmem %s150, 2080
      %v222 = vld [vmem:[%s221] sm:$0xff]
      %s223 = scalar_lea.vmem %s176, 7184
      %s224 = scalar_lea.vmem %s150, 12320
      %v225 = vld [vmem:[%s224] sm:$0xff]
      %s226 = scalar_lea.vmem %s176, 2064
      %s227 = scalar_lea.vmem %s150, 6176
      %v228 = vld [vmem:[%s227] sm:$0xff]
      %s229 = scalar_lea.vmem %s176, 5136
      %s230 = scalar_lea.vmem %s150, 32
      %v231 = vld [vmem:[%s230] sm:$0xff]
      %s232 = scalar_lea.vmem %s176, 8208
      %s233 = scalar_lea.vmem %s150, 16448
      %v234 = vld [vmem:[%s233] sm:$0xff]
      %s235 = scalar_lea.vmem %s176, 32
      %s236 = scalar_lea.vmem %s150, 10304
      %v237 = vld [vmem:[%s236] sm:$0xff]
      %s238 = scalar_lea.vmem %s176, 3104
      %s239 = scalar_lea.vmem %s150, 4160
      %v240 = vld [vmem:[%s239] sm:$0xff]
      %s241 = scalar_lea.vmem %s176, 6176
      %s242 = scalar_lea.vmem %s150, 14400
      %v243 = vld [vmem:[%s242] sm:$0xff]
      %s244 = scalar_lea.vmem %s176, 1056
      %s245 = scalar_lea.vmem %s150, 8256
      %v246 = vld [vmem:[%s245] sm:$0xff]
      %s247 = scalar_lea.vmem %s176, 4128
      %s248 = scalar_lea.vmem %s150, 2112
      %v249 = vld [vmem:[%s248] sm:$0xff]
      %s250 = scalar_lea.vmem %s176, 7200
      %s251 = scalar_lea.vmem %s150, 12352
      %v252 = vld [vmem:[%s251] sm:$0xff]
      %s253 = scalar_lea.vmem %s176, 2080
      %s254 = scalar_lea.vmem %s150, 6208
      %v255 = vld [vmem:[%s254] sm:$0xff]
      %s256 = scalar_lea.vmem %s176, 5152
      %s257 = scalar_lea.vmem %s150, 64
      %v258 = vld [vmem:[%s257] sm:$0xff]
      %s259 = scalar_lea.vmem %s176, 8224
      %s260 = scalar_lea.vmem %s150, 16480
      %v261 = vld [vmem:[%s260] sm:$0xff]
      %s262 = scalar_lea.vmem %s176, 48
      %s263 = scalar_lea.vmem %s150, 10336
      %v264 = vld [vmem:[%s263] sm:$0xff]
      %s265 = scalar_lea.vmem %s176, 3120
      %s266 = scalar_lea.vmem %s150, 4192
      %v267 = vld [vmem:[%s266] sm:$0xff]
      %s268 = scalar_lea.vmem %s176, 6192
      %s269 = scalar_lea.vmem %s150, 14432
      %v270 = vld [vmem:[%s269] sm:$0xff]
      %s271 = scalar_lea.vmem %s176, 1072
      %s272 = scalar_lea.vmem %s150, 8288
      %v273 = vld [vmem:[%s272] sm:$0xff]
      %s274 = scalar_lea.vmem %s176, 4144
      %s275 = scalar_lea.vmem %s150, 2144
      %v276 = vld [vmem:[%s275] sm:$0xff]
      %s277 = scalar_lea.vmem %s176, 7216
      %s278 = scalar_lea.vmem %s150, 12384
      %v279 = vld [vmem:[%s278] sm:$0xff]
      %s280 = scalar_lea.vmem %s176, 2096
      %s281 = scalar_lea.vmem %s150, 6240
      %v282 = vld [vmem:[%s281] sm:$0xff]
      %s283 = scalar_lea.vmem %s176, 5168
      %s284 = scalar_lea.vmem %s150, 96
      %v285 = vld [vmem:[%s284] sm:$0xff]
      %s286 = scalar_lea.vmem %s176, 8240
      %s287 = scalar_lea.vmem %s150, 16512
      %v288 = vld [vmem:[%s287] sm:$0xff]
      %s289 = scalar_lea.vmem %s176, 64
      %s290 = scalar_lea.vmem %s150, 10368
      %v291 = vld [vmem:[%s290] sm:$0xff]
      %s292 = scalar_lea.vmem %s176, 3136
      %s293 = scalar_lea.vmem %s150, 4224
      %v294 = vld [vmem:[%s293] sm:$0xff]
      %s295 = scalar_lea.vmem %s176, 6208
      %s296 = scalar_lea.vmem %s150, 14464
      %v297 = vld [vmem:[%s296] sm:$0xff]
      %s298 = scalar_lea.vmem %s176, 1088
      %s299 = scalar_lea.vmem %s150, 8320
      %v300 = vld [vmem:[%s299] sm:$0xff]
      %s301 = scalar_lea.vmem %s176, 4160
      %s302 = scalar_lea.vmem %s150, 2176
      %v303 = vld [vmem:[%s302] sm:$0xff]
      %s304 = scalar_lea.vmem %s176, 7232
      %s305 = scalar_lea.vmem %s150, 12416
      %v306 = vld [vmem:[%s305] sm:$0xff]
      %s307 = scalar_lea.vmem %s176, 2112
      %s308 = scalar_lea.vmem %s150, 6272
      %v309 = vld [vmem:[%s308] sm:$0xff]
      %s310 = scalar_lea.vmem %s176, 5184
      %s311 = scalar_lea.vmem %s150, 128
      %v312 = vld [vmem:[%s311] sm:$0xff]
      %s313 = scalar_lea.vmem %s176, 8256
      %s314 = scalar_lea.vmem %s150, 16544
      %v315 = vld [vmem:[%s314] sm:$0xff]
      %s316 = scalar_lea.vmem %s176, 80
      %s317 = scalar_lea.vmem %s150, 10400
      %v318 = vld [vmem:[%s317] sm:$0xff]
      %s319 = scalar_lea.vmem %s176, 3152
      %s320 = scalar_lea.vmem %s150, 4256
      %v321 = vld [vmem:[%s320] sm:$0xff]
      %s322 = scalar_lea.vmem %s176, 6224
      %s323 = scalar_lea.vmem %s150, 14496
      %v324 = vld [vmem:[%s323] sm:$0xff]
      %s325 = scalar_lea.vmem %s176, 1104
      %s326 = scalar_lea.vmem %s150, 8352
      %v327 = vld [vmem:[%s326] sm:$0xff]
      %s328 = scalar_lea.vmem %s176, 4176
      %s329 = scalar_lea.vmem %s150, 2208
      %v330 = vld [vmem:[%s329] sm:$0xff]
      %s331 = scalar_lea.vmem %s176, 7248
      %s332 = scalar_lea.vmem %s150, 12448
      %v333 = vld [vmem:[%s332] sm:$0xff]
      %s334 = scalar_lea.vmem %s176, 2128
      %s335 = scalar_lea.vmem %s150, 6304
      %v336 = vld [vmem:[%s335] sm:$0xff]
      %s337 = scalar_lea.vmem %s176, 5200
      %s338 = scalar_lea.vmem %s150, 160
      %v339 = vld [vmem:[%s338] sm:$0xff]
      %s340 = scalar_lea.vmem %s176, 8272
      %s341 = scalar_lea.vmem %s150, 16576
      %v342 = vld [vmem:[%s341] sm:$0xff]
      %s343 = scalar_lea.vmem %s176, 96
      %s344 = scalar_lea.vmem %s150, 10432
      %v345 = vld [vmem:[%s344] sm:$0xff]
      %s346 = scalar_lea.vmem %s176, 3168
      %s347 = scalar_lea.vmem %s150, 4288
      %v348 = vld [vmem:[%s347] sm:$0xff]
      %s349 = scalar_lea.vmem %s176, 6240
      %s350 = scalar_lea.vmem %s150, 14528
      %v351 = vld [vmem:[%s350] sm:$0xff]
      %s352 = scalar_lea.vmem %s176, 1120
      %s353 = scalar_lea.vmem %s150, 8384
      %v354 = vld [vmem:[%s353] sm:$0xff]
      %s355 = scalar_lea.vmem %s176, 4192
      %s356 = scalar_lea.vmem %s150, 2240
      %v357 = vld [vmem:[%s356] sm:$0xff]
      %s358 = scalar_lea.vmem %s176, 7264
      %s359 = scalar_lea.vmem %s150, 12480
      %v360 = vld [vmem:[%s359] sm:$0xff]
      %s361 = scalar_lea.vmem %s176, 2144
      %s362 = scalar_lea.vmem %s150, 6336
      %v363 = vld [vmem:[%s362] sm:$0xff]
      %s364 = scalar_lea.vmem %s176, 5216
      %s365 = scalar_lea.vmem %s150, 192
      %v366 = vld [vmem:[%s365] sm:$0xff]
      %s367 = scalar_lea.vmem %s176, 8288
      %s368 = scalar_lea.vmem %s150, 16608
      %v369 = vld [vmem:[%s368] sm:$0xff]
      %s370 = scalar_lea.vmem %s176, 112
      %s371 = scalar_lea.vmem %s150, 10464
      %v372 = vld [vmem:[%s371] sm:$0xff]
      %s373 = scalar_lea.vmem %s176, 3184
      %s374 = scalar_lea.vmem %s150, 4320
      %v375 = vld [vmem:[%s374] sm:$0xff]
      %s376 = scalar_lea.vmem %s176, 6256
      %s377 = scalar_lea.vmem %s150, 14560
      %v378 = vld [vmem:[%s377] sm:$0xff]
      %s379 = scalar_lea.vmem %s176, 1136
      %s380 = scalar_lea.vmem %s150, 8416
      %v381 = vld [vmem:[%s380] sm:$0xff]
      %s382 = scalar_lea.vmem %s176, 4208
      %s383 = scalar_lea.vmem %s150, 2272
      %v384 = vld [vmem:[%s383] sm:$0xff]
      %s385 = scalar_lea.vmem %s176, 7280
      %s386 = scalar_lea.vmem %s150, 12512
      %v387 = vld [vmem:[%s386] sm:$0xff]
      %s388 = scalar_lea.vmem %s176, 2160
      %s389 = scalar_lea.vmem %s150, 6368
      %v390 = vld [vmem:[%s389] sm:$0xff]
      %s391 = scalar_lea.vmem %s176, 5232
      %s392 = scalar_lea.vmem %s150, 224
      %v393 = vld [vmem:[%s392] sm:$0xff]
      %s394 = scalar_lea.vmem %s176, 8304
      %s395 = scalar_lea.vmem %s150, 16640
      %v396 = vld [vmem:[%s395] sm:$0xff]
      %s397 = scalar_lea.vmem %s176, 128
      %s398 = scalar_lea.vmem %s150, 10496
      %v399 = vld [vmem:[%s398] sm:$0xff]
      %s400 = scalar_lea.vmem %s176, 3200
      %s401 = scalar_lea.vmem %s150, 4352
      %v402 = vld [vmem:[%s401] sm:$0xff]
      %s403 = scalar_lea.vmem %s176, 6272
      %s404 = scalar_lea.vmem %s150, 14592
      %v405 = vld [vmem:[%s404] sm:$0xff]
      %s406 = scalar_lea.vmem %s176, 1152
      %s407 = scalar_lea.vmem %s150, 8448
      %v408 = vld [vmem:[%s407] sm:$0xff]
      %s409 = scalar_lea.vmem %s176, 4224
      %s410 = scalar_lea.vmem %s150, 2304
      %v411 = vld [vmem:[%s410] sm:$0xff]
      %s412 = scalar_lea.vmem %s176, 7296
      %s413 = scalar_lea.vmem %s150, 12544
      %v414 = vld [vmem:[%s413] sm:$0xff]
      %s415 = scalar_lea.vmem %s176, 2176
      %s416 = scalar_lea.vmem %s150, 6400
      %v417 = vld [vmem:[%s416] sm:$0xff]
      %s418 = scalar_lea.vmem %s176, 5248
      %s419 = scalar_lea.vmem %s150, 256
      %v420 = vld [vmem:[%s419] sm:$0xff]
      %s421 = scalar_lea.vmem %s176, 8320
      %s422 = scalar_lea.vmem %s150, 16672
      %v423 = vld [vmem:[%s422] sm:$0xff]
      %s424 = scalar_lea.vmem %s176, 144
      %s425 = scalar_lea.vmem %s150, 10528
      %v426 = vld [vmem:[%s425] sm:$0xff]
      %s427 = scalar_lea.vmem %s176, 3216
      %s428 = scalar_lea.vmem %s150, 4384
      %v429 = vld [vmem:[%s428] sm:$0xff]
      %s430 = scalar_lea.vmem %s176, 6288
      %s431 = scalar_lea.vmem %s150, 14624
      %v432 = vld [vmem:[%s431] sm:$0xff]
      %s433 = scalar_lea.vmem %s176, 1168
      %s434 = scalar_lea.vmem %s150, 8480
      %v435 = vld [vmem:[%s434] sm:$0xff]
      %s436 = scalar_lea.vmem %s176, 4240
      %s437 = scalar_lea.vmem %s150, 2336
      %v438 = vld [vmem:[%s437] sm:$0xff]
      %s439 = scalar_lea.vmem %s176, 7312
      %s440 = scalar_lea.vmem %s150, 12576
      %v441 = vld [vmem:[%s440] sm:$0xff]
      %s442 = scalar_lea.vmem %s176, 2192
      %s443 = scalar_lea.vmem %s150, 6432
      %v444 = vld [vmem:[%s443] sm:$0xff]
      %s445 = scalar_lea.vmem %s176, 5264
      %s446 = scalar_lea.vmem %s150, 288
      %v447 = vld [vmem:[%s446] sm:$0xff]
      %s448 = scalar_lea.vmem %s176, 8336
      %s449 = scalar_lea.vmem %s150, 16704
      %v450 = vld [vmem:[%s449] sm:$0xff]
      %s451 = scalar_lea.vmem %s176, 160
      %s452 = scalar_lea.vmem %s150, 10560
      %v453 = vld [vmem:[%s452] sm:$0xff]
      %s454 = scalar_lea.vmem %s176, 3232
      %s455 = scalar_lea.vmem %s150, 4416
      %v456 = vld [vmem:[%s455] sm:$0xff]
      %s457 = scalar_lea.vmem %s176, 6304
      %s458 = scalar_lea.vmem %s150, 14656
      %v459 = vld [vmem:[%s458] sm:$0xff]
      %s460 = scalar_lea.vmem %s176, 1184
      %s461 = scalar_lea.vmem %s150, 8512
      %v462 = vld [vmem:[%s461] sm:$0xff]
      %s463 = scalar_lea.vmem %s176, 4256
      %s464 = scalar_lea.vmem %s150, 2368
      %v465 = vld [vmem:[%s464] sm:$0xff]
      %s466 = scalar_lea.vmem %s176, 7328
      %s467 = scalar_lea.vmem %s150, 12608
      %v468 = vld [vmem:[%s467] sm:$0xff]
      %s469 = scalar_lea.vmem %s176, 2208
      %s470 = scalar_lea.vmem %s150, 6464
      %v471 = vld [vmem:[%s470] sm:$0xff]
      %s472 = scalar_lea.vmem %s176, 5280
      %s473 = scalar_lea.vmem %s150, 320
      %v474 = vld [vmem:[%s473] sm:$0xff]
      %s475 = scalar_lea.vmem %s176, 8352
      %s476 = scalar_lea.vmem %s150, 16736
      %v477 = vld [vmem:[%s476] sm:$0xff]
      %s478 = scalar_lea.vmem %s176, 176
      %s479 = scalar_lea.vmem %s150, 10592
      %v480 = vld [vmem:[%s479] sm:$0xff]
      %s481 = scalar_lea.vmem %s176, 3248
      %s482 = scalar_lea.vmem %s150, 4448
      %v483 = vld [vmem:[%s482] sm:$0xff]
      %s484 = scalar_lea.vmem %s176, 6320
      %s485 = scalar_lea.vmem %s150, 14688
      %v486 = vld [vmem:[%s485] sm:$0xff]
      %s487 = scalar_lea.vmem %s176, 1200
      %s488 = scalar_lea.vmem %s150, 8544
      %v489 = vld [vmem:[%s488] sm:$0xff]
      %s490 = scalar_lea.vmem %s176, 4272
      %s491 = scalar_lea.vmem %s150, 2400
      %v492 = vld [vmem:[%s491] sm:$0xff]
      %s493 = scalar_lea.vmem %s176, 7344
      %s494 = scalar_lea.vmem %s150, 12640
      %v495 = vld [vmem:[%s494] sm:$0xff]
      %s496 = scalar_lea.vmem %s176, 2224
      %s497 = scalar_lea.vmem %s150, 6496
      %v498 = vld [vmem:[%s497] sm:$0xff]
      %s499 = scalar_lea.vmem %s176, 5296
      %s500 = scalar_lea.vmem %s150, 352
      %v501 = vld [vmem:[%s500] sm:$0xff]
      %s502 = scalar_lea.vmem %s176, 8368
      %s503 = scalar_lea.vmem %s150, 16768
      %v504 = vld [vmem:[%s503] sm:$0xff]
      %s505 = scalar_lea.vmem %s176, 192
      %s506 = scalar_lea.vmem %s150, 10624
      %v507 = vld [vmem:[%s506] sm:$0xff]
      %s508 = scalar_lea.vmem %s176, 3264
      %s509 = scalar_lea.vmem %s150, 4480
      %v510 = vld [vmem:[%s509] sm:$0xff]
      %s511 = scalar_lea.vmem %s176, 6336
      %s512 = scalar_lea.vmem %s150, 14720
      %v513 = vld [vmem:[%s512] sm:$0xff]
      %s514 = scalar_lea.vmem %s176, 1216
      %s515 = scalar_lea.vmem %s150, 8576
      %v516 = vld [vmem:[%s515] sm:$0xff]
      %s517 = scalar_lea.vmem %s176, 4288
      %s518 = scalar_lea.vmem %s150, 2432
      %v519 = vld [vmem:[%s518] sm:$0xff]
      %s520 = scalar_lea.vmem %s176, 7360
      %s521 = scalar_lea.vmem %s150, 12672
      %v522 = vld [vmem:[%s521] sm:$0xff]
      %s523 = scalar_lea.vmem %s176, 2240
      %s524 = scalar_lea.vmem %s150, 6528
      %v525 = vld [vmem:[%s524] sm:$0xff]
      %s526 = scalar_lea.vmem %s176, 5312
      %s527 = scalar_lea.vmem %s150, 384
      %v528 = vld [vmem:[%s527] sm:$0xff]
      %s529 = scalar_lea.vmem %s176, 8384
      %s530 = scalar_lea.vmem %s150, 16800
      %v531 = vld [vmem:[%s530] sm:$0xff]
      %s532 = scalar_lea.vmem %s176, 208
      %s533 = scalar_lea.vmem %s150, 10656
      %v534 = vld [vmem:[%s533] sm:$0xff]
      %s535 = scalar_lea.vmem %s176, 3280
      %s536 = scalar_lea.vmem %s150, 4512
      %v537 = vld [vmem:[%s536] sm:$0xff]
      %s538 = scalar_lea.vmem %s176, 6352
      %s539 = scalar_lea.vmem %s150, 14752
      %v540 = vld [vmem:[%s539] sm:$0xff]
      %s541 = scalar_lea.vmem %s176, 1232
      %s542 = scalar_lea.vmem %s150, 8608
      %v543 = vld [vmem:[%s542] sm:$0xff]
      %s544 = scalar_lea.vmem %s176, 4304
      %s545 = scalar_lea.vmem %s150, 2464
      %v546 = vld [vmem:[%s545] sm:$0xff]
      %s547 = scalar_lea.vmem %s176, 7376
      %s548 = scalar_lea.vmem %s150, 12704
      %v549 = vld [vmem:[%s548] sm:$0xff]
      %s550 = scalar_lea.vmem %s176, 2256
      %s551 = scalar_lea.vmem %s150, 6560
      %v552 = vld [vmem:[%s551] sm:$0xff]
      %s553 = scalar_lea.vmem %s176, 5328
      %s554 = scalar_lea.vmem %s150, 416
      %v555 = vld [vmem:[%s554] sm:$0xff]
      %s556 = scalar_lea.vmem %s176, 8400
      %s557 = scalar_lea.vmem %s150, 16832
      %v558 = vld [vmem:[%s557] sm:$0xff]
      %s559 = scalar_lea.vmem %s176, 224
      %s560 = scalar_lea.vmem %s150, 10688
      %v561 = vld [vmem:[%s560] sm:$0xff]
      %s562 = scalar_lea.vmem %s176, 3296
      %s563 = scalar_lea.vmem %s150, 4544
      %v564 = vld [vmem:[%s563] sm:$0xff]
      %s565 = scalar_lea.vmem %s176, 6368
      %s566 = scalar_lea.vmem %s150, 14784
      %v567 = vld [vmem:[%s566] sm:$0xff]
      %s568 = scalar_lea.vmem %s176, 1248
      %s569 = scalar_lea.vmem %s150, 8640
      %v570 = vld [vmem:[%s569] sm:$0xff]
      %s571 = scalar_lea.vmem %s176, 4320
      %s572 = scalar_lea.vmem %s150, 2496
      %v573 = vld [vmem:[%s572] sm:$0xff]
      %s574 = scalar_lea.vmem %s176, 7392
      %s575 = scalar_lea.vmem %s150, 12736
      %v576 = vld [vmem:[%s575] sm:$0xff]
      %s577 = scalar_lea.vmem %s176, 2272
      %s578 = scalar_lea.vmem %s150, 6592
      %v579 = vld [vmem:[%s578] sm:$0xff]
      %s580 = scalar_lea.vmem %s176, 5344
      %s581 = scalar_lea.vmem %s150, 448
      %v582 = vld [vmem:[%s581] sm:$0xff]
      %s583 = scalar_lea.vmem %s176, 8416
      %s584 = scalar_lea.vmem %s150, 16864
      %v585 = vld [vmem:[%s584] sm:$0xff]
      %s586 = scalar_lea.vmem %s176, 240
      %s587 = scalar_lea.vmem %s150, 10720
      %v588 = vld [vmem:[%s587] sm:$0xff]
      %s589 = scalar_lea.vmem %s176, 3312
      %s590 = scalar_lea.vmem %s150, 4576
      %v591 = vld [vmem:[%s590] sm:$0xff]
      %s592 = scalar_lea.vmem %s176, 6384
      %s593 = scalar_lea.vmem %s150, 14816
      %v594 = vld [vmem:[%s593] sm:$0xff]
      %s595 = scalar_lea.vmem %s176, 1264
      %s596 = scalar_lea.vmem %s150, 8672
      %v597 = vld [vmem:[%s596] sm:$0xff]
      %s598 = scalar_lea.vmem %s176, 4336
      %s599 = scalar_lea.vmem %s150, 2528
      %v600 = vld [vmem:[%s599] sm:$0xff]
      %s601 = scalar_lea.vmem %s176, 7408
      %s602 = scalar_lea.vmem %s150, 12768
      %v603 = vld [vmem:[%s602] sm:$0xff]
      %s604 = scalar_lea.vmem %s176, 2288
      %s605 = scalar_lea.vmem %s150, 6624
      %v606 = vld [vmem:[%s605] sm:$0xff]
      %s607 = scalar_lea.vmem %s176, 5360
      %s608 = scalar_lea.vmem %s150, 480
      %v609 = vld [vmem:[%s608] sm:$0xff]
      %s610 = scalar_lea.vmem %s176, 8432
      %s611 = scalar_lea.vmem %s150, 16896
      %v612 = vld [vmem:[%s611] sm:$0xff]
      %s613 = scalar_lea.vmem %s176, 256
      %s614 = scalar_lea.vmem %s150, 10752
      %v615 = vld [vmem:[%s614] sm:$0xff]
      %s616 = scalar_lea.vmem %s176, 3328
      %s617 = scalar_lea.vmem %s150, 4608
      %v618 = vld [vmem:[%s617] sm:$0xff]
      %s619 = scalar_lea.vmem %s176, 6400
      %s620 = scalar_lea.vmem %s150, 14848
      %v621 = vld [vmem:[%s620] sm:$0xff]
      %s622 = scalar_lea.vmem %s176, 1280
      %s623 = scalar_lea.vmem %s150, 8704
      %v624 = vld [vmem:[%s623] sm:$0xff]
      %s625 = scalar_lea.vmem %s176, 4352
      %s626 = scalar_lea.vmem %s150, 2560
      %v627 = vld [vmem:[%s626] sm:$0xff]
      %s628 = scalar_lea.vmem %s176, 7424
      %s629 = scalar_lea.vmem %s150, 12800
      %v630 = vld [vmem:[%s629] sm:$0xff]
      %s631 = scalar_lea.vmem %s176, 2304
      %s632 = scalar_lea.vmem %s150, 6656
      %v633 = vld [vmem:[%s632] sm:$0xff]
      %s634 = scalar_lea.vmem %s176, 5376
      %s635 = scalar_lea.vmem %s150, 512
      %v636 = vld [vmem:[%s635] sm:$0xff]
      %s637 = scalar_lea.vmem %s176, 8448
      %s638 = scalar_lea.vmem %s150, 16928
      %v639 = vld [vmem:[%s638] sm:$0xff]
      %s640 = scalar_lea.vmem %s176, 272
      %s641 = scalar_lea.vmem %s150, 10784
      %v642 = vld [vmem:[%s641] sm:$0xff]
      %s643 = scalar_lea.vmem %s176, 3344
      %s644 = scalar_lea.vmem %s150, 4640
      %v645 = vld [vmem:[%s644] sm:$0xff]
      %s646 = scalar_lea.vmem %s176, 6416
      %s647 = scalar_lea.vmem %s150, 14880
      %v648 = vld [vmem:[%s647] sm:$0xff]
      %s649 = scalar_lea.vmem %s176, 1296
      %s650 = scalar_lea.vmem %s150, 8736
      %v651 = vld [vmem:[%s650] sm:$0xff]
      %s652 = scalar_lea.vmem %s176, 4368
      %s653 = scalar_lea.vmem %s150, 2592
      %v654 = vld [vmem:[%s653] sm:$0xff]
      %s655 = scalar_lea.vmem %s176, 7440
      %s656 = scalar_lea.vmem %s150, 12832
      %v657 = vld [vmem:[%s656] sm:$0xff]
      %s658 = scalar_lea.vmem %s176, 2320
      %s659 = scalar_lea.vmem %s150, 6688
      %v660 = vld [vmem:[%s659] sm:$0xff]
      %s661 = scalar_lea.vmem %s176, 5392
      %s662 = scalar_lea.vmem %s150, 544
      %v663 = vld [vmem:[%s662] sm:$0xff]
      %s664 = scalar_lea.vmem %s176, 8464
      %s665 = scalar_lea.vmem %s150, 16960
      %v666 = vld [vmem:[%s665] sm:$0xff]
      %s667 = scalar_lea.vmem %s176, 288
      %s668 = scalar_lea.vmem %s150, 10816
      %v669 = vld [vmem:[%s668] sm:$0xff]
      %s670 = scalar_lea.vmem %s176, 3360
      %s671 = scalar_lea.vmem %s150, 4672
      %v672 = vld [vmem:[%s671] sm:$0xff]
      %s673 = scalar_lea.vmem %s176, 6432
      %s674 = scalar_lea.vmem %s150, 14912
      %v675 = vld [vmem:[%s674] sm:$0xff]
      %s676 = scalar_lea.vmem %s176, 1312
      %s677 = scalar_lea.vmem %s150, 8768
      %v678 = vld [vmem:[%s677] sm:$0xff]
      %s679 = scalar_lea.vmem %s176, 4384
      %s680 = scalar_lea.vmem %s150, 2624
      %v681 = vld [vmem:[%s680] sm:$0xff]
      %s682 = scalar_lea.vmem %s176, 7456
      %s683 = scalar_lea.vmem %s150, 12864
      %v684 = vld [vmem:[%s683] sm:$0xff]
      %s685 = scalar_lea.vmem %s176, 2336
      %s686 = scalar_lea.vmem %s150, 6720
      %v687 = vld [vmem:[%s686] sm:$0xff]
      %s688 = scalar_lea.vmem %s176, 5408
      %s689 = scalar_lea.vmem %s150, 576
      %v690 = vld [vmem:[%s689] sm:$0xff]
      %s691 = scalar_lea.vmem %s176, 8480
      %s692 = scalar_lea.vmem %s150, 16992
      %v693 = vld [vmem:[%s692] sm:$0xff]
      %s694 = scalar_lea.vmem %s176, 304
      %s695 = scalar_lea.vmem %s150, 10848
      %v696 = vld [vmem:[%s695] sm:$0xff]
      %s697 = scalar_lea.vmem %s176, 3376
      %s698 = scalar_lea.vmem %s150, 4704
      %v699 = vld [vmem:[%s698] sm:$0xff]
      %s700 = scalar_lea.vmem %s176, 6448
      %s701 = scalar_lea.vmem %s150, 14944
      %v702 = vld [vmem:[%s701] sm:$0xff]
      %s703 = scalar_lea.vmem %s176, 1328
      %s704 = scalar_lea.vmem %s150, 8800
      %v705 = vld [vmem:[%s704] sm:$0xff]
      %s706 = scalar_lea.vmem %s176, 4400
      %s707 = scalar_lea.vmem %s150, 2656
      %v708 = vld [vmem:[%s707] sm:$0xff]
      %s709 = scalar_lea.vmem %s176, 7472
      %s710 = scalar_lea.vmem %s150, 12896
      %v711 = vld [vmem:[%s710] sm:$0xff]
      %s712 = scalar_lea.vmem %s176, 2352
      %s713 = scalar_lea.vmem %s150, 6752
      %v714 = vld [vmem:[%s713] sm:$0xff]
      %s715 = scalar_lea.vmem %s176, 5424
      %s716 = scalar_lea.vmem %s150, 608
      %v717 = vld [vmem:[%s716] sm:$0xff]
      %s718 = scalar_lea.vmem %s176, 8496
      %s719 = scalar_lea.vmem %s150, 17024
      %v720 = vld [vmem:[%s719] sm:$0xff]
      %s721 = scalar_lea.vmem %s176, 320
      %s722 = scalar_lea.vmem %s150, 10880
      %v723 = vld [vmem:[%s722] sm:$0xff]
      %s724 = scalar_lea.vmem %s176, 3392
      %s725 = scalar_lea.vmem %s150, 4736
      %v726 = vld [vmem:[%s725] sm:$0xff]
      %s727 = scalar_lea.vmem %s176, 6464
      %s728 = scalar_lea.vmem %s150, 14976
      %v729 = vld [vmem:[%s728] sm:$0xff]
      %s730 = scalar_lea.vmem %s176, 1344
      %s731 = scalar_lea.vmem %s150, 8832
      %v732 = vld [vmem:[%s731] sm:$0xff]
      %s733 = scalar_lea.vmem %s176, 4416
      %s734 = scalar_lea.vmem %s150, 2688
      %v735 = vld [vmem:[%s734] sm:$0xff]
      %s736 = scalar_lea.vmem %s176, 7488
      %s737 = scalar_lea.vmem %s150, 12928
      %v738 = vld [vmem:[%s737] sm:$0xff]
      %s739 = scalar_lea.vmem %s176, 2368
      %s740 = scalar_lea.vmem %s150, 6784
      %v741 = vld [vmem:[%s740] sm:$0xff]
      %s742 = scalar_lea.vmem %s176, 5440
      %s743 = scalar_lea.vmem %s150, 640
      %v744 = vld [vmem:[%s743] sm:$0xff]
      %s745 = scalar_lea.vmem %s176, 8512
      %s746 = scalar_lea.vmem %s150, 17056
      %v747 = vld [vmem:[%s746] sm:$0xff]
      %s748 = scalar_lea.vmem %s176, 336
      %s749 = scalar_lea.vmem %s150, 10912
      %v750 = vld [vmem:[%s749] sm:$0xff]
      %s751 = scalar_lea.vmem %s176, 3408
      %s752 = scalar_lea.vmem %s150, 4768
      %v753 = vld [vmem:[%s752] sm:$0xff]
      %s754 = scalar_lea.vmem %s176, 6480
      %s755 = scalar_lea.vmem %s150, 15008
      %v756 = vld [vmem:[%s755] sm:$0xff]
      %s757 = scalar_lea.vmem %s176, 1360
      %s758 = scalar_lea.vmem %s150, 8864
      %v759 = vld [vmem:[%s758] sm:$0xff]
      %s760 = scalar_lea.vmem %s176, 4432
      %s761 = scalar_lea.vmem %s150, 2720
      %v762 = vld [vmem:[%s761] sm:$0xff]
      %s763 = scalar_lea.vmem %s176, 7504
      %s764 = scalar_lea.vmem %s150, 12960
      %v765 = vld [vmem:[%s764] sm:$0xff]
      %s766 = scalar_lea.vmem %s176, 2384
      %s767 = scalar_lea.vmem %s150, 6816
      %v768 = vld [vmem:[%s767] sm:$0xff]
      %s769 = scalar_lea.vmem %s176, 5456
      %s770 = scalar_lea.vmem %s150, 672
      %v771 = vld [vmem:[%s770] sm:$0xff]
      %s772 = scalar_lea.vmem %s176, 8528
      %s773 = scalar_lea.vmem %s150, 17088
      %v774 = vld [vmem:[%s773] sm:$0xff]
      %s775 = scalar_lea.vmem %s176, 352
      %s776 = scalar_lea.vmem %s150, 10944
      %v777 = vld [vmem:[%s776] sm:$0xff]
      %s778 = scalar_lea.vmem %s176, 3424
      %s779 = scalar_lea.vmem %s150, 4800
      %v780 = vld [vmem:[%s779] sm:$0xff]
      %s781 = scalar_lea.vmem %s176, 6496
      %s782 = scalar_lea.vmem %s150, 15040
      %v783 = vld [vmem:[%s782] sm:$0xff]
      %s784 = scalar_lea.vmem %s176, 1376
      %s785 = scalar_lea.vmem %s150, 8896
      %v786 = vld [vmem:[%s785] sm:$0xff]
      %s787 = scalar_lea.vmem %s176, 4448
      %s788 = scalar_lea.vmem %s150, 2752
      %v789 = vld [vmem:[%s788] sm:$0xff]
      %s790 = scalar_lea.vmem %s176, 7520
      %s791 = scalar_lea.vmem %s150, 12992
      %v792 = vld [vmem:[%s791] sm:$0xff]
      %s793 = scalar_lea.vmem %s176, 2400
      %s794 = scalar_lea.vmem %s150, 6848
      %v795 = vld [vmem:[%s794] sm:$0xff]
      %s796 = scalar_lea.vmem %s176, 5472
      %s797 = scalar_lea.vmem %s150, 704
      %v798 = vld [vmem:[%s797] sm:$0xff]
      %s799 = scalar_lea.vmem %s176, 8544
      %s800 = scalar_lea.vmem %s150, 17120
      %v801 = vld [vmem:[%s800] sm:$0xff]
      %s802 = scalar_lea.vmem %s176, 368
      %s803 = scalar_lea.vmem %s150, 10976
      %v804 = vld [vmem:[%s803] sm:$0xff]
      %s805 = scalar_lea.vmem %s176, 3440
      %s806 = scalar_lea.vmem %s150, 4832
      %v807 = vld [vmem:[%s806] sm:$0xff]
      %s808 = scalar_lea.vmem %s176, 6512
      %s809 = scalar_lea.vmem %s150, 15072
      %v810 = vld [vmem:[%s809] sm:$0xff]
      %s811 = scalar_lea.vmem %s176, 1392
      %s812 = scalar_lea.vmem %s150, 8928
      %v813 = vld [vmem:[%s812] sm:$0xff]
      %s814 = scalar_lea.vmem %s176, 4464
      %s815 = scalar_lea.vmem %s150, 2784
      %v816 = vld [vmem:[%s815] sm:$0xff]
      %s817 = scalar_lea.vmem %s176, 7536
      %s818 = scalar_lea.vmem %s150, 13024
      %v819 = vld [vmem:[%s818] sm:$0xff]
      %s820 = scalar_lea.vmem %s176, 2416
      %s821 = scalar_lea.vmem %s150, 6880
      %v822 = vld [vmem:[%s821] sm:$0xff]
      %s823 = scalar_lea.vmem %s176, 5488
      %s824 = scalar_lea.vmem %s150, 736
      %v825 = vld [vmem:[%s824] sm:$0xff]
      %s826 = scalar_lea.vmem %s176, 8560
      %s827 = scalar_lea.vmem %s150, 17152
      %v828 = vld [vmem:[%s827] sm:$0xff]
      %s829 = scalar_lea.vmem %s176, 384
      %s830 = scalar_lea.vmem %s150, 11008
      %v831 = vld [vmem:[%s830] sm:$0xff]
      %s832 = scalar_lea.vmem %s176, 3456
      %s833 = scalar_lea.vmem %s150, 4864
      %v834 = vld [vmem:[%s833] sm:$0xff]
      %s835 = scalar_lea.vmem %s176, 6528
      %s836 = scalar_lea.vmem %s150, 15104
      %v837 = vld [vmem:[%s836] sm:$0xff]
      %s838 = scalar_lea.vmem %s176, 1408
      %s839 = scalar_lea.vmem %s150, 8960
      %v840 = vld [vmem:[%s839] sm:$0xff]
      %s841 = scalar_lea.vmem %s176, 4480
      %s842 = scalar_lea.vmem %s150, 2816
      %v843 = vld [vmem:[%s842] sm:$0xff]
      %s844 = scalar_lea.vmem %s176, 7552
      %s845 = scalar_lea.vmem %s150, 13056
      %v846 = vld [vmem:[%s845] sm:$0xff]
      %s847 = scalar_lea.vmem %s176, 2432
      %s848 = scalar_lea.vmem %s150, 6912
      %v849 = vld [vmem:[%s848] sm:$0xff]
      %s850 = scalar_lea.vmem %s176, 5504
      %s851 = scalar_lea.vmem %s150, 768
      %v852 = vld [vmem:[%s851] sm:$0xff]
      %s853 = scalar_lea.vmem %s176, 8576
      %s854 = scalar_lea.vmem %s150, 17184
      %v855 = vld [vmem:[%s854] sm:$0xff]
      %s856 = scalar_lea.vmem %s176, 400
      %s857 = scalar_lea.vmem %s150, 11040
      %v858 = vld [vmem:[%s857] sm:$0xff]
      %s859 = scalar_lea.vmem %s176, 3472
      %s860 = scalar_lea.vmem %s150, 4896
      %v861 = vld [vmem:[%s860] sm:$0xff]
      %s862 = scalar_lea.vmem %s176, 6544
      %s863 = scalar_lea.vmem %s150, 15136
      %v864 = vld [vmem:[%s863] sm:$0xff]
      %s865 = scalar_lea.vmem %s176, 1424
      %s866 = scalar_lea.vmem %s150, 8992
      %v867 = vld [vmem:[%s866] sm:$0xff]
      %s868 = scalar_lea.vmem %s176, 4496
      %s869 = scalar_lea.vmem %s150, 2848
      %v870 = vld [vmem:[%s869] sm:$0xff]
      %s871 = scalar_lea.vmem %s176, 7568
      %s872 = scalar_lea.vmem %s150, 13088
      %v873 = vld [vmem:[%s872] sm:$0xff]
      %s874 = scalar_lea.vmem %s176, 2448
      %s875 = scalar_lea.vmem %s150, 6944
      %v876 = vld [vmem:[%s875] sm:$0xff]
      %s877 = scalar_lea.vmem %s176, 5520
      %s878 = scalar_lea.vmem %s150, 800
      %v879 = vld [vmem:[%s878] sm:$0xff]
      %s880 = scalar_lea.vmem %s176, 8592
      %s881 = scalar_lea.vmem %s150, 17216
      %v882 = vld [vmem:[%s881] sm:$0xff]
      %s883 = scalar_lea.vmem %s176, 416
      %s884 = scalar_lea.vmem %s150, 11072
      %v885 = vld [vmem:[%s884] sm:$0xff]
      %s886 = scalar_lea.vmem %s176, 3488
      %s887 = scalar_lea.vmem %s150, 4928
      %v888 = vld [vmem:[%s887] sm:$0xff]
      %s889 = scalar_lea.vmem %s176, 6560
      %s890 = scalar_lea.vmem %s150, 15168
      %v891 = vld [vmem:[%s890] sm:$0xff]
      %s892 = scalar_lea.vmem %s176, 1440
      %s893 = scalar_lea.vmem %s150, 9024
      %v894 = vld [vmem:[%s893] sm:$0xff]
      %s895 = scalar_lea.vmem %s176, 4512
      %s896 = scalar_lea.vmem %s150, 2880
      %v897 = vld [vmem:[%s896] sm:$0xff]
      %s898 = scalar_lea.vmem %s176, 7584
      %s899 = scalar_lea.vmem %s150, 13120
      %v900 = vld [vmem:[%s899] sm:$0xff]
      %s901 = scalar_lea.vmem %s176, 2464
      %s902 = scalar_lea.vmem %s150, 6976
      %v903 = vld [vmem:[%s902] sm:$0xff]
      %s904 = scalar_lea.vmem %s176, 5536
      %s905 = scalar_lea.vmem %s150, 832
      %v906 = vld [vmem:[%s905] sm:$0xff]
      %s907 = scalar_lea.vmem %s176, 8608
      %s908 = scalar_lea.vmem %s150, 17248
      %v909 = vld [vmem:[%s908] sm:$0xff]
      %s910 = scalar_lea.vmem %s176, 432
      %s911 = scalar_lea.vmem %s150, 11104
      %v912 = vld [vmem:[%s911] sm:$0xff]
      %s913 = scalar_lea.vmem %s176, 3504
      %s914 = scalar_lea.vmem %s150, 4960
      %v915 = vld [vmem:[%s914] sm:$0xff]
      %s916 = scalar_lea.vmem %s176, 6576
      %s917 = scalar_lea.vmem %s150, 15200
      %v918 = vld [vmem:[%s917] sm:$0xff]
      %s919 = scalar_lea.vmem %s176, 1456
      %s920 = scalar_lea.vmem %s150, 9056
      %v921 = vld [vmem:[%s920] sm:$0xff]
      %s922 = scalar_lea.vmem %s176, 4528
      %s923 = scalar_lea.vmem %s150, 2912
      %v924 = vld [vmem:[%s923] sm:$0xff]
      %s925 = scalar_lea.vmem %s176, 7600
      %s926 = scalar_lea.vmem %s150, 13152
      %v927 = vld [vmem:[%s926] sm:$0xff]
      %s928 = scalar_lea.vmem %s176, 2480
      %s929 = scalar_lea.vmem %s150, 7008
      %v930 = vld [vmem:[%s929] sm:$0xff]
      %s931 = scalar_lea.vmem %s176, 5552
      %s932 = scalar_lea.vmem %s150, 864
      %v933 = vld [vmem:[%s932] sm:$0xff]
      %s934 = scalar_lea.vmem %s176, 8624
      %s935 = scalar_lea.vmem %s150, 17280
      %v936 = vld [vmem:[%s935] sm:$0xff]
      %s937 = scalar_lea.vmem %s176, 448
      %s938 = scalar_lea.vmem %s150, 11136
      %v939 = vld [vmem:[%s938] sm:$0xff]
      %s940 = scalar_lea.vmem %s176, 3520
      %s941 = scalar_lea.vmem %s150, 4992
      %v942 = vld [vmem:[%s941] sm:$0xff]
      %s943 = scalar_lea.vmem %s176, 6592
      %s944 = scalar_lea.vmem %s150, 15232
      %v945 = vld [vmem:[%s944] sm:$0xff]
      %s946 = scalar_lea.vmem %s176, 1472
      %s947 = scalar_lea.vmem %s150, 9088
      %v948 = vld [vmem:[%s947] sm:$0xff]
      %s949 = scalar_lea.vmem %s176, 4544
      %s950 = scalar_lea.vmem %s150, 2944
      %v951 = vld [vmem:[%s950] sm:$0xff]
      %s952 = scalar_lea.vmem %s176, 7616
      %s953 = scalar_lea.vmem %s150, 13184
      %v954 = vld [vmem:[%s953] sm:$0xff]
      %s955 = scalar_lea.vmem %s176, 2496
      %s956 = scalar_lea.vmem %s150, 7040
      %v957 = vld [vmem:[%s956] sm:$0xff]
      %s958 = scalar_lea.vmem %s176, 5568
      %s959 = scalar_lea.vmem %s150, 896
      %v960 = vld [vmem:[%s959] sm:$0xff]
      %s961 = scalar_lea.vmem %s176, 8640
      %s962 = scalar_lea.vmem %s150, 17312
      %v963 = vld [vmem:[%s962] sm:$0xff]
      %s964 = scalar_lea.vmem %s176, 464
      %s965 = scalar_lea.vmem %s150, 11168
      %v966 = vld [vmem:[%s965] sm:$0xff]
      %s967 = scalar_lea.vmem %s176, 3536
      %s968 = scalar_lea.vmem %s150, 5024
      %v969 = vld [vmem:[%s968] sm:$0xff]
      %s970 = scalar_lea.vmem %s176, 6608
      %s971 = scalar_lea.vmem %s150, 15264
      %v972 = vld [vmem:[%s971] sm:$0xff]
      %s973 = scalar_lea.vmem %s176, 1488
      %s974 = scalar_lea.vmem %s150, 9120
      %v975 = vld [vmem:[%s974] sm:$0xff]
      %s976 = scalar_lea.vmem %s176, 4560
      %s977 = scalar_lea.vmem %s150, 2976
      %v978 = vld [vmem:[%s977] sm:$0xff]
      %s979 = scalar_lea.vmem %s176, 7632
      %s980 = scalar_lea.vmem %s150, 13216
      %v981 = vld [vmem:[%s980] sm:$0xff]
      %s982 = scalar_lea.vmem %s176, 2512
      %s983 = scalar_lea.vmem %s150, 7072
      %v984 = vld [vmem:[%s983] sm:$0xff]
      %s985 = scalar_lea.vmem %s176, 5584
      %s986 = scalar_lea.vmem %s150, 928
      %v987 = vld [vmem:[%s986] sm:$0xff]
      %s988 = scalar_lea.vmem %s176, 8656
      %s989 = scalar_lea.vmem %s150, 17344
      %v990 = vld [vmem:[%s989] sm:$0xff]
      %s991 = scalar_lea.vmem %s176, 480
      %s992 = scalar_lea.vmem %s150, 11200
      %v993 = vld [vmem:[%s992] sm:$0xff]
      %s994 = scalar_lea.vmem %s176, 3552
      %s995 = scalar_lea.vmem %s150, 5056
      %v996 = vld [vmem:[%s995] sm:$0xff]
      %s997 = scalar_lea.vmem %s176, 6624
      %s998 = scalar_lea.vmem %s150, 15296
      %v999 = vld [vmem:[%s998] sm:$0xff]
      %s1000 = scalar_lea.vmem %s176, 1504
      %s1001 = scalar_lea.vmem %s150, 9152
      %v1002 = vld [vmem:[%s1001] sm:$0xff]
      %s1003 = scalar_lea.vmem %s176, 4576
      %s1004 = scalar_lea.vmem %s150, 3008
      %v1005 = vld [vmem:[%s1004] sm:$0xff]
      %s1006 = scalar_lea.vmem %s176, 7648
      %s1007 = scalar_lea.vmem %s150, 13248
      %v1008 = vld [vmem:[%s1007] sm:$0xff]
      %s1009 = scalar_lea.vmem %s176, 2528
      %s1010 = scalar_lea.vmem %s150, 7104
      %v1011 = vld [vmem:[%s1010] sm:$0xff]
      %s1012 = scalar_lea.vmem %s176, 5600
      %s1013 = scalar_lea.vmem %s150, 960
      %v1014 = vld [vmem:[%s1013] sm:$0xff]
      %s1015 = scalar_lea.vmem %s176, 8672
      %s1016 = scalar_lea.vmem %s150, 17376
      %v1017 = vld [vmem:[%s1016] sm:$0xff]
      %s1018 = scalar_lea.vmem %s176, 496
      %s1019 = scalar_lea.vmem %s150, 11232
      %v1020 = vld [vmem:[%s1019] sm:$0xff]
      %s1021 = scalar_lea.vmem %s176, 3568
      %s1022 = scalar_lea.vmem %s150, 5088
      %v1023 = vld [vmem:[%s1022] sm:$0xff]
      %s1024 = scalar_lea.vmem %s176, 6640
      %s1025 = scalar_lea.vmem %s150, 15328
      %v1026 = vld [vmem:[%s1025] sm:$0xff]
      %s1027 = scalar_lea.vmem %s176, 1520
      %s1028 = scalar_lea.vmem %s150, 9184
      %v1029 = vld [vmem:[%s1028] sm:$0xff]
      %s1030 = scalar_lea.vmem %s176, 4592
      %s1031 = scalar_lea.vmem %s150, 3040
      %v1032 = vld [vmem:[%s1031] sm:$0xff]
      %s1033 = scalar_lea.vmem %s176, 7664
      %s1034 = scalar_lea.vmem %s150, 13280
      %v1035 = vld [vmem:[%s1034] sm:$0xff]
      %s1036 = scalar_lea.vmem %s176, 2544
      %s1037 = scalar_lea.vmem %s150, 7136
      %v1038 = vld [vmem:[%s1037] sm:$0xff]
      %s1039 = scalar_lea.vmem %s176, 5616
      %s1040 = scalar_lea.vmem %s150, 992
      %v1041 = vld [vmem:[%s1040] sm:$0xff]
      %s1042 = scalar_lea.vmem %s176, 8688
      %s1043 = scalar_lea.vmem %s150, 16392
      %v1044 = vld [vmem:[%s1043] sm:$0xff]
      %s1045 = scalar_lea.vmem %s176, 4
      %s1047 = ssub.s32 0, 4
      %s1048 = scalar_lea.vmem %s1045, %s1047
      %v1049 = vpack.c.bf16 %v1044, %v182
      %1050 = vst [vmem:[%s1048] sm:$0xff] %v1049
      %s1051 = scalar_lea.vmem %s150, 10248
      %v1052 = vld [vmem:[%s1051] sm:$0xff]
      %s1053 = scalar_lea.vmem %s176, 3076
      %s1055 = ssub.s32 0, 4
      %s1056 = scalar_lea.vmem %s1053, %s1055
      %v1057 = vpack.c.bf16 %v1052, %v184
      %1058 = vst [vmem:[%s1056] sm:$0xff] %v1057
      %s1059 = scalar_lea.vmem %s150, 4104
      %v1060 = vld [vmem:[%s1059] sm:$0xff]
      %s1061 = scalar_lea.vmem %s176, 6148
      %s1063 = ssub.s32 0, 4
      %s1064 = scalar_lea.vmem %s1061, %s1063
      %v1065 = vpack.c.bf16 %v1060, %v187
      %1066 = vst [vmem:[%s1064] sm:$0xff] %v1065
      %s1067 = scalar_lea.vmem %s150, 14344
      %v1068 = vld [vmem:[%s1067] sm:$0xff]
      %s1069 = scalar_lea.vmem %s176, 1028
      %s1071 = ssub.s32 0, 4
      %s1072 = scalar_lea.vmem %s1069, %s1071
      %v1073 = vpack.c.bf16 %v1068, %v190
      %1074 = vst [vmem:[%s1072] sm:$0xff] %v1073
      %s1075 = scalar_lea.vmem %s150, 8200
      %v1076 = vld [vmem:[%s1075] sm:$0xff]
      %s1077 = scalar_lea.vmem %s176, 4100
      %s1079 = ssub.s32 0, 4
      %s1080 = scalar_lea.vmem %s1077, %s1079
      %v1081 = vpack.c.bf16 %v1076, %v193
      %1082 = vst [vmem:[%s1080] sm:$0xff] %v1081
      %s1083 = scalar_lea.vmem %s150, 2056
      %v1084 = vld [vmem:[%s1083] sm:$0xff]
      %s1085 = scalar_lea.vmem %s176, 7172
      %s1087 = ssub.s32 0, 4
      %s1088 = scalar_lea.vmem %s1085, %s1087
      %v1089 = vpack.c.bf16 %v1084, %v196
      %1090 = vst [vmem:[%s1088] sm:$0xff] %v1089
      %s1091 = scalar_lea.vmem %s150, 12296
      %v1092 = vld [vmem:[%s1091] sm:$0xff]
      %s1093 = scalar_lea.vmem %s176, 2052
      %s1095 = ssub.s32 0, 4
      %s1096 = scalar_lea.vmem %s1093, %s1095
      %v1097 = vpack.c.bf16 %v1092, %v199
      %1098 = vst [vmem:[%s1096] sm:$0xff] %v1097
      %s1099 = scalar_lea.vmem %s150, 6152
      %v1100 = vld [vmem:[%s1099] sm:$0xff]
      %s1101 = scalar_lea.vmem %s176, 5124
      %s1103 = ssub.s32 0, 4
      %s1104 = scalar_lea.vmem %s1101, %s1103
      %v1105 = vpack.c.bf16 %v1100, %v202
      %1106 = vst [vmem:[%s1104] sm:$0xff] %v1105
      %s1107 = scalar_lea.vmem %s150, 8
      %v1108 = vld [vmem:[%s1107] sm:$0xff]
      %s1109 = scalar_lea.vmem %s176, 8196
      %s1111 = ssub.s32 0, 4
      %s1112 = scalar_lea.vmem %s1109, %s1111
      %v1113 = vpack.c.bf16 %v1108, %v204
      %1114 = vst [vmem:[%s1112] sm:$0xff] %v1113
      %s1115 = scalar_lea.vmem %s150, 16424
      %v1116 = vld [vmem:[%s1115] sm:$0xff]
      %s1117 = scalar_lea.vmem %s176, 20
      %s1119 = ssub.s32 0, 4
      %s1120 = scalar_lea.vmem %s1117, %s1119
      %v1121 = vpack.c.bf16 %v1116, %v207
      %1122 = vst [vmem:[%s1120] sm:$0xff] %v1121
      %s1123 = scalar_lea.vmem %s150, 10280
      %v1124 = vld [vmem:[%s1123] sm:$0xff]
      %s1125 = scalar_lea.vmem %s176, 3092
      %s1127 = ssub.s32 0, 4
      %s1128 = scalar_lea.vmem %s1125, %s1127
      %v1129 = vpack.c.bf16 %v1124, %v210
      %1130 = vst [vmem:[%s1128] sm:$0xff] %v1129
      %s1131 = scalar_lea.vmem %s150, 4136
      %v1132 = vld [vmem:[%s1131] sm:$0xff]
      %s1133 = scalar_lea.vmem %s176, 6164
      %s1135 = ssub.s32 0, 4
      %s1136 = scalar_lea.vmem %s1133, %s1135
      %v1137 = vpack.c.bf16 %v1132, %v213
      %1138 = vst [vmem:[%s1136] sm:$0xff] %v1137
      %s1139 = scalar_lea.vmem %s150, 14376
      %v1140 = vld [vmem:[%s1139] sm:$0xff]
      %s1141 = scalar_lea.vmem %s176, 1044
      %s1143 = ssub.s32 0, 4
      %s1144 = scalar_lea.vmem %s1141, %s1143
      %v1145 = vpack.c.bf16 %v1140, %v216
      %1146 = vst [vmem:[%s1144] sm:$0xff] %v1145
      %s1147 = scalar_lea.vmem %s150, 8232
      %v1148 = vld [vmem:[%s1147] sm:$0xff]
      %s1149 = scalar_lea.vmem %s176, 4116
      %s1151 = ssub.s32 0, 4
      %s1152 = scalar_lea.vmem %s1149, %s1151
      %v1153 = vpack.c.bf16 %v1148, %v219
      %1154 = vst [vmem:[%s1152] sm:$0xff] %v1153
      %s1155 = scalar_lea.vmem %s150, 2088
      %v1156 = vld [vmem:[%s1155] sm:$0xff]
      %s1157 = scalar_lea.vmem %s176, 7188
      %s1159 = ssub.s32 0, 4
      %s1160 = scalar_lea.vmem %s1157, %s1159
      %v1161 = vpack.c.bf16 %v1156, %v222
      %1162 = vst [vmem:[%s1160] sm:$0xff] %v1161
      %s1163 = scalar_lea.vmem %s150, 12328
      %v1164 = vld [vmem:[%s1163] sm:$0xff]
      %s1165 = scalar_lea.vmem %s176, 2068
      %s1167 = ssub.s32 0, 4
      %s1168 = scalar_lea.vmem %s1165, %s1167
      %v1169 = vpack.c.bf16 %v1164, %v225
      %1170 = vst [vmem:[%s1168] sm:$0xff] %v1169
      %s1171 = scalar_lea.vmem %s150, 6184
      %v1172 = vld [vmem:[%s1171] sm:$0xff]
      %s1173 = scalar_lea.vmem %s176, 5140
      %s1175 = ssub.s32 0, 4
      %s1176 = scalar_lea.vmem %s1173, %s1175
      %v1177 = vpack.c.bf16 %v1172, %v228
      %1178 = vst [vmem:[%s1176] sm:$0xff] %v1177
      %s1179 = scalar_lea.vmem %s150, 40
      %v1180 = vld [vmem:[%s1179] sm:$0xff]
      %s1181 = scalar_lea.vmem %s176, 8212
      %s1183 = ssub.s32 0, 4
      %s1184 = scalar_lea.vmem %s1181, %s1183
      %v1185 = vpack.c.bf16 %v1180, %v231
      %1186 = vst [vmem:[%s1184] sm:$0xff] %v1185
      %s1187 = scalar_lea.vmem %s150, 16456
      %v1188 = vld [vmem:[%s1187] sm:$0xff]
      %s1189 = scalar_lea.vmem %s176, 36
      %s1191 = ssub.s32 0, 4
      %s1192 = scalar_lea.vmem %s1189, %s1191
      %v1193 = vpack.c.bf16 %v1188, %v234
      %1194 = vst [vmem:[%s1192] sm:$0xff] %v1193
      %s1195 = scalar_lea.vmem %s150, 10312
      %v1196 = vld [vmem:[%s1195] sm:$0xff]
      %s1197 = scalar_lea.vmem %s176, 3108
      %s1199 = ssub.s32 0, 4
      %s1200 = scalar_lea.vmem %s1197, %s1199
      %v1201 = vpack.c.bf16 %v1196, %v237
      %1202 = vst [vmem:[%s1200] sm:$0xff] %v1201
      %s1203 = scalar_lea.vmem %s150, 4168
      %v1204 = vld [vmem:[%s1203] sm:$0xff]
      %s1205 = scalar_lea.vmem %s176, 6180
      %s1207 = ssub.s32 0, 4
      %s1208 = scalar_lea.vmem %s1205, %s1207
      %v1209 = vpack.c.bf16 %v1204, %v240
      %1210 = vst [vmem:[%s1208] sm:$0xff] %v1209
      %s1211 = scalar_lea.vmem %s150, 14408
      %v1212 = vld [vmem:[%s1211] sm:$0xff]
      %s1213 = scalar_lea.vmem %s176, 1060
      %s1215 = ssub.s32 0, 4
      %s1216 = scalar_lea.vmem %s1213, %s1215
      %v1217 = vpack.c.bf16 %v1212, %v243
      %1218 = vst [vmem:[%s1216] sm:$0xff] %v1217
      %s1219 = scalar_lea.vmem %s150, 8264
      %v1220 = vld [vmem:[%s1219] sm:$0xff]
      %s1221 = scalar_lea.vmem %s176, 4132
      %s1223 = ssub.s32 0, 4
      %s1224 = scalar_lea.vmem %s1221, %s1223
      %v1225 = vpack.c.bf16 %v1220, %v246
      %1226 = vst [vmem:[%s1224] sm:$0xff] %v1225
      %s1227 = scalar_lea.vmem %s150, 2120
      %v1228 = vld [vmem:[%s1227] sm:$0xff]
      %s1229 = scalar_lea.vmem %s176, 7204
      %s1231 = ssub.s32 0, 4
      %s1232 = scalar_lea.vmem %s1229, %s1231
      %v1233 = vpack.c.bf16 %v1228, %v249
      %1234 = vst [vmem:[%s1232] sm:$0xff] %v1233
      %s1235 = scalar_lea.vmem %s150, 12360
      %v1236 = vld [vmem:[%s1235] sm:$0xff]
      %s1237 = scalar_lea.vmem %s176, 2084
      %s1239 = ssub.s32 0, 4
      %s1240 = scalar_lea.vmem %s1237, %s1239
      %v1241 = vpack.c.bf16 %v1236, %v252
      %1242 = vst [vmem:[%s1240] sm:$0xff] %v1241
      %s1243 = scalar_lea.vmem %s150, 6216
      %v1244 = vld [vmem:[%s1243] sm:$0xff]
      %s1245 = scalar_lea.vmem %s176, 5156
      %s1247 = ssub.s32 0, 4
      %s1248 = scalar_lea.vmem %s1245, %s1247
      %v1249 = vpack.c.bf16 %v1244, %v255
      %1250 = vst [vmem:[%s1248] sm:$0xff] %v1249
      %s1251 = scalar_lea.vmem %s150, 72
      %v1252 = vld [vmem:[%s1251] sm:$0xff]
      %s1253 = scalar_lea.vmem %s176, 8228
      %s1255 = ssub.s32 0, 4
      %s1256 = scalar_lea.vmem %s1253, %s1255
      %v1257 = vpack.c.bf16 %v1252, %v258
      %1258 = vst [vmem:[%s1256] sm:$0xff] %v1257
      %s1259 = scalar_lea.vmem %s150, 16488
      %v1260 = vld [vmem:[%s1259] sm:$0xff]
      %s1261 = scalar_lea.vmem %s176, 52
      %s1263 = ssub.s32 0, 4
      %s1264 = scalar_lea.vmem %s1261, %s1263
      %v1265 = vpack.c.bf16 %v1260, %v261
      %1266 = vst [vmem:[%s1264] sm:$0xff] %v1265
      %s1267 = scalar_lea.vmem %s150, 10344
      %v1268 = vld [vmem:[%s1267] sm:$0xff]
      %s1269 = scalar_lea.vmem %s176, 3124
      %s1271 = ssub.s32 0, 4
      %s1272 = scalar_lea.vmem %s1269, %s1271
      %v1273 = vpack.c.bf16 %v1268, %v264
      %1274 = vst [vmem:[%s1272] sm:$0xff] %v1273
      %s1275 = scalar_lea.vmem %s150, 4200
      %v1276 = vld [vmem:[%s1275] sm:$0xff]
      %s1277 = scalar_lea.vmem %s176, 6196
      %s1279 = ssub.s32 0, 4
      %s1280 = scalar_lea.vmem %s1277, %s1279
      %v1281 = vpack.c.bf16 %v1276, %v267
      %1282 = vst [vmem:[%s1280] sm:$0xff] %v1281
      %s1283 = scalar_lea.vmem %s150, 14440
      %v1284 = vld [vmem:[%s1283] sm:$0xff]
      %s1285 = scalar_lea.vmem %s176, 1076
      %s1287 = ssub.s32 0, 4
      %s1288 = scalar_lea.vmem %s1285, %s1287
      %v1289 = vpack.c.bf16 %v1284, %v270
      %1290 = vst [vmem:[%s1288] sm:$0xff] %v1289
      %s1291 = scalar_lea.vmem %s150, 8296
      %v1292 = vld [vmem:[%s1291] sm:$0xff]
      %s1293 = scalar_lea.vmem %s176, 4148
      %s1295 = ssub.s32 0, 4
      %s1296 = scalar_lea.vmem %s1293, %s1295
      %v1297 = vpack.c.bf16 %v1292, %v273
      %1298 = vst [vmem:[%s1296] sm:$0xff] %v1297
      %s1299 = scalar_lea.vmem %s150, 2152
      %v1300 = vld [vmem:[%s1299] sm:$0xff]
      %s1301 = scalar_lea.vmem %s176, 7220
      %s1303 = ssub.s32 0, 4
      %s1304 = scalar_lea.vmem %s1301, %s1303
      %v1305 = vpack.c.bf16 %v1300, %v276
      %1306 = vst [vmem:[%s1304] sm:$0xff] %v1305
      %s1307 = scalar_lea.vmem %s150, 12392
      %v1308 = vld [vmem:[%s1307] sm:$0xff]
      %s1309 = scalar_lea.vmem %s176, 2100
      %s1311 = ssub.s32 0, 4
      %s1312 = scalar_lea.vmem %s1309, %s1311
      %v1313 = vpack.c.bf16 %v1308, %v279
      %1314 = vst [vmem:[%s1312] sm:$0xff] %v1313
      %s1315 = scalar_lea.vmem %s150, 6248
      %v1316 = vld [vmem:[%s1315] sm:$0xff]
      %s1317 = scalar_lea.vmem %s176, 5172
      %s1319 = ssub.s32 0, 4
      %s1320 = scalar_lea.vmem %s1317, %s1319
      %v1321 = vpack.c.bf16 %v1316, %v282
      %1322 = vst [vmem:[%s1320] sm:$0xff] %v1321
      %s1323 = scalar_lea.vmem %s150, 104
      %v1324 = vld [vmem:[%s1323] sm:$0xff]
      %s1325 = scalar_lea.vmem %s176, 8244
      %s1327 = ssub.s32 0, 4
      %s1328 = scalar_lea.vmem %s1325, %s1327
      %v1329 = vpack.c.bf16 %v1324, %v285
      %1330 = vst [vmem:[%s1328] sm:$0xff] %v1329
      %s1331 = scalar_lea.vmem %s150, 16520
      %v1332 = vld [vmem:[%s1331] sm:$0xff]
      %s1333 = scalar_lea.vmem %s176, 68
      %s1335 = ssub.s32 0, 4
      %s1336 = scalar_lea.vmem %s1333, %s1335
      %v1337 = vpack.c.bf16 %v1332, %v288
      %1338 = vst [vmem:[%s1336] sm:$0xff] %v1337
      %s1339 = scalar_lea.vmem %s150, 10376
      %v1340 = vld [vmem:[%s1339] sm:$0xff]
      %s1341 = scalar_lea.vmem %s176, 3140
      %s1343 = ssub.s32 0, 4
      %s1344 = scalar_lea.vmem %s1341, %s1343
      %v1345 = vpack.c.bf16 %v1340, %v291
      %1346 = vst [vmem:[%s1344] sm:$0xff] %v1345
      %s1347 = scalar_lea.vmem %s150, 4232
      %v1348 = vld [vmem:[%s1347] sm:$0xff]
      %s1349 = scalar_lea.vmem %s176, 6212
      %s1351 = ssub.s32 0, 4
      %s1352 = scalar_lea.vmem %s1349, %s1351
      %v1353 = vpack.c.bf16 %v1348, %v294
      %1354 = vst [vmem:[%s1352] sm:$0xff] %v1353
      %s1355 = scalar_lea.vmem %s150, 14472
      %v1356 = vld [vmem:[%s1355] sm:$0xff]
      %s1357 = scalar_lea.vmem %s176, 1092
      %s1359 = ssub.s32 0, 4
      %s1360 = scalar_lea.vmem %s1357, %s1359
      %v1361 = vpack.c.bf16 %v1356, %v297
      %1362 = vst [vmem:[%s1360] sm:$0xff] %v1361
      %s1363 = scalar_lea.vmem %s150, 8328
      %v1364 = vld [vmem:[%s1363] sm:$0xff]
      %s1365 = scalar_lea.vmem %s176, 4164
      %s1367 = ssub.s32 0, 4
      %s1368 = scalar_lea.vmem %s1365, %s1367
      %v1369 = vpack.c.bf16 %v1364, %v300
      %1370 = vst [vmem:[%s1368] sm:$0xff] %v1369
      %s1371 = scalar_lea.vmem %s150, 2184
      %v1372 = vld [vmem:[%s1371] sm:$0xff]
      %s1373 = scalar_lea.vmem %s176, 7236
      %s1375 = ssub.s32 0, 4
      %s1376 = scalar_lea.vmem %s1373, %s1375
      %v1377 = vpack.c.bf16 %v1372, %v303
      %1378 = vst [vmem:[%s1376] sm:$0xff] %v1377
      %s1379 = scalar_lea.vmem %s150, 12424
      %v1380 = vld [vmem:[%s1379] sm:$0xff]
      %s1381 = scalar_lea.vmem %s176, 2116
      %s1383 = ssub.s32 0, 4
      %s1384 = scalar_lea.vmem %s1381, %s1383
      %v1385 = vpack.c.bf16 %v1380, %v306
      %1386 = vst [vmem:[%s1384] sm:$0xff] %v1385
      %s1387 = scalar_lea.vmem %s150, 6280
      %v1388 = vld [vmem:[%s1387] sm:$0xff]
      %s1389 = scalar_lea.vmem %s176, 5188
      %s1391 = ssub.s32 0, 4
      %s1392 = scalar_lea.vmem %s1389, %s1391
      %v1393 = vpack.c.bf16 %v1388, %v309
      %1394 = vst [vmem:[%s1392] sm:$0xff] %v1393
      %s1395 = scalar_lea.vmem %s150, 136
      %v1396 = vld [vmem:[%s1395] sm:$0xff]
      %s1397 = scalar_lea.vmem %s176, 8260
      %s1399 = ssub.s32 0, 4
      %s1400 = scalar_lea.vmem %s1397, %s1399
      %v1401 = vpack.c.bf16 %v1396, %v312
      %1402 = vst [vmem:[%s1400] sm:$0xff] %v1401
      %s1403 = scalar_lea.vmem %s150, 16552
      %v1404 = vld [vmem:[%s1403] sm:$0xff]
      %s1405 = scalar_lea.vmem %s176, 84
      %s1407 = ssub.s32 0, 4
      %s1408 = scalar_lea.vmem %s1405, %s1407
      %v1409 = vpack.c.bf16 %v1404, %v315
      %1410 = vst [vmem:[%s1408] sm:$0xff] %v1409
      %s1411 = scalar_lea.vmem %s150, 10408
      %v1412 = vld [vmem:[%s1411] sm:$0xff]
      %s1413 = scalar_lea.vmem %s176, 3156
      %s1415 = ssub.s32 0, 4
      %s1416 = scalar_lea.vmem %s1413, %s1415
      %v1417 = vpack.c.bf16 %v1412, %v318
      %1418 = vst [vmem:[%s1416] sm:$0xff] %v1417
      %s1419 = scalar_lea.vmem %s150, 4264
      %v1420 = vld [vmem:[%s1419] sm:$0xff]
      %s1421 = scalar_lea.vmem %s176, 6228
      %s1423 = ssub.s32 0, 4
      %s1424 = scalar_lea.vmem %s1421, %s1423
      %v1425 = vpack.c.bf16 %v1420, %v321
      %1426 = vst [vmem:[%s1424] sm:$0xff] %v1425
      %s1427 = scalar_lea.vmem %s150, 14504
      %v1428 = vld [vmem:[%s1427] sm:$0xff]
      %s1429 = scalar_lea.vmem %s176, 1108
      %s1431 = ssub.s32 0, 4
      %s1432 = scalar_lea.vmem %s1429, %s1431
      %v1433 = vpack.c.bf16 %v1428, %v324
      %1434 = vst [vmem:[%s1432] sm:$0xff] %v1433
      %s1435 = scalar_lea.vmem %s150, 8360
      %v1436 = vld [vmem:[%s1435] sm:$0xff]
      %s1437 = scalar_lea.vmem %s176, 4180
      %s1439 = ssub.s32 0, 4
      %s1440 = scalar_lea.vmem %s1437, %s1439
      %v1441 = vpack.c.bf16 %v1436, %v327
      %1442 = vst [vmem:[%s1440] sm:$0xff] %v1441
      %s1443 = scalar_lea.vmem %s150, 2216
      %v1444 = vld [vmem:[%s1443] sm:$0xff]
      %s1445 = scalar_lea.vmem %s176, 7252
      %s1447 = ssub.s32 0, 4
      %s1448 = scalar_lea.vmem %s1445, %s1447
      %v1449 = vpack.c.bf16 %v1444, %v330
      %1450 = vst [vmem:[%s1448] sm:$0xff] %v1449
      %s1451 = scalar_lea.vmem %s150, 12456
      %v1452 = vld [vmem:[%s1451] sm:$0xff]
      %s1453 = scalar_lea.vmem %s176, 2132
      %s1455 = ssub.s32 0, 4
      %s1456 = scalar_lea.vmem %s1453, %s1455
      %v1457 = vpack.c.bf16 %v1452, %v333
      %1458 = vst [vmem:[%s1456] sm:$0xff] %v1457
      %s1459 = scalar_lea.vmem %s150, 6312
      %v1460 = vld [vmem:[%s1459] sm:$0xff]
      %s1461 = scalar_lea.vmem %s176, 5204
      %s1463 = ssub.s32 0, 4
      %s1464 = scalar_lea.vmem %s1461, %s1463
      %v1465 = vpack.c.bf16 %v1460, %v336
      %1466 = vst [vmem:[%s1464] sm:$0xff] %v1465
      %s1467 = scalar_lea.vmem %s150, 168
      %v1468 = vld [vmem:[%s1467] sm:$0xff]
      %s1469 = scalar_lea.vmem %s176, 8276
      %s1471 = ssub.s32 0, 4
      %s1472 = scalar_lea.vmem %s1469, %s1471
      %v1473 = vpack.c.bf16 %v1468, %v339
      %1474 = vst [vmem:[%s1472] sm:$0xff] %v1473
      %s1475 = scalar_lea.vmem %s150, 16584
      %v1476 = vld [vmem:[%s1475] sm:$0xff]
      %s1477 = scalar_lea.vmem %s176, 100
      %s1479 = ssub.s32 0, 4
      %s1480 = scalar_lea.vmem %s1477, %s1479
      %v1481 = vpack.c.bf16 %v1476, %v342
      %1482 = vst [vmem:[%s1480] sm:$0xff] %v1481
      %s1483 = scalar_lea.vmem %s150, 10440
      %v1484 = vld [vmem:[%s1483] sm:$0xff]
      %s1485 = scalar_lea.vmem %s176, 3172
      %s1487 = ssub.s32 0, 4
      %s1488 = scalar_lea.vmem %s1485, %s1487
      %v1489 = vpack.c.bf16 %v1484, %v345
      %1490 = vst [vmem:[%s1488] sm:$0xff] %v1489
      %s1491 = scalar_lea.vmem %s150, 4296
      %v1492 = vld [vmem:[%s1491] sm:$0xff]
      %s1493 = scalar_lea.vmem %s176, 6244
      %s1495 = ssub.s32 0, 4
      %s1496 = scalar_lea.vmem %s1493, %s1495
      %v1497 = vpack.c.bf16 %v1492, %v348
      %1498 = vst [vmem:[%s1496] sm:$0xff] %v1497
      %s1499 = scalar_lea.vmem %s150, 14536
      %v1500 = vld [vmem:[%s1499] sm:$0xff]
      %s1501 = scalar_lea.vmem %s176, 1124
      %s1503 = ssub.s32 0, 4
      %s1504 = scalar_lea.vmem %s1501, %s1503
      %v1505 = vpack.c.bf16 %v1500, %v351
      %1506 = vst [vmem:[%s1504] sm:$0xff] %v1505
      %s1507 = scalar_lea.vmem %s150, 8392
      %v1508 = vld [vmem:[%s1507] sm:$0xff]
      %s1509 = scalar_lea.vmem %s176, 4196
      %s1511 = ssub.s32 0, 4
      %s1512 = scalar_lea.vmem %s1509, %s1511
      %v1513 = vpack.c.bf16 %v1508, %v354
      %1514 = vst [vmem:[%s1512] sm:$0xff] %v1513
      %s1515 = scalar_lea.vmem %s150, 2248
      %v1516 = vld [vmem:[%s1515] sm:$0xff]
      %s1517 = scalar_lea.vmem %s176, 7268
      %s1519 = ssub.s32 0, 4
      %s1520 = scalar_lea.vmem %s1517, %s1519
      %v1521 = vpack.c.bf16 %v1516, %v357
      %1522 = vst [vmem:[%s1520] sm:$0xff] %v1521
      %s1523 = scalar_lea.vmem %s150, 12488
      %v1524 = vld [vmem:[%s1523] sm:$0xff]
      %s1525 = scalar_lea.vmem %s176, 2148
      %s1527 = ssub.s32 0, 4
      %s1528 = scalar_lea.vmem %s1525, %s1527
      %v1529 = vpack.c.bf16 %v1524, %v360
      %1530 = vst [vmem:[%s1528] sm:$0xff] %v1529
      %s1531 = scalar_lea.vmem %s150, 6344
      %v1532 = vld [vmem:[%s1531] sm:$0xff]
      %s1533 = scalar_lea.vmem %s176, 5220
      %s1535 = ssub.s32 0, 4
      %s1536 = scalar_lea.vmem %s1533, %s1535
      %v1537 = vpack.c.bf16 %v1532, %v363
      %1538 = vst [vmem:[%s1536] sm:$0xff] %v1537
      %s1539 = scalar_lea.vmem %s150, 200
      %v1540 = vld [vmem:[%s1539] sm:$0xff]
      %s1541 = scalar_lea.vmem %s176, 8292
      %s1543 = ssub.s32 0, 4
      %s1544 = scalar_lea.vmem %s1541, %s1543
      %v1545 = vpack.c.bf16 %v1540, %v366
      %1546 = vst [vmem:[%s1544] sm:$0xff] %v1545
      %s1547 = scalar_lea.vmem %s150, 16616
      %v1548 = vld [vmem:[%s1547] sm:$0xff]
      %s1549 = scalar_lea.vmem %s176, 116
      %s1551 = ssub.s32 0, 4
      %s1552 = scalar_lea.vmem %s1549, %s1551
      %v1553 = vpack.c.bf16 %v1548, %v369
      %1554 = vst [vmem:[%s1552] sm:$0xff] %v1553
      %s1555 = scalar_lea.vmem %s150, 10472
      %v1556 = vld [vmem:[%s1555] sm:$0xff]
      %s1557 = scalar_lea.vmem %s176, 3188
      %s1559 = ssub.s32 0, 4
      %s1560 = scalar_lea.vmem %s1557, %s1559
      %v1561 = vpack.c.bf16 %v1556, %v372
      %1562 = vst [vmem:[%s1560] sm:$0xff] %v1561
      %s1563 = scalar_lea.vmem %s150, 4328
      %v1564 = vld [vmem:[%s1563] sm:$0xff]
      %s1565 = scalar_lea.vmem %s176, 6260
      %s1567 = ssub.s32 0, 4
      %s1568 = scalar_lea.vmem %s1565, %s1567
      %v1569 = vpack.c.bf16 %v1564, %v375
      %1570 = vst [vmem:[%s1568] sm:$0xff] %v1569
      %s1571 = scalar_lea.vmem %s150, 14568
      %v1572 = vld [vmem:[%s1571] sm:$0xff]
      %s1573 = scalar_lea.vmem %s176, 1140
      %s1575 = ssub.s32 0, 4
      %s1576 = scalar_lea.vmem %s1573, %s1575
      %v1577 = vpack.c.bf16 %v1572, %v378
      %1578 = vst [vmem:[%s1576] sm:$0xff] %v1577
      %s1579 = scalar_lea.vmem %s150, 8424
      %v1580 = vld [vmem:[%s1579] sm:$0xff]
      %s1581 = scalar_lea.vmem %s176, 4212
      %s1583 = ssub.s32 0, 4
      %s1584 = scalar_lea.vmem %s1581, %s1583
      %v1585 = vpack.c.bf16 %v1580, %v381
      %1586 = vst [vmem:[%s1584] sm:$0xff] %v1585
      %s1587 = scalar_lea.vmem %s150, 2280
      %v1588 = vld [vmem:[%s1587] sm:$0xff]
      %s1589 = scalar_lea.vmem %s176, 7284
      %s1591 = ssub.s32 0, 4
      %s1592 = scalar_lea.vmem %s1589, %s1591
      %v1593 = vpack.c.bf16 %v1588, %v384
      %1594 = vst [vmem:[%s1592] sm:$0xff] %v1593
      %s1595 = scalar_lea.vmem %s150, 12520
      %v1596 = vld [vmem:[%s1595] sm:$0xff]
      %s1597 = scalar_lea.vmem %s176, 2164
      %s1599 = ssub.s32 0, 4
      %s1600 = scalar_lea.vmem %s1597, %s1599
      %v1601 = vpack.c.bf16 %v1596, %v387
      %1602 = vst [vmem:[%s1600] sm:$0xff] %v1601
      %s1603 = scalar_lea.vmem %s150, 6376
      %v1604 = vld [vmem:[%s1603] sm:$0xff]
      %s1605 = scalar_lea.vmem %s176, 5236
      %s1607 = ssub.s32 0, 4
      %s1608 = scalar_lea.vmem %s1605, %s1607
      %v1609 = vpack.c.bf16 %v1604, %v390
      %1610 = vst [vmem:[%s1608] sm:$0xff] %v1609
      %s1611 = scalar_lea.vmem %s150, 232
      %v1612 = vld [vmem:[%s1611] sm:$0xff]
      %s1613 = scalar_lea.vmem %s176, 8308
      %s1615 = ssub.s32 0, 4
      %s1616 = scalar_lea.vmem %s1613, %s1615
      %v1617 = vpack.c.bf16 %v1612, %v393
      %1618 = vst [vmem:[%s1616] sm:$0xff] %v1617
      %s1619 = scalar_lea.vmem %s150, 16648
      %v1620 = vld [vmem:[%s1619] sm:$0xff]
      %s1621 = scalar_lea.vmem %s176, 132
      %s1623 = ssub.s32 0, 4
      %s1624 = scalar_lea.vmem %s1621, %s1623
      %v1625 = vpack.c.bf16 %v1620, %v396
      %1626 = vst [vmem:[%s1624] sm:$0xff] %v1625
      %s1627 = scalar_lea.vmem %s150, 10504
      %v1628 = vld [vmem:[%s1627] sm:$0xff]
      %s1629 = scalar_lea.vmem %s176, 3204
      %s1631 = ssub.s32 0, 4
      %s1632 = scalar_lea.vmem %s1629, %s1631
      %v1633 = vpack.c.bf16 %v1628, %v399
      %1634 = vst [vmem:[%s1632] sm:$0xff] %v1633
      %s1635 = scalar_lea.vmem %s150, 4360
      %v1636 = vld [vmem:[%s1635] sm:$0xff]
      %s1637 = scalar_lea.vmem %s176, 6276
      %s1639 = ssub.s32 0, 4
      %s1640 = scalar_lea.vmem %s1637, %s1639
      %v1641 = vpack.c.bf16 %v1636, %v402
      %1642 = vst [vmem:[%s1640] sm:$0xff] %v1641
      %s1643 = scalar_lea.vmem %s150, 14600
      %v1644 = vld [vmem:[%s1643] sm:$0xff]
      %s1645 = scalar_lea.vmem %s176, 1156
      %s1647 = ssub.s32 0, 4
      %s1648 = scalar_lea.vmem %s1645, %s1647
      %v1649 = vpack.c.bf16 %v1644, %v405
      %1650 = vst [vmem:[%s1648] sm:$0xff] %v1649
      %s1651 = scalar_lea.vmem %s150, 8456
      %v1652 = vld [vmem:[%s1651] sm:$0xff]
      %s1653 = scalar_lea.vmem %s176, 4228
      %s1655 = ssub.s32 0, 4
      %s1656 = scalar_lea.vmem %s1653, %s1655
      %v1657 = vpack.c.bf16 %v1652, %v408
      %1658 = vst [vmem:[%s1656] sm:$0xff] %v1657
      %s1659 = scalar_lea.vmem %s150, 2312
      %v1660 = vld [vmem:[%s1659] sm:$0xff]
      %s1661 = scalar_lea.vmem %s176, 7300
      %s1663 = ssub.s32 0, 4
      %s1664 = scalar_lea.vmem %s1661, %s1663
      %v1665 = vpack.c.bf16 %v1660, %v411
      %1666 = vst [vmem:[%s1664] sm:$0xff] %v1665
      %s1667 = scalar_lea.vmem %s150, 12552
      %v1668 = vld [vmem:[%s1667] sm:$0xff]
      %s1669 = scalar_lea.vmem %s176, 2180
      %s1671 = ssub.s32 0, 4
      %s1672 = scalar_lea.vmem %s1669, %s1671
      %v1673 = vpack.c.bf16 %v1668, %v414
      %1674 = vst [vmem:[%s1672] sm:$0xff] %v1673
      %s1675 = scalar_lea.vmem %s150, 6408
      %v1676 = vld [vmem:[%s1675] sm:$0xff]
      %s1677 = scalar_lea.vmem %s176, 5252
      %s1679 = ssub.s32 0, 4
      %s1680 = scalar_lea.vmem %s1677, %s1679
      %v1681 = vpack.c.bf16 %v1676, %v417
      %1682 = vst [vmem:[%s1680] sm:$0xff] %v1681
      %s1683 = scalar_lea.vmem %s150, 264
      %v1684 = vld [vmem:[%s1683] sm:$0xff]
      %s1685 = scalar_lea.vmem %s176, 8324
      %s1687 = ssub.s32 0, 4
      %s1688 = scalar_lea.vmem %s1685, %s1687
      %v1689 = vpack.c.bf16 %v1684, %v420
      %1690 = vst [vmem:[%s1688] sm:$0xff] %v1689
      %s1691 = scalar_lea.vmem %s150, 16680
      %v1692 = vld [vmem:[%s1691] sm:$0xff]
      %s1693 = scalar_lea.vmem %s176, 148
      %s1695 = ssub.s32 0, 4
      %s1696 = scalar_lea.vmem %s1693, %s1695
      %v1697 = vpack.c.bf16 %v1692, %v423
      %1698 = vst [vmem:[%s1696] sm:$0xff] %v1697
      %s1699 = scalar_lea.vmem %s150, 10536
      %v1700 = vld [vmem:[%s1699] sm:$0xff]
      %s1701 = scalar_lea.vmem %s176, 3220
      %s1703 = ssub.s32 0, 4
      %s1704 = scalar_lea.vmem %s1701, %s1703
      %v1705 = vpack.c.bf16 %v1700, %v426
      %1706 = vst [vmem:[%s1704] sm:$0xff] %v1705
      %s1707 = scalar_lea.vmem %s150, 4392
      %v1708 = vld [vmem:[%s1707] sm:$0xff]
      %s1709 = scalar_lea.vmem %s176, 6292
      %s1711 = ssub.s32 0, 4
      %s1712 = scalar_lea.vmem %s1709, %s1711
      %v1713 = vpack.c.bf16 %v1708, %v429
      %1714 = vst [vmem:[%s1712] sm:$0xff] %v1713
      %s1715 = scalar_lea.vmem %s150, 14632
      %v1716 = vld [vmem:[%s1715] sm:$0xff]
      %s1717 = scalar_lea.vmem %s176, 1172
      %s1719 = ssub.s32 0, 4
      %s1720 = scalar_lea.vmem %s1717, %s1719
      %v1721 = vpack.c.bf16 %v1716, %v432
      %1722 = vst [vmem:[%s1720] sm:$0xff] %v1721
      %s1723 = scalar_lea.vmem %s150, 8488
      %v1724 = vld [vmem:[%s1723] sm:$0xff]
      %s1725 = scalar_lea.vmem %s176, 4244
      %s1727 = ssub.s32 0, 4
      %s1728 = scalar_lea.vmem %s1725, %s1727
      %v1729 = vpack.c.bf16 %v1724, %v435
      %1730 = vst [vmem:[%s1728] sm:$0xff] %v1729
      %s1731 = scalar_lea.vmem %s150, 2344
      %v1732 = vld [vmem:[%s1731] sm:$0xff]
      %s1733 = scalar_lea.vmem %s176, 7316
      %s1735 = ssub.s32 0, 4
      %s1736 = scalar_lea.vmem %s1733, %s1735
      %v1737 = vpack.c.bf16 %v1732, %v438
      %1738 = vst [vmem:[%s1736] sm:$0xff] %v1737
      %s1739 = scalar_lea.vmem %s150, 12584
      %v1740 = vld [vmem:[%s1739] sm:$0xff]
      %s1741 = scalar_lea.vmem %s176, 2196
      %s1743 = ssub.s32 0, 4
      %s1744 = scalar_lea.vmem %s1741, %s1743
      %v1745 = vpack.c.bf16 %v1740, %v441
      %1746 = vst [vmem:[%s1744] sm:$0xff] %v1745
      %s1747 = scalar_lea.vmem %s150, 6440
      %v1748 = vld [vmem:[%s1747] sm:$0xff]
      %s1749 = scalar_lea.vmem %s176, 5268
      %s1751 = ssub.s32 0, 4
      %s1752 = scalar_lea.vmem %s1749, %s1751
      %v1753 = vpack.c.bf16 %v1748, %v444
      %1754 = vst [vmem:[%s1752] sm:$0xff] %v1753
      %s1755 = scalar_lea.vmem %s150, 296
      %v1756 = vld [vmem:[%s1755] sm:$0xff]
      %s1757 = scalar_lea.vmem %s176, 8340
      %s1759 = ssub.s32 0, 4
      %s1760 = scalar_lea.vmem %s1757, %s1759
      %v1761 = vpack.c.bf16 %v1756, %v447
      %1762 = vst [vmem:[%s1760] sm:$0xff] %v1761
      %s1763 = scalar_lea.vmem %s150, 16712
      %v1764 = vld [vmem:[%s1763] sm:$0xff]
      %s1765 = scalar_lea.vmem %s176, 164
      %s1767 = ssub.s32 0, 4
      %s1768 = scalar_lea.vmem %s1765, %s1767
      %v1769 = vpack.c.bf16 %v1764, %v450
      %1770 = vst [vmem:[%s1768] sm:$0xff] %v1769
      %s1771 = scalar_lea.vmem %s150, 10568
      %v1772 = vld [vmem:[%s1771] sm:$0xff]
      %s1773 = scalar_lea.vmem %s176, 3236
      %s1775 = ssub.s32 0, 4
      %s1776 = scalar_lea.vmem %s1773, %s1775
      %v1777 = vpack.c.bf16 %v1772, %v453
      %1778 = vst [vmem:[%s1776] sm:$0xff] %v1777
      %s1779 = scalar_lea.vmem %s150, 4424
      %v1780 = vld [vmem:[%s1779] sm:$0xff]
      %s1781 = scalar_lea.vmem %s176, 6308
      %s1783 = ssub.s32 0, 4
      %s1784 = scalar_lea.vmem %s1781, %s1783
      %v1785 = vpack.c.bf16 %v1780, %v456
      %1786 = vst [vmem:[%s1784] sm:$0xff] %v1785
      %s1787 = scalar_lea.vmem %s150, 14664
      %v1788 = vld [vmem:[%s1787] sm:$0xff]
      %s1789 = scalar_lea.vmem %s176, 1188
      %s1791 = ssub.s32 0, 4
      %s1792 = scalar_lea.vmem %s1789, %s1791
      %v1793 = vpack.c.bf16 %v1788, %v459
      %1794 = vst [vmem:[%s1792] sm:$0xff] %v1793
      %s1795 = scalar_lea.vmem %s150, 8520
      %v1796 = vld [vmem:[%s1795] sm:$0xff]
      %s1797 = scalar_lea.vmem %s176, 4260
      %s1799 = ssub.s32 0, 4
      %s1800 = scalar_lea.vmem %s1797, %s1799
      %v1801 = vpack.c.bf16 %v1796, %v462
      %1802 = vst [vmem:[%s1800] sm:$0xff] %v1801
      %s1803 = scalar_lea.vmem %s150, 2376
      %v1804 = vld [vmem:[%s1803] sm:$0xff]
      %s1805 = scalar_lea.vmem %s176, 7332
      %s1807 = ssub.s32 0, 4
      %s1808 = scalar_lea.vmem %s1805, %s1807
      %v1809 = vpack.c.bf16 %v1804, %v465
      %1810 = vst [vmem:[%s1808] sm:$0xff] %v1809
      %s1811 = scalar_lea.vmem %s150, 12616
      %v1812 = vld [vmem:[%s1811] sm:$0xff]
      %s1813 = scalar_lea.vmem %s176, 2212
      %s1815 = ssub.s32 0, 4
      %s1816 = scalar_lea.vmem %s1813, %s1815
      %v1817 = vpack.c.bf16 %v1812, %v468
      %1818 = vst [vmem:[%s1816] sm:$0xff] %v1817
      %s1819 = scalar_lea.vmem %s150, 6472
      %v1820 = vld [vmem:[%s1819] sm:$0xff]
      %s1821 = scalar_lea.vmem %s176, 5284
      %s1823 = ssub.s32 0, 4
      %s1824 = scalar_lea.vmem %s1821, %s1823
      %v1825 = vpack.c.bf16 %v1820, %v471
      %1826 = vst [vmem:[%s1824] sm:$0xff] %v1825
      %s1827 = scalar_lea.vmem %s150, 328
      %v1828 = vld [vmem:[%s1827] sm:$0xff]
      %s1829 = scalar_lea.vmem %s176, 8356
      %s1831 = ssub.s32 0, 4
      %s1832 = scalar_lea.vmem %s1829, %s1831
      %v1833 = vpack.c.bf16 %v1828, %v474
      %1834 = vst [vmem:[%s1832] sm:$0xff] %v1833
      %s1835 = scalar_lea.vmem %s150, 16744
      %v1836 = vld [vmem:[%s1835] sm:$0xff]
      %s1837 = scalar_lea.vmem %s176, 180
      %s1839 = ssub.s32 0, 4
      %s1840 = scalar_lea.vmem %s1837, %s1839
      %v1841 = vpack.c.bf16 %v1836, %v477
      %1842 = vst [vmem:[%s1840] sm:$0xff] %v1841
      %s1843 = scalar_lea.vmem %s150, 10600
      %v1844 = vld [vmem:[%s1843] sm:$0xff]
      %s1845 = scalar_lea.vmem %s176, 3252
      %s1847 = ssub.s32 0, 4
      %s1848 = scalar_lea.vmem %s1845, %s1847
      %v1849 = vpack.c.bf16 %v1844, %v480
      %1850 = vst [vmem:[%s1848] sm:$0xff] %v1849
      %s1851 = scalar_lea.vmem %s150, 4456
      %v1852 = vld [vmem:[%s1851] sm:$0xff]
      %s1853 = scalar_lea.vmem %s176, 6324
      %s1855 = ssub.s32 0, 4
      %s1856 = scalar_lea.vmem %s1853, %s1855
      %v1857 = vpack.c.bf16 %v1852, %v483
      %1858 = vst [vmem:[%s1856] sm:$0xff] %v1857
      %s1859 = scalar_lea.vmem %s150, 14696
      %v1860 = vld [vmem:[%s1859] sm:$0xff]
      %s1861 = scalar_lea.vmem %s176, 1204
      %s1863 = ssub.s32 0, 4
      %s1864 = scalar_lea.vmem %s1861, %s1863
      %v1865 = vpack.c.bf16 %v1860, %v486
      %1866 = vst [vmem:[%s1864] sm:$0xff] %v1865
      %s1867 = scalar_lea.vmem %s150, 8552
      %v1868 = vld [vmem:[%s1867] sm:$0xff]
      %s1869 = scalar_lea.vmem %s176, 4276
      %s1871 = ssub.s32 0, 4
      %s1872 = scalar_lea.vmem %s1869, %s1871
      %v1873 = vpack.c.bf16 %v1868, %v489
      %1874 = vst [vmem:[%s1872] sm:$0xff] %v1873
      %s1875 = scalar_lea.vmem %s150, 2408
      %v1876 = vld [vmem:[%s1875] sm:$0xff]
      %s1877 = scalar_lea.vmem %s176, 7348
      %s1879 = ssub.s32 0, 4
      %s1880 = scalar_lea.vmem %s1877, %s1879
      %v1881 = vpack.c.bf16 %v1876, %v492
      %1882 = vst [vmem:[%s1880] sm:$0xff] %v1881
      %s1883 = scalar_lea.vmem %s150, 12648
      %v1884 = vld [vmem:[%s1883] sm:$0xff]
      %s1885 = scalar_lea.vmem %s176, 2228
      %s1887 = ssub.s32 0, 4
      %s1888 = scalar_lea.vmem %s1885, %s1887
      %v1889 = vpack.c.bf16 %v1884, %v495
      %1890 = vst [vmem:[%s1888] sm:$0xff] %v1889
      %s1891 = scalar_lea.vmem %s150, 6504
      %v1892 = vld [vmem:[%s1891] sm:$0xff]
      %s1893 = scalar_lea.vmem %s176, 5300
      %s1895 = ssub.s32 0, 4
      %s1896 = scalar_lea.vmem %s1893, %s1895
      %v1897 = vpack.c.bf16 %v1892, %v498
      %1898 = vst [vmem:[%s1896] sm:$0xff] %v1897
      %s1899 = scalar_lea.vmem %s150, 360
      %v1900 = vld [vmem:[%s1899] sm:$0xff]
      %s1901 = scalar_lea.vmem %s176, 8372
      %s1903 = ssub.s32 0, 4
      %s1904 = scalar_lea.vmem %s1901, %s1903
      %v1905 = vpack.c.bf16 %v1900, %v501
      %1906 = vst [vmem:[%s1904] sm:$0xff] %v1905
      %s1907 = scalar_lea.vmem %s150, 16776
      %v1908 = vld [vmem:[%s1907] sm:$0xff]
      %s1909 = scalar_lea.vmem %s176, 196
      %s1911 = ssub.s32 0, 4
      %s1912 = scalar_lea.vmem %s1909, %s1911
      %v1913 = vpack.c.bf16 %v1908, %v504
      %1914 = vst [vmem:[%s1912] sm:$0xff] %v1913
      %s1915 = scalar_lea.vmem %s150, 10632
      %v1916 = vld [vmem:[%s1915] sm:$0xff]
      %s1917 = scalar_lea.vmem %s176, 3268
      %s1919 = ssub.s32 0, 4
      %s1920 = scalar_lea.vmem %s1917, %s1919
      %v1921 = vpack.c.bf16 %v1916, %v507
      %1922 = vst [vmem:[%s1920] sm:$0xff] %v1921
      %s1923 = scalar_lea.vmem %s150, 4488
      %v1924 = vld [vmem:[%s1923] sm:$0xff]
      %s1925 = scalar_lea.vmem %s176, 6340
      %s1927 = ssub.s32 0, 4
      %s1928 = scalar_lea.vmem %s1925, %s1927
      %v1929 = vpack.c.bf16 %v1924, %v510
      %1930 = vst [vmem:[%s1928] sm:$0xff] %v1929
      %s1931 = scalar_lea.vmem %s150, 14728
      %v1932 = vld [vmem:[%s1931] sm:$0xff]
      %s1933 = scalar_lea.vmem %s176, 1220
      %s1935 = ssub.s32 0, 4
      %s1936 = scalar_lea.vmem %s1933, %s1935
      %v1937 = vpack.c.bf16 %v1932, %v513
      %1938 = vst [vmem:[%s1936] sm:$0xff] %v1937
      %s1939 = scalar_lea.vmem %s150, 8584
      %v1940 = vld [vmem:[%s1939] sm:$0xff]
      %s1941 = scalar_lea.vmem %s176, 4292
      %s1943 = ssub.s32 0, 4
      %s1944 = scalar_lea.vmem %s1941, %s1943
      %v1945 = vpack.c.bf16 %v1940, %v516
      %1946 = vst [vmem:[%s1944] sm:$0xff] %v1945
      %s1947 = scalar_lea.vmem %s150, 2440
      %v1948 = vld [vmem:[%s1947] sm:$0xff]
      %s1949 = scalar_lea.vmem %s176, 7364
      %s1951 = ssub.s32 0, 4
      %s1952 = scalar_lea.vmem %s1949, %s1951
      %v1953 = vpack.c.bf16 %v1948, %v519
      %1954 = vst [vmem:[%s1952] sm:$0xff] %v1953
      %s1955 = scalar_lea.vmem %s150, 12680
      %v1956 = vld [vmem:[%s1955] sm:$0xff]
      %s1957 = scalar_lea.vmem %s176, 2244
      %s1959 = ssub.s32 0, 4
      %s1960 = scalar_lea.vmem %s1957, %s1959
      %v1961 = vpack.c.bf16 %v1956, %v522
      %1962 = vst [vmem:[%s1960] sm:$0xff] %v1961
      %s1963 = scalar_lea.vmem %s150, 6536
      %v1964 = vld [vmem:[%s1963] sm:$0xff]
      %s1965 = scalar_lea.vmem %s176, 5316
      %s1967 = ssub.s32 0, 4
      %s1968 = scalar_lea.vmem %s1965, %s1967
      %v1969 = vpack.c.bf16 %v1964, %v525
      %1970 = vst [vmem:[%s1968] sm:$0xff] %v1969
      %s1971 = scalar_lea.vmem %s150, 392
      %v1972 = vld [vmem:[%s1971] sm:$0xff]
      %s1973 = scalar_lea.vmem %s176, 8388
      %s1975 = ssub.s32 0, 4
      %s1976 = scalar_lea.vmem %s1973, %s1975
      %v1977 = vpack.c.bf16 %v1972, %v528
      %1978 = vst [vmem:[%s1976] sm:$0xff] %v1977
      %s1979 = scalar_lea.vmem %s150, 16808
      %v1980 = vld [vmem:[%s1979] sm:$0xff]
      %s1981 = scalar_lea.vmem %s176, 212
      %s1983 = ssub.s32 0, 4
      %s1984 = scalar_lea.vmem %s1981, %s1983
      %v1985 = vpack.c.bf16 %v1980, %v531
      %1986 = vst [vmem:[%s1984] sm:$0xff] %v1985
      %s1987 = scalar_lea.vmem %s150, 10664
      %v1988 = vld [vmem:[%s1987] sm:$0xff]
      %s1989 = scalar_lea.vmem %s176, 3284
      %s1991 = ssub.s32 0, 4
      %s1992 = scalar_lea.vmem %s1989, %s1991
      %v1993 = vpack.c.bf16 %v1988, %v534
      %1994 = vst [vmem:[%s1992] sm:$0xff] %v1993
      %s1995 = scalar_lea.vmem %s150, 4520
      %v1996 = vld [vmem:[%s1995] sm:$0xff]
      %s1997 = scalar_lea.vmem %s176, 6356
      %s1999 = ssub.s32 0, 4
      %s2000 = scalar_lea.vmem %s1997, %s1999
      %v2001 = vpack.c.bf16 %v1996, %v537
      %2002 = vst [vmem:[%s2000] sm:$0xff] %v2001
      %s2003 = scalar_lea.vmem %s150, 14760
      %v2004 = vld [vmem:[%s2003] sm:$0xff]
      %s2005 = scalar_lea.vmem %s176, 1236
      %s2007 = ssub.s32 0, 4
      %s2008 = scalar_lea.vmem %s2005, %s2007
      %v2009 = vpack.c.bf16 %v2004, %v540
      %2010 = vst [vmem:[%s2008] sm:$0xff] %v2009
      %s2011 = scalar_lea.vmem %s150, 8616
      %v2012 = vld [vmem:[%s2011] sm:$0xff]
      %s2013 = scalar_lea.vmem %s176, 4308
      %s2015 = ssub.s32 0, 4
      %s2016 = scalar_lea.vmem %s2013, %s2015
      %v2017 = vpack.c.bf16 %v2012, %v543
      %2018 = vst [vmem:[%s2016] sm:$0xff] %v2017
      %s2019 = scalar_lea.vmem %s150, 2472
      %v2020 = vld [vmem:[%s2019] sm:$0xff]
      %s2021 = scalar_lea.vmem %s176, 7380
      %s2023 = ssub.s32 0, 4
      %s2024 = scalar_lea.vmem %s2021, %s2023
      %v2025 = vpack.c.bf16 %v2020, %v546
      %2026 = vst [vmem:[%s2024] sm:$0xff] %v2025
      %s2027 = scalar_lea.vmem %s150, 12712
      %v2028 = vld [vmem:[%s2027] sm:$0xff]
      %s2029 = scalar_lea.vmem %s176, 2260
      %s2031 = ssub.s32 0, 4
      %s2032 = scalar_lea.vmem %s2029, %s2031
      %v2033 = vpack.c.bf16 %v2028, %v549
      %2034 = vst [vmem:[%s2032] sm:$0xff] %v2033
      %s2035 = scalar_lea.vmem %s150, 6568
      %v2036 = vld [vmem:[%s2035] sm:$0xff]
      %s2037 = scalar_lea.vmem %s176, 5332
      %s2039 = ssub.s32 0, 4
      %s2040 = scalar_lea.vmem %s2037, %s2039
      %v2041 = vpack.c.bf16 %v2036, %v552
      %2042 = vst [vmem:[%s2040] sm:$0xff] %v2041
      %s2043 = scalar_lea.vmem %s150, 424
      %v2044 = vld [vmem:[%s2043] sm:$0xff]
      %s2045 = scalar_lea.vmem %s176, 8404
      %s2047 = ssub.s32 0, 4
      %s2048 = scalar_lea.vmem %s2045, %s2047
      %v2049 = vpack.c.bf16 %v2044, %v555
      %2050 = vst [vmem:[%s2048] sm:$0xff] %v2049
      %s2051 = scalar_lea.vmem %s150, 16840
      %v2052 = vld [vmem:[%s2051] sm:$0xff]
      %s2053 = scalar_lea.vmem %s176, 228
      %s2055 = ssub.s32 0, 4
      %s2056 = scalar_lea.vmem %s2053, %s2055
      %v2057 = vpack.c.bf16 %v2052, %v558
      %2058 = vst [vmem:[%s2056] sm:$0xff] %v2057
      %s2059 = scalar_lea.vmem %s150, 10696
      %v2060 = vld [vmem:[%s2059] sm:$0xff]
      %s2061 = scalar_lea.vmem %s176, 3300
      %s2063 = ssub.s32 0, 4
      %s2064 = scalar_lea.vmem %s2061, %s2063
      %v2065 = vpack.c.bf16 %v2060, %v561
      %2066 = vst [vmem:[%s2064] sm:$0xff] %v2065
      %s2067 = scalar_lea.vmem %s150, 4552
      %v2068 = vld [vmem:[%s2067] sm:$0xff]
      %s2069 = scalar_lea.vmem %s176, 6372
      %s2071 = ssub.s32 0, 4
      %s2072 = scalar_lea.vmem %s2069, %s2071
      %v2073 = vpack.c.bf16 %v2068, %v564
      %2074 = vst [vmem:[%s2072] sm:$0xff] %v2073
      %s2075 = scalar_lea.vmem %s150, 14792
      %v2076 = vld [vmem:[%s2075] sm:$0xff]
      %s2077 = scalar_lea.vmem %s176, 1252
      %s2079 = ssub.s32 0, 4
      %s2080 = scalar_lea.vmem %s2077, %s2079
      %v2081 = vpack.c.bf16 %v2076, %v567
      %2082 = vst [vmem:[%s2080] sm:$0xff] %v2081
      %s2083 = scalar_lea.vmem %s150, 8648
      %v2084 = vld [vmem:[%s2083] sm:$0xff]
      %s2085 = scalar_lea.vmem %s176, 4324
      %s2087 = ssub.s32 0, 4
      %s2088 = scalar_lea.vmem %s2085, %s2087
      %v2089 = vpack.c.bf16 %v2084, %v570
      %2090 = vst [vmem:[%s2088] sm:$0xff] %v2089
      %s2091 = scalar_lea.vmem %s150, 2504
      %v2092 = vld [vmem:[%s2091] sm:$0xff]
      %s2093 = scalar_lea.vmem %s176, 7396
      %s2095 = ssub.s32 0, 4
      %s2096 = scalar_lea.vmem %s2093, %s2095
      %v2097 = vpack.c.bf16 %v2092, %v573
      %2098 = vst [vmem:[%s2096] sm:$0xff] %v2097
      %s2099 = scalar_lea.vmem %s150, 12744
      %v2100 = vld [vmem:[%s2099] sm:$0xff]
      %s2101 = scalar_lea.vmem %s176, 2276
      %s2103 = ssub.s32 0, 4
      %s2104 = scalar_lea.vmem %s2101, %s2103
      %v2105 = vpack.c.bf16 %v2100, %v576
      %2106 = vst [vmem:[%s2104] sm:$0xff] %v2105
      %s2107 = scalar_lea.vmem %s150, 6600
      %v2108 = vld [vmem:[%s2107] sm:$0xff]
      %s2109 = scalar_lea.vmem %s176, 5348
      %s2111 = ssub.s32 0, 4
      %s2112 = scalar_lea.vmem %s2109, %s2111
      %v2113 = vpack.c.bf16 %v2108, %v579
      %2114 = vst [vmem:[%s2112] sm:$0xff] %v2113
      %s2115 = scalar_lea.vmem %s150, 456
      %v2116 = vld [vmem:[%s2115] sm:$0xff]
      %s2117 = scalar_lea.vmem %s176, 8420
      %s2119 = ssub.s32 0, 4
      %s2120 = scalar_lea.vmem %s2117, %s2119
      %v2121 = vpack.c.bf16 %v2116, %v582
      %2122 = vst [vmem:[%s2120] sm:$0xff] %v2121
      %s2123 = scalar_lea.vmem %s150, 16872
      %v2124 = vld [vmem:[%s2123] sm:$0xff]
      %s2125 = scalar_lea.vmem %s176, 244
      %s2127 = ssub.s32 0, 4
      %s2128 = scalar_lea.vmem %s2125, %s2127
      %v2129 = vpack.c.bf16 %v2124, %v585
      %2130 = vst [vmem:[%s2128] sm:$0xff] %v2129
      %s2131 = scalar_lea.vmem %s150, 10728
      %v2132 = vld [vmem:[%s2131] sm:$0xff]
      %s2133 = scalar_lea.vmem %s176, 3316
      %s2135 = ssub.s32 0, 4
      %s2136 = scalar_lea.vmem %s2133, %s2135
      %v2137 = vpack.c.bf16 %v2132, %v588
      %2138 = vst [vmem:[%s2136] sm:$0xff] %v2137
      %s2139 = scalar_lea.vmem %s150, 4584
      %v2140 = vld [vmem:[%s2139] sm:$0xff]
      %s2141 = scalar_lea.vmem %s176, 6388
      %s2143 = ssub.s32 0, 4
      %s2144 = scalar_lea.vmem %s2141, %s2143
      %v2145 = vpack.c.bf16 %v2140, %v591
      %2146 = vst [vmem:[%s2144] sm:$0xff] %v2145
      %s2147 = scalar_lea.vmem %s150, 14824
      %v2148 = vld [vmem:[%s2147] sm:$0xff]
      %s2149 = scalar_lea.vmem %s176, 1268
      %s2151 = ssub.s32 0, 4
      %s2152 = scalar_lea.vmem %s2149, %s2151
      %v2153 = vpack.c.bf16 %v2148, %v594
      %2154 = vst [vmem:[%s2152] sm:$0xff] %v2153
      %s2155 = scalar_lea.vmem %s150, 8680
      %v2156 = vld [vmem:[%s2155] sm:$0xff]
      %s2157 = scalar_lea.vmem %s176, 4340
      %s2159 = ssub.s32 0, 4
      %s2160 = scalar_lea.vmem %s2157, %s2159
      %v2161 = vpack.c.bf16 %v2156, %v597
      %2162 = vst [vmem:[%s2160] sm:$0xff] %v2161
      %s2163 = scalar_lea.vmem %s150, 2536
      %v2164 = vld [vmem:[%s2163] sm:$0xff]
      %s2165 = scalar_lea.vmem %s176, 7412
      %s2167 = ssub.s32 0, 4
      %s2168 = scalar_lea.vmem %s2165, %s2167
      %v2169 = vpack.c.bf16 %v2164, %v600
      %2170 = vst [vmem:[%s2168] sm:$0xff] %v2169
      %s2171 = scalar_lea.vmem %s150, 12776
      %v2172 = vld [vmem:[%s2171] sm:$0xff]
      %s2173 = scalar_lea.vmem %s176, 2292
      %s2175 = ssub.s32 0, 4
      %s2176 = scalar_lea.vmem %s2173, %s2175
      %v2177 = vpack.c.bf16 %v2172, %v603
      %2178 = vst [vmem:[%s2176] sm:$0xff] %v2177
      %s2179 = scalar_lea.vmem %s150, 6632
      %v2180 = vld [vmem:[%s2179] sm:$0xff]
      %s2181 = scalar_lea.vmem %s176, 5364
      %s2183 = ssub.s32 0, 4
      %s2184 = scalar_lea.vmem %s2181, %s2183
      %v2185 = vpack.c.bf16 %v2180, %v606
      %2186 = vst [vmem:[%s2184] sm:$0xff] %v2185
      %s2187 = scalar_lea.vmem %s150, 488
      %v2188 = vld [vmem:[%s2187] sm:$0xff]
      %s2189 = scalar_lea.vmem %s176, 8436
      %s2191 = ssub.s32 0, 4
      %s2192 = scalar_lea.vmem %s2189, %s2191
      %v2193 = vpack.c.bf16 %v2188, %v609
      %2194 = vst [vmem:[%s2192] sm:$0xff] %v2193
      %s2195 = scalar_lea.vmem %s150, 16904
      %v2196 = vld [vmem:[%s2195] sm:$0xff]
      %s2197 = scalar_lea.vmem %s176, 260
      %s2199 = ssub.s32 0, 4
      %s2200 = scalar_lea.vmem %s2197, %s2199
      %v2201 = vpack.c.bf16 %v2196, %v612
      %2202 = vst [vmem:[%s2200] sm:$0xff] %v2201
      %s2203 = scalar_lea.vmem %s150, 10760
      %v2204 = vld [vmem:[%s2203] sm:$0xff]
      %s2205 = scalar_lea.vmem %s176, 3332
      %s2207 = ssub.s32 0, 4
      %s2208 = scalar_lea.vmem %s2205, %s2207
      %v2209 = vpack.c.bf16 %v2204, %v615
      %2210 = vst [vmem:[%s2208] sm:$0xff] %v2209
      %s2211 = scalar_lea.vmem %s150, 4616
      %v2212 = vld [vmem:[%s2211] sm:$0xff]
      %s2213 = scalar_lea.vmem %s176, 6404
      %s2215 = ssub.s32 0, 4
      %s2216 = scalar_lea.vmem %s2213, %s2215
      %v2217 = vpack.c.bf16 %v2212, %v618
      %2218 = vst [vmem:[%s2216] sm:$0xff] %v2217
      %s2219 = scalar_lea.vmem %s150, 14856
      %v2220 = vld [vmem:[%s2219] sm:$0xff]
      %s2221 = scalar_lea.vmem %s176, 1284
      %s2223 = ssub.s32 0, 4
      %s2224 = scalar_lea.vmem %s2221, %s2223
      %v2225 = vpack.c.bf16 %v2220, %v621
      %2226 = vst [vmem:[%s2224] sm:$0xff] %v2225
      %s2227 = scalar_lea.vmem %s150, 8712
      %v2228 = vld [vmem:[%s2227] sm:$0xff]
      %s2229 = scalar_lea.vmem %s176, 4356
      %s2231 = ssub.s32 0, 4
      %s2232 = scalar_lea.vmem %s2229, %s2231
      %v2233 = vpack.c.bf16 %v2228, %v624
      %2234 = vst [vmem:[%s2232] sm:$0xff] %v2233
      %s2235 = scalar_lea.vmem %s150, 2568
      %v2236 = vld [vmem:[%s2235] sm:$0xff]
      %s2237 = scalar_lea.vmem %s176, 7428
      %s2239 = ssub.s32 0, 4
      %s2240 = scalar_lea.vmem %s2237, %s2239
      %v2241 = vpack.c.bf16 %v2236, %v627
      %2242 = vst [vmem:[%s2240] sm:$0xff] %v2241
      %s2243 = scalar_lea.vmem %s150, 12808
      %v2244 = vld [vmem:[%s2243] sm:$0xff]
      %s2245 = scalar_lea.vmem %s176, 2308
      %s2247 = ssub.s32 0, 4
      %s2248 = scalar_lea.vmem %s2245, %s2247
      %v2249 = vpack.c.bf16 %v2244, %v630
      %2250 = vst [vmem:[%s2248] sm:$0xff] %v2249
      %s2251 = scalar_lea.vmem %s150, 6664
      %v2252 = vld [vmem:[%s2251] sm:$0xff]
      %s2253 = scalar_lea.vmem %s176, 5380
      %s2255 = ssub.s32 0, 4
      %s2256 = scalar_lea.vmem %s2253, %s2255
      %v2257 = vpack.c.bf16 %v2252, %v633
      %2258 = vst [vmem:[%s2256] sm:$0xff] %v2257
      %s2259 = scalar_lea.vmem %s150, 520
      %v2260 = vld [vmem:[%s2259] sm:$0xff]
      %s2261 = scalar_lea.vmem %s176, 8452
      %s2263 = ssub.s32 0, 4
      %s2264 = scalar_lea.vmem %s2261, %s2263
      %v2265 = vpack.c.bf16 %v2260, %v636
      %2266 = vst [vmem:[%s2264] sm:$0xff] %v2265
      %s2267 = scalar_lea.vmem %s150, 16936
      %v2268 = vld [vmem:[%s2267] sm:$0xff]
      %s2269 = scalar_lea.vmem %s176, 276
      %s2271 = ssub.s32 0, 4
      %s2272 = scalar_lea.vmem %s2269, %s2271
      %v2273 = vpack.c.bf16 %v2268, %v639
      %2274 = vst [vmem:[%s2272] sm:$0xff] %v2273
      %s2275 = scalar_lea.vmem %s150, 10792
      %v2276 = vld [vmem:[%s2275] sm:$0xff]
      %s2277 = scalar_lea.vmem %s176, 3348
      %s2279 = ssub.s32 0, 4
      %s2280 = scalar_lea.vmem %s2277, %s2279
      %v2281 = vpack.c.bf16 %v2276, %v642
      %2282 = vst [vmem:[%s2280] sm:$0xff] %v2281
      %s2283 = scalar_lea.vmem %s150, 4648
      %v2284 = vld [vmem:[%s2283] sm:$0xff]
      %s2285 = scalar_lea.vmem %s176, 6420
      %s2287 = ssub.s32 0, 4
      %s2288 = scalar_lea.vmem %s2285, %s2287
      %v2289 = vpack.c.bf16 %v2284, %v645
      %2290 = vst [vmem:[%s2288] sm:$0xff] %v2289
      %s2291 = scalar_lea.vmem %s150, 14888
      %v2292 = vld [vmem:[%s2291] sm:$0xff]
      %s2293 = scalar_lea.vmem %s176, 1300
      %s2295 = ssub.s32 0, 4
      %s2296 = scalar_lea.vmem %s2293, %s2295
      %v2297 = vpack.c.bf16 %v2292, %v648
      %2298 = vst [vmem:[%s2296] sm:$0xff] %v2297
      %s2299 = scalar_lea.vmem %s150, 8744
      %v2300 = vld [vmem:[%s2299] sm:$0xff]
      %s2301 = scalar_lea.vmem %s176, 4372
      %s2303 = ssub.s32 0, 4
      %s2304 = scalar_lea.vmem %s2301, %s2303
      %v2305 = vpack.c.bf16 %v2300, %v651
      %2306 = vst [vmem:[%s2304] sm:$0xff] %v2305
      %s2307 = scalar_lea.vmem %s150, 2600
      %v2308 = vld [vmem:[%s2307] sm:$0xff]
      %s2309 = scalar_lea.vmem %s176, 7444
      %s2311 = ssub.s32 0, 4
      %s2312 = scalar_lea.vmem %s2309, %s2311
      %v2313 = vpack.c.bf16 %v2308, %v654
      %2314 = vst [vmem:[%s2312] sm:$0xff] %v2313
      %s2315 = scalar_lea.vmem %s150, 12840
      %v2316 = vld [vmem:[%s2315] sm:$0xff]
      %s2317 = scalar_lea.vmem %s176, 2324
      %s2319 = ssub.s32 0, 4
      %s2320 = scalar_lea.vmem %s2317, %s2319
      %v2321 = vpack.c.bf16 %v2316, %v657
      %2322 = vst [vmem:[%s2320] sm:$0xff] %v2321
      %s2323 = scalar_lea.vmem %s150, 6696
      %v2324 = vld [vmem:[%s2323] sm:$0xff]
      %s2325 = scalar_lea.vmem %s176, 5396
      %s2327 = ssub.s32 0, 4
      %s2328 = scalar_lea.vmem %s2325, %s2327
      %v2329 = vpack.c.bf16 %v2324, %v660
      %2330 = vst [vmem:[%s2328] sm:$0xff] %v2329
      %s2331 = scalar_lea.vmem %s150, 552
      %v2332 = vld [vmem:[%s2331] sm:$0xff]
      %s2333 = scalar_lea.vmem %s176, 8468
      %s2335 = ssub.s32 0, 4
      %s2336 = scalar_lea.vmem %s2333, %s2335
      %v2337 = vpack.c.bf16 %v2332, %v663
      %2338 = vst [vmem:[%s2336] sm:$0xff] %v2337
      %s2339 = scalar_lea.vmem %s150, 16968
      %v2340 = vld [vmem:[%s2339] sm:$0xff]
      %s2341 = scalar_lea.vmem %s176, 292
      %s2343 = ssub.s32 0, 4
      %s2344 = scalar_lea.vmem %s2341, %s2343
      %v2345 = vpack.c.bf16 %v2340, %v666
      %2346 = vst [vmem:[%s2344] sm:$0xff] %v2345
      %s2347 = scalar_lea.vmem %s150, 10824
      %v2348 = vld [vmem:[%s2347] sm:$0xff]
      %s2349 = scalar_lea.vmem %s176, 3364
      %s2351 = ssub.s32 0, 4
      %s2352 = scalar_lea.vmem %s2349, %s2351
      %v2353 = vpack.c.bf16 %v2348, %v669
      %2354 = vst [vmem:[%s2352] sm:$0xff] %v2353
      %s2355 = scalar_lea.vmem %s150, 4680
      %v2356 = vld [vmem:[%s2355] sm:$0xff]
      %s2357 = scalar_lea.vmem %s176, 6436
      %s2359 = ssub.s32 0, 4
      %s2360 = scalar_lea.vmem %s2357, %s2359
      %v2361 = vpack.c.bf16 %v2356, %v672
      %2362 = vst [vmem:[%s2360] sm:$0xff] %v2361
      %s2363 = scalar_lea.vmem %s150, 14920
      %v2364 = vld [vmem:[%s2363] sm:$0xff]
      %s2365 = scalar_lea.vmem %s176, 1316
      %s2367 = ssub.s32 0, 4
      %s2368 = scalar_lea.vmem %s2365, %s2367
      %v2369 = vpack.c.bf16 %v2364, %v675
      %2370 = vst [vmem:[%s2368] sm:$0xff] %v2369
      %s2371 = scalar_lea.vmem %s150, 8776
      %v2372 = vld [vmem:[%s2371] sm:$0xff]
      %s2373 = scalar_lea.vmem %s176, 4388
      %s2375 = ssub.s32 0, 4
      %s2376 = scalar_lea.vmem %s2373, %s2375
      %v2377 = vpack.c.bf16 %v2372, %v678
      %2378 = vst [vmem:[%s2376] sm:$0xff] %v2377
      %s2379 = scalar_lea.vmem %s150, 2632
      %v2380 = vld [vmem:[%s2379] sm:$0xff]
      %s2381 = scalar_lea.vmem %s176, 7460
      %s2383 = ssub.s32 0, 4
      %s2384 = scalar_lea.vmem %s2381, %s2383
      %v2385 = vpack.c.bf16 %v2380, %v681
      %2386 = vst [vmem:[%s2384] sm:$0xff] %v2385
      %s2387 = scalar_lea.vmem %s150, 12872
      %v2388 = vld [vmem:[%s2387] sm:$0xff]
      %s2389 = scalar_lea.vmem %s176, 2340
      %s2391 = ssub.s32 0, 4
      %s2392 = scalar_lea.vmem %s2389, %s2391
      %v2393 = vpack.c.bf16 %v2388, %v684
      %2394 = vst [vmem:[%s2392] sm:$0xff] %v2393
      %s2395 = scalar_lea.vmem %s150, 6728
      %v2396 = vld [vmem:[%s2395] sm:$0xff]
      %s2397 = scalar_lea.vmem %s176, 5412
      %s2399 = ssub.s32 0, 4
      %s2400 = scalar_lea.vmem %s2397, %s2399
      %v2401 = vpack.c.bf16 %v2396, %v687
      %2402 = vst [vmem:[%s2400] sm:$0xff] %v2401
      %s2403 = scalar_lea.vmem %s150, 584
      %v2404 = vld [vmem:[%s2403] sm:$0xff]
      %s2405 = scalar_lea.vmem %s176, 8484
      %s2407 = ssub.s32 0, 4
      %s2408 = scalar_lea.vmem %s2405, %s2407
      %v2409 = vpack.c.bf16 %v2404, %v690
      %2410 = vst [vmem:[%s2408] sm:$0xff] %v2409
      %s2411 = scalar_lea.vmem %s150, 17000
      %v2412 = vld [vmem:[%s2411] sm:$0xff]
      %s2413 = scalar_lea.vmem %s176, 308
      %s2415 = ssub.s32 0, 4
      %s2416 = scalar_lea.vmem %s2413, %s2415
      %v2417 = vpack.c.bf16 %v2412, %v693
      %2418 = vst [vmem:[%s2416] sm:$0xff] %v2417
      %s2419 = scalar_lea.vmem %s150, 10856
      %v2420 = vld [vmem:[%s2419] sm:$0xff]
      %s2421 = scalar_lea.vmem %s176, 3380
      %s2423 = ssub.s32 0, 4
      %s2424 = scalar_lea.vmem %s2421, %s2423
      %v2425 = vpack.c.bf16 %v2420, %v696
      %2426 = vst [vmem:[%s2424] sm:$0xff] %v2425
      %s2427 = scalar_lea.vmem %s150, 4712
      %v2428 = vld [vmem:[%s2427] sm:$0xff]
      %s2429 = scalar_lea.vmem %s176, 6452
      %s2431 = ssub.s32 0, 4
      %s2432 = scalar_lea.vmem %s2429, %s2431
      %v2433 = vpack.c.bf16 %v2428, %v699
      %2434 = vst [vmem:[%s2432] sm:$0xff] %v2433
      %s2435 = scalar_lea.vmem %s150, 14952
      %v2436 = vld [vmem:[%s2435] sm:$0xff]
      %s2437 = scalar_lea.vmem %s176, 1332
      %s2439 = ssub.s32 0, 4
      %s2440 = scalar_lea.vmem %s2437, %s2439
      %v2441 = vpack.c.bf16 %v2436, %v702
      %2442 = vst [vmem:[%s2440] sm:$0xff] %v2441
      %s2443 = scalar_lea.vmem %s150, 8808
      %v2444 = vld [vmem:[%s2443] sm:$0xff]
      %s2445 = scalar_lea.vmem %s176, 4404
      %s2447 = ssub.s32 0, 4
      %s2448 = scalar_lea.vmem %s2445, %s2447
      %v2449 = vpack.c.bf16 %v2444, %v705
      %2450 = vst [vmem:[%s2448] sm:$0xff] %v2449
      %s2451 = scalar_lea.vmem %s150, 2664
      %v2452 = vld [vmem:[%s2451] sm:$0xff]
      %s2453 = scalar_lea.vmem %s176, 7476
      %s2455 = ssub.s32 0, 4
      %s2456 = scalar_lea.vmem %s2453, %s2455
      %v2457 = vpack.c.bf16 %v2452, %v708
      %2458 = vst [vmem:[%s2456] sm:$0xff] %v2457
      %s2459 = scalar_lea.vmem %s150, 12904
      %v2460 = vld [vmem:[%s2459] sm:$0xff]
      %s2461 = scalar_lea.vmem %s176, 2356
      %s2463 = ssub.s32 0, 4
      %s2464 = scalar_lea.vmem %s2461, %s2463
      %v2465 = vpack.c.bf16 %v2460, %v711
      %2466 = vst [vmem:[%s2464] sm:$0xff] %v2465
      %s2467 = scalar_lea.vmem %s150, 6760
      %v2468 = vld [vmem:[%s2467] sm:$0xff]
      %s2469 = scalar_lea.vmem %s176, 5428
      %s2471 = ssub.s32 0, 4
      %s2472 = scalar_lea.vmem %s2469, %s2471
      %v2473 = vpack.c.bf16 %v2468, %v714
      %2474 = vst [vmem:[%s2472] sm:$0xff] %v2473
      %s2475 = scalar_lea.vmem %s150, 616
      %v2476 = vld [vmem:[%s2475] sm:$0xff]
      %s2477 = scalar_lea.vmem %s176, 8500
      %s2479 = ssub.s32 0, 4
      %s2480 = scalar_lea.vmem %s2477, %s2479
      %v2481 = vpack.c.bf16 %v2476, %v717
      %2482 = vst [vmem:[%s2480] sm:$0xff] %v2481
      %s2483 = scalar_lea.vmem %s150, 17032
      %v2484 = vld [vmem:[%s2483] sm:$0xff]
      %s2485 = scalar_lea.vmem %s176, 324
      %s2487 = ssub.s32 0, 4
      %s2488 = scalar_lea.vmem %s2485, %s2487
      %v2489 = vpack.c.bf16 %v2484, %v720
      %2490 = vst [vmem:[%s2488] sm:$0xff] %v2489
      %s2491 = scalar_lea.vmem %s150, 10888
      %v2492 = vld [vmem:[%s2491] sm:$0xff]
      %s2493 = scalar_lea.vmem %s176, 3396
      %s2495 = ssub.s32 0, 4
      %s2496 = scalar_lea.vmem %s2493, %s2495
      %v2497 = vpack.c.bf16 %v2492, %v723
      %2498 = vst [vmem:[%s2496] sm:$0xff] %v2497
      %s2499 = scalar_lea.vmem %s150, 4744
      %v2500 = vld [vmem:[%s2499] sm:$0xff]
      %s2501 = scalar_lea.vmem %s176, 6468
      %s2503 = ssub.s32 0, 4
      %s2504 = scalar_lea.vmem %s2501, %s2503
      %v2505 = vpack.c.bf16 %v2500, %v726
      %2506 = vst [vmem:[%s2504] sm:$0xff] %v2505
      %s2507 = scalar_lea.vmem %s150, 14984
      %v2508 = vld [vmem:[%s2507] sm:$0xff]
      %s2509 = scalar_lea.vmem %s176, 1348
      %s2511 = ssub.s32 0, 4
      %s2512 = scalar_lea.vmem %s2509, %s2511
      %v2513 = vpack.c.bf16 %v2508, %v729
      %2514 = vst [vmem:[%s2512] sm:$0xff] %v2513
      %s2515 = scalar_lea.vmem %s150, 8840
      %v2516 = vld [vmem:[%s2515] sm:$0xff]
      %s2517 = scalar_lea.vmem %s176, 4420
      %s2519 = ssub.s32 0, 4
      %s2520 = scalar_lea.vmem %s2517, %s2519
      %v2521 = vpack.c.bf16 %v2516, %v732
      %2522 = vst [vmem:[%s2520] sm:$0xff] %v2521
      %s2523 = scalar_lea.vmem %s150, 2696
      %v2524 = vld [vmem:[%s2523] sm:$0xff]
      %s2525 = scalar_lea.vmem %s176, 7492
      %s2527 = ssub.s32 0, 4
      %s2528 = scalar_lea.vmem %s2525, %s2527
      %v2529 = vpack.c.bf16 %v2524, %v735
      %2530 = vst [vmem:[%s2528] sm:$0xff] %v2529
      %s2531 = scalar_lea.vmem %s150, 12936
      %v2532 = vld [vmem:[%s2531] sm:$0xff]
      %s2533 = scalar_lea.vmem %s176, 2372
      %s2535 = ssub.s32 0, 4
      %s2536 = scalar_lea.vmem %s2533, %s2535
      %v2537 = vpack.c.bf16 %v2532, %v738
      %2538 = vst [vmem:[%s2536] sm:$0xff] %v2537
      %s2539 = scalar_lea.vmem %s150, 6792
      %v2540 = vld [vmem:[%s2539] sm:$0xff]
      %s2541 = scalar_lea.vmem %s176, 5444
      %s2543 = ssub.s32 0, 4
      %s2544 = scalar_lea.vmem %s2541, %s2543
      %v2545 = vpack.c.bf16 %v2540, %v741
      %2546 = vst [vmem:[%s2544] sm:$0xff] %v2545
      %s2547 = scalar_lea.vmem %s150, 648
      %v2548 = vld [vmem:[%s2547] sm:$0xff]
      %s2549 = scalar_lea.vmem %s176, 8516
      %s2551 = ssub.s32 0, 4
      %s2552 = scalar_lea.vmem %s2549, %s2551
      %v2553 = vpack.c.bf16 %v2548, %v744
      %2554 = vst [vmem:[%s2552] sm:$0xff] %v2553
      %s2555 = scalar_lea.vmem %s150, 17064
      %v2556 = vld [vmem:[%s2555] sm:$0xff]
      %s2557 = scalar_lea.vmem %s176, 340
      %s2559 = ssub.s32 0, 4
      %s2560 = scalar_lea.vmem %s2557, %s2559
      %v2561 = vpack.c.bf16 %v2556, %v747
      %2562 = vst [vmem:[%s2560] sm:$0xff] %v2561
      %s2563 = scalar_lea.vmem %s150, 10920
      %v2564 = vld [vmem:[%s2563] sm:$0xff]
      %s2565 = scalar_lea.vmem %s176, 3412
      %s2567 = ssub.s32 0, 4
      %s2568 = scalar_lea.vmem %s2565, %s2567
      %v2569 = vpack.c.bf16 %v2564, %v750
      %2570 = vst [vmem:[%s2568] sm:$0xff] %v2569
      %s2571 = scalar_lea.vmem %s150, 4776
      %v2572 = vld [vmem:[%s2571] sm:$0xff]
      %s2573 = scalar_lea.vmem %s176, 6484
      %s2575 = ssub.s32 0, 4
      %s2576 = scalar_lea.vmem %s2573, %s2575
      %v2577 = vpack.c.bf16 %v2572, %v753
      %2578 = vst [vmem:[%s2576] sm:$0xff] %v2577
      %s2579 = scalar_lea.vmem %s150, 15016
      %v2580 = vld [vmem:[%s2579] sm:$0xff]
      %s2581 = scalar_lea.vmem %s176, 1364
      %s2583 = ssub.s32 0, 4
      %s2584 = scalar_lea.vmem %s2581, %s2583
      %v2585 = vpack.c.bf16 %v2580, %v756
      %2586 = vst [vmem:[%s2584] sm:$0xff] %v2585
      %s2587 = scalar_lea.vmem %s150, 8872
      %v2588 = vld [vmem:[%s2587] sm:$0xff]
      %s2589 = scalar_lea.vmem %s176, 4436
      %s2591 = ssub.s32 0, 4
      %s2592 = scalar_lea.vmem %s2589, %s2591
      %v2593 = vpack.c.bf16 %v2588, %v759
      %2594 = vst [vmem:[%s2592] sm:$0xff] %v2593
      %s2595 = scalar_lea.vmem %s150, 2728
      %v2596 = vld [vmem:[%s2595] sm:$0xff]
      %s2597 = scalar_lea.vmem %s176, 7508
      %s2599 = ssub.s32 0, 4
      %s2600 = scalar_lea.vmem %s2597, %s2599
      %v2601 = vpack.c.bf16 %v2596, %v762
      %2602 = vst [vmem:[%s2600] sm:$0xff] %v2601
      %s2603 = scalar_lea.vmem %s150, 12968
      %v2604 = vld [vmem:[%s2603] sm:$0xff]
      %s2605 = scalar_lea.vmem %s176, 2388
      %s2607 = ssub.s32 0, 4
      %s2608 = scalar_lea.vmem %s2605, %s2607
      %v2609 = vpack.c.bf16 %v2604, %v765
      %2610 = vst [vmem:[%s2608] sm:$0xff] %v2609
      %s2611 = scalar_lea.vmem %s150, 6824
      %v2612 = vld [vmem:[%s2611] sm:$0xff]
      %s2613 = scalar_lea.vmem %s176, 5460
      %s2615 = ssub.s32 0, 4
      %s2616 = scalar_lea.vmem %s2613, %s2615
      %v2617 = vpack.c.bf16 %v2612, %v768
      %2618 = vst [vmem:[%s2616] sm:$0xff] %v2617
      %s2619 = scalar_lea.vmem %s150, 680
      %v2620 = vld [vmem:[%s2619] sm:$0xff]
      %s2621 = scalar_lea.vmem %s176, 8532
      %s2623 = ssub.s32 0, 4
      %s2624 = scalar_lea.vmem %s2621, %s2623
      %v2625 = vpack.c.bf16 %v2620, %v771
      %2626 = vst [vmem:[%s2624] sm:$0xff] %v2625
      %s2627 = scalar_lea.vmem %s150, 17096
      %v2628 = vld [vmem:[%s2627] sm:$0xff]
      %s2629 = scalar_lea.vmem %s176, 356
      %s2631 = ssub.s32 0, 4
      %s2632 = scalar_lea.vmem %s2629, %s2631
      %v2633 = vpack.c.bf16 %v2628, %v774
      %2634 = vst [vmem:[%s2632] sm:$0xff] %v2633
      %s2635 = scalar_lea.vmem %s150, 10952
      %v2636 = vld [vmem:[%s2635] sm:$0xff]
      %s2637 = scalar_lea.vmem %s176, 3428
      %s2639 = ssub.s32 0, 4
      %s2640 = scalar_lea.vmem %s2637, %s2639
      %v2641 = vpack.c.bf16 %v2636, %v777
      %2642 = vst [vmem:[%s2640] sm:$0xff] %v2641
      %s2643 = scalar_lea.vmem %s150, 4808
      %v2644 = vld [vmem:[%s2643] sm:$0xff]
      %s2645 = scalar_lea.vmem %s176, 6500
      %s2647 = ssub.s32 0, 4
      %s2648 = scalar_lea.vmem %s2645, %s2647
      %v2649 = vpack.c.bf16 %v2644, %v780
      %2650 = vst [vmem:[%s2648] sm:$0xff] %v2649
      %s2651 = scalar_lea.vmem %s150, 15048
      %v2652 = vld [vmem:[%s2651] sm:$0xff]
      %s2653 = scalar_lea.vmem %s176, 1380
      %s2655 = ssub.s32 0, 4
      %s2656 = scalar_lea.vmem %s2653, %s2655
      %v2657 = vpack.c.bf16 %v2652, %v783
      %2658 = vst [vmem:[%s2656] sm:$0xff] %v2657
      %s2659 = scalar_lea.vmem %s150, 8904
      %v2660 = vld [vmem:[%s2659] sm:$0xff]
      %s2661 = scalar_lea.vmem %s176, 4452
      %s2663 = ssub.s32 0, 4
      %s2664 = scalar_lea.vmem %s2661, %s2663
      %v2665 = vpack.c.bf16 %v2660, %v786
      %2666 = vst [vmem:[%s2664] sm:$0xff] %v2665
      %s2667 = scalar_lea.vmem %s150, 2760
      %v2668 = vld [vmem:[%s2667] sm:$0xff]
      %s2669 = scalar_lea.vmem %s176, 7524
      %s2671 = ssub.s32 0, 4
      %s2672 = scalar_lea.vmem %s2669, %s2671
      %v2673 = vpack.c.bf16 %v2668, %v789
      %2674 = vst [vmem:[%s2672] sm:$0xff] %v2673
      %s2675 = scalar_lea.vmem %s150, 13000
      %v2676 = vld [vmem:[%s2675] sm:$0xff]
      %s2677 = scalar_lea.vmem %s176, 2404
      %s2679 = ssub.s32 0, 4
      %s2680 = scalar_lea.vmem %s2677, %s2679
      %v2681 = vpack.c.bf16 %v2676, %v792
      %2682 = vst [vmem:[%s2680] sm:$0xff] %v2681
      %s2683 = scalar_lea.vmem %s150, 6856
      %v2684 = vld [vmem:[%s2683] sm:$0xff]
      %s2685 = scalar_lea.vmem %s176, 5476
      %s2687 = ssub.s32 0, 4
      %s2688 = scalar_lea.vmem %s2685, %s2687
      %v2689 = vpack.c.bf16 %v2684, %v795
      %2690 = vst [vmem:[%s2688] sm:$0xff] %v2689
      %s2691 = scalar_lea.vmem %s150, 712
      %v2692 = vld [vmem:[%s2691] sm:$0xff]
      %s2693 = scalar_lea.vmem %s176, 8548
      %s2695 = ssub.s32 0, 4
      %s2696 = scalar_lea.vmem %s2693, %s2695
      %v2697 = vpack.c.bf16 %v2692, %v798
      %2698 = vst [vmem:[%s2696] sm:$0xff] %v2697
      %s2699 = scalar_lea.vmem %s150, 17128
      %v2700 = vld [vmem:[%s2699] sm:$0xff]
      %s2701 = scalar_lea.vmem %s176, 372
      %s2703 = ssub.s32 0, 4
      %s2704 = scalar_lea.vmem %s2701, %s2703
      %v2705 = vpack.c.bf16 %v2700, %v801
      %2706 = vst [vmem:[%s2704] sm:$0xff] %v2705
      %s2707 = scalar_lea.vmem %s150, 10984
      %v2708 = vld [vmem:[%s2707] sm:$0xff]
      %s2709 = scalar_lea.vmem %s176, 3444
      %s2711 = ssub.s32 0, 4
      %s2712 = scalar_lea.vmem %s2709, %s2711
      %v2713 = vpack.c.bf16 %v2708, %v804
      %2714 = vst [vmem:[%s2712] sm:$0xff] %v2713
      %s2715 = scalar_lea.vmem %s150, 4840
      %v2716 = vld [vmem:[%s2715] sm:$0xff]
      %s2717 = scalar_lea.vmem %s176, 6516
      %s2719 = ssub.s32 0, 4
      %s2720 = scalar_lea.vmem %s2717, %s2719
      %v2721 = vpack.c.bf16 %v2716, %v807
      %2722 = vst [vmem:[%s2720] sm:$0xff] %v2721
      %s2723 = scalar_lea.vmem %s150, 15080
      %v2724 = vld [vmem:[%s2723] sm:$0xff]
      %s2725 = scalar_lea.vmem %s176, 1396
      %s2727 = ssub.s32 0, 4
      %s2728 = scalar_lea.vmem %s2725, %s2727
      %v2729 = vpack.c.bf16 %v2724, %v810
      %2730 = vst [vmem:[%s2728] sm:$0xff] %v2729
      %s2731 = scalar_lea.vmem %s150, 8936
      %v2732 = vld [vmem:[%s2731] sm:$0xff]
      %s2733 = scalar_lea.vmem %s176, 4468
      %s2735 = ssub.s32 0, 4
      %s2736 = scalar_lea.vmem %s2733, %s2735
      %v2737 = vpack.c.bf16 %v2732, %v813
      %2738 = vst [vmem:[%s2736] sm:$0xff] %v2737
      %s2739 = scalar_lea.vmem %s150, 2792
      %v2740 = vld [vmem:[%s2739] sm:$0xff]
      %s2741 = scalar_lea.vmem %s176, 7540
      %s2743 = ssub.s32 0, 4
      %s2744 = scalar_lea.vmem %s2741, %s2743
      %v2745 = vpack.c.bf16 %v2740, %v816
      %2746 = vst [vmem:[%s2744] sm:$0xff] %v2745
      %s2747 = scalar_lea.vmem %s150, 13032
      %v2748 = vld [vmem:[%s2747] sm:$0xff]
      %s2749 = scalar_lea.vmem %s176, 2420
      %s2751 = ssub.s32 0, 4
      %s2752 = scalar_lea.vmem %s2749, %s2751
      %v2753 = vpack.c.bf16 %v2748, %v819
      %2754 = vst [vmem:[%s2752] sm:$0xff] %v2753
      %s2755 = scalar_lea.vmem %s150, 6888
      %v2756 = vld [vmem:[%s2755] sm:$0xff]
      %s2757 = scalar_lea.vmem %s176, 5492
      %s2759 = ssub.s32 0, 4
      %s2760 = scalar_lea.vmem %s2757, %s2759
      %v2761 = vpack.c.bf16 %v2756, %v822
      %2762 = vst [vmem:[%s2760] sm:$0xff] %v2761
      %s2763 = scalar_lea.vmem %s150, 744
      %v2764 = vld [vmem:[%s2763] sm:$0xff]
      %s2765 = scalar_lea.vmem %s176, 8564
      %s2767 = ssub.s32 0, 4
      %s2768 = scalar_lea.vmem %s2765, %s2767
      %v2769 = vpack.c.bf16 %v2764, %v825
      %2770 = vst [vmem:[%s2768] sm:$0xff] %v2769
      %s2771 = scalar_lea.vmem %s150, 17160
      %v2772 = vld [vmem:[%s2771] sm:$0xff]
      %s2773 = scalar_lea.vmem %s176, 388
      %s2775 = ssub.s32 0, 4
      %s2776 = scalar_lea.vmem %s2773, %s2775
      %v2777 = vpack.c.bf16 %v2772, %v828
      %2778 = vst [vmem:[%s2776] sm:$0xff] %v2777
      %s2779 = scalar_lea.vmem %s150, 11016
      %v2780 = vld [vmem:[%s2779] sm:$0xff]
      %s2781 = scalar_lea.vmem %s176, 3460
      %s2783 = ssub.s32 0, 4
      %s2784 = scalar_lea.vmem %s2781, %s2783
      %v2785 = vpack.c.bf16 %v2780, %v831
      %2786 = vst [vmem:[%s2784] sm:$0xff] %v2785
      %s2787 = scalar_lea.vmem %s150, 4872
      %v2788 = vld [vmem:[%s2787] sm:$0xff]
      %s2789 = scalar_lea.vmem %s176, 6532
      %s2791 = ssub.s32 0, 4
      %s2792 = scalar_lea.vmem %s2789, %s2791
      %v2793 = vpack.c.bf16 %v2788, %v834
      %2794 = vst [vmem:[%s2792] sm:$0xff] %v2793
      %s2795 = scalar_lea.vmem %s150, 15112
      %v2796 = vld [vmem:[%s2795] sm:$0xff]
      %s2797 = scalar_lea.vmem %s176, 1412
      %s2799 = ssub.s32 0, 4
      %s2800 = scalar_lea.vmem %s2797, %s2799
      %v2801 = vpack.c.bf16 %v2796, %v837
      %2802 = vst [vmem:[%s2800] sm:$0xff] %v2801
      %s2803 = scalar_lea.vmem %s150, 8968
      %v2804 = vld [vmem:[%s2803] sm:$0xff]
      %s2805 = scalar_lea.vmem %s176, 4484
      %s2807 = ssub.s32 0, 4
      %s2808 = scalar_lea.vmem %s2805, %s2807
      %v2809 = vpack.c.bf16 %v2804, %v840
      %2810 = vst [vmem:[%s2808] sm:$0xff] %v2809
      %s2811 = scalar_lea.vmem %s150, 2824
      %v2812 = vld [vmem:[%s2811] sm:$0xff]
      %s2813 = scalar_lea.vmem %s176, 7556
      %s2815 = ssub.s32 0, 4
      %s2816 = scalar_lea.vmem %s2813, %s2815
      %v2817 = vpack.c.bf16 %v2812, %v843
      %2818 = vst [vmem:[%s2816] sm:$0xff] %v2817
      %s2819 = scalar_lea.vmem %s150, 13064
      %v2820 = vld [vmem:[%s2819] sm:$0xff]
      %s2821 = scalar_lea.vmem %s176, 2436
      %s2823 = ssub.s32 0, 4
      %s2824 = scalar_lea.vmem %s2821, %s2823
      %v2825 = vpack.c.bf16 %v2820, %v846
      %2826 = vst [vmem:[%s2824] sm:$0xff] %v2825
      %s2827 = scalar_lea.vmem %s150, 6920
      %v2828 = vld [vmem:[%s2827] sm:$0xff]
      %s2829 = scalar_lea.vmem %s176, 5508
      %s2831 = ssub.s32 0, 4
      %s2832 = scalar_lea.vmem %s2829, %s2831
      %v2833 = vpack.c.bf16 %v2828, %v849
      %2834 = vst [vmem:[%s2832] sm:$0xff] %v2833
      %s2835 = scalar_lea.vmem %s150, 776
      %v2836 = vld [vmem:[%s2835] sm:$0xff]
      %s2837 = scalar_lea.vmem %s176, 8580
      %s2839 = ssub.s32 0, 4
      %s2840 = scalar_lea.vmem %s2837, %s2839
      %v2841 = vpack.c.bf16 %v2836, %v852
      %2842 = vst [vmem:[%s2840] sm:$0xff] %v2841
      %s2843 = scalar_lea.vmem %s150, 17192
      %v2844 = vld [vmem:[%s2843] sm:$0xff]
      %s2845 = scalar_lea.vmem %s176, 404
      %s2847 = ssub.s32 0, 4
      %s2848 = scalar_lea.vmem %s2845, %s2847
      %v2849 = vpack.c.bf16 %v2844, %v855
      %2850 = vst [vmem:[%s2848] sm:$0xff] %v2849
      %s2851 = scalar_lea.vmem %s150, 11048
      %v2852 = vld [vmem:[%s2851] sm:$0xff]
      %s2853 = scalar_lea.vmem %s176, 3476
      %s2855 = ssub.s32 0, 4
      %s2856 = scalar_lea.vmem %s2853, %s2855
      %v2857 = vpack.c.bf16 %v2852, %v858
      %2858 = vst [vmem:[%s2856] sm:$0xff] %v2857
      %s2859 = scalar_lea.vmem %s150, 4904
      %v2860 = vld [vmem:[%s2859] sm:$0xff]
      %s2861 = scalar_lea.vmem %s176, 6548
      %s2863 = ssub.s32 0, 4
      %s2864 = scalar_lea.vmem %s2861, %s2863
      %v2865 = vpack.c.bf16 %v2860, %v861
      %2866 = vst [vmem:[%s2864] sm:$0xff] %v2865
      %s2867 = scalar_lea.vmem %s150, 15144
      %v2868 = vld [vmem:[%s2867] sm:$0xff]
      %s2869 = scalar_lea.vmem %s176, 1428
      %s2871 = ssub.s32 0, 4
      %s2872 = scalar_lea.vmem %s2869, %s2871
      %v2873 = vpack.c.bf16 %v2868, %v864
      %2874 = vst [vmem:[%s2872] sm:$0xff] %v2873
      %s2875 = scalar_lea.vmem %s150, 9000
      %v2876 = vld [vmem:[%s2875] sm:$0xff]
      %s2877 = scalar_lea.vmem %s176, 4500
      %s2879 = ssub.s32 0, 4
      %s2880 = scalar_lea.vmem %s2877, %s2879
      %v2881 = vpack.c.bf16 %v2876, %v867
      %2882 = vst [vmem:[%s2880] sm:$0xff] %v2881
      %s2883 = scalar_lea.vmem %s150, 2856
      %v2884 = vld [vmem:[%s2883] sm:$0xff]
      %s2885 = scalar_lea.vmem %s176, 7572
      %s2887 = ssub.s32 0, 4
      %s2888 = scalar_lea.vmem %s2885, %s2887
      %v2889 = vpack.c.bf16 %v2884, %v870
      %2890 = vst [vmem:[%s2888] sm:$0xff] %v2889
      %s2891 = scalar_lea.vmem %s150, 13096
      %v2892 = vld [vmem:[%s2891] sm:$0xff]
      %s2893 = scalar_lea.vmem %s176, 2452
      %s2895 = ssub.s32 0, 4
      %s2896 = scalar_lea.vmem %s2893, %s2895
      %v2897 = vpack.c.bf16 %v2892, %v873
      %2898 = vst [vmem:[%s2896] sm:$0xff] %v2897
      %s2899 = scalar_lea.vmem %s150, 6952
      %v2900 = vld [vmem:[%s2899] sm:$0xff]
      %s2901 = scalar_lea.vmem %s176, 5524
      %s2903 = ssub.s32 0, 4
      %s2904 = scalar_lea.vmem %s2901, %s2903
      %v2905 = vpack.c.bf16 %v2900, %v876
      %2906 = vst [vmem:[%s2904] sm:$0xff] %v2905
      %s2907 = scalar_lea.vmem %s150, 808
      %v2908 = vld [vmem:[%s2907] sm:$0xff]
      %s2909 = scalar_lea.vmem %s176, 8596
      %s2911 = ssub.s32 0, 4
      %s2912 = scalar_lea.vmem %s2909, %s2911
      %v2913 = vpack.c.bf16 %v2908, %v879
      %2914 = vst [vmem:[%s2912] sm:$0xff] %v2913
      %s2915 = scalar_lea.vmem %s150, 17224
      %v2916 = vld [vmem:[%s2915] sm:$0xff]
      %s2917 = scalar_lea.vmem %s176, 420
      %s2919 = ssub.s32 0, 4
      %s2920 = scalar_lea.vmem %s2917, %s2919
      %v2921 = vpack.c.bf16 %v2916, %v882
      %2922 = vst [vmem:[%s2920] sm:$0xff] %v2921
      %s2923 = scalar_lea.vmem %s150, 11080
      %v2924 = vld [vmem:[%s2923] sm:$0xff]
      %s2925 = scalar_lea.vmem %s176, 3492
      %s2927 = ssub.s32 0, 4
      %s2928 = scalar_lea.vmem %s2925, %s2927
      %v2929 = vpack.c.bf16 %v2924, %v885
      %2930 = vst [vmem:[%s2928] sm:$0xff] %v2929
      %s2931 = scalar_lea.vmem %s150, 4936
      %v2932 = vld [vmem:[%s2931] sm:$0xff]
      %s2933 = scalar_lea.vmem %s176, 6564
      %s2935 = ssub.s32 0, 4
      %s2936 = scalar_lea.vmem %s2933, %s2935
      %v2937 = vpack.c.bf16 %v2932, %v888
      %2938 = vst [vmem:[%s2936] sm:$0xff] %v2937
      %s2939 = scalar_lea.vmem %s150, 15176
      %v2940 = vld [vmem:[%s2939] sm:$0xff]
      %s2941 = scalar_lea.vmem %s176, 1444
      %s2943 = ssub.s32 0, 4
      %s2944 = scalar_lea.vmem %s2941, %s2943
      %v2945 = vpack.c.bf16 %v2940, %v891
      %2946 = vst [vmem:[%s2944] sm:$0xff] %v2945
      %s2947 = scalar_lea.vmem %s150, 9032
      %v2948 = vld [vmem:[%s2947] sm:$0xff]
      %s2949 = scalar_lea.vmem %s176, 4516
      %s2951 = ssub.s32 0, 4
      %s2952 = scalar_lea.vmem %s2949, %s2951
      %v2953 = vpack.c.bf16 %v2948, %v894
      %2954 = vst [vmem:[%s2952] sm:$0xff] %v2953
      %s2955 = scalar_lea.vmem %s150, 2888
      %v2956 = vld [vmem:[%s2955] sm:$0xff]
      %s2957 = scalar_lea.vmem %s176, 7588
      %s2959 = ssub.s32 0, 4
      %s2960 = scalar_lea.vmem %s2957, %s2959
      %v2961 = vpack.c.bf16 %v2956, %v897
      %2962 = vst [vmem:[%s2960] sm:$0xff] %v2961
      %s2963 = scalar_lea.vmem %s150, 13128
      %v2964 = vld [vmem:[%s2963] sm:$0xff]
      %s2965 = scalar_lea.vmem %s176, 2468
      %s2967 = ssub.s32 0, 4
      %s2968 = scalar_lea.vmem %s2965, %s2967
      %v2969 = vpack.c.bf16 %v2964, %v900
      %2970 = vst [vmem:[%s2968] sm:$0xff] %v2969
      %s2971 = scalar_lea.vmem %s150, 6984
      %v2972 = vld [vmem:[%s2971] sm:$0xff]
      %s2973 = scalar_lea.vmem %s176, 5540
      %s2975 = ssub.s32 0, 4
      %s2976 = scalar_lea.vmem %s2973, %s2975
      %v2977 = vpack.c.bf16 %v2972, %v903
      %2978 = vst [vmem:[%s2976] sm:$0xff] %v2977
      %s2979 = scalar_lea.vmem %s150, 840
      %v2980 = vld [vmem:[%s2979] sm:$0xff]
      %s2981 = scalar_lea.vmem %s176, 8612
      %s2983 = ssub.s32 0, 4
      %s2984 = scalar_lea.vmem %s2981, %s2983
      %v2985 = vpack.c.bf16 %v2980, %v906
      %2986 = vst [vmem:[%s2984] sm:$0xff] %v2985
      %s2987 = scalar_lea.vmem %s150, 17256
      %v2988 = vld [vmem:[%s2987] sm:$0xff]
      %s2989 = scalar_lea.vmem %s176, 436
      %s2991 = ssub.s32 0, 4
      %s2992 = scalar_lea.vmem %s2989, %s2991
      %v2993 = vpack.c.bf16 %v2988, %v909
      %2994 = vst [vmem:[%s2992] sm:$0xff] %v2993
      %s2995 = scalar_lea.vmem %s150, 11112
      %v2996 = vld [vmem:[%s2995] sm:$0xff]
      %s2997 = scalar_lea.vmem %s176, 3508
      %s2999 = ssub.s32 0, 4
      %s3000 = scalar_lea.vmem %s2997, %s2999
      %v3001 = vpack.c.bf16 %v2996, %v912
      %3002 = vst [vmem:[%s3000] sm:$0xff] %v3001
      %s3003 = scalar_lea.vmem %s150, 4968
      %v3004 = vld [vmem:[%s3003] sm:$0xff]
      %s3005 = scalar_lea.vmem %s176, 6580
      %s3007 = ssub.s32 0, 4
      %s3008 = scalar_lea.vmem %s3005, %s3007
      %v3009 = vpack.c.bf16 %v3004, %v915
      %3010 = vst [vmem:[%s3008] sm:$0xff] %v3009
      %s3011 = scalar_lea.vmem %s150, 15208
      %v3012 = vld [vmem:[%s3011] sm:$0xff]
      %s3013 = scalar_lea.vmem %s176, 1460
      %s3015 = ssub.s32 0, 4
      %s3016 = scalar_lea.vmem %s3013, %s3015
      %v3017 = vpack.c.bf16 %v3012, %v918
      %3018 = vst [vmem:[%s3016] sm:$0xff] %v3017
      %s3019 = scalar_lea.vmem %s150, 9064
      %v3020 = vld [vmem:[%s3019] sm:$0xff]
      %s3021 = scalar_lea.vmem %s176, 4532
      %s3023 = ssub.s32 0, 4
      %s3024 = scalar_lea.vmem %s3021, %s3023
      %v3025 = vpack.c.bf16 %v3020, %v921
      %3026 = vst [vmem:[%s3024] sm:$0xff] %v3025
      %s3027 = scalar_lea.vmem %s150, 2920
      %v3028 = vld [vmem:[%s3027] sm:$0xff]
      %s3029 = scalar_lea.vmem %s176, 7604
      %s3031 = ssub.s32 0, 4
      %s3032 = scalar_lea.vmem %s3029, %s3031
      %v3033 = vpack.c.bf16 %v3028, %v924
      %3034 = vst [vmem:[%s3032] sm:$0xff] %v3033
      %s3035 = scalar_lea.vmem %s150, 13160
      %v3036 = vld [vmem:[%s3035] sm:$0xff]
      %s3037 = scalar_lea.vmem %s176, 2484
      %s3039 = ssub.s32 0, 4
      %s3040 = scalar_lea.vmem %s3037, %s3039
      %v3041 = vpack.c.bf16 %v3036, %v927
      %3042 = vst [vmem:[%s3040] sm:$0xff] %v3041
      %s3043 = scalar_lea.vmem %s150, 7016
      %v3044 = vld [vmem:[%s3043] sm:$0xff]
      %s3045 = scalar_lea.vmem %s176, 5556
      %s3047 = ssub.s32 0, 4
      %s3048 = scalar_lea.vmem %s3045, %s3047
      %v3049 = vpack.c.bf16 %v3044, %v930
      %3050 = vst [vmem:[%s3048] sm:$0xff] %v3049
      %s3051 = scalar_lea.vmem %s150, 872
      %v3052 = vld [vmem:[%s3051] sm:$0xff]
      %s3053 = scalar_lea.vmem %s176, 8628
      %s3055 = ssub.s32 0, 4
      %s3056 = scalar_lea.vmem %s3053, %s3055
      %v3057 = vpack.c.bf16 %v3052, %v933
      %3058 = vst [vmem:[%s3056] sm:$0xff] %v3057
      %s3059 = scalar_lea.vmem %s150, 17288
      %v3060 = vld [vmem:[%s3059] sm:$0xff]
      %s3061 = scalar_lea.vmem %s176, 452
      %s3063 = ssub.s32 0, 4
      %s3064 = scalar_lea.vmem %s3061, %s3063
      %v3065 = vpack.c.bf16 %v3060, %v936
      %3066 = vst [vmem:[%s3064] sm:$0xff] %v3065
      %s3067 = scalar_lea.vmem %s150, 11144
      %v3068 = vld [vmem:[%s3067] sm:$0xff]
      %s3069 = scalar_lea.vmem %s176, 3524
      %s3071 = ssub.s32 0, 4
      %s3072 = scalar_lea.vmem %s3069, %s3071
      %v3073 = vpack.c.bf16 %v3068, %v939
      %3074 = vst [vmem:[%s3072] sm:$0xff] %v3073
      %s3075 = scalar_lea.vmem %s150, 5000
      %v3076 = vld [vmem:[%s3075] sm:$0xff]
      %s3077 = scalar_lea.vmem %s176, 6596
      %s3079 = ssub.s32 0, 4
      %s3080 = scalar_lea.vmem %s3077, %s3079
      %v3081 = vpack.c.bf16 %v3076, %v942
      %3082 = vst [vmem:[%s3080] sm:$0xff] %v3081
      %s3083 = scalar_lea.vmem %s150, 15240
      %v3084 = vld [vmem:[%s3083] sm:$0xff]
      %s3085 = scalar_lea.vmem %s176, 1476
      %s3087 = ssub.s32 0, 4
      %s3088 = scalar_lea.vmem %s3085, %s3087
      %v3089 = vpack.c.bf16 %v3084, %v945
      %3090 = vst [vmem:[%s3088] sm:$0xff] %v3089
      %s3091 = scalar_lea.vmem %s150, 9096
      %v3092 = vld [vmem:[%s3091] sm:$0xff]
      %s3093 = scalar_lea.vmem %s176, 4548
      %s3095 = ssub.s32 0, 4
      %s3096 = scalar_lea.vmem %s3093, %s3095
      %v3097 = vpack.c.bf16 %v3092, %v948
      %3098 = vst [vmem:[%s3096] sm:$0xff] %v3097
      %s3099 = scalar_lea.vmem %s150, 2952
      %v3100 = vld [vmem:[%s3099] sm:$0xff]
      %s3101 = scalar_lea.vmem %s176, 7620
      %s3103 = ssub.s32 0, 4
      %s3104 = scalar_lea.vmem %s3101, %s3103
      %v3105 = vpack.c.bf16 %v3100, %v951
      %3106 = vst [vmem:[%s3104] sm:$0xff] %v3105
      %s3107 = scalar_lea.vmem %s150, 13192
      %v3108 = vld [vmem:[%s3107] sm:$0xff]
      %s3109 = scalar_lea.vmem %s176, 2500
      %s3111 = ssub.s32 0, 4
      %s3112 = scalar_lea.vmem %s3109, %s3111
      %v3113 = vpack.c.bf16 %v3108, %v954
      %3114 = vst [vmem:[%s3112] sm:$0xff] %v3113
      %s3115 = scalar_lea.vmem %s150, 7048
      %v3116 = vld [vmem:[%s3115] sm:$0xff]
      %s3117 = scalar_lea.vmem %s176, 5572
      %s3119 = ssub.s32 0, 4
      %s3120 = scalar_lea.vmem %s3117, %s3119
      %v3121 = vpack.c.bf16 %v3116, %v957
      %3122 = vst [vmem:[%s3120] sm:$0xff] %v3121
      %s3123 = scalar_lea.vmem %s150, 904
      %v3124 = vld [vmem:[%s3123] sm:$0xff]
      %s3125 = scalar_lea.vmem %s176, 8644
      %s3127 = ssub.s32 0, 4
      %s3128 = scalar_lea.vmem %s3125, %s3127
      %v3129 = vpack.c.bf16 %v3124, %v960
      %3130 = vst [vmem:[%s3128] sm:$0xff] %v3129
      %s3131 = scalar_lea.vmem %s150, 17320
      %v3132 = vld [vmem:[%s3131] sm:$0xff]
      %s3133 = scalar_lea.vmem %s176, 468
      %s3135 = ssub.s32 0, 4
      %s3136 = scalar_lea.vmem %s3133, %s3135
      %v3137 = vpack.c.bf16 %v3132, %v963
      %3138 = vst [vmem:[%s3136] sm:$0xff] %v3137
      %s3139 = scalar_lea.vmem %s150, 11176
      %v3140 = vld [vmem:[%s3139] sm:$0xff]
      %s3141 = scalar_lea.vmem %s176, 3540
      %s3143 = ssub.s32 0, 4
      %s3144 = scalar_lea.vmem %s3141, %s3143
      %v3145 = vpack.c.bf16 %v3140, %v966
      %3146 = vst [vmem:[%s3144] sm:$0xff] %v3145
      %s3147 = scalar_lea.vmem %s150, 5032
      %v3148 = vld [vmem:[%s3147] sm:$0xff]
      %s3149 = scalar_lea.vmem %s176, 6612
      %s3151 = ssub.s32 0, 4
      %s3152 = scalar_lea.vmem %s3149, %s3151
      %v3153 = vpack.c.bf16 %v3148, %v969
      %3154 = vst [vmem:[%s3152] sm:$0xff] %v3153
      %s3155 = scalar_lea.vmem %s150, 15272
      %v3156 = vld [vmem:[%s3155] sm:$0xff]
      %s3157 = scalar_lea.vmem %s176, 1492
      %s3159 = ssub.s32 0, 4
      %s3160 = scalar_lea.vmem %s3157, %s3159
      %v3161 = vpack.c.bf16 %v3156, %v972
      %3162 = vst [vmem:[%s3160] sm:$0xff] %v3161
      %s3163 = scalar_lea.vmem %s150, 9128
      %v3164 = vld [vmem:[%s3163] sm:$0xff]
      %s3165 = scalar_lea.vmem %s176, 4564
      %s3167 = ssub.s32 0, 4
      %s3168 = scalar_lea.vmem %s3165, %s3167
      %v3169 = vpack.c.bf16 %v3164, %v975
      %3170 = vst [vmem:[%s3168] sm:$0xff] %v3169
      %s3171 = scalar_lea.vmem %s150, 2984
      %v3172 = vld [vmem:[%s3171] sm:$0xff]
      %s3173 = scalar_lea.vmem %s176, 7636
      %s3175 = ssub.s32 0, 4
      %s3176 = scalar_lea.vmem %s3173, %s3175
      %v3177 = vpack.c.bf16 %v3172, %v978
      %3178 = vst [vmem:[%s3176] sm:$0xff] %v3177
      %s3179 = scalar_lea.vmem %s150, 13224
      %v3180 = vld [vmem:[%s3179] sm:$0xff]
      %s3181 = scalar_lea.vmem %s176, 2516
      %s3183 = ssub.s32 0, 4
      %s3184 = scalar_lea.vmem %s3181, %s3183
      %v3185 = vpack.c.bf16 %v3180, %v981
      %3186 = vst [vmem:[%s3184] sm:$0xff] %v3185
      %s3187 = scalar_lea.vmem %s150, 7080
      %v3188 = vld [vmem:[%s3187] sm:$0xff]
      %s3189 = scalar_lea.vmem %s176, 5588
      %s3191 = ssub.s32 0, 4
      %s3192 = scalar_lea.vmem %s3189, %s3191
      %v3193 = vpack.c.bf16 %v3188, %v984
      %3194 = vst [vmem:[%s3192] sm:$0xff] %v3193
      %s3195 = scalar_lea.vmem %s150, 936
      %v3196 = vld [vmem:[%s3195] sm:$0xff]
      %s3197 = scalar_lea.vmem %s176, 8660
      %s3199 = ssub.s32 0, 4
      %s3200 = scalar_lea.vmem %s3197, %s3199
      %v3201 = vpack.c.bf16 %v3196, %v987
      %3202 = vst [vmem:[%s3200] sm:$0xff] %v3201
      %s3203 = scalar_lea.vmem %s150, 17352
      %v3204 = vld [vmem:[%s3203] sm:$0xff]
      %s3205 = scalar_lea.vmem %s176, 484
      %s3207 = ssub.s32 0, 4
      %s3208 = scalar_lea.vmem %s3205, %s3207
      %v3209 = vpack.c.bf16 %v3204, %v990
      %3210 = vst [vmem:[%s3208] sm:$0xff] %v3209
      %s3211 = scalar_lea.vmem %s150, 11208
      %v3212 = vld [vmem:[%s3211] sm:$0xff]
      %s3213 = scalar_lea.vmem %s176, 3556
      %s3215 = ssub.s32 0, 4
      %s3216 = scalar_lea.vmem %s3213, %s3215
      %v3217 = vpack.c.bf16 %v3212, %v993
      %3218 = vst [vmem:[%s3216] sm:$0xff] %v3217
      %s3219 = scalar_lea.vmem %s150, 5064
      %v3220 = vld [vmem:[%s3219] sm:$0xff]
      %s3221 = scalar_lea.vmem %s176, 6628
      %s3223 = ssub.s32 0, 4
      %s3224 = scalar_lea.vmem %s3221, %s3223
      %v3225 = vpack.c.bf16 %v3220, %v996
      %3226 = vst [vmem:[%s3224] sm:$0xff] %v3225
      %s3227 = scalar_lea.vmem %s150, 15304
      %v3228 = vld [vmem:[%s3227] sm:$0xff]
      %s3229 = scalar_lea.vmem %s176, 1508
      %s3231 = ssub.s32 0, 4
      %s3232 = scalar_lea.vmem %s3229, %s3231
      %v3233 = vpack.c.bf16 %v3228, %v999
      %3234 = vst [vmem:[%s3232] sm:$0xff] %v3233
      %s3235 = scalar_lea.vmem %s150, 9160
      %v3236 = vld [vmem:[%s3235] sm:$0xff]
      %s3237 = scalar_lea.vmem %s176, 4580
      %s3239 = ssub.s32 0, 4
      %s3240 = scalar_lea.vmem %s3237, %s3239
      %v3241 = vpack.c.bf16 %v3236, %v1002
      %3242 = vst [vmem:[%s3240] sm:$0xff] %v3241
      %s3243 = scalar_lea.vmem %s150, 3016
      %v3244 = vld [vmem:[%s3243] sm:$0xff]
      %s3245 = scalar_lea.vmem %s176, 7652
      %s3247 = ssub.s32 0, 4
      %s3248 = scalar_lea.vmem %s3245, %s3247
      %v3249 = vpack.c.bf16 %v3244, %v1005
      %3250 = vst [vmem:[%s3248] sm:$0xff] %v3249
      %s3251 = scalar_lea.vmem %s150, 13256
      %v3252 = vld [vmem:[%s3251] sm:$0xff]
      %s3253 = scalar_lea.vmem %s176, 2532
      %s3255 = ssub.s32 0, 4
      %s3256 = scalar_lea.vmem %s3253, %s3255
      %v3257 = vpack.c.bf16 %v3252, %v1008
      %3258 = vst [vmem:[%s3256] sm:$0xff] %v3257
      %s3259 = scalar_lea.vmem %s150, 7112
      %v3260 = vld [vmem:[%s3259] sm:$0xff]
      %s3261 = scalar_lea.vmem %s176, 5604
      %s3263 = ssub.s32 0, 4
      %s3264 = scalar_lea.vmem %s3261, %s3263
      %v3265 = vpack.c.bf16 %v3260, %v1011
      %3266 = vst [vmem:[%s3264] sm:$0xff] %v3265
      %s3267 = scalar_lea.vmem %s150, 968
      %v3268 = vld [vmem:[%s3267] sm:$0xff]
      %s3269 = scalar_lea.vmem %s176, 8676
      %s3271 = ssub.s32 0, 4
      %s3272 = scalar_lea.vmem %s3269, %s3271
      %v3273 = vpack.c.bf16 %v3268, %v1014
      %3274 = vst [vmem:[%s3272] sm:$0xff] %v3273
      %s3275 = scalar_lea.vmem %s150, 17384
      %v3276 = vld [vmem:[%s3275] sm:$0xff]
      %s3277 = scalar_lea.vmem %s176, 500
      %s3279 = ssub.s32 0, 4
      %s3280 = scalar_lea.vmem %s3277, %s3279
      %v3281 = vpack.c.bf16 %v3276, %v1017
      %3282 = vst [vmem:[%s3280] sm:$0xff] %v3281
      %s3283 = scalar_lea.vmem %s150, 11240
      %v3284 = vld [vmem:[%s3283] sm:$0xff]
      %s3285 = scalar_lea.vmem %s176, 3572
      %s3287 = ssub.s32 0, 4
      %s3288 = scalar_lea.vmem %s3285, %s3287
      %v3289 = vpack.c.bf16 %v3284, %v1020
      %3290 = vst [vmem:[%s3288] sm:$0xff] %v3289
      %s3291 = scalar_lea.vmem %s150, 5096
      %v3292 = vld [vmem:[%s3291] sm:$0xff]
      %s3293 = scalar_lea.vmem %s176, 6644
      %s3295 = ssub.s32 0, 4
      %s3296 = scalar_lea.vmem %s3293, %s3295
      %v3297 = vpack.c.bf16 %v3292, %v1023
      %3298 = vst [vmem:[%s3296] sm:$0xff] %v3297
      %s3299 = scalar_lea.vmem %s150, 15336
      %v3300 = vld [vmem:[%s3299] sm:$0xff]
      %s3301 = scalar_lea.vmem %s176, 1524
      %s3303 = ssub.s32 0, 4
      %s3304 = scalar_lea.vmem %s3301, %s3303
      %v3305 = vpack.c.bf16 %v3300, %v1026
      %3306 = vst [vmem:[%s3304] sm:$0xff] %v3305
      %s3307 = scalar_lea.vmem %s150, 9192
      %v3308 = vld [vmem:[%s3307] sm:$0xff]
      %s3309 = scalar_lea.vmem %s176, 4596
      %s3311 = ssub.s32 0, 4
      %s3312 = scalar_lea.vmem %s3309, %s3311
      %v3313 = vpack.c.bf16 %v3308, %v1029
      %3314 = vst [vmem:[%s3312] sm:$0xff] %v3313
      %s3315 = scalar_lea.vmem %s150, 3048
      %v3316 = vld [vmem:[%s3315] sm:$0xff]
      %s3317 = scalar_lea.vmem %s176, 7668
      %s3319 = ssub.s32 0, 4
      %s3320 = scalar_lea.vmem %s3317, %s3319
      %v3321 = vpack.c.bf16 %v3316, %v1032
      %3322 = vst [vmem:[%s3320] sm:$0xff] %v3321
      %s3323 = scalar_lea.vmem %s150, 13288
      %v3324 = vld [vmem:[%s3323] sm:$0xff]
      %s3325 = scalar_lea.vmem %s176, 2548
      %s3327 = ssub.s32 0, 4
      %s3328 = scalar_lea.vmem %s3325, %s3327
      %v3329 = vpack.c.bf16 %v3324, %v1035
      %3330 = vst [vmem:[%s3328] sm:$0xff] %v3329
      %s3331 = scalar_lea.vmem %s150, 7144
      %v3332 = vld [vmem:[%s3331] sm:$0xff]
      %s3333 = scalar_lea.vmem %s176, 5620
      %s3335 = ssub.s32 0, 4
      %s3336 = scalar_lea.vmem %s3333, %s3335
      %v3337 = vpack.c.bf16 %v3332, %v1038
      %3338 = vst [vmem:[%s3336] sm:$0xff] %v3337
      %s3339 = scalar_lea.vmem %s150, 1000
      %v3340 = vld [vmem:[%s3339] sm:$0xff]
      %s3341 = scalar_lea.vmem %s176, 8692
      %s3343 = ssub.s32 0, 4
      %s3344 = scalar_lea.vmem %s3341, %s3343
      %v3345 = vpack.c.bf16 %v3340, %v1041
      %3346 = vst [vmem:[%s3344] sm:$0xff] %v3345
      %s3347 = scalar_lea.vmem %s150, 16400
      %v3348 = vld [vmem:[%s3347] sm:$0xff]
      %s3349 = scalar_lea.vmem %s176, 8
      %s3350 = scalar_lea.vmem %s150, 10256
      %v3351 = vld [vmem:[%s3350] sm:$0xff]
      %s3352 = scalar_lea.vmem %s176, 3080
      %s3353 = scalar_lea.vmem %s150, 4112
      %v3354 = vld [vmem:[%s3353] sm:$0xff]
      %s3355 = scalar_lea.vmem %s176, 6152
      %s3356 = scalar_lea.vmem %s150, 14352
      %v3357 = vld [vmem:[%s3356] sm:$0xff]
      %s3358 = scalar_lea.vmem %s176, 1032
      %s3359 = scalar_lea.vmem %s150, 8208
      %v3360 = vld [vmem:[%s3359] sm:$0xff]
      %s3361 = scalar_lea.vmem %s176, 4104
      %s3362 = scalar_lea.vmem %s150, 2064
      %v3363 = vld [vmem:[%s3362] sm:$0xff]
      %s3364 = scalar_lea.vmem %s176, 7176
      %s3365 = scalar_lea.vmem %s150, 12304
      %v3366 = vld [vmem:[%s3365] sm:$0xff]
      %s3367 = scalar_lea.vmem %s176, 2056
      %s3368 = scalar_lea.vmem %s150, 6160
      %v3369 = vld [vmem:[%s3368] sm:$0xff]
      %s3370 = scalar_lea.vmem %s176, 5128
      %s3371 = scalar_lea.vmem %s150, 16
      %v3372 = vld [vmem:[%s3371] sm:$0xff]
      %s3373 = scalar_lea.vmem %s176, 8200
      %s3374 = scalar_lea.vmem %s150, 16432
      %v3375 = vld [vmem:[%s3374] sm:$0xff]
      %s3376 = scalar_lea.vmem %s176, 24
      %s3377 = scalar_lea.vmem %s150, 10288
      %v3378 = vld [vmem:[%s3377] sm:$0xff]
      %s3379 = scalar_lea.vmem %s176, 3096
      %s3380 = scalar_lea.vmem %s150, 4144
      %v3381 = vld [vmem:[%s3380] sm:$0xff]
      %s3382 = scalar_lea.vmem %s176, 6168
      %s3383 = scalar_lea.vmem %s150, 14384
      %v3384 = vld [vmem:[%s3383] sm:$0xff]
      %s3385 = scalar_lea.vmem %s176, 1048
      %s3386 = scalar_lea.vmem %s150, 8240
      %v3387 = vld [vmem:[%s3386] sm:$0xff]
      %s3388 = scalar_lea.vmem %s176, 4120
      %s3389 = scalar_lea.vmem %s150, 2096
      %v3390 = vld [vmem:[%s3389] sm:$0xff]
      %s3391 = scalar_lea.vmem %s176, 7192
      %s3392 = scalar_lea.vmem %s150, 12336
      %v3393 = vld [vmem:[%s3392] sm:$0xff]
      %s3394 = scalar_lea.vmem %s176, 2072
      %s3395 = scalar_lea.vmem %s150, 6192
      %v3396 = vld [vmem:[%s3395] sm:$0xff]
      %s3397 = scalar_lea.vmem %s176, 5144
      %s3398 = scalar_lea.vmem %s150, 48
      %v3399 = vld [vmem:[%s3398] sm:$0xff]
      %s3400 = scalar_lea.vmem %s176, 8216
      %s3401 = scalar_lea.vmem %s150, 16464
      %v3402 = vld [vmem:[%s3401] sm:$0xff]
      %s3403 = scalar_lea.vmem %s176, 40
      %s3404 = scalar_lea.vmem %s150, 10320
      %v3405 = vld [vmem:[%s3404] sm:$0xff]
      %s3406 = scalar_lea.vmem %s176, 3112
      %s3407 = scalar_lea.vmem %s150, 4176
      %v3408 = vld [vmem:[%s3407] sm:$0xff]
      %s3409 = scalar_lea.vmem %s176, 6184
      %s3410 = scalar_lea.vmem %s150, 14416
      %v3411 = vld [vmem:[%s3410] sm:$0xff]
      %s3412 = scalar_lea.vmem %s176, 1064
      %s3413 = scalar_lea.vmem %s150, 8272
      %v3414 = vld [vmem:[%s3413] sm:$0xff]
      %s3415 = scalar_lea.vmem %s176, 4136
      %s3416 = scalar_lea.vmem %s150, 2128
      %v3417 = vld [vmem:[%s3416] sm:$0xff]
      %s3418 = scalar_lea.vmem %s176, 7208
      %s3419 = scalar_lea.vmem %s150, 12368
      %v3420 = vld [vmem:[%s3419] sm:$0xff]
      %s3421 = scalar_lea.vmem %s176, 2088
      %s3422 = scalar_lea.vmem %s150, 6224
      %v3423 = vld [vmem:[%s3422] sm:$0xff]
      %s3424 = scalar_lea.vmem %s176, 5160
      %s3425 = scalar_lea.vmem %s150, 80
      %v3426 = vld [vmem:[%s3425] sm:$0xff]
      %s3427 = scalar_lea.vmem %s176, 8232
      %s3428 = scalar_lea.vmem %s150, 16496
      %v3429 = vld [vmem:[%s3428] sm:$0xff]
      %s3430 = scalar_lea.vmem %s176, 56
      %s3431 = scalar_lea.vmem %s150, 10352
      %v3432 = vld [vmem:[%s3431] sm:$0xff]
      %s3433 = scalar_lea.vmem %s176, 3128
      %s3434 = scalar_lea.vmem %s150, 4208
      %v3435 = vld [vmem:[%s3434] sm:$0xff]
      %s3436 = scalar_lea.vmem %s176, 6200
      %s3437 = scalar_lea.vmem %s150, 14448
      %v3438 = vld [vmem:[%s3437] sm:$0xff]
      %s3439 = scalar_lea.vmem %s176, 1080
      %s3440 = scalar_lea.vmem %s150, 8304
      %v3441 = vld [vmem:[%s3440] sm:$0xff]
      %s3442 = scalar_lea.vmem %s176, 4152
      %s3443 = scalar_lea.vmem %s150, 2160
      %v3444 = vld [vmem:[%s3443] sm:$0xff]
      %s3445 = scalar_lea.vmem %s176, 7224
      %s3446 = scalar_lea.vmem %s150, 12400
      %v3447 = vld [vmem:[%s3446] sm:$0xff]
      %s3448 = scalar_lea.vmem %s176, 2104
      %s3449 = scalar_lea.vmem %s150, 6256
      %v3450 = vld [vmem:[%s3449] sm:$0xff]
      %s3451 = scalar_lea.vmem %s176, 5176
      %s3452 = scalar_lea.vmem %s150, 112
      %v3453 = vld [vmem:[%s3452] sm:$0xff]
      %s3454 = scalar_lea.vmem %s176, 8248
      %s3455 = scalar_lea.vmem %s150, 16528
      %v3456 = vld [vmem:[%s3455] sm:$0xff]
      %s3457 = scalar_lea.vmem %s176, 72
      %s3458 = scalar_lea.vmem %s150, 10384
      %v3459 = vld [vmem:[%s3458] sm:$0xff]
      %s3460 = scalar_lea.vmem %s176, 3144
      %s3461 = scalar_lea.vmem %s150, 4240
      %v3462 = vld [vmem:[%s3461] sm:$0xff]
      %s3463 = scalar_lea.vmem %s176, 6216
      %s3464 = scalar_lea.vmem %s150, 14480
      %v3465 = vld [vmem:[%s3464] sm:$0xff]
      %s3466 = scalar_lea.vmem %s176, 1096
      %s3467 = scalar_lea.vmem %s150, 8336
      %v3468 = vld [vmem:[%s3467] sm:$0xff]
      %s3469 = scalar_lea.vmem %s176, 4168
      %s3470 = scalar_lea.vmem %s150, 2192
      %v3471 = vld [vmem:[%s3470] sm:$0xff]
      %s3472 = scalar_lea.vmem %s176, 7240
      %s3473 = scalar_lea.vmem %s150, 12432
      %v3474 = vld [vmem:[%s3473] sm:$0xff]
      %s3475 = scalar_lea.vmem %s176, 2120
      %s3476 = scalar_lea.vmem %s150, 6288
      %v3477 = vld [vmem:[%s3476] sm:$0xff]
      %s3478 = scalar_lea.vmem %s176, 5192
      %s3479 = scalar_lea.vmem %s150, 144
      %v3480 = vld [vmem:[%s3479] sm:$0xff]
      %s3481 = scalar_lea.vmem %s176, 8264
      %s3482 = scalar_lea.vmem %s150, 16560
      %v3483 = vld [vmem:[%s3482] sm:$0xff]
      %s3484 = scalar_lea.vmem %s176, 88
      %s3485 = scalar_lea.vmem %s150, 10416
      %v3486 = vld [vmem:[%s3485] sm:$0xff]
      %s3487 = scalar_lea.vmem %s176, 3160
      %s3488 = scalar_lea.vmem %s150, 4272
      %v3489 = vld [vmem:[%s3488] sm:$0xff]
      %s3490 = scalar_lea.vmem %s176, 6232
      %s3491 = scalar_lea.vmem %s150, 14512
      %v3492 = vld [vmem:[%s3491] sm:$0xff]
      %s3493 = scalar_lea.vmem %s176, 1112
      %s3494 = scalar_lea.vmem %s150, 8368
      %v3495 = vld [vmem:[%s3494] sm:$0xff]
      %s3496 = scalar_lea.vmem %s176, 4184
      %s3497 = scalar_lea.vmem %s150, 2224
      %v3498 = vld [vmem:[%s3497] sm:$0xff]
      %s3499 = scalar_lea.vmem %s176, 7256
      %s3500 = scalar_lea.vmem %s150, 12464
      %v3501 = vld [vmem:[%s3500] sm:$0xff]
      %s3502 = scalar_lea.vmem %s176, 2136
      %s3503 = scalar_lea.vmem %s150, 6320
      %v3504 = vld [vmem:[%s3503] sm:$0xff]
      %s3505 = scalar_lea.vmem %s176, 5208
      %s3506 = scalar_lea.vmem %s150, 176
      %v3507 = vld [vmem:[%s3506] sm:$0xff]
      %s3508 = scalar_lea.vmem %s176, 8280
      %s3509 = scalar_lea.vmem %s150, 16592
      %v3510 = vld [vmem:[%s3509] sm:$0xff]
      %s3511 = scalar_lea.vmem %s176, 104
      %s3512 = scalar_lea.vmem %s150, 10448
      %v3513 = vld [vmem:[%s3512] sm:$0xff]
      %s3514 = scalar_lea.vmem %s176, 3176
      %s3515 = scalar_lea.vmem %s150, 4304
      %v3516 = vld [vmem:[%s3515] sm:$0xff]
      %s3517 = scalar_lea.vmem %s176, 6248
      %s3518 = scalar_lea.vmem %s150, 14544
      %v3519 = vld [vmem:[%s3518] sm:$0xff]
      %s3520 = scalar_lea.vmem %s176, 1128
      %s3521 = scalar_lea.vmem %s150, 8400
      %v3522 = vld [vmem:[%s3521] sm:$0xff]
      %s3523 = scalar_lea.vmem %s176, 4200
      %s3524 = scalar_lea.vmem %s150, 2256
      %v3525 = vld [vmem:[%s3524] sm:$0xff]
      %s3526 = scalar_lea.vmem %s176, 7272
      %s3527 = scalar_lea.vmem %s150, 12496
      %v3528 = vld [vmem:[%s3527] sm:$0xff]
      %s3529 = scalar_lea.vmem %s176, 2152
      %s3530 = scalar_lea.vmem %s150, 6352
      %v3531 = vld [vmem:[%s3530] sm:$0xff]
      %s3532 = scalar_lea.vmem %s176, 5224
      %s3533 = scalar_lea.vmem %s150, 208
      %v3534 = vld [vmem:[%s3533] sm:$0xff]
      %s3535 = scalar_lea.vmem %s176, 8296
      %s3536 = scalar_lea.vmem %s150, 16624
      %v3537 = vld [vmem:[%s3536] sm:$0xff]
      %s3538 = scalar_lea.vmem %s176, 120
      %s3539 = scalar_lea.vmem %s150, 10480
      %v3540 = vld [vmem:[%s3539] sm:$0xff]
      %s3541 = scalar_lea.vmem %s176, 3192
      %s3542 = scalar_lea.vmem %s150, 4336
      %v3543 = vld [vmem:[%s3542] sm:$0xff]
      %s3544 = scalar_lea.vmem %s176, 6264
      %s3545 = scalar_lea.vmem %s150, 14576
      %v3546 = vld [vmem:[%s3545] sm:$0xff]
      %s3547 = scalar_lea.vmem %s176, 1144
      %s3548 = scalar_lea.vmem %s150, 8432
      %v3549 = vld [vmem:[%s3548] sm:$0xff]
      %s3550 = scalar_lea.vmem %s176, 4216
      %s3551 = scalar_lea.vmem %s150, 2288
      %v3552 = vld [vmem:[%s3551] sm:$0xff]
      %s3553 = scalar_lea.vmem %s176, 7288
      %s3554 = scalar_lea.vmem %s150, 12528
      %v3555 = vld [vmem:[%s3554] sm:$0xff]
      %s3556 = scalar_lea.vmem %s176, 2168
      %s3557 = scalar_lea.vmem %s150, 6384
      %v3558 = vld [vmem:[%s3557] sm:$0xff]
      %s3559 = scalar_lea.vmem %s176, 5240
      %s3560 = scalar_lea.vmem %s150, 240
      %v3561 = vld [vmem:[%s3560] sm:$0xff]
      %s3562 = scalar_lea.vmem %s176, 8312
      %s3563 = scalar_lea.vmem %s150, 16656
      %v3564 = vld [vmem:[%s3563] sm:$0xff]
      %s3565 = scalar_lea.vmem %s176, 136
      %s3566 = scalar_lea.vmem %s150, 10512
      %v3567 = vld [vmem:[%s3566] sm:$0xff]
      %s3568 = scalar_lea.vmem %s176, 3208
      %s3569 = scalar_lea.vmem %s150, 4368
      %v3570 = vld [vmem:[%s3569] sm:$0xff]
      %s3571 = scalar_lea.vmem %s176, 6280
      %s3572 = scalar_lea.vmem %s150, 14608
      %v3573 = vld [vmem:[%s3572] sm:$0xff]
      %s3574 = scalar_lea.vmem %s176, 1160
      %s3575 = scalar_lea.vmem %s150, 8464
      %v3576 = vld [vmem:[%s3575] sm:$0xff]
      %s3577 = scalar_lea.vmem %s176, 4232
      %s3578 = scalar_lea.vmem %s150, 2320
      %v3579 = vld [vmem:[%s3578] sm:$0xff]
      %s3580 = scalar_lea.vmem %s176, 7304
      %s3581 = scalar_lea.vmem %s150, 12560
      %v3582 = vld [vmem:[%s3581] sm:$0xff]
      %s3583 = scalar_lea.vmem %s176, 2184
      %s3584 = scalar_lea.vmem %s150, 6416
      %v3585 = vld [vmem:[%s3584] sm:$0xff]
      %s3586 = scalar_lea.vmem %s176, 5256
      %s3587 = scalar_lea.vmem %s150, 272
      %v3588 = vld [vmem:[%s3587] sm:$0xff]
      %s3589 = scalar_lea.vmem %s176, 8328
      %s3590 = scalar_lea.vmem %s150, 16688
      %v3591 = vld [vmem:[%s3590] sm:$0xff]
      %s3592 = scalar_lea.vmem %s176, 152
      %s3593 = scalar_lea.vmem %s150, 10544
      %v3594 = vld [vmem:[%s3593] sm:$0xff]
      %s3595 = scalar_lea.vmem %s176, 3224
      %s3596 = scalar_lea.vmem %s150, 4400
      %v3597 = vld [vmem:[%s3596] sm:$0xff]
      %s3598 = scalar_lea.vmem %s176, 6296
      %s3599 = scalar_lea.vmem %s150, 14640
      %v3600 = vld [vmem:[%s3599] sm:$0xff]
      %s3601 = scalar_lea.vmem %s176, 1176
      %s3602 = scalar_lea.vmem %s150, 8496
      %v3603 = vld [vmem:[%s3602] sm:$0xff]
      %s3604 = scalar_lea.vmem %s176, 4248
      %s3605 = scalar_lea.vmem %s150, 2352
      %v3606 = vld [vmem:[%s3605] sm:$0xff]
      %s3607 = scalar_lea.vmem %s176, 7320
      %s3608 = scalar_lea.vmem %s150, 12592
      %v3609 = vld [vmem:[%s3608] sm:$0xff]
      %s3610 = scalar_lea.vmem %s176, 2200
      %s3611 = scalar_lea.vmem %s150, 6448
      %v3612 = vld [vmem:[%s3611] sm:$0xff]
      %s3613 = scalar_lea.vmem %s176, 5272
      %s3614 = scalar_lea.vmem %s150, 304
      %v3615 = vld [vmem:[%s3614] sm:$0xff]
      %s3616 = scalar_lea.vmem %s176, 8344
      %s3617 = scalar_lea.vmem %s150, 16720
      %v3618 = vld [vmem:[%s3617] sm:$0xff]
      %s3619 = scalar_lea.vmem %s176, 168
      %s3620 = scalar_lea.vmem %s150, 10576
      %v3621 = vld [vmem:[%s3620] sm:$0xff]
      %s3622 = scalar_lea.vmem %s176, 3240
      %s3623 = scalar_lea.vmem %s150, 4432
      %v3624 = vld [vmem:[%s3623] sm:$0xff]
      %s3625 = scalar_lea.vmem %s176, 6312
      %s3626 = scalar_lea.vmem %s150, 14672
      %v3627 = vld [vmem:[%s3626] sm:$0xff]
      %s3628 = scalar_lea.vmem %s176, 1192
      %s3629 = scalar_lea.vmem %s150, 8528
      %v3630 = vld [vmem:[%s3629] sm:$0xff]
      %s3631 = scalar_lea.vmem %s176, 4264
      %s3632 = scalar_lea.vmem %s150, 2384
      %v3633 = vld [vmem:[%s3632] sm:$0xff]
      %s3634 = scalar_lea.vmem %s176, 7336
      %s3635 = scalar_lea.vmem %s150, 12624
      %v3636 = vld [vmem:[%s3635] sm:$0xff]
      %s3637 = scalar_lea.vmem %s176, 2216
      %s3638 = scalar_lea.vmem %s150, 6480
      %v3639 = vld [vmem:[%s3638] sm:$0xff]
      %s3640 = scalar_lea.vmem %s176, 5288
      %s3641 = scalar_lea.vmem %s150, 336
      %v3642 = vld [vmem:[%s3641] sm:$0xff]
      %s3643 = scalar_lea.vmem %s176, 8360
      %s3644 = scalar_lea.vmem %s150, 16752
      %v3645 = vld [vmem:[%s3644] sm:$0xff]
      %s3646 = scalar_lea.vmem %s176, 184
      %s3647 = scalar_lea.vmem %s150, 10608
      %v3648 = vld [vmem:[%s3647] sm:$0xff]
      %s3649 = scalar_lea.vmem %s176, 3256
      %s3650 = scalar_lea.vmem %s150, 4464
      %v3651 = vld [vmem:[%s3650] sm:$0xff]
      %s3652 = scalar_lea.vmem %s176, 6328
      %s3653 = scalar_lea.vmem %s150, 14704
      %v3654 = vld [vmem:[%s3653] sm:$0xff]
      %s3655 = scalar_lea.vmem %s176, 1208
      %s3656 = scalar_lea.vmem %s150, 8560
      %v3657 = vld [vmem:[%s3656] sm:$0xff]
      %s3658 = scalar_lea.vmem %s176, 4280
      %s3659 = scalar_lea.vmem %s150, 2416
      %v3660 = vld [vmem:[%s3659] sm:$0xff]
      %s3661 = scalar_lea.vmem %s176, 7352
      %s3662 = scalar_lea.vmem %s150, 12656
      %v3663 = vld [vmem:[%s3662] sm:$0xff]
      %s3664 = scalar_lea.vmem %s176, 2232
      %s3665 = scalar_lea.vmem %s150, 6512
      %v3666 = vld [vmem:[%s3665] sm:$0xff]
      %s3667 = scalar_lea.vmem %s176, 5304
      %s3668 = scalar_lea.vmem %s150, 368
      %v3669 = vld [vmem:[%s3668] sm:$0xff]
      %s3670 = scalar_lea.vmem %s176, 8376
      %s3671 = scalar_lea.vmem %s150, 16784
      %v3672 = vld [vmem:[%s3671] sm:$0xff]
      %s3673 = scalar_lea.vmem %s176, 200
      %s3674 = scalar_lea.vmem %s150, 10640
      %v3675 = vld [vmem:[%s3674] sm:$0xff]
      %s3676 = scalar_lea.vmem %s176, 3272
      %s3677 = scalar_lea.vmem %s150, 4496
      %v3678 = vld [vmem:[%s3677] sm:$0xff]
      %s3679 = scalar_lea.vmem %s176, 6344
      %s3680 = scalar_lea.vmem %s150, 14736
      %v3681 = vld [vmem:[%s3680] sm:$0xff]
      %s3682 = scalar_lea.vmem %s176, 1224
      %s3683 = scalar_lea.vmem %s150, 8592
      %v3684 = vld [vmem:[%s3683] sm:$0xff]
      %s3685 = scalar_lea.vmem %s176, 4296
      %s3686 = scalar_lea.vmem %s150, 2448
      %v3687 = vld [vmem:[%s3686] sm:$0xff]
      %s3688 = scalar_lea.vmem %s176, 7368
      %s3689 = scalar_lea.vmem %s150, 12688
      %v3690 = vld [vmem:[%s3689] sm:$0xff]
      %s3691 = scalar_lea.vmem %s176, 2248
      %s3692 = scalar_lea.vmem %s150, 6544
      %v3693 = vld [vmem:[%s3692] sm:$0xff]
      %s3694 = scalar_lea.vmem %s176, 5320
      %s3695 = scalar_lea.vmem %s150, 400
      %v3696 = vld [vmem:[%s3695] sm:$0xff]
      %s3697 = scalar_lea.vmem %s176, 8392
      %s3698 = scalar_lea.vmem %s150, 16816
      %v3699 = vld [vmem:[%s3698] sm:$0xff]
      %s3700 = scalar_lea.vmem %s176, 216
      %s3701 = scalar_lea.vmem %s150, 10672
      %v3702 = vld [vmem:[%s3701] sm:$0xff]
      %s3703 = scalar_lea.vmem %s176, 3288
      %s3704 = scalar_lea.vmem %s150, 4528
      %v3705 = vld [vmem:[%s3704] sm:$0xff]
      %s3706 = scalar_lea.vmem %s176, 6360
      %s3707 = scalar_lea.vmem %s150, 14768
      %v3708 = vld [vmem:[%s3707] sm:$0xff]
      %s3709 = scalar_lea.vmem %s176, 1240
      %s3710 = scalar_lea.vmem %s150, 8624
      %v3711 = vld [vmem:[%s3710] sm:$0xff]
      %s3712 = scalar_lea.vmem %s176, 4312
      %s3713 = scalar_lea.vmem %s150, 2480
      %v3714 = vld [vmem:[%s3713] sm:$0xff]
      %s3715 = scalar_lea.vmem %s176, 7384
      %s3716 = scalar_lea.vmem %s150, 12720
      %v3717 = vld [vmem:[%s3716] sm:$0xff]
      %s3718 = scalar_lea.vmem %s176, 2264
      %s3719 = scalar_lea.vmem %s150, 6576
      %v3720 = vld [vmem:[%s3719] sm:$0xff]
      %s3721 = scalar_lea.vmem %s176, 5336
      %s3722 = scalar_lea.vmem %s150, 432
      %v3723 = vld [vmem:[%s3722] sm:$0xff]
      %s3724 = scalar_lea.vmem %s176, 8408
      %s3725 = scalar_lea.vmem %s150, 16848
      %v3726 = vld [vmem:[%s3725] sm:$0xff]
      %s3727 = scalar_lea.vmem %s176, 232
      %s3728 = scalar_lea.vmem %s150, 10704
      %v3729 = vld [vmem:[%s3728] sm:$0xff]
      %s3730 = scalar_lea.vmem %s176, 3304
      %s3731 = scalar_lea.vmem %s150, 4560
      %v3732 = vld [vmem:[%s3731] sm:$0xff]
      %s3733 = scalar_lea.vmem %s176, 6376
      %s3734 = scalar_lea.vmem %s150, 14800
      %v3735 = vld [vmem:[%s3734] sm:$0xff]
      %s3736 = scalar_lea.vmem %s176, 1256
      %s3737 = scalar_lea.vmem %s150, 8656
      %v3738 = vld [vmem:[%s3737] sm:$0xff]
      %s3739 = scalar_lea.vmem %s176, 4328
      %s3740 = scalar_lea.vmem %s150, 2512
      %v3741 = vld [vmem:[%s3740] sm:$0xff]
      %s3742 = scalar_lea.vmem %s176, 7400
      %s3743 = scalar_lea.vmem %s150, 12752
      %v3744 = vld [vmem:[%s3743] sm:$0xff]
      %s3745 = scalar_lea.vmem %s176, 2280
      %s3746 = scalar_lea.vmem %s150, 6608
      %v3747 = vld [vmem:[%s3746] sm:$0xff]
      %s3748 = scalar_lea.vmem %s176, 5352
      %s3749 = scalar_lea.vmem %s150, 464
      %v3750 = vld [vmem:[%s3749] sm:$0xff]
      %s3751 = scalar_lea.vmem %s176, 8424
      %s3752 = scalar_lea.vmem %s150, 16880
      %v3753 = vld [vmem:[%s3752] sm:$0xff]
      %s3754 = scalar_lea.vmem %s176, 248
      %s3755 = scalar_lea.vmem %s150, 10736
      %v3756 = vld [vmem:[%s3755] sm:$0xff]
      %s3757 = scalar_lea.vmem %s176, 3320
      %s3758 = scalar_lea.vmem %s150, 4592
      %v3759 = vld [vmem:[%s3758] sm:$0xff]
      %s3760 = scalar_lea.vmem %s176, 6392
      %s3761 = scalar_lea.vmem %s150, 14832
      %v3762 = vld [vmem:[%s3761] sm:$0xff]
      %s3763 = scalar_lea.vmem %s176, 1272
      %s3764 = scalar_lea.vmem %s150, 8688
      %v3765 = vld [vmem:[%s3764] sm:$0xff]
      %s3766 = scalar_lea.vmem %s176, 4344
      %s3767 = scalar_lea.vmem %s150, 2544
      %v3768 = vld [vmem:[%s3767] sm:$0xff]
      %s3769 = scalar_lea.vmem %s176, 7416
      %s3770 = scalar_lea.vmem %s150, 12784
      %v3771 = vld [vmem:[%s3770] sm:$0xff]
      %s3772 = scalar_lea.vmem %s176, 2296
      %s3773 = scalar_lea.vmem %s150, 6640
      %v3774 = vld [vmem:[%s3773] sm:$0xff]
      %s3775 = scalar_lea.vmem %s176, 5368
      %s3776 = scalar_lea.vmem %s150, 496
      %v3777 = vld [vmem:[%s3776] sm:$0xff]
      %s3778 = scalar_lea.vmem %s176, 8440
      %s3779 = scalar_lea.vmem %s150, 16912
      %v3780 = vld [vmem:[%s3779] sm:$0xff]
      %s3781 = scalar_lea.vmem %s176, 264
      %s3782 = scalar_lea.vmem %s150, 10768
      %v3783 = vld [vmem:[%s3782] sm:$0xff]
      %s3784 = scalar_lea.vmem %s176, 3336
      %s3785 = scalar_lea.vmem %s150, 4624
      %v3786 = vld [vmem:[%s3785] sm:$0xff]
      %s3787 = scalar_lea.vmem %s176, 6408
      %s3788 = scalar_lea.vmem %s150, 14864
      %v3789 = vld [vmem:[%s3788] sm:$0xff]
      %s3790 = scalar_lea.vmem %s176, 1288
      %s3791 = scalar_lea.vmem %s150, 8720
      %v3792 = vld [vmem:[%s3791] sm:$0xff]
      %s3793 = scalar_lea.vmem %s176, 4360
      %s3794 = scalar_lea.vmem %s150, 2576
      %v3795 = vld [vmem:[%s3794] sm:$0xff]
      %s3796 = scalar_lea.vmem %s176, 7432
      %s3797 = scalar_lea.vmem %s150, 12816
      %v3798 = vld [vmem:[%s3797] sm:$0xff]
      %s3799 = scalar_lea.vmem %s176, 2312
      %s3800 = scalar_lea.vmem %s150, 6672
      %v3801 = vld [vmem:[%s3800] sm:$0xff]
      %s3802 = scalar_lea.vmem %s176, 5384
      %s3803 = scalar_lea.vmem %s150, 528
      %v3804 = vld [vmem:[%s3803] sm:$0xff]
      %s3805 = scalar_lea.vmem %s176, 8456
      %s3806 = scalar_lea.vmem %s150, 16944
      %v3807 = vld [vmem:[%s3806] sm:$0xff]
      %s3808 = scalar_lea.vmem %s176, 280
      %s3809 = scalar_lea.vmem %s150, 10800
      %v3810 = vld [vmem:[%s3809] sm:$0xff]
      %s3811 = scalar_lea.vmem %s176, 3352
      %s3812 = scalar_lea.vmem %s150, 4656
      %v3813 = vld [vmem:[%s3812] sm:$0xff]
      %s3814 = scalar_lea.vmem %s176, 6424
      %s3815 = scalar_lea.vmem %s150, 14896
      %v3816 = vld [vmem:[%s3815] sm:$0xff]
      %s3817 = scalar_lea.vmem %s176, 1304
      %s3818 = scalar_lea.vmem %s150, 8752
      %v3819 = vld [vmem:[%s3818] sm:$0xff]
      %s3820 = scalar_lea.vmem %s176, 4376
      %s3821 = scalar_lea.vmem %s150, 2608
      %v3822 = vld [vmem:[%s3821] sm:$0xff]
      %s3823 = scalar_lea.vmem %s176, 7448
      %s3824 = scalar_lea.vmem %s150, 12848
      %v3825 = vld [vmem:[%s3824] sm:$0xff]
      %s3826 = scalar_lea.vmem %s176, 2328
      %s3827 = scalar_lea.vmem %s150, 6704
      %v3828 = vld [vmem:[%s3827] sm:$0xff]
      %s3829 = scalar_lea.vmem %s176, 5400
      %s3830 = scalar_lea.vmem %s150, 560
      %v3831 = vld [vmem:[%s3830] sm:$0xff]
      %s3832 = scalar_lea.vmem %s176, 8472
      %s3833 = scalar_lea.vmem %s150, 16976
      %v3834 = vld [vmem:[%s3833] sm:$0xff]
      %s3835 = scalar_lea.vmem %s176, 296
      %s3836 = scalar_lea.vmem %s150, 10832
      %v3837 = vld [vmem:[%s3836] sm:$0xff]
      %s3838 = scalar_lea.vmem %s176, 3368
      %s3839 = scalar_lea.vmem %s150, 4688
      %v3840 = vld [vmem:[%s3839] sm:$0xff]
      %s3841 = scalar_lea.vmem %s176, 6440
      %s3842 = scalar_lea.vmem %s150, 14928
      %v3843 = vld [vmem:[%s3842] sm:$0xff]
      %s3844 = scalar_lea.vmem %s176, 1320
      %s3845 = scalar_lea.vmem %s150, 8784
      %v3846 = vld [vmem:[%s3845] sm:$0xff]
      %s3847 = scalar_lea.vmem %s176, 4392
      %s3848 = scalar_lea.vmem %s150, 2640
      %v3849 = vld [vmem:[%s3848] sm:$0xff]
      %s3850 = scalar_lea.vmem %s176, 7464
      %s3851 = scalar_lea.vmem %s150, 12880
      %v3852 = vld [vmem:[%s3851] sm:$0xff]
      %s3853 = scalar_lea.vmem %s176, 2344
      %s3854 = scalar_lea.vmem %s150, 6736
      %v3855 = vld [vmem:[%s3854] sm:$0xff]
      %s3856 = scalar_lea.vmem %s176, 5416
      %s3857 = scalar_lea.vmem %s150, 592
      %v3858 = vld [vmem:[%s3857] sm:$0xff]
      %s3859 = scalar_lea.vmem %s176, 8488
      %s3860 = scalar_lea.vmem %s150, 17008
      %v3861 = vld [vmem:[%s3860] sm:$0xff]
      %s3862 = scalar_lea.vmem %s176, 312
      %s3863 = scalar_lea.vmem %s150, 10864
      %v3864 = vld [vmem:[%s3863] sm:$0xff]
      %s3865 = scalar_lea.vmem %s176, 3384
      %s3866 = scalar_lea.vmem %s150, 4720
      %v3867 = vld [vmem:[%s3866] sm:$0xff]
      %s3868 = scalar_lea.vmem %s176, 6456
      %s3869 = scalar_lea.vmem %s150, 14960
      %v3870 = vld [vmem:[%s3869] sm:$0xff]
      %s3871 = scalar_lea.vmem %s176, 1336
      %s3872 = scalar_lea.vmem %s150, 8816
      %v3873 = vld [vmem:[%s3872] sm:$0xff]
      %s3874 = scalar_lea.vmem %s176, 4408
      %s3875 = scalar_lea.vmem %s150, 2672
      %v3876 = vld [vmem:[%s3875] sm:$0xff]
      %s3877 = scalar_lea.vmem %s176, 7480
      %s3878 = scalar_lea.vmem %s150, 12912
      %v3879 = vld [vmem:[%s3878] sm:$0xff]
      %s3880 = scalar_lea.vmem %s176, 2360
      %s3881 = scalar_lea.vmem %s150, 6768
      %v3882 = vld [vmem:[%s3881] sm:$0xff]
      %s3883 = scalar_lea.vmem %s176, 5432
      %s3884 = scalar_lea.vmem %s150, 624
      %v3885 = vld [vmem:[%s3884] sm:$0xff]
      %s3886 = scalar_lea.vmem %s176, 8504
      %s3887 = scalar_lea.vmem %s150, 17040
      %v3888 = vld [vmem:[%s3887] sm:$0xff]
      %s3889 = scalar_lea.vmem %s176, 328
      %s3890 = scalar_lea.vmem %s150, 10896
      %v3891 = vld [vmem:[%s3890] sm:$0xff]
      %s3892 = scalar_lea.vmem %s176, 3400
      %s3893 = scalar_lea.vmem %s150, 4752
      %v3894 = vld [vmem:[%s3893] sm:$0xff]
      %s3895 = scalar_lea.vmem %s176, 6472
      %s3896 = scalar_lea.vmem %s150, 14992
      %v3897 = vld [vmem:[%s3896] sm:$0xff]
      %s3898 = scalar_lea.vmem %s176, 1352
      %s3899 = scalar_lea.vmem %s150, 8848
      %v3900 = vld [vmem:[%s3899] sm:$0xff]
      %s3901 = scalar_lea.vmem %s176, 4424
      %s3902 = scalar_lea.vmem %s150, 2704
      %v3903 = vld [vmem:[%s3902] sm:$0xff]
      %s3904 = scalar_lea.vmem %s176, 7496
      %s3905 = scalar_lea.vmem %s150, 12944
      %v3906 = vld [vmem:[%s3905] sm:$0xff]
      %s3907 = scalar_lea.vmem %s176, 2376
      %s3908 = scalar_lea.vmem %s150, 6800
      %v3909 = vld [vmem:[%s3908] sm:$0xff]
      %s3910 = scalar_lea.vmem %s176, 5448
      %s3911 = scalar_lea.vmem %s150, 656
      %v3912 = vld [vmem:[%s3911] sm:$0xff]
      %s3913 = scalar_lea.vmem %s176, 8520
      %s3914 = scalar_lea.vmem %s150, 17072
      %v3915 = vld [vmem:[%s3914] sm:$0xff]
      %s3916 = scalar_lea.vmem %s176, 344
      %s3917 = scalar_lea.vmem %s150, 10928
      %v3918 = vld [vmem:[%s3917] sm:$0xff]
      %s3919 = scalar_lea.vmem %s176, 3416
      %s3920 = scalar_lea.vmem %s150, 4784
      %v3921 = vld [vmem:[%s3920] sm:$0xff]
      %s3922 = scalar_lea.vmem %s176, 6488
      %s3923 = scalar_lea.vmem %s150, 15024
      %v3924 = vld [vmem:[%s3923] sm:$0xff]
      %s3925 = scalar_lea.vmem %s176, 1368
      %s3926 = scalar_lea.vmem %s150, 8880
      %v3927 = vld [vmem:[%s3926] sm:$0xff]
      %s3928 = scalar_lea.vmem %s176, 4440
      %s3929 = scalar_lea.vmem %s150, 2736
      %v3930 = vld [vmem:[%s3929] sm:$0xff]
      %s3931 = scalar_lea.vmem %s176, 7512
      %s3932 = scalar_lea.vmem %s150, 12976
      %v3933 = vld [vmem:[%s3932] sm:$0xff]
      %s3934 = scalar_lea.vmem %s176, 2392
      %s3935 = scalar_lea.vmem %s150, 6832
      %v3936 = vld [vmem:[%s3935] sm:$0xff]
      %s3937 = scalar_lea.vmem %s176, 5464
      %s3938 = scalar_lea.vmem %s150, 688
      %v3939 = vld [vmem:[%s3938] sm:$0xff]
      %s3940 = scalar_lea.vmem %s176, 8536
      %s3941 = scalar_lea.vmem %s150, 17104
      %v3942 = vld [vmem:[%s3941] sm:$0xff]
      %s3943 = scalar_lea.vmem %s176, 360
      %s3944 = scalar_lea.vmem %s150, 10960
      %v3945 = vld [vmem:[%s3944] sm:$0xff]
      %s3946 = scalar_lea.vmem %s176, 3432
      %s3947 = scalar_lea.vmem %s150, 4816
      %v3948 = vld [vmem:[%s3947] sm:$0xff]
      %s3949 = scalar_lea.vmem %s176, 6504
      %s3950 = scalar_lea.vmem %s150, 15056
      %v3951 = vld [vmem:[%s3950] sm:$0xff]
      %s3952 = scalar_lea.vmem %s176, 1384
      %s3953 = scalar_lea.vmem %s150, 8912
      %v3954 = vld [vmem:[%s3953] sm:$0xff]
      %s3955 = scalar_lea.vmem %s176, 4456
      %s3956 = scalar_lea.vmem %s150, 2768
      %v3957 = vld [vmem:[%s3956] sm:$0xff]
      %s3958 = scalar_lea.vmem %s176, 7528
      %s3959 = scalar_lea.vmem %s150, 13008
      %v3960 = vld [vmem:[%s3959] sm:$0xff]
      %s3961 = scalar_lea.vmem %s176, 2408
      %s3962 = scalar_lea.vmem %s150, 6864
      %v3963 = vld [vmem:[%s3962] sm:$0xff]
      %s3964 = scalar_lea.vmem %s176, 5480
      %s3965 = scalar_lea.vmem %s150, 720
      %v3966 = vld [vmem:[%s3965] sm:$0xff]
      %s3967 = scalar_lea.vmem %s176, 8552
      %s3968 = scalar_lea.vmem %s150, 17136
      %v3969 = vld [vmem:[%s3968] sm:$0xff]
      %s3970 = scalar_lea.vmem %s176, 376
      %s3971 = scalar_lea.vmem %s150, 10992
      %v3972 = vld [vmem:[%s3971] sm:$0xff]
      %s3973 = scalar_lea.vmem %s176, 3448
      %s3974 = scalar_lea.vmem %s150, 4848
      %v3975 = vld [vmem:[%s3974] sm:$0xff]
      %s3976 = scalar_lea.vmem %s176, 6520
      %s3977 = scalar_lea.vmem %s150, 15088
      %v3978 = vld [vmem:[%s3977] sm:$0xff]
      %s3979 = scalar_lea.vmem %s176, 1400
      %s3980 = scalar_lea.vmem %s150, 8944
      %v3981 = vld [vmem:[%s3980] sm:$0xff]
      %s3982 = scalar_lea.vmem %s176, 4472
      %s3983 = scalar_lea.vmem %s150, 2800
      %v3984 = vld [vmem:[%s3983] sm:$0xff]
      %s3985 = scalar_lea.vmem %s176, 7544
      %s3986 = scalar_lea.vmem %s150, 13040
      %v3987 = vld [vmem:[%s3986] sm:$0xff]
      %s3988 = scalar_lea.vmem %s176, 2424
      %s3989 = scalar_lea.vmem %s150, 6896
      %v3990 = vld [vmem:[%s3989] sm:$0xff]
      %s3991 = scalar_lea.vmem %s176, 5496
      %s3992 = scalar_lea.vmem %s150, 752
      %v3993 = vld [vmem:[%s3992] sm:$0xff]
      %s3994 = scalar_lea.vmem %s176, 8568
      %s3995 = scalar_lea.vmem %s150, 17168
      %v3996 = vld [vmem:[%s3995] sm:$0xff]
      %s3997 = scalar_lea.vmem %s176, 392
      %s3998 = scalar_lea.vmem %s150, 11024
      %v3999 = vld [vmem:[%s3998] sm:$0xff]
      %s4000 = scalar_lea.vmem %s176, 3464
      %s4001 = scalar_lea.vmem %s150, 4880
      %v4002 = vld [vmem:[%s4001] sm:$0xff]
      %s4003 = scalar_lea.vmem %s176, 6536
      %s4004 = scalar_lea.vmem %s150, 15120
      %v4005 = vld [vmem:[%s4004] sm:$0xff]
      %s4006 = scalar_lea.vmem %s176, 1416
      %s4007 = scalar_lea.vmem %s150, 8976
      %v4008 = vld [vmem:[%s4007] sm:$0xff]
      %s4009 = scalar_lea.vmem %s176, 4488
      %s4010 = scalar_lea.vmem %s150, 2832
      %v4011 = vld [vmem:[%s4010] sm:$0xff]
      %s4012 = scalar_lea.vmem %s176, 7560
      %s4013 = scalar_lea.vmem %s150, 13072
      %v4014 = vld [vmem:[%s4013] sm:$0xff]
      %s4015 = scalar_lea.vmem %s176, 2440
      %s4016 = scalar_lea.vmem %s150, 6928
      %v4017 = vld [vmem:[%s4016] sm:$0xff]
      %s4018 = scalar_lea.vmem %s176, 5512
      %s4019 = scalar_lea.vmem %s150, 784
      %v4020 = vld [vmem:[%s4019] sm:$0xff]
      %s4021 = scalar_lea.vmem %s176, 8584
      %s4022 = scalar_lea.vmem %s150, 17200
      %v4023 = vld [vmem:[%s4022] sm:$0xff]
      %s4024 = scalar_lea.vmem %s176, 408
      %s4025 = scalar_lea.vmem %s150, 11056
      %v4026 = vld [vmem:[%s4025] sm:$0xff]
      %s4027 = scalar_lea.vmem %s176, 3480
      %s4028 = scalar_lea.vmem %s150, 4912
      %v4029 = vld [vmem:[%s4028] sm:$0xff]
      %s4030 = scalar_lea.vmem %s176, 6552
      %s4031 = scalar_lea.vmem %s150, 15152
      %v4032 = vld [vmem:[%s4031] sm:$0xff]
      %s4033 = scalar_lea.vmem %s176, 1432
      %s4034 = scalar_lea.vmem %s150, 9008
      %v4035 = vld [vmem:[%s4034] sm:$0xff]
      %s4036 = scalar_lea.vmem %s176, 4504
      %s4037 = scalar_lea.vmem %s150, 2864
      %v4038 = vld [vmem:[%s4037] sm:$0xff]
      %s4039 = scalar_lea.vmem %s176, 7576
      %s4040 = scalar_lea.vmem %s150, 13104
      %v4041 = vld [vmem:[%s4040] sm:$0xff]
      %s4042 = scalar_lea.vmem %s176, 2456
      %s4043 = scalar_lea.vmem %s150, 6960
      %v4044 = vld [vmem:[%s4043] sm:$0xff]
      %s4045 = scalar_lea.vmem %s176, 5528
      %s4046 = scalar_lea.vmem %s150, 816
      %v4047 = vld [vmem:[%s4046] sm:$0xff]
      %s4048 = scalar_lea.vmem %s176, 8600
      %s4049 = scalar_lea.vmem %s150, 17232
      %v4050 = vld [vmem:[%s4049] sm:$0xff]
      %s4051 = scalar_lea.vmem %s176, 424
      %s4052 = scalar_lea.vmem %s150, 11088
      %v4053 = vld [vmem:[%s4052] sm:$0xff]
      %s4054 = scalar_lea.vmem %s176, 3496
      %s4055 = scalar_lea.vmem %s150, 4944
      %v4056 = vld [vmem:[%s4055] sm:$0xff]
      %s4057 = scalar_lea.vmem %s176, 6568
      %s4058 = scalar_lea.vmem %s150, 15184
      %v4059 = vld [vmem:[%s4058] sm:$0xff]
      %s4060 = scalar_lea.vmem %s176, 1448
      %s4061 = scalar_lea.vmem %s150, 9040
      %v4062 = vld [vmem:[%s4061] sm:$0xff]
      %s4063 = scalar_lea.vmem %s176, 4520
      %s4064 = scalar_lea.vmem %s150, 2896
      %v4065 = vld [vmem:[%s4064] sm:$0xff]
      %s4066 = scalar_lea.vmem %s176, 7592
      %s4067 = scalar_lea.vmem %s150, 13136
      %v4068 = vld [vmem:[%s4067] sm:$0xff]
      %s4069 = scalar_lea.vmem %s176, 2472
      %s4070 = scalar_lea.vmem %s150, 6992
      %v4071 = vld [vmem:[%s4070] sm:$0xff]
      %s4072 = scalar_lea.vmem %s176, 5544
      %s4073 = scalar_lea.vmem %s150, 848
      %v4074 = vld [vmem:[%s4073] sm:$0xff]
      %s4075 = scalar_lea.vmem %s176, 8616
      %s4076 = scalar_lea.vmem %s150, 17264
      %v4077 = vld [vmem:[%s4076] sm:$0xff]
      %s4078 = scalar_lea.vmem %s176, 440
      %s4079 = scalar_lea.vmem %s150, 11120
      %v4080 = vld [vmem:[%s4079] sm:$0xff]
      %s4081 = scalar_lea.vmem %s176, 3512
      %s4082 = scalar_lea.vmem %s150, 4976
      %v4083 = vld [vmem:[%s4082] sm:$0xff]
      %s4084 = scalar_lea.vmem %s176, 6584
      %s4085 = scalar_lea.vmem %s150, 15216
      %v4086 = vld [vmem:[%s4085] sm:$0xff]
      %s4087 = scalar_lea.vmem %s176, 1464
      %s4088 = scalar_lea.vmem %s150, 9072
      %v4089 = vld [vmem:[%s4088] sm:$0xff]
      %s4090 = scalar_lea.vmem %s176, 4536
      %s4091 = scalar_lea.vmem %s150, 2928
      %v4092 = vld [vmem:[%s4091] sm:$0xff]
      %s4093 = scalar_lea.vmem %s176, 7608
      %s4094 = scalar_lea.vmem %s150, 13168
      %v4095 = vld [vmem:[%s4094] sm:$0xff]
      %s4096 = scalar_lea.vmem %s176, 2488
      %s4097 = scalar_lea.vmem %s150, 7024
      %v4098 = vld [vmem:[%s4097] sm:$0xff]
      %s4099 = scalar_lea.vmem %s176, 5560
      %s4100 = scalar_lea.vmem %s150, 880
      %v4101 = vld [vmem:[%s4100] sm:$0xff]
      %s4102 = scalar_lea.vmem %s176, 8632
      %s4103 = scalar_lea.vmem %s150, 17296
      %v4104 = vld [vmem:[%s4103] sm:$0xff]
      %s4105 = scalar_lea.vmem %s176, 456
      %s4106 = scalar_lea.vmem %s150, 11152
      %v4107 = vld [vmem:[%s4106] sm:$0xff]
      %s4108 = scalar_lea.vmem %s176, 3528
      %s4109 = scalar_lea.vmem %s150, 5008
      %v4110 = vld [vmem:[%s4109] sm:$0xff]
      %s4111 = scalar_lea.vmem %s176, 6600
      %s4112 = scalar_lea.vmem %s150, 15248
      %v4113 = vld [vmem:[%s4112] sm:$0xff]
      %s4114 = scalar_lea.vmem %s176, 1480
      %s4115 = scalar_lea.vmem %s150, 9104
      %v4116 = vld [vmem:[%s4115] sm:$0xff]
      %s4117 = scalar_lea.vmem %s176, 4552
      %s4118 = scalar_lea.vmem %s150, 2960
      %v4119 = vld [vmem:[%s4118] sm:$0xff]
      %s4120 = scalar_lea.vmem %s176, 7624
      %s4121 = scalar_lea.vmem %s150, 13200
      %v4122 = vld [vmem:[%s4121] sm:$0xff]
      %s4123 = scalar_lea.vmem %s176, 2504
      %s4124 = scalar_lea.vmem %s150, 7056
      %v4125 = vld [vmem:[%s4124] sm:$0xff]
      %s4126 = scalar_lea.vmem %s176, 5576
      %s4127 = scalar_lea.vmem %s150, 912
      %v4128 = vld [vmem:[%s4127] sm:$0xff]
      %s4129 = scalar_lea.vmem %s176, 8648
      %s4130 = scalar_lea.vmem %s150, 17328
      %v4131 = vld [vmem:[%s4130] sm:$0xff]
      %s4132 = scalar_lea.vmem %s176, 472
      %s4133 = scalar_lea.vmem %s150, 11184
      %v4134 = vld [vmem:[%s4133] sm:$0xff]
      %s4135 = scalar_lea.vmem %s176, 3544
      %s4136 = scalar_lea.vmem %s150, 5040
      %v4137 = vld [vmem:[%s4136] sm:$0xff]
      %s4138 = scalar_lea.vmem %s176, 6616
      %s4139 = scalar_lea.vmem %s150, 15280
      %v4140 = vld [vmem:[%s4139] sm:$0xff]
      %s4141 = scalar_lea.vmem %s176, 1496
      %s4142 = scalar_lea.vmem %s150, 9136
      %v4143 = vld [vmem:[%s4142] sm:$0xff]
      %s4144 = scalar_lea.vmem %s176, 4568
      %s4145 = scalar_lea.vmem %s150, 2992
      %v4146 = vld [vmem:[%s4145] sm:$0xff]
      %s4147 = scalar_lea.vmem %s176, 7640
      %s4148 = scalar_lea.vmem %s150, 13232
      %v4149 = vld [vmem:[%s4148] sm:$0xff]
      %s4150 = scalar_lea.vmem %s176, 2520
      %s4151 = scalar_lea.vmem %s150, 7088
      %v4152 = vld [vmem:[%s4151] sm:$0xff]
      %s4153 = scalar_lea.vmem %s176, 5592
      %s4154 = scalar_lea.vmem %s150, 944
      %v4155 = vld [vmem:[%s4154] sm:$0xff]
      %s4156 = scalar_lea.vmem %s176, 8664
      %s4157 = scalar_lea.vmem %s150, 17360
      %v4158 = vld [vmem:[%s4157] sm:$0xff]
      %s4159 = scalar_lea.vmem %s176, 488
      %s4160 = scalar_lea.vmem %s150, 11216
      %v4161 = vld [vmem:[%s4160] sm:$0xff]
      %s4162 = scalar_lea.vmem %s176, 3560
      %s4163 = scalar_lea.vmem %s150, 5072
      %v4164 = vld [vmem:[%s4163] sm:$0xff]
      %s4165 = scalar_lea.vmem %s176, 6632
      %s4166 = scalar_lea.vmem %s150, 15312
      %v4167 = vld [vmem:[%s4166] sm:$0xff]
      %s4168 = scalar_lea.vmem %s176, 1512
      %s4169 = scalar_lea.vmem %s150, 9168
      %v4170 = vld [vmem:[%s4169] sm:$0xff]
      %s4171 = scalar_lea.vmem %s176, 4584
      %s4172 = scalar_lea.vmem %s150, 3024
      %v4173 = vld [vmem:[%s4172] sm:$0xff]
      %s4174 = scalar_lea.vmem %s176, 7656
      %s4175 = scalar_lea.vmem %s150, 13264
      %v4176 = vld [vmem:[%s4175] sm:$0xff]
      %s4177 = scalar_lea.vmem %s176, 2536
      %s4178 = scalar_lea.vmem %s150, 7120
      %v4179 = vld [vmem:[%s4178] sm:$0xff]
      %s4180 = scalar_lea.vmem %s176, 5608
      %s4181 = scalar_lea.vmem %s150, 976
      %v4182 = vld [vmem:[%s4181] sm:$0xff]
      %s4183 = scalar_lea.vmem %s176, 8680
      %s4184 = scalar_lea.vmem %s150, 17392
      %v4185 = vld [vmem:[%s4184] sm:$0xff]
      %s4186 = scalar_lea.vmem %s176, 504
      %s4187 = scalar_lea.vmem %s150, 11248
      %v4188 = vld [vmem:[%s4187] sm:$0xff]
      %s4189 = scalar_lea.vmem %s176, 3576
      %s4190 = scalar_lea.vmem %s150, 5104
      %v4191 = vld [vmem:[%s4190] sm:$0xff]
      %s4192 = scalar_lea.vmem %s176, 6648
      %s4193 = scalar_lea.vmem %s150, 15344
      %v4194 = vld [vmem:[%s4193] sm:$0xff]
      %s4195 = scalar_lea.vmem %s176, 1528
      %s4196 = scalar_lea.vmem %s150, 9200
      %v4197 = vld [vmem:[%s4196] sm:$0xff]
      %s4198 = scalar_lea.vmem %s176, 4600
      %s4199 = scalar_lea.vmem %s150, 3056
      %v4200 = vld [vmem:[%s4199] sm:$0xff]
      %s4201 = scalar_lea.vmem %s176, 7672
      %s4202 = scalar_lea.vmem %s150, 13296
      %v4203 = vld [vmem:[%s4202] sm:$0xff]
      %s4204 = scalar_lea.vmem %s176, 2552
      %s4205 = scalar_lea.vmem %s150, 7152
      %v4206 = vld [vmem:[%s4205] sm:$0xff]
      %s4207 = scalar_lea.vmem %s176, 5624
      %s4208 = scalar_lea.vmem %s150, 1008
      %v4209 = vld [vmem:[%s4208] sm:$0xff]
      %s4210 = scalar_lea.vmem %s176, 8696
      %s4211 = scalar_lea.vmem %s150, 16408
      %v4212 = vld [vmem:[%s4211] sm:$0xff]
      %s4213 = scalar_lea.vmem %s176, 12
      %s4215 = ssub.s32 0, 4
      %s4216 = scalar_lea.vmem %s4213, %s4215
      %v4217 = vpack.c.bf16 %v4212, %v3348
      %4218 = vst [vmem:[%s4216] sm:$0xff] %v4217
      %s4219 = scalar_lea.vmem %s150, 10264
      %v4220 = vld [vmem:[%s4219] sm:$0xff]
      %s4221 = scalar_lea.vmem %s176, 3084
      %s4223 = ssub.s32 0, 4
      %s4224 = scalar_lea.vmem %s4221, %s4223
      %v4225 = vpack.c.bf16 %v4220, %v3351
      %4226 = vst [vmem:[%s4224] sm:$0xff] %v4225
      %s4227 = scalar_lea.vmem %s150, 4120
      %v4228 = vld [vmem:[%s4227] sm:$0xff]
      %s4229 = scalar_lea.vmem %s176, 6156
      %s4231 = ssub.s32 0, 4
      %s4232 = scalar_lea.vmem %s4229, %s4231
      %v4233 = vpack.c.bf16 %v4228, %v3354
      %4234 = vst [vmem:[%s4232] sm:$0xff] %v4233
      %s4235 = scalar_lea.vmem %s150, 14360
      %v4236 = vld [vmem:[%s4235] sm:$0xff]
      %s4237 = scalar_lea.vmem %s176, 1036
      %s4239 = ssub.s32 0, 4
      %s4240 = scalar_lea.vmem %s4237, %s4239
      %v4241 = vpack.c.bf16 %v4236, %v3357
      %4242 = vst [vmem:[%s4240] sm:$0xff] %v4241
      %s4243 = scalar_lea.vmem %s150, 8216
      %v4244 = vld [vmem:[%s4243] sm:$0xff]
      %s4245 = scalar_lea.vmem %s176, 4108
      %s4247 = ssub.s32 0, 4
      %s4248 = scalar_lea.vmem %s4245, %s4247
      %v4249 = vpack.c.bf16 %v4244, %v3360
      %4250 = vst [vmem:[%s4248] sm:$0xff] %v4249
      %s4251 = scalar_lea.vmem %s150, 2072
      %v4252 = vld [vmem:[%s4251] sm:$0xff]
      %s4253 = scalar_lea.vmem %s176, 7180
      %s4255 = ssub.s32 0, 4
      %s4256 = scalar_lea.vmem %s4253, %s4255
      %v4257 = vpack.c.bf16 %v4252, %v3363
      %4258 = vst [vmem:[%s4256] sm:$0xff] %v4257
      %s4259 = scalar_lea.vmem %s150, 12312
      %v4260 = vld [vmem:[%s4259] sm:$0xff]
      %s4261 = scalar_lea.vmem %s176, 2060
      %s4263 = ssub.s32 0, 4
      %s4264 = scalar_lea.vmem %s4261, %s4263
      %v4265 = vpack.c.bf16 %v4260, %v3366
      %4266 = vst [vmem:[%s4264] sm:$0xff] %v4265
      %s4267 = scalar_lea.vmem %s150, 6168
      %v4268 = vld [vmem:[%s4267] sm:$0xff]
      %s4269 = scalar_lea.vmem %s176, 5132
      %s4271 = ssub.s32 0, 4
      %s4272 = scalar_lea.vmem %s4269, %s4271
      %v4273 = vpack.c.bf16 %v4268, %v3369
      %4274 = vst [vmem:[%s4272] sm:$0xff] %v4273
      %s4275 = scalar_lea.vmem %s150, 24
      %v4276 = vld [vmem:[%s4275] sm:$0xff]
      %s4277 = scalar_lea.vmem %s176, 8204
      %s4279 = ssub.s32 0, 4
      %s4280 = scalar_lea.vmem %s4277, %s4279
      %v4281 = vpack.c.bf16 %v4276, %v3372
      %4282 = vst [vmem:[%s4280] sm:$0xff] %v4281
      %s4283 = scalar_lea.vmem %s150, 16440
      %v4284 = vld [vmem:[%s4283] sm:$0xff]
      %s4285 = scalar_lea.vmem %s176, 28
      %s4287 = ssub.s32 0, 4
      %s4288 = scalar_lea.vmem %s4285, %s4287
      %v4289 = vpack.c.bf16 %v4284, %v3375
      %4290 = vst [vmem:[%s4288] sm:$0xff] %v4289
      %s4291 = scalar_lea.vmem %s150, 10296
      %v4292 = vld [vmem:[%s4291] sm:$0xff]
      %s4293 = scalar_lea.vmem %s176, 3100
      %s4295 = ssub.s32 0, 4
      %s4296 = scalar_lea.vmem %s4293, %s4295
      %v4297 = vpack.c.bf16 %v4292, %v3378
      %4298 = vst [vmem:[%s4296] sm:$0xff] %v4297
      %s4299 = scalar_lea.vmem %s150, 4152
      %v4300 = vld [vmem:[%s4299] sm:$0xff]
      %s4301 = scalar_lea.vmem %s176, 6172
      %s4303 = ssub.s32 0, 4
      %s4304 = scalar_lea.vmem %s4301, %s4303
      %v4305 = vpack.c.bf16 %v4300, %v3381
      %4306 = vst [vmem:[%s4304] sm:$0xff] %v4305
      %s4307 = scalar_lea.vmem %s150, 14392
      %v4308 = vld [vmem:[%s4307] sm:$0xff]
      %s4309 = scalar_lea.vmem %s176, 1052
      %s4311 = ssub.s32 0, 4
      %s4312 = scalar_lea.vmem %s4309, %s4311
      %v4313 = vpack.c.bf16 %v4308, %v3384
      %4314 = vst [vmem:[%s4312] sm:$0xff] %v4313
      %s4315 = scalar_lea.vmem %s150, 8248
      %v4316 = vld [vmem:[%s4315] sm:$0xff]
      %s4317 = scalar_lea.vmem %s176, 4124
      %s4319 = ssub.s32 0, 4
      %s4320 = scalar_lea.vmem %s4317, %s4319
      %v4321 = vpack.c.bf16 %v4316, %v3387
      %4322 = vst [vmem:[%s4320] sm:$0xff] %v4321
      %s4323 = scalar_lea.vmem %s150, 2104
      %v4324 = vld [vmem:[%s4323] sm:$0xff]
      %s4325 = scalar_lea.vmem %s176, 7196
      %s4327 = ssub.s32 0, 4
      %s4328 = scalar_lea.vmem %s4325, %s4327
      %v4329 = vpack.c.bf16 %v4324, %v3390
      %4330 = vst [vmem:[%s4328] sm:$0xff] %v4329
      %s4331 = scalar_lea.vmem %s150, 12344
      %v4332 = vld [vmem:[%s4331] sm:$0xff]
      %s4333 = scalar_lea.vmem %s176, 2076
      %s4335 = ssub.s32 0, 4
      %s4336 = scalar_lea.vmem %s4333, %s4335
      %v4337 = vpack.c.bf16 %v4332, %v3393
      %4338 = vst [vmem:[%s4336] sm:$0xff] %v4337
      %s4339 = scalar_lea.vmem %s150, 6200
      %v4340 = vld [vmem:[%s4339] sm:$0xff]
      %s4341 = scalar_lea.vmem %s176, 5148
      %s4343 = ssub.s32 0, 4
      %s4344 = scalar_lea.vmem %s4341, %s4343
      %v4345 = vpack.c.bf16 %v4340, %v3396
      %4346 = vst [vmem:[%s4344] sm:$0xff] %v4345
      %s4347 = scalar_lea.vmem %s150, 56
      %v4348 = vld [vmem:[%s4347] sm:$0xff]
      %s4349 = scalar_lea.vmem %s176, 8220
      %s4351 = ssub.s32 0, 4
      %s4352 = scalar_lea.vmem %s4349, %s4351
      %v4353 = vpack.c.bf16 %v4348, %v3399
      %4354 = vst [vmem:[%s4352] sm:$0xff] %v4353
      %s4355 = scalar_lea.vmem %s150, 16472
      %v4356 = vld [vmem:[%s4355] sm:$0xff]
      %s4357 = scalar_lea.vmem %s176, 44
      %s4359 = ssub.s32 0, 4
      %s4360 = scalar_lea.vmem %s4357, %s4359
      %v4361 = vpack.c.bf16 %v4356, %v3402
      %4362 = vst [vmem:[%s4360] sm:$0xff] %v4361
      %s4363 = scalar_lea.vmem %s150, 10328
      %v4364 = vld [vmem:[%s4363] sm:$0xff]
      %s4365 = scalar_lea.vmem %s176, 3116
      %s4367 = ssub.s32 0, 4
      %s4368 = scalar_lea.vmem %s4365, %s4367
      %v4369 = vpack.c.bf16 %v4364, %v3405
      %4370 = vst [vmem:[%s4368] sm:$0xff] %v4369
      %s4371 = scalar_lea.vmem %s150, 4184
      %v4372 = vld [vmem:[%s4371] sm:$0xff]
      %s4373 = scalar_lea.vmem %s176, 6188
      %s4375 = ssub.s32 0, 4
      %s4376 = scalar_lea.vmem %s4373, %s4375
      %v4377 = vpack.c.bf16 %v4372, %v3408
      %4378 = vst [vmem:[%s4376] sm:$0xff] %v4377
      %s4379 = scalar_lea.vmem %s150, 14424
      %v4380 = vld [vmem:[%s4379] sm:$0xff]
      %s4381 = scalar_lea.vmem %s176, 1068
      %s4383 = ssub.s32 0, 4
      %s4384 = scalar_lea.vmem %s4381, %s4383
      %v4385 = vpack.c.bf16 %v4380, %v3411
      %4386 = vst [vmem:[%s4384] sm:$0xff] %v4385
      %s4387 = scalar_lea.vmem %s150, 8280
      %v4388 = vld [vmem:[%s4387] sm:$0xff]
      %s4389 = scalar_lea.vmem %s176, 4140
      %s4391 = ssub.s32 0, 4
      %s4392 = scalar_lea.vmem %s4389, %s4391
      %v4393 = vpack.c.bf16 %v4388, %v3414
      %4394 = vst [vmem:[%s4392] sm:$0xff] %v4393
      %s4395 = scalar_lea.vmem %s150, 2136
      %v4396 = vld [vmem:[%s4395] sm:$0xff]
      %s4397 = scalar_lea.vmem %s176, 7212
      %s4399 = ssub.s32 0, 4
      %s4400 = scalar_lea.vmem %s4397, %s4399
      %v4401 = vpack.c.bf16 %v4396, %v3417
      %4402 = vst [vmem:[%s4400] sm:$0xff] %v4401
      %s4403 = scalar_lea.vmem %s150, 12376
      %v4404 = vld [vmem:[%s4403] sm:$0xff]
      %s4405 = scalar_lea.vmem %s176, 2092
      %s4407 = ssub.s32 0, 4
      %s4408 = scalar_lea.vmem %s4405, %s4407
      %v4409 = vpack.c.bf16 %v4404, %v3420
      %4410 = vst [vmem:[%s4408] sm:$0xff] %v4409
      %s4411 = scalar_lea.vmem %s150, 6232
      %v4412 = vld [vmem:[%s4411] sm:$0xff]
      %s4413 = scalar_lea.vmem %s176, 5164
      %s4415 = ssub.s32 0, 4
      %s4416 = scalar_lea.vmem %s4413, %s4415
      %v4417 = vpack.c.bf16 %v4412, %v3423
      %4418 = vst [vmem:[%s4416] sm:$0xff] %v4417
      %s4419 = scalar_lea.vmem %s150, 88
      %v4420 = vld [vmem:[%s4419] sm:$0xff]
      %s4421 = scalar_lea.vmem %s176, 8236
      %s4423 = ssub.s32 0, 4
      %s4424 = scalar_lea.vmem %s4421, %s4423
      %v4425 = vpack.c.bf16 %v4420, %v3426
      %4426 = vst [vmem:[%s4424] sm:$0xff] %v4425
      %s4427 = scalar_lea.vmem %s150, 16504
      %v4428 = vld [vmem:[%s4427] sm:$0xff]
      %s4429 = scalar_lea.vmem %s176, 60
      %s4431 = ssub.s32 0, 4
      %s4432 = scalar_lea.vmem %s4429, %s4431
      %v4433 = vpack.c.bf16 %v4428, %v3429
      %4434 = vst [vmem:[%s4432] sm:$0xff] %v4433
      %s4435 = scalar_lea.vmem %s150, 10360
      %v4436 = vld [vmem:[%s4435] sm:$0xff]
      %s4437 = scalar_lea.vmem %s176, 3132
      %s4439 = ssub.s32 0, 4
      %s4440 = scalar_lea.vmem %s4437, %s4439
      %v4441 = vpack.c.bf16 %v4436, %v3432
      %4442 = vst [vmem:[%s4440] sm:$0xff] %v4441
      %s4443 = scalar_lea.vmem %s150, 4216
      %v4444 = vld [vmem:[%s4443] sm:$0xff]
      %s4445 = scalar_lea.vmem %s176, 6204
      %s4447 = ssub.s32 0, 4
      %s4448 = scalar_lea.vmem %s4445, %s4447
      %v4449 = vpack.c.bf16 %v4444, %v3435
      %4450 = vst [vmem:[%s4448] sm:$0xff] %v4449
      %s4451 = scalar_lea.vmem %s150, 14456
      %v4452 = vld [vmem:[%s4451] sm:$0xff]
      %s4453 = scalar_lea.vmem %s176, 1084
      %s4455 = ssub.s32 0, 4
      %s4456 = scalar_lea.vmem %s4453, %s4455
      %v4457 = vpack.c.bf16 %v4452, %v3438
      %4458 = vst [vmem:[%s4456] sm:$0xff] %v4457
      %s4459 = scalar_lea.vmem %s150, 8312
      %v4460 = vld [vmem:[%s4459] sm:$0xff]
      %s4461 = scalar_lea.vmem %s176, 4156
      %s4463 = ssub.s32 0, 4
      %s4464 = scalar_lea.vmem %s4461, %s4463
      %v4465 = vpack.c.bf16 %v4460, %v3441
      %4466 = vst [vmem:[%s4464] sm:$0xff] %v4465
      %s4467 = scalar_lea.vmem %s150, 2168
      %v4468 = vld [vmem:[%s4467] sm:$0xff]
      %s4469 = scalar_lea.vmem %s176, 7228
      %s4471 = ssub.s32 0, 4
      %s4472 = scalar_lea.vmem %s4469, %s4471
      %v4473 = vpack.c.bf16 %v4468, %v3444
      %4474 = vst [vmem:[%s4472] sm:$0xff] %v4473
      %s4475 = scalar_lea.vmem %s150, 12408
      %v4476 = vld [vmem:[%s4475] sm:$0xff]
      %s4477 = scalar_lea.vmem %s176, 2108
      %s4479 = ssub.s32 0, 4
      %s4480 = scalar_lea.vmem %s4477, %s4479
      %v4481 = vpack.c.bf16 %v4476, %v3447
      %4482 = vst [vmem:[%s4480] sm:$0xff] %v4481
      %s4483 = scalar_lea.vmem %s150, 6264
      %v4484 = vld [vmem:[%s4483] sm:$0xff]
      %s4485 = scalar_lea.vmem %s176, 5180
      %s4487 = ssub.s32 0, 4
      %s4488 = scalar_lea.vmem %s4485, %s4487
      %v4489 = vpack.c.bf16 %v4484, %v3450
      %4490 = vst [vmem:[%s4488] sm:$0xff] %v4489
      %s4491 = scalar_lea.vmem %s150, 120
      %v4492 = vld [vmem:[%s4491] sm:$0xff]
      %s4493 = scalar_lea.vmem %s176, 8252
      %s4495 = ssub.s32 0, 4
      %s4496 = scalar_lea.vmem %s4493, %s4495
      %v4497 = vpack.c.bf16 %v4492, %v3453
      %4498 = vst [vmem:[%s4496] sm:$0xff] %v4497
      %s4499 = scalar_lea.vmem %s150, 16536
      %v4500 = vld [vmem:[%s4499] sm:$0xff]
      %s4501 = scalar_lea.vmem %s176, 76
      %s4503 = ssub.s32 0, 4
      %s4504 = scalar_lea.vmem %s4501, %s4503
      %v4505 = vpack.c.bf16 %v4500, %v3456
      %4506 = vst [vmem:[%s4504] sm:$0xff] %v4505
      %s4507 = scalar_lea.vmem %s150, 10392
      %v4508 = vld [vmem:[%s4507] sm:$0xff]
      %s4509 = scalar_lea.vmem %s176, 3148
      %s4511 = ssub.s32 0, 4
      %s4512 = scalar_lea.vmem %s4509, %s4511
      %v4513 = vpack.c.bf16 %v4508, %v3459
      %4514 = vst [vmem:[%s4512] sm:$0xff] %v4513
      %s4515 = scalar_lea.vmem %s150, 4248
      %v4516 = vld [vmem:[%s4515] sm:$0xff]
      %s4517 = scalar_lea.vmem %s176, 6220
      %s4519 = ssub.s32 0, 4
      %s4520 = scalar_lea.vmem %s4517, %s4519
      %v4521 = vpack.c.bf16 %v4516, %v3462
      %4522 = vst [vmem:[%s4520] sm:$0xff] %v4521
      %s4523 = scalar_lea.vmem %s150, 14488
      %v4524 = vld [vmem:[%s4523] sm:$0xff]
      %s4525 = scalar_lea.vmem %s176, 1100
      %s4527 = ssub.s32 0, 4
      %s4528 = scalar_lea.vmem %s4525, %s4527
      %v4529 = vpack.c.bf16 %v4524, %v3465
      %4530 = vst [vmem:[%s4528] sm:$0xff] %v4529
      %s4531 = scalar_lea.vmem %s150, 8344
      %v4532 = vld [vmem:[%s4531] sm:$0xff]
      %s4533 = scalar_lea.vmem %s176, 4172
      %s4535 = ssub.s32 0, 4
      %s4536 = scalar_lea.vmem %s4533, %s4535
      %v4537 = vpack.c.bf16 %v4532, %v3468
      %4538 = vst [vmem:[%s4536] sm:$0xff] %v4537
      %s4539 = scalar_lea.vmem %s150, 2200
      %v4540 = vld [vmem:[%s4539] sm:$0xff]
      %s4541 = scalar_lea.vmem %s176, 7244
      %s4543 = ssub.s32 0, 4
      %s4544 = scalar_lea.vmem %s4541, %s4543
      %v4545 = vpack.c.bf16 %v4540, %v3471
      %4546 = vst [vmem:[%s4544] sm:$0xff] %v4545
      %s4547 = scalar_lea.vmem %s150, 12440
      %v4548 = vld [vmem:[%s4547] sm:$0xff]
      %s4549 = scalar_lea.vmem %s176, 2124
      %s4551 = ssub.s32 0, 4
      %s4552 = scalar_lea.vmem %s4549, %s4551
      %v4553 = vpack.c.bf16 %v4548, %v3474
      %4554 = vst [vmem:[%s4552] sm:$0xff] %v4553
      %s4555 = scalar_lea.vmem %s150, 6296
      %v4556 = vld [vmem:[%s4555] sm:$0xff]
      %s4557 = scalar_lea.vmem %s176, 5196
      %s4559 = ssub.s32 0, 4
      %s4560 = scalar_lea.vmem %s4557, %s4559
      %v4561 = vpack.c.bf16 %v4556, %v3477
      %4562 = vst [vmem:[%s4560] sm:$0xff] %v4561
      %s4563 = scalar_lea.vmem %s150, 152
      %v4564 = vld [vmem:[%s4563] sm:$0xff]
      %s4565 = scalar_lea.vmem %s176, 8268
      %s4567 = ssub.s32 0, 4
      %s4568 = scalar_lea.vmem %s4565, %s4567
      %v4569 = vpack.c.bf16 %v4564, %v3480
      %4570 = vst [vmem:[%s4568] sm:$0xff] %v4569
      %s4571 = scalar_lea.vmem %s150, 16568
      %v4572 = vld [vmem:[%s4571] sm:$0xff]
      %s4573 = scalar_lea.vmem %s176, 92
      %s4575 = ssub.s32 0, 4
      %s4576 = scalar_lea.vmem %s4573, %s4575
      %v4577 = vpack.c.bf16 %v4572, %v3483
      %4578 = vst [vmem:[%s4576] sm:$0xff] %v4577
      %s4579 = scalar_lea.vmem %s150, 10424
      %v4580 = vld [vmem:[%s4579] sm:$0xff]
      %s4581 = scalar_lea.vmem %s176, 3164
      %s4583 = ssub.s32 0, 4
      %s4584 = scalar_lea.vmem %s4581, %s4583
      %v4585 = vpack.c.bf16 %v4580, %v3486
      %4586 = vst [vmem:[%s4584] sm:$0xff] %v4585
      %s4587 = scalar_lea.vmem %s150, 4280
      %v4588 = vld [vmem:[%s4587] sm:$0xff]
      %s4589 = scalar_lea.vmem %s176, 6236
      %s4591 = ssub.s32 0, 4
      %s4592 = scalar_lea.vmem %s4589, %s4591
      %v4593 = vpack.c.bf16 %v4588, %v3489
      %4594 = vst [vmem:[%s4592] sm:$0xff] %v4593
      %s4595 = scalar_lea.vmem %s150, 14520
      %v4596 = vld [vmem:[%s4595] sm:$0xff]
      %s4597 = scalar_lea.vmem %s176, 1116
      %s4599 = ssub.s32 0, 4
      %s4600 = scalar_lea.vmem %s4597, %s4599
      %v4601 = vpack.c.bf16 %v4596, %v3492
      %4602 = vst [vmem:[%s4600] sm:$0xff] %v4601
      %s4603 = scalar_lea.vmem %s150, 8376
      %v4604 = vld [vmem:[%s4603] sm:$0xff]
      %s4605 = scalar_lea.vmem %s176, 4188
      %s4607 = ssub.s32 0, 4
      %s4608 = scalar_lea.vmem %s4605, %s4607
      %v4609 = vpack.c.bf16 %v4604, %v3495
      %4610 = vst [vmem:[%s4608] sm:$0xff] %v4609
      %s4611 = scalar_lea.vmem %s150, 2232
      %v4612 = vld [vmem:[%s4611] sm:$0xff]
      %s4613 = scalar_lea.vmem %s176, 7260
      %s4615 = ssub.s32 0, 4
      %s4616 = scalar_lea.vmem %s4613, %s4615
      %v4617 = vpack.c.bf16 %v4612, %v3498
      %4618 = vst [vmem:[%s4616] sm:$0xff] %v4617
      %s4619 = scalar_lea.vmem %s150, 12472
      %v4620 = vld [vmem:[%s4619] sm:$0xff]
      %s4621 = scalar_lea.vmem %s176, 2140
      %s4623 = ssub.s32 0, 4
      %s4624 = scalar_lea.vmem %s4621, %s4623
      %v4625 = vpack.c.bf16 %v4620, %v3501
      %4626 = vst [vmem:[%s4624] sm:$0xff] %v4625
      %s4627 = scalar_lea.vmem %s150, 6328
      %v4628 = vld [vmem:[%s4627] sm:$0xff]
      %s4629 = scalar_lea.vmem %s176, 5212
      %s4631 = ssub.s32 0, 4
      %s4632 = scalar_lea.vmem %s4629, %s4631
      %v4633 = vpack.c.bf16 %v4628, %v3504
      %4634 = vst [vmem:[%s4632] sm:$0xff] %v4633
      %s4635 = scalar_lea.vmem %s150, 184
      %v4636 = vld [vmem:[%s4635] sm:$0xff]
      %s4637 = scalar_lea.vmem %s176, 8284
      %s4639 = ssub.s32 0, 4
      %s4640 = scalar_lea.vmem %s4637, %s4639
      %v4641 = vpack.c.bf16 %v4636, %v3507
      %4642 = vst [vmem:[%s4640] sm:$0xff] %v4641
      %s4643 = scalar_lea.vmem %s150, 16600
      %v4644 = vld [vmem:[%s4643] sm:$0xff]
      %s4645 = scalar_lea.vmem %s176, 108
      %s4647 = ssub.s32 0, 4
      %s4648 = scalar_lea.vmem %s4645, %s4647
      %v4649 = vpack.c.bf16 %v4644, %v3510
      %4650 = vst [vmem:[%s4648] sm:$0xff] %v4649
      %s4651 = scalar_lea.vmem %s150, 10456
      %v4652 = vld [vmem:[%s4651] sm:$0xff]
      %s4653 = scalar_lea.vmem %s176, 3180
      %s4655 = ssub.s32 0, 4
      %s4656 = scalar_lea.vmem %s4653, %s4655
      %v4657 = vpack.c.bf16 %v4652, %v3513
      %4658 = vst [vmem:[%s4656] sm:$0xff] %v4657
      %s4659 = scalar_lea.vmem %s150, 4312
      %v4660 = vld [vmem:[%s4659] sm:$0xff]
      %s4661 = scalar_lea.vmem %s176, 6252
      %s4663 = ssub.s32 0, 4
      %s4664 = scalar_lea.vmem %s4661, %s4663
      %v4665 = vpack.c.bf16 %v4660, %v3516
      %4666 = vst [vmem:[%s4664] sm:$0xff] %v4665
      %s4667 = scalar_lea.vmem %s150, 14552
      %v4668 = vld [vmem:[%s4667] sm:$0xff]
      %s4669 = scalar_lea.vmem %s176, 1132
      %s4671 = ssub.s32 0, 4
      %s4672 = scalar_lea.vmem %s4669, %s4671
      %v4673 = vpack.c.bf16 %v4668, %v3519
      %4674 = vst [vmem:[%s4672] sm:$0xff] %v4673
      %s4675 = scalar_lea.vmem %s150, 8408
      %v4676 = vld [vmem:[%s4675] sm:$0xff]
      %s4677 = scalar_lea.vmem %s176, 4204
      %s4679 = ssub.s32 0, 4
      %s4680 = scalar_lea.vmem %s4677, %s4679
      %v4681 = vpack.c.bf16 %v4676, %v3522
      %4682 = vst [vmem:[%s4680] sm:$0xff] %v4681
      %s4683 = scalar_lea.vmem %s150, 2264
      %v4684 = vld [vmem:[%s4683] sm:$0xff]
      %s4685 = scalar_lea.vmem %s176, 7276
      %s4687 = ssub.s32 0, 4
      %s4688 = scalar_lea.vmem %s4685, %s4687
      %v4689 = vpack.c.bf16 %v4684, %v3525
      %4690 = vst [vmem:[%s4688] sm:$0xff] %v4689
      %s4691 = scalar_lea.vmem %s150, 12504
      %v4692 = vld [vmem:[%s4691] sm:$0xff]
      %s4693 = scalar_lea.vmem %s176, 2156
      %s4695 = ssub.s32 0, 4
      %s4696 = scalar_lea.vmem %s4693, %s4695
      %v4697 = vpack.c.bf16 %v4692, %v3528
      %4698 = vst [vmem:[%s4696] sm:$0xff] %v4697
      %s4699 = scalar_lea.vmem %s150, 6360
      %v4700 = vld [vmem:[%s4699] sm:$0xff]
      %s4701 = scalar_lea.vmem %s176, 5228
      %s4703 = ssub.s32 0, 4
      %s4704 = scalar_lea.vmem %s4701, %s4703
      %v4705 = vpack.c.bf16 %v4700, %v3531
      %4706 = vst [vmem:[%s4704] sm:$0xff] %v4705
      %s4707 = scalar_lea.vmem %s150, 216
      %v4708 = vld [vmem:[%s4707] sm:$0xff]
      %s4709 = scalar_lea.vmem %s176, 8300
      %s4711 = ssub.s32 0, 4
      %s4712 = scalar_lea.vmem %s4709, %s4711
      %v4713 = vpack.c.bf16 %v4708, %v3534
      %4714 = vst [vmem:[%s4712] sm:$0xff] %v4713
      %s4715 = scalar_lea.vmem %s150, 16632
      %v4716 = vld [vmem:[%s4715] sm:$0xff]
      %s4717 = scalar_lea.vmem %s176, 124
      %s4719 = ssub.s32 0, 4
      %s4720 = scalar_lea.vmem %s4717, %s4719
      %v4721 = vpack.c.bf16 %v4716, %v3537
      %4722 = vst [vmem:[%s4720] sm:$0xff] %v4721
      %s4723 = scalar_lea.vmem %s150, 10488
      %v4724 = vld [vmem:[%s4723] sm:$0xff]
      %s4725 = scalar_lea.vmem %s176, 3196
      %s4727 = ssub.s32 0, 4
      %s4728 = scalar_lea.vmem %s4725, %s4727
      %v4729 = vpack.c.bf16 %v4724, %v3540
      %4730 = vst [vmem:[%s4728] sm:$0xff] %v4729
      %s4731 = scalar_lea.vmem %s150, 4344
      %v4732 = vld [vmem:[%s4731] sm:$0xff]
      %s4733 = scalar_lea.vmem %s176, 6268
      %s4735 = ssub.s32 0, 4
      %s4736 = scalar_lea.vmem %s4733, %s4735
      %v4737 = vpack.c.bf16 %v4732, %v3543
      %4738 = vst [vmem:[%s4736] sm:$0xff] %v4737
      %s4739 = scalar_lea.vmem %s150, 14584
      %v4740 = vld [vmem:[%s4739] sm:$0xff]
      %s4741 = scalar_lea.vmem %s176, 1148
      %s4743 = ssub.s32 0, 4
      %s4744 = scalar_lea.vmem %s4741, %s4743
      %v4745 = vpack.c.bf16 %v4740, %v3546
      %4746 = vst [vmem:[%s4744] sm:$0xff] %v4745
      %s4747 = scalar_lea.vmem %s150, 8440
      %v4748 = vld [vmem:[%s4747] sm:$0xff]
      %s4749 = scalar_lea.vmem %s176, 4220
      %s4751 = ssub.s32 0, 4
      %s4752 = scalar_lea.vmem %s4749, %s4751
      %v4753 = vpack.c.bf16 %v4748, %v3549
      %4754 = vst [vmem:[%s4752] sm:$0xff] %v4753
      %s4755 = scalar_lea.vmem %s150, 2296
      %v4756 = vld [vmem:[%s4755] sm:$0xff]
      %s4757 = scalar_lea.vmem %s176, 7292
      %s4759 = ssub.s32 0, 4
      %s4760 = scalar_lea.vmem %s4757, %s4759
      %v4761 = vpack.c.bf16 %v4756, %v3552
      %4762 = vst [vmem:[%s4760] sm:$0xff] %v4761
      %s4763 = scalar_lea.vmem %s150, 12536
      %v4764 = vld [vmem:[%s4763] sm:$0xff]
      %s4765 = scalar_lea.vmem %s176, 2172
      %s4767 = ssub.s32 0, 4
      %s4768 = scalar_lea.vmem %s4765, %s4767
      %v4769 = vpack.c.bf16 %v4764, %v3555
      %4770 = vst [vmem:[%s4768] sm:$0xff] %v4769
      %s4771 = scalar_lea.vmem %s150, 6392
      %v4772 = vld [vmem:[%s4771] sm:$0xff]
      %s4773 = scalar_lea.vmem %s176, 5244
      %s4775 = ssub.s32 0, 4
      %s4776 = scalar_lea.vmem %s4773, %s4775
      %v4777 = vpack.c.bf16 %v4772, %v3558
      %4778 = vst [vmem:[%s4776] sm:$0xff] %v4777
      %s4779 = scalar_lea.vmem %s150, 248
      %v4780 = vld [vmem:[%s4779] sm:$0xff]
      %s4781 = scalar_lea.vmem %s176, 8316
      %s4783 = ssub.s32 0, 4
      %s4784 = scalar_lea.vmem %s4781, %s4783
      %v4785 = vpack.c.bf16 %v4780, %v3561
      %4786 = vst [vmem:[%s4784] sm:$0xff] %v4785
      %s4787 = scalar_lea.vmem %s150, 16664
      %v4788 = vld [vmem:[%s4787] sm:$0xff]
      %s4789 = scalar_lea.vmem %s176, 140
      %s4791 = ssub.s32 0, 4
      %s4792 = scalar_lea.vmem %s4789, %s4791
      %v4793 = vpack.c.bf16 %v4788, %v3564
      %4794 = vst [vmem:[%s4792] sm:$0xff] %v4793
      %s4795 = scalar_lea.vmem %s150, 10520
      %v4796 = vld [vmem:[%s4795] sm:$0xff]
      %s4797 = scalar_lea.vmem %s176, 3212
      %s4799 = ssub.s32 0, 4
      %s4800 = scalar_lea.vmem %s4797, %s4799
      %v4801 = vpack.c.bf16 %v4796, %v3567
      %4802 = vst [vmem:[%s4800] sm:$0xff] %v4801
      %s4803 = scalar_lea.vmem %s150, 4376
      %v4804 = vld [vmem:[%s4803] sm:$0xff]
      %s4805 = scalar_lea.vmem %s176, 6284
      %s4807 = ssub.s32 0, 4
      %s4808 = scalar_lea.vmem %s4805, %s4807
      %v4809 = vpack.c.bf16 %v4804, %v3570
      %4810 = vst [vmem:[%s4808] sm:$0xff] %v4809
      %s4811 = scalar_lea.vmem %s150, 14616
      %v4812 = vld [vmem:[%s4811] sm:$0xff]
      %s4813 = scalar_lea.vmem %s176, 1164
      %s4815 = ssub.s32 0, 4
      %s4816 = scalar_lea.vmem %s4813, %s4815
      %v4817 = vpack.c.bf16 %v4812, %v3573
      %4818 = vst [vmem:[%s4816] sm:$0xff] %v4817
      %s4819 = scalar_lea.vmem %s150, 8472
      %v4820 = vld [vmem:[%s4819] sm:$0xff]
      %s4821 = scalar_lea.vmem %s176, 4236
      %s4823 = ssub.s32 0, 4
      %s4824 = scalar_lea.vmem %s4821, %s4823
      %v4825 = vpack.c.bf16 %v4820, %v3576
      %4826 = vst [vmem:[%s4824] sm:$0xff] %v4825
      %s4827 = scalar_lea.vmem %s150, 2328
      %v4828 = vld [vmem:[%s4827] sm:$0xff]
      %s4829 = scalar_lea.vmem %s176, 7308
      %s4831 = ssub.s32 0, 4
      %s4832 = scalar_lea.vmem %s4829, %s4831
      %v4833 = vpack.c.bf16 %v4828, %v3579
      %4834 = vst [vmem:[%s4832] sm:$0xff] %v4833
      %s4835 = scalar_lea.vmem %s150, 12568
      %v4836 = vld [vmem:[%s4835] sm:$0xff]
      %s4837 = scalar_lea.vmem %s176, 2188
      %s4839 = ssub.s32 0, 4
      %s4840 = scalar_lea.vmem %s4837, %s4839
      %v4841 = vpack.c.bf16 %v4836, %v3582
      %4842 = vst [vmem:[%s4840] sm:$0xff] %v4841
      %s4843 = scalar_lea.vmem %s150, 6424
      %v4844 = vld [vmem:[%s4843] sm:$0xff]
      %s4845 = scalar_lea.vmem %s176, 5260
      %s4847 = ssub.s32 0, 4
      %s4848 = scalar_lea.vmem %s4845, %s4847
      %v4849 = vpack.c.bf16 %v4844, %v3585
      %4850 = vst [vmem:[%s4848] sm:$0xff] %v4849
      %s4851 = scalar_lea.vmem %s150, 280
      %v4852 = vld [vmem:[%s4851] sm:$0xff]
      %s4853 = scalar_lea.vmem %s176, 8332
      %s4855 = ssub.s32 0, 4
      %s4856 = scalar_lea.vmem %s4853, %s4855
      %v4857 = vpack.c.bf16 %v4852, %v3588
      %4858 = vst [vmem:[%s4856] sm:$0xff] %v4857
      %s4859 = scalar_lea.vmem %s150, 16696
      %v4860 = vld [vmem:[%s4859] sm:$0xff]
      %s4861 = scalar_lea.vmem %s176, 156
      %s4863 = ssub.s32 0, 4
      %s4864 = scalar_lea.vmem %s4861, %s4863
      %v4865 = vpack.c.bf16 %v4860, %v3591
      %4866 = vst [vmem:[%s4864] sm:$0xff] %v4865
      %s4867 = scalar_lea.vmem %s150, 10552
      %v4868 = vld [vmem:[%s4867] sm:$0xff]
      %s4869 = scalar_lea.vmem %s176, 3228
      %s4871 = ssub.s32 0, 4
      %s4872 = scalar_lea.vmem %s4869, %s4871
      %v4873 = vpack.c.bf16 %v4868, %v3594
      %4874 = vst [vmem:[%s4872] sm:$0xff] %v4873
      %s4875 = scalar_lea.vmem %s150, 4408
      %v4876 = vld [vmem:[%s4875] sm:$0xff]
      %s4877 = scalar_lea.vmem %s176, 6300
      %s4879 = ssub.s32 0, 4
      %s4880 = scalar_lea.vmem %s4877, %s4879
      %v4881 = vpack.c.bf16 %v4876, %v3597
      %4882 = vst [vmem:[%s4880] sm:$0xff] %v4881
      %s4883 = scalar_lea.vmem %s150, 14648
      %v4884 = vld [vmem:[%s4883] sm:$0xff]
      %s4885 = scalar_lea.vmem %s176, 1180
      %s4887 = ssub.s32 0, 4
      %s4888 = scalar_lea.vmem %s4885, %s4887
      %v4889 = vpack.c.bf16 %v4884, %v3600
      %4890 = vst [vmem:[%s4888] sm:$0xff] %v4889
      %s4891 = scalar_lea.vmem %s150, 8504
      %v4892 = vld [vmem:[%s4891] sm:$0xff]
      %s4893 = scalar_lea.vmem %s176, 4252
      %s4895 = ssub.s32 0, 4
      %s4896 = scalar_lea.vmem %s4893, %s4895
      %v4897 = vpack.c.bf16 %v4892, %v3603
      %4898 = vst [vmem:[%s4896] sm:$0xff] %v4897
      %s4899 = scalar_lea.vmem %s150, 2360
      %v4900 = vld [vmem:[%s4899] sm:$0xff]
      %s4901 = scalar_lea.vmem %s176, 7324
      %s4903 = ssub.s32 0, 4
      %s4904 = scalar_lea.vmem %s4901, %s4903
      %v4905 = vpack.c.bf16 %v4900, %v3606
      %4906 = vst [vmem:[%s4904] sm:$0xff] %v4905
      %s4907 = scalar_lea.vmem %s150, 12600
      %v4908 = vld [vmem:[%s4907] sm:$0xff]
      %s4909 = scalar_lea.vmem %s176, 2204
      %s4911 = ssub.s32 0, 4
      %s4912 = scalar_lea.vmem %s4909, %s4911
      %v4913 = vpack.c.bf16 %v4908, %v3609
      %4914 = vst [vmem:[%s4912] sm:$0xff] %v4913
      %s4915 = scalar_lea.vmem %s150, 6456
      %v4916 = vld [vmem:[%s4915] sm:$0xff]
      %s4917 = scalar_lea.vmem %s176, 5276
      %s4919 = ssub.s32 0, 4
      %s4920 = scalar_lea.vmem %s4917, %s4919
      %v4921 = vpack.c.bf16 %v4916, %v3612
      %4922 = vst [vmem:[%s4920] sm:$0xff] %v4921
      %s4923 = scalar_lea.vmem %s150, 312
      %v4924 = vld [vmem:[%s4923] sm:$0xff]
      %s4925 = scalar_lea.vmem %s176, 8348
      %s4927 = ssub.s32 0, 4
      %s4928 = scalar_lea.vmem %s4925, %s4927
      %v4929 = vpack.c.bf16 %v4924, %v3615
      %4930 = vst [vmem:[%s4928] sm:$0xff] %v4929
      %s4931 = scalar_lea.vmem %s150, 16728
      %v4932 = vld [vmem:[%s4931] sm:$0xff]
      %s4933 = scalar_lea.vmem %s176, 172
      %s4935 = ssub.s32 0, 4
      %s4936 = scalar_lea.vmem %s4933, %s4935
      %v4937 = vpack.c.bf16 %v4932, %v3618
      %4938 = vst [vmem:[%s4936] sm:$0xff] %v4937
      %s4939 = scalar_lea.vmem %s150, 10584
      %v4940 = vld [vmem:[%s4939] sm:$0xff]
      %s4941 = scalar_lea.vmem %s176, 3244
      %s4943 = ssub.s32 0, 4
      %s4944 = scalar_lea.vmem %s4941, %s4943
      %v4945 = vpack.c.bf16 %v4940, %v3621
      %4946 = vst [vmem:[%s4944] sm:$0xff] %v4945
      %s4947 = scalar_lea.vmem %s150, 4440
      %v4948 = vld [vmem:[%s4947] sm:$0xff]
      %s4949 = scalar_lea.vmem %s176, 6316
      %s4951 = ssub.s32 0, 4
      %s4952 = scalar_lea.vmem %s4949, %s4951
      %v4953 = vpack.c.bf16 %v4948, %v3624
      %4954 = vst [vmem:[%s4952] sm:$0xff] %v4953
      %s4955 = scalar_lea.vmem %s150, 14680
      %v4956 = vld [vmem:[%s4955] sm:$0xff]
      %s4957 = scalar_lea.vmem %s176, 1196
      %s4959 = ssub.s32 0, 4
      %s4960 = scalar_lea.vmem %s4957, %s4959
      %v4961 = vpack.c.bf16 %v4956, %v3627
      %4962 = vst [vmem:[%s4960] sm:$0xff] %v4961
      %s4963 = scalar_lea.vmem %s150, 8536
      %v4964 = vld [vmem:[%s4963] sm:$0xff]
      %s4965 = scalar_lea.vmem %s176, 4268
      %s4967 = ssub.s32 0, 4
      %s4968 = scalar_lea.vmem %s4965, %s4967
      %v4969 = vpack.c.bf16 %v4964, %v3630
      %4970 = vst [vmem:[%s4968] sm:$0xff] %v4969
      %s4971 = scalar_lea.vmem %s150, 2392
      %v4972 = vld [vmem:[%s4971] sm:$0xff]
      %s4973 = scalar_lea.vmem %s176, 7340
      %s4975 = ssub.s32 0, 4
      %s4976 = scalar_lea.vmem %s4973, %s4975
      %v4977 = vpack.c.bf16 %v4972, %v3633
      %4978 = vst [vmem:[%s4976] sm:$0xff] %v4977
      %s4979 = scalar_lea.vmem %s150, 12632
      %v4980 = vld [vmem:[%s4979] sm:$0xff]
      %s4981 = scalar_lea.vmem %s176, 2220
      %s4983 = ssub.s32 0, 4
      %s4984 = scalar_lea.vmem %s4981, %s4983
      %v4985 = vpack.c.bf16 %v4980, %v3636
      %4986 = vst [vmem:[%s4984] sm:$0xff] %v4985
      %s4987 = scalar_lea.vmem %s150, 6488
      %v4988 = vld [vmem:[%s4987] sm:$0xff]
      %s4989 = scalar_lea.vmem %s176, 5292
      %s4991 = ssub.s32 0, 4
      %s4992 = scalar_lea.vmem %s4989, %s4991
      %v4993 = vpack.c.bf16 %v4988, %v3639
      %4994 = vst [vmem:[%s4992] sm:$0xff] %v4993
      %s4995 = scalar_lea.vmem %s150, 344
      %v4996 = vld [vmem:[%s4995] sm:$0xff]
      %s4997 = scalar_lea.vmem %s176, 8364
      %s4999 = ssub.s32 0, 4
      %s5000 = scalar_lea.vmem %s4997, %s4999
      %v5001 = vpack.c.bf16 %v4996, %v3642
      %5002 = vst [vmem:[%s5000] sm:$0xff] %v5001
      %s5003 = scalar_lea.vmem %s150, 16760
      %v5004 = vld [vmem:[%s5003] sm:$0xff]
      %s5005 = scalar_lea.vmem %s176, 188
      %s5007 = ssub.s32 0, 4
      %s5008 = scalar_lea.vmem %s5005, %s5007
      %v5009 = vpack.c.bf16 %v5004, %v3645
      %5010 = vst [vmem:[%s5008] sm:$0xff] %v5009
      %s5011 = scalar_lea.vmem %s150, 10616
      %v5012 = vld [vmem:[%s5011] sm:$0xff]
      %s5013 = scalar_lea.vmem %s176, 3260
      %s5015 = ssub.s32 0, 4
      %s5016 = scalar_lea.vmem %s5013, %s5015
      %v5017 = vpack.c.bf16 %v5012, %v3648
      %5018 = vst [vmem:[%s5016] sm:$0xff] %v5017
      %s5019 = scalar_lea.vmem %s150, 4472
      %v5020 = vld [vmem:[%s5019] sm:$0xff]
      %s5021 = scalar_lea.vmem %s176, 6332
      %s5023 = ssub.s32 0, 4
      %s5024 = scalar_lea.vmem %s5021, %s5023
      %v5025 = vpack.c.bf16 %v5020, %v3651
      %5026 = vst [vmem:[%s5024] sm:$0xff] %v5025
      %s5027 = scalar_lea.vmem %s150, 14712
      %v5028 = vld [vmem:[%s5027] sm:$0xff]
      %s5029 = scalar_lea.vmem %s176, 1212
      %s5031 = ssub.s32 0, 4
      %s5032 = scalar_lea.vmem %s5029, %s5031
      %v5033 = vpack.c.bf16 %v5028, %v3654
      %5034 = vst [vmem:[%s5032] sm:$0xff] %v5033
      %s5035 = scalar_lea.vmem %s150, 8568
      %v5036 = vld [vmem:[%s5035] sm:$0xff]
      %s5037 = scalar_lea.vmem %s176, 4284
      %s5039 = ssub.s32 0, 4
      %s5040 = scalar_lea.vmem %s5037, %s5039
      %v5041 = vpack.c.bf16 %v5036, %v3657
      %5042 = vst [vmem:[%s5040] sm:$0xff] %v5041
      %s5043 = scalar_lea.vmem %s150, 2424
      %v5044 = vld [vmem:[%s5043] sm:$0xff]
      %s5045 = scalar_lea.vmem %s176, 7356
      %s5047 = ssub.s32 0, 4
      %s5048 = scalar_lea.vmem %s5045, %s5047
      %v5049 = vpack.c.bf16 %v5044, %v3660
      %5050 = vst [vmem:[%s5048] sm:$0xff] %v5049
      %s5051 = scalar_lea.vmem %s150, 12664
      %v5052 = vld [vmem:[%s5051] sm:$0xff]
      %s5053 = scalar_lea.vmem %s176, 2236
      %s5055 = ssub.s32 0, 4
      %s5056 = scalar_lea.vmem %s5053, %s5055
      %v5057 = vpack.c.bf16 %v5052, %v3663
      %5058 = vst [vmem:[%s5056] sm:$0xff] %v5057
      %s5059 = scalar_lea.vmem %s150, 6520
      %v5060 = vld [vmem:[%s5059] sm:$0xff]
      %s5061 = scalar_lea.vmem %s176, 5308
      %s5063 = ssub.s32 0, 4
      %s5064 = scalar_lea.vmem %s5061, %s5063
      %v5065 = vpack.c.bf16 %v5060, %v3666
      %5066 = vst [vmem:[%s5064] sm:$0xff] %v5065
      %s5067 = scalar_lea.vmem %s150, 376
      %v5068 = vld [vmem:[%s5067] sm:$0xff]
      %s5069 = scalar_lea.vmem %s176, 8380
      %s5071 = ssub.s32 0, 4
      %s5072 = scalar_lea.vmem %s5069, %s5071
      %v5073 = vpack.c.bf16 %v5068, %v3669
      %5074 = vst [vmem:[%s5072] sm:$0xff] %v5073
      %s5075 = scalar_lea.vmem %s150, 16792
      %v5076 = vld [vmem:[%s5075] sm:$0xff]
      %s5077 = scalar_lea.vmem %s176, 204
      %s5079 = ssub.s32 0, 4
      %s5080 = scalar_lea.vmem %s5077, %s5079
      %v5081 = vpack.c.bf16 %v5076, %v3672
      %5082 = vst [vmem:[%s5080] sm:$0xff] %v5081
      %s5083 = scalar_lea.vmem %s150, 10648
      %v5084 = vld [vmem:[%s5083] sm:$0xff]
      %s5085 = scalar_lea.vmem %s176, 3276
      %s5087 = ssub.s32 0, 4
      %s5088 = scalar_lea.vmem %s5085, %s5087
      %v5089 = vpack.c.bf16 %v5084, %v3675
      %5090 = vst [vmem:[%s5088] sm:$0xff] %v5089
      %s5091 = scalar_lea.vmem %s150, 4504
      %v5092 = vld [vmem:[%s5091] sm:$0xff]
      %s5093 = scalar_lea.vmem %s176, 6348
      %s5095 = ssub.s32 0, 4
      %s5096 = scalar_lea.vmem %s5093, %s5095
      %v5097 = vpack.c.bf16 %v5092, %v3678
      %5098 = vst [vmem:[%s5096] sm:$0xff] %v5097
      %s5099 = scalar_lea.vmem %s150, 14744
      %v5100 = vld [vmem:[%s5099] sm:$0xff]
      %s5101 = scalar_lea.vmem %s176, 1228
      %s5103 = ssub.s32 0, 4
      %s5104 = scalar_lea.vmem %s5101, %s5103
      %v5105 = vpack.c.bf16 %v5100, %v3681
      %5106 = vst [vmem:[%s5104] sm:$0xff] %v5105
      %s5107 = scalar_lea.vmem %s150, 8600
      %v5108 = vld [vmem:[%s5107] sm:$0xff]
      %s5109 = scalar_lea.vmem %s176, 4300
      %s5111 = ssub.s32 0, 4
      %s5112 = scalar_lea.vmem %s5109, %s5111
      %v5113 = vpack.c.bf16 %v5108, %v3684
      %5114 = vst [vmem:[%s5112] sm:$0xff] %v5113
      %s5115 = scalar_lea.vmem %s150, 2456
      %v5116 = vld [vmem:[%s5115] sm:$0xff]
      %s5117 = scalar_lea.vmem %s176, 7372
      %s5119 = ssub.s32 0, 4
      %s5120 = scalar_lea.vmem %s5117, %s5119
      %v5121 = vpack.c.bf16 %v5116, %v3687
      %5122 = vst [vmem:[%s5120] sm:$0xff] %v5121
      %s5123 = scalar_lea.vmem %s150, 12696
      %v5124 = vld [vmem:[%s5123] sm:$0xff]
      %s5125 = scalar_lea.vmem %s176, 2252
      %s5127 = ssub.s32 0, 4
      %s5128 = scalar_lea.vmem %s5125, %s5127
      %v5129 = vpack.c.bf16 %v5124, %v3690
      %5130 = vst [vmem:[%s5128] sm:$0xff] %v5129
      %s5131 = scalar_lea.vmem %s150, 6552
      %v5132 = vld [vmem:[%s5131] sm:$0xff]
      %s5133 = scalar_lea.vmem %s176, 5324
      %s5135 = ssub.s32 0, 4
      %s5136 = scalar_lea.vmem %s5133, %s5135
      %v5137 = vpack.c.bf16 %v5132, %v3693
      %5138 = vst [vmem:[%s5136] sm:$0xff] %v5137
      %s5139 = scalar_lea.vmem %s150, 408
      %v5140 = vld [vmem:[%s5139] sm:$0xff]
      %s5141 = scalar_lea.vmem %s176, 8396
      %s5143 = ssub.s32 0, 4
      %s5144 = scalar_lea.vmem %s5141, %s5143
      %v5145 = vpack.c.bf16 %v5140, %v3696
      %5146 = vst [vmem:[%s5144] sm:$0xff] %v5145
      %s5147 = scalar_lea.vmem %s150, 16824
      %v5148 = vld [vmem:[%s5147] sm:$0xff]
      %s5149 = scalar_lea.vmem %s176, 220
      %s5151 = ssub.s32 0, 4
      %s5152 = scalar_lea.vmem %s5149, %s5151
      %v5153 = vpack.c.bf16 %v5148, %v3699
      %5154 = vst [vmem:[%s5152] sm:$0xff] %v5153
      %s5155 = scalar_lea.vmem %s150, 10680
      %v5156 = vld [vmem:[%s5155] sm:$0xff]
      %s5157 = scalar_lea.vmem %s176, 3292
      %s5159 = ssub.s32 0, 4
      %s5160 = scalar_lea.vmem %s5157, %s5159
      %v5161 = vpack.c.bf16 %v5156, %v3702
      %5162 = vst [vmem:[%s5160] sm:$0xff] %v5161
      %s5163 = scalar_lea.vmem %s150, 4536
      %v5164 = vld [vmem:[%s5163] sm:$0xff]
      %s5165 = scalar_lea.vmem %s176, 6364
      %s5167 = ssub.s32 0, 4
      %s5168 = scalar_lea.vmem %s5165, %s5167
      %v5169 = vpack.c.bf16 %v5164, %v3705
      %5170 = vst [vmem:[%s5168] sm:$0xff] %v5169
      %s5171 = scalar_lea.vmem %s150, 14776
      %v5172 = vld [vmem:[%s5171] sm:$0xff]
      %s5173 = scalar_lea.vmem %s176, 1244
      %s5175 = ssub.s32 0, 4
      %s5176 = scalar_lea.vmem %s5173, %s5175
      %v5177 = vpack.c.bf16 %v5172, %v3708
      %5178 = vst [vmem:[%s5176] sm:$0xff] %v5177
      %s5179 = scalar_lea.vmem %s150, 8632
      %v5180 = vld [vmem:[%s5179] sm:$0xff]
      %s5181 = scalar_lea.vmem %s176, 4316
      %s5183 = ssub.s32 0, 4
      %s5184 = scalar_lea.vmem %s5181, %s5183
      %v5185 = vpack.c.bf16 %v5180, %v3711
      %5186 = vst [vmem:[%s5184] sm:$0xff] %v5185
      %s5187 = scalar_lea.vmem %s150, 2488
      %v5188 = vld [vmem:[%s5187] sm:$0xff]
      %s5189 = scalar_lea.vmem %s176, 7388
      %s5191 = ssub.s32 0, 4
      %s5192 = scalar_lea.vmem %s5189, %s5191
      %v5193 = vpack.c.bf16 %v5188, %v3714
      %5194 = vst [vmem:[%s5192] sm:$0xff] %v5193
      %s5195 = scalar_lea.vmem %s150, 12728
      %v5196 = vld [vmem:[%s5195] sm:$0xff]
      %s5197 = scalar_lea.vmem %s176, 2268
      %s5199 = ssub.s32 0, 4
      %s5200 = scalar_lea.vmem %s5197, %s5199
      %v5201 = vpack.c.bf16 %v5196, %v3717
      %5202 = vst [vmem:[%s5200] sm:$0xff] %v5201
      %s5203 = scalar_lea.vmem %s150, 6584
      %v5204 = vld [vmem:[%s5203] sm:$0xff]
      %s5205 = scalar_lea.vmem %s176, 5340
      %s5207 = ssub.s32 0, 4
      %s5208 = scalar_lea.vmem %s5205, %s5207
      %v5209 = vpack.c.bf16 %v5204, %v3720
      %5210 = vst [vmem:[%s5208] sm:$0xff] %v5209
      %s5211 = scalar_lea.vmem %s150, 440
      %v5212 = vld [vmem:[%s5211] sm:$0xff]
      %s5213 = scalar_lea.vmem %s176, 8412
      %s5215 = ssub.s32 0, 4
      %s5216 = scalar_lea.vmem %s5213, %s5215
      %v5217 = vpack.c.bf16 %v5212, %v3723
      %5218 = vst [vmem:[%s5216] sm:$0xff] %v5217
      %s5219 = scalar_lea.vmem %s150, 16856
      %v5220 = vld [vmem:[%s5219] sm:$0xff]
      %s5221 = scalar_lea.vmem %s176, 236
      %s5223 = ssub.s32 0, 4
      %s5224 = scalar_lea.vmem %s5221, %s5223
      %v5225 = vpack.c.bf16 %v5220, %v3726
      %5226 = vst [vmem:[%s5224] sm:$0xff] %v5225
      %s5227 = scalar_lea.vmem %s150, 10712
      %v5228 = vld [vmem:[%s5227] sm:$0xff]
      %s5229 = scalar_lea.vmem %s176, 3308
      %s5231 = ssub.s32 0, 4
      %s5232 = scalar_lea.vmem %s5229, %s5231
      %v5233 = vpack.c.bf16 %v5228, %v3729
      %5234 = vst [vmem:[%s5232] sm:$0xff] %v5233
      %s5235 = scalar_lea.vmem %s150, 4568
      %v5236 = vld [vmem:[%s5235] sm:$0xff]
      %s5237 = scalar_lea.vmem %s176, 6380
      %s5239 = ssub.s32 0, 4
      %s5240 = scalar_lea.vmem %s5237, %s5239
      %v5241 = vpack.c.bf16 %v5236, %v3732
      %5242 = vst [vmem:[%s5240] sm:$0xff] %v5241
      %s5243 = scalar_lea.vmem %s150, 14808
      %v5244 = vld [vmem:[%s5243] sm:$0xff]
      %s5245 = scalar_lea.vmem %s176, 1260
      %s5247 = ssub.s32 0, 4
      %s5248 = scalar_lea.vmem %s5245, %s5247
      %v5249 = vpack.c.bf16 %v5244, %v3735
      %5250 = vst [vmem:[%s5248] sm:$0xff] %v5249
      %s5251 = scalar_lea.vmem %s150, 8664
      %v5252 = vld [vmem:[%s5251] sm:$0xff]
      %s5253 = scalar_lea.vmem %s176, 4332
      %s5255 = ssub.s32 0, 4
      %s5256 = scalar_lea.vmem %s5253, %s5255
      %v5257 = vpack.c.bf16 %v5252, %v3738
      %5258 = vst [vmem:[%s5256] sm:$0xff] %v5257
      %s5259 = scalar_lea.vmem %s150, 2520
      %v5260 = vld [vmem:[%s5259] sm:$0xff]
      %s5261 = scalar_lea.vmem %s176, 7404
      %s5263 = ssub.s32 0, 4
      %s5264 = scalar_lea.vmem %s5261, %s5263
      %v5265 = vpack.c.bf16 %v5260, %v3741
      %5266 = vst [vmem:[%s5264] sm:$0xff] %v5265
      %s5267 = scalar_lea.vmem %s150, 12760
      %v5268 = vld [vmem:[%s5267] sm:$0xff]
      %s5269 = scalar_lea.vmem %s176, 2284
      %s5271 = ssub.s32 0, 4
      %s5272 = scalar_lea.vmem %s5269, %s5271
      %v5273 = vpack.c.bf16 %v5268, %v3744
      %5274 = vst [vmem:[%s5272] sm:$0xff] %v5273
      %s5275 = scalar_lea.vmem %s150, 6616
      %v5276 = vld [vmem:[%s5275] sm:$0xff]
      %s5277 = scalar_lea.vmem %s176, 5356
      %s5279 = ssub.s32 0, 4
      %s5280 = scalar_lea.vmem %s5277, %s5279
      %v5281 = vpack.c.bf16 %v5276, %v3747
      %5282 = vst [vmem:[%s5280] sm:$0xff] %v5281
      %s5283 = scalar_lea.vmem %s150, 472
      %v5284 = vld [vmem:[%s5283] sm:$0xff]
      %s5285 = scalar_lea.vmem %s176, 8428
      %s5287 = ssub.s32 0, 4
      %s5288 = scalar_lea.vmem %s5285, %s5287
      %v5289 = vpack.c.bf16 %v5284, %v3750
      %5290 = vst [vmem:[%s5288] sm:$0xff] %v5289
      %s5291 = scalar_lea.vmem %s150, 16888
      %v5292 = vld [vmem:[%s5291] sm:$0xff]
      %s5293 = scalar_lea.vmem %s176, 252
      %s5295 = ssub.s32 0, 4
      %s5296 = scalar_lea.vmem %s5293, %s5295
      %v5297 = vpack.c.bf16 %v5292, %v3753
      %5298 = vst [vmem:[%s5296] sm:$0xff] %v5297
      %s5299 = scalar_lea.vmem %s150, 10744
      %v5300 = vld [vmem:[%s5299] sm:$0xff]
      %s5301 = scalar_lea.vmem %s176, 3324
      %s5303 = ssub.s32 0, 4
      %s5304 = scalar_lea.vmem %s5301, %s5303
      %v5305 = vpack.c.bf16 %v5300, %v3756
      %5306 = vst [vmem:[%s5304] sm:$0xff] %v5305
      %s5307 = scalar_lea.vmem %s150, 4600
      %v5308 = vld [vmem:[%s5307] sm:$0xff]
      %s5309 = scalar_lea.vmem %s176, 6396
      %s5311 = ssub.s32 0, 4
      %s5312 = scalar_lea.vmem %s5309, %s5311
      %v5313 = vpack.c.bf16 %v5308, %v3759
      %5314 = vst [vmem:[%s5312] sm:$0xff] %v5313
      %s5315 = scalar_lea.vmem %s150, 14840
      %v5316 = vld [vmem:[%s5315] sm:$0xff]
      %s5317 = scalar_lea.vmem %s176, 1276
      %s5319 = ssub.s32 0, 4
      %s5320 = scalar_lea.vmem %s5317, %s5319
      %v5321 = vpack.c.bf16 %v5316, %v3762
      %5322 = vst [vmem:[%s5320] sm:$0xff] %v5321
      %s5323 = scalar_lea.vmem %s150, 8696
      %v5324 = vld [vmem:[%s5323] sm:$0xff]
      %s5325 = scalar_lea.vmem %s176, 4348
      %s5327 = ssub.s32 0, 4
      %s5328 = scalar_lea.vmem %s5325, %s5327
      %v5329 = vpack.c.bf16 %v5324, %v3765
      %5330 = vst [vmem:[%s5328] sm:$0xff] %v5329
      %s5331 = scalar_lea.vmem %s150, 2552
      %v5332 = vld [vmem:[%s5331] sm:$0xff]
      %s5333 = scalar_lea.vmem %s176, 7420
      %s5335 = ssub.s32 0, 4
      %s5336 = scalar_lea.vmem %s5333, %s5335
      %v5337 = vpack.c.bf16 %v5332, %v3768
      %5338 = vst [vmem:[%s5336] sm:$0xff] %v5337
      %s5339 = scalar_lea.vmem %s150, 12792
      %v5340 = vld [vmem:[%s5339] sm:$0xff]
      %s5341 = scalar_lea.vmem %s176, 2300
      %s5343 = ssub.s32 0, 4
      %s5344 = scalar_lea.vmem %s5341, %s5343
      %v5345 = vpack.c.bf16 %v5340, %v3771
      %5346 = vst [vmem:[%s5344] sm:$0xff] %v5345
      %s5347 = scalar_lea.vmem %s150, 6648
      %v5348 = vld [vmem:[%s5347] sm:$0xff]
      %s5349 = scalar_lea.vmem %s176, 5372
      %s5351 = ssub.s32 0, 4
      %s5352 = scalar_lea.vmem %s5349, %s5351
      %v5353 = vpack.c.bf16 %v5348, %v3774
      %5354 = vst [vmem:[%s5352] sm:$0xff] %v5353
      %s5355 = scalar_lea.vmem %s150, 504
      %v5356 = vld [vmem:[%s5355] sm:$0xff]
      %s5357 = scalar_lea.vmem %s176, 8444
      %s5359 = ssub.s32 0, 4
      %s5360 = scalar_lea.vmem %s5357, %s5359
      %v5361 = vpack.c.bf16 %v5356, %v3777
      %5362 = vst [vmem:[%s5360] sm:$0xff] %v5361
      %s5363 = scalar_lea.vmem %s150, 16920
      %v5364 = vld [vmem:[%s5363] sm:$0xff]
      %s5365 = scalar_lea.vmem %s176, 268
      %s5367 = ssub.s32 0, 4
      %s5368 = scalar_lea.vmem %s5365, %s5367
      %v5369 = vpack.c.bf16 %v5364, %v3780
      %5370 = vst [vmem:[%s5368] sm:$0xff] %v5369
      %s5371 = scalar_lea.vmem %s150, 10776
      %v5372 = vld [vmem:[%s5371] sm:$0xff]
      %s5373 = scalar_lea.vmem %s176, 3340
      %s5375 = ssub.s32 0, 4
      %s5376 = scalar_lea.vmem %s5373, %s5375
      %v5377 = vpack.c.bf16 %v5372, %v3783
      %5378 = vst [vmem:[%s5376] sm:$0xff] %v5377
      %s5379 = scalar_lea.vmem %s150, 4632
      %v5380 = vld [vmem:[%s5379] sm:$0xff]
      %s5381 = scalar_lea.vmem %s176, 6412
      %s5383 = ssub.s32 0, 4
      %s5384 = scalar_lea.vmem %s5381, %s5383
      %v5385 = vpack.c.bf16 %v5380, %v3786
      %5386 = vst [vmem:[%s5384] sm:$0xff] %v5385
      %s5387 = scalar_lea.vmem %s150, 14872
      %v5388 = vld [vmem:[%s5387] sm:$0xff]
      %s5389 = scalar_lea.vmem %s176, 1292
      %s5391 = ssub.s32 0, 4
      %s5392 = scalar_lea.vmem %s5389, %s5391
      %v5393 = vpack.c.bf16 %v5388, %v3789
      %5394 = vst [vmem:[%s5392] sm:$0xff] %v5393
      %s5395 = scalar_lea.vmem %s150, 8728
      %v5396 = vld [vmem:[%s5395] sm:$0xff]
      %s5397 = scalar_lea.vmem %s176, 4364
      %s5399 = ssub.s32 0, 4
      %s5400 = scalar_lea.vmem %s5397, %s5399
      %v5401 = vpack.c.bf16 %v5396, %v3792
      %5402 = vst [vmem:[%s5400] sm:$0xff] %v5401
      %s5403 = scalar_lea.vmem %s150, 2584
      %v5404 = vld [vmem:[%s5403] sm:$0xff]
      %s5405 = scalar_lea.vmem %s176, 7436
      %s5407 = ssub.s32 0, 4
      %s5408 = scalar_lea.vmem %s5405, %s5407
      %v5409 = vpack.c.bf16 %v5404, %v3795
      %5410 = vst [vmem:[%s5408] sm:$0xff] %v5409
      %s5411 = scalar_lea.vmem %s150, 12824
      %v5412 = vld [vmem:[%s5411] sm:$0xff]
      %s5413 = scalar_lea.vmem %s176, 2316
      %s5415 = ssub.s32 0, 4
      %s5416 = scalar_lea.vmem %s5413, %s5415
      %v5417 = vpack.c.bf16 %v5412, %v3798
      %5418 = vst [vmem:[%s5416] sm:$0xff] %v5417
      %s5419 = scalar_lea.vmem %s150, 6680
      %v5420 = vld [vmem:[%s5419] sm:$0xff]
      %s5421 = scalar_lea.vmem %s176, 5388
      %s5423 = ssub.s32 0, 4
      %s5424 = scalar_lea.vmem %s5421, %s5423
      %v5425 = vpack.c.bf16 %v5420, %v3801
      %5426 = vst [vmem:[%s5424] sm:$0xff] %v5425
      %s5427 = scalar_lea.vmem %s150, 536
      %v5428 = vld [vmem:[%s5427] sm:$0xff]
      %s5429 = scalar_lea.vmem %s176, 8460
      %s5431 = ssub.s32 0, 4
      %s5432 = scalar_lea.vmem %s5429, %s5431
      %v5433 = vpack.c.bf16 %v5428, %v3804
      %5434 = vst [vmem:[%s5432] sm:$0xff] %v5433
      %s5435 = scalar_lea.vmem %s150, 16952
      %v5436 = vld [vmem:[%s5435] sm:$0xff]
      %s5437 = scalar_lea.vmem %s176, 284
      %s5439 = ssub.s32 0, 4
      %s5440 = scalar_lea.vmem %s5437, %s5439
      %v5441 = vpack.c.bf16 %v5436, %v3807
      %5442 = vst [vmem:[%s5440] sm:$0xff] %v5441
      %s5443 = scalar_lea.vmem %s150, 10808
      %v5444 = vld [vmem:[%s5443] sm:$0xff]
      %s5445 = scalar_lea.vmem %s176, 3356
      %s5447 = ssub.s32 0, 4
      %s5448 = scalar_lea.vmem %s5445, %s5447
      %v5449 = vpack.c.bf16 %v5444, %v3810
      %5450 = vst [vmem:[%s5448] sm:$0xff] %v5449
      %s5451 = scalar_lea.vmem %s150, 4664
      %v5452 = vld [vmem:[%s5451] sm:$0xff]
      %s5453 = scalar_lea.vmem %s176, 6428
      %s5455 = ssub.s32 0, 4
      %s5456 = scalar_lea.vmem %s5453, %s5455
      %v5457 = vpack.c.bf16 %v5452, %v3813
      %5458 = vst [vmem:[%s5456] sm:$0xff] %v5457
      %s5459 = scalar_lea.vmem %s150, 14904
      %v5460 = vld [vmem:[%s5459] sm:$0xff]
      %s5461 = scalar_lea.vmem %s176, 1308
      %s5463 = ssub.s32 0, 4
      %s5464 = scalar_lea.vmem %s5461, %s5463
      %v5465 = vpack.c.bf16 %v5460, %v3816
      %5466 = vst [vmem:[%s5464] sm:$0xff] %v5465
      %s5467 = scalar_lea.vmem %s150, 8760
      %v5468 = vld [vmem:[%s5467] sm:$0xff]
      %s5469 = scalar_lea.vmem %s176, 4380
      %s5471 = ssub.s32 0, 4
      %s5472 = scalar_lea.vmem %s5469, %s5471
      %v5473 = vpack.c.bf16 %v5468, %v3819
      %5474 = vst [vmem:[%s5472] sm:$0xff] %v5473
      %s5475 = scalar_lea.vmem %s150, 2616
      %v5476 = vld [vmem:[%s5475] sm:$0xff]
      %s5477 = scalar_lea.vmem %s176, 7452
      %s5479 = ssub.s32 0, 4
      %s5480 = scalar_lea.vmem %s5477, %s5479
      %v5481 = vpack.c.bf16 %v5476, %v3822
      %5482 = vst [vmem:[%s5480] sm:$0xff] %v5481
      %s5483 = scalar_lea.vmem %s150, 12856
      %v5484 = vld [vmem:[%s5483] sm:$0xff]
      %s5485 = scalar_lea.vmem %s176, 2332
      %s5487 = ssub.s32 0, 4
      %s5488 = scalar_lea.vmem %s5485, %s5487
      %v5489 = vpack.c.bf16 %v5484, %v3825
      %5490 = vst [vmem:[%s5488] sm:$0xff] %v5489
      %s5491 = scalar_lea.vmem %s150, 6712
      %v5492 = vld [vmem:[%s5491] sm:$0xff]
      %s5493 = scalar_lea.vmem %s176, 5404
      %s5495 = ssub.s32 0, 4
      %s5496 = scalar_lea.vmem %s5493, %s5495
      %v5497 = vpack.c.bf16 %v5492, %v3828
      %5498 = vst [vmem:[%s5496] sm:$0xff] %v5497
      %s5499 = scalar_lea.vmem %s150, 568
      %v5500 = vld [vmem:[%s5499] sm:$0xff]
      %s5501 = scalar_lea.vmem %s176, 8476
      %s5503 = ssub.s32 0, 4
      %s5504 = scalar_lea.vmem %s5501, %s5503
      %v5505 = vpack.c.bf16 %v5500, %v3831
      %5506 = vst [vmem:[%s5504] sm:$0xff] %v5505
      %s5507 = scalar_lea.vmem %s150, 16984
      %v5508 = vld [vmem:[%s5507] sm:$0xff]
      %s5509 = scalar_lea.vmem %s176, 300
      %s5511 = ssub.s32 0, 4
      %s5512 = scalar_lea.vmem %s5509, %s5511
      %v5513 = vpack.c.bf16 %v5508, %v3834
      %5514 = vst [vmem:[%s5512] sm:$0xff] %v5513
      %s5515 = scalar_lea.vmem %s150, 10840
      %v5516 = vld [vmem:[%s5515] sm:$0xff]
      %s5517 = scalar_lea.vmem %s176, 3372
      %s5519 = ssub.s32 0, 4
      %s5520 = scalar_lea.vmem %s5517, %s5519
      %v5521 = vpack.c.bf16 %v5516, %v3837
      %5522 = vst [vmem:[%s5520] sm:$0xff] %v5521
      %s5523 = scalar_lea.vmem %s150, 4696
      %v5524 = vld [vmem:[%s5523] sm:$0xff]
      %s5525 = scalar_lea.vmem %s176, 6444
      %s5527 = ssub.s32 0, 4
      %s5528 = scalar_lea.vmem %s5525, %s5527
      %v5529 = vpack.c.bf16 %v5524, %v3840
      %5530 = vst [vmem:[%s5528] sm:$0xff] %v5529
      %s5531 = scalar_lea.vmem %s150, 14936
      %v5532 = vld [vmem:[%s5531] sm:$0xff]
      %s5533 = scalar_lea.vmem %s176, 1324
      %s5535 = ssub.s32 0, 4
      %s5536 = scalar_lea.vmem %s5533, %s5535
      %v5537 = vpack.c.bf16 %v5532, %v3843
      %5538 = vst [vmem:[%s5536] sm:$0xff] %v5537
      %s5539 = scalar_lea.vmem %s150, 8792
      %v5540 = vld [vmem:[%s5539] sm:$0xff]
      %s5541 = scalar_lea.vmem %s176, 4396
      %s5543 = ssub.s32 0, 4
      %s5544 = scalar_lea.vmem %s5541, %s5543
      %v5545 = vpack.c.bf16 %v5540, %v3846
      %5546 = vst [vmem:[%s5544] sm:$0xff] %v5545
      %s5547 = scalar_lea.vmem %s150, 2648
      %v5548 = vld [vmem:[%s5547] sm:$0xff]
      %s5549 = scalar_lea.vmem %s176, 7468
      %s5551 = ssub.s32 0, 4
      %s5552 = scalar_lea.vmem %s5549, %s5551
      %v5553 = vpack.c.bf16 %v5548, %v3849
      %5554 = vst [vmem:[%s5552] sm:$0xff] %v5553
      %s5555 = scalar_lea.vmem %s150, 12888
      %v5556 = vld [vmem:[%s5555] sm:$0xff]
      %s5557 = scalar_lea.vmem %s176, 2348
      %s5559 = ssub.s32 0, 4
      %s5560 = scalar_lea.vmem %s5557, %s5559
      %v5561 = vpack.c.bf16 %v5556, %v3852
      %5562 = vst [vmem:[%s5560] sm:$0xff] %v5561
      %s5563 = scalar_lea.vmem %s150, 6744
      %v5564 = vld [vmem:[%s5563] sm:$0xff]
      %s5565 = scalar_lea.vmem %s176, 5420
      %s5567 = ssub.s32 0, 4
      %s5568 = scalar_lea.vmem %s5565, %s5567
      %v5569 = vpack.c.bf16 %v5564, %v3855
      %5570 = vst [vmem:[%s5568] sm:$0xff] %v5569
      %s5571 = scalar_lea.vmem %s150, 600
      %v5572 = vld [vmem:[%s5571] sm:$0xff]
      %s5573 = scalar_lea.vmem %s176, 8492
      %s5575 = ssub.s32 0, 4
      %s5576 = scalar_lea.vmem %s5573, %s5575
      %v5577 = vpack.c.bf16 %v5572, %v3858
      %5578 = vst [vmem:[%s5576] sm:$0xff] %v5577
      %s5579 = scalar_lea.vmem %s150, 17016
      %v5580 = vld [vmem:[%s5579] sm:$0xff]
      %s5581 = scalar_lea.vmem %s176, 316
      %s5583 = ssub.s32 0, 4
      %s5584 = scalar_lea.vmem %s5581, %s5583
      %v5585 = vpack.c.bf16 %v5580, %v3861
      %5586 = vst [vmem:[%s5584] sm:$0xff] %v5585
      %s5587 = scalar_lea.vmem %s150, 10872
      %v5588 = vld [vmem:[%s5587] sm:$0xff]
      %s5589 = scalar_lea.vmem %s176, 3388
      %s5591 = ssub.s32 0, 4
      %s5592 = scalar_lea.vmem %s5589, %s5591
      %v5593 = vpack.c.bf16 %v5588, %v3864
      %5594 = vst [vmem:[%s5592] sm:$0xff] %v5593
      %s5595 = scalar_lea.vmem %s150, 4728
      %v5596 = vld [vmem:[%s5595] sm:$0xff]
      %s5597 = scalar_lea.vmem %s176, 6460
      %s5599 = ssub.s32 0, 4
      %s5600 = scalar_lea.vmem %s5597, %s5599
      %v5601 = vpack.c.bf16 %v5596, %v3867
      %5602 = vst [vmem:[%s5600] sm:$0xff] %v5601
      %s5603 = scalar_lea.vmem %s150, 14968
      %v5604 = vld [vmem:[%s5603] sm:$0xff]
      %s5605 = scalar_lea.vmem %s176, 1340
      %s5607 = ssub.s32 0, 4
      %s5608 = scalar_lea.vmem %s5605, %s5607
      %v5609 = vpack.c.bf16 %v5604, %v3870
      %5610 = vst [vmem:[%s5608] sm:$0xff] %v5609
      %s5611 = scalar_lea.vmem %s150, 8824
      %v5612 = vld [vmem:[%s5611] sm:$0xff]
      %s5613 = scalar_lea.vmem %s176, 4412
      %s5615 = ssub.s32 0, 4
      %s5616 = scalar_lea.vmem %s5613, %s5615
      %v5617 = vpack.c.bf16 %v5612, %v3873
      %5618 = vst [vmem:[%s5616] sm:$0xff] %v5617
      %s5619 = scalar_lea.vmem %s150, 2680
      %v5620 = vld [vmem:[%s5619] sm:$0xff]
      %s5621 = scalar_lea.vmem %s176, 7484
      %s5623 = ssub.s32 0, 4
      %s5624 = scalar_lea.vmem %s5621, %s5623
      %v5625 = vpack.c.bf16 %v5620, %v3876
      %5626 = vst [vmem:[%s5624] sm:$0xff] %v5625
      %s5627 = scalar_lea.vmem %s150, 12920
      %v5628 = vld [vmem:[%s5627] sm:$0xff]
      %s5629 = scalar_lea.vmem %s176, 2364
      %s5631 = ssub.s32 0, 4
      %s5632 = scalar_lea.vmem %s5629, %s5631
      %v5633 = vpack.c.bf16 %v5628, %v3879
      %5634 = vst [vmem:[%s5632] sm:$0xff] %v5633
      %s5635 = scalar_lea.vmem %s150, 6776
      %v5636 = vld [vmem:[%s5635] sm:$0xff]
      %s5637 = scalar_lea.vmem %s176, 5436
      %s5639 = ssub.s32 0, 4
      %s5640 = scalar_lea.vmem %s5637, %s5639
      %v5641 = vpack.c.bf16 %v5636, %v3882
      %5642 = vst [vmem:[%s5640] sm:$0xff] %v5641
      %s5643 = scalar_lea.vmem %s150, 632
      %v5644 = vld [vmem:[%s5643] sm:$0xff]
      %s5645 = scalar_lea.vmem %s176, 8508
      %s5647 = ssub.s32 0, 4
      %s5648 = scalar_lea.vmem %s5645, %s5647
      %v5649 = vpack.c.bf16 %v5644, %v3885
      %5650 = vst [vmem:[%s5648] sm:$0xff] %v5649
      %s5651 = scalar_lea.vmem %s150, 17048
      %v5652 = vld [vmem:[%s5651] sm:$0xff]
      %s5653 = scalar_lea.vmem %s176, 332
      %s5655 = ssub.s32 0, 4
      %s5656 = scalar_lea.vmem %s5653, %s5655
      %v5657 = vpack.c.bf16 %v5652, %v3888
      %5658 = vst [vmem:[%s5656] sm:$0xff] %v5657
      %s5659 = scalar_lea.vmem %s150, 10904
      %v5660 = vld [vmem:[%s5659] sm:$0xff]
      %s5661 = scalar_lea.vmem %s176, 3404
      %s5663 = ssub.s32 0, 4
      %s5664 = scalar_lea.vmem %s5661, %s5663
      %v5665 = vpack.c.bf16 %v5660, %v3891
      %5666 = vst [vmem:[%s5664] sm:$0xff] %v5665
      %s5667 = scalar_lea.vmem %s150, 4760
      %v5668 = vld [vmem:[%s5667] sm:$0xff]
      %s5669 = scalar_lea.vmem %s176, 6476
      %s5671 = ssub.s32 0, 4
      %s5672 = scalar_lea.vmem %s5669, %s5671
      %v5673 = vpack.c.bf16 %v5668, %v3894
      %5674 = vst [vmem:[%s5672] sm:$0xff] %v5673
      %s5675 = scalar_lea.vmem %s150, 15000
      %v5676 = vld [vmem:[%s5675] sm:$0xff]
      %s5677 = scalar_lea.vmem %s176, 1356
      %s5679 = ssub.s32 0, 4
      %s5680 = scalar_lea.vmem %s5677, %s5679
      %v5681 = vpack.c.bf16 %v5676, %v3897
      %5682 = vst [vmem:[%s5680] sm:$0xff] %v5681
      %s5683 = scalar_lea.vmem %s150, 8856
      %v5684 = vld [vmem:[%s5683] sm:$0xff]
      %s5685 = scalar_lea.vmem %s176, 4428
      %s5687 = ssub.s32 0, 4
      %s5688 = scalar_lea.vmem %s5685, %s5687
      %v5689 = vpack.c.bf16 %v5684, %v3900
      %5690 = vst [vmem:[%s5688] sm:$0xff] %v5689
      %s5691 = scalar_lea.vmem %s150, 2712
      %v5692 = vld [vmem:[%s5691] sm:$0xff]
      %s5693 = scalar_lea.vmem %s176, 7500
      %s5695 = ssub.s32 0, 4
      %s5696 = scalar_lea.vmem %s5693, %s5695
      %v5697 = vpack.c.bf16 %v5692, %v3903
      %5698 = vst [vmem:[%s5696] sm:$0xff] %v5697
      %s5699 = scalar_lea.vmem %s150, 12952
      %v5700 = vld [vmem:[%s5699] sm:$0xff]
      %s5701 = scalar_lea.vmem %s176, 2380
      %s5703 = ssub.s32 0, 4
      %s5704 = scalar_lea.vmem %s5701, %s5703
      %v5705 = vpack.c.bf16 %v5700, %v3906
      %5706 = vst [vmem:[%s5704] sm:$0xff] %v5705
      %s5707 = scalar_lea.vmem %s150, 6808
      %v5708 = vld [vmem:[%s5707] sm:$0xff]
      %s5709 = scalar_lea.vmem %s176, 5452
      %s5711 = ssub.s32 0, 4
      %s5712 = scalar_lea.vmem %s5709, %s5711
      %v5713 = vpack.c.bf16 %v5708, %v3909
      %5714 = vst [vmem:[%s5712] sm:$0xff] %v5713
      %s5715 = scalar_lea.vmem %s150, 664
      %v5716 = vld [vmem:[%s5715] sm:$0xff]
      %s5717 = scalar_lea.vmem %s176, 8524
      %s5719 = ssub.s32 0, 4
      %s5720 = scalar_lea.vmem %s5717, %s5719
      %v5721 = vpack.c.bf16 %v5716, %v3912
      %5722 = vst [vmem:[%s5720] sm:$0xff] %v5721
      %s5723 = scalar_lea.vmem %s150, 17080
      %v5724 = vld [vmem:[%s5723] sm:$0xff]
      %s5725 = scalar_lea.vmem %s176, 348
      %s5727 = ssub.s32 0, 4
      %s5728 = scalar_lea.vmem %s5725, %s5727
      %v5729 = vpack.c.bf16 %v5724, %v3915
      %5730 = vst [vmem:[%s5728] sm:$0xff] %v5729
      %s5731 = scalar_lea.vmem %s150, 10936
      %v5732 = vld [vmem:[%s5731] sm:$0xff]
      %s5733 = scalar_lea.vmem %s176, 3420
      %s5735 = ssub.s32 0, 4
      %s5736 = scalar_lea.vmem %s5733, %s5735
      %v5737 = vpack.c.bf16 %v5732, %v3918
      %5738 = vst [vmem:[%s5736] sm:$0xff] %v5737
      %s5739 = scalar_lea.vmem %s150, 4792
      %v5740 = vld [vmem:[%s5739] sm:$0xff]
      %s5741 = scalar_lea.vmem %s176, 6492
      %s5743 = ssub.s32 0, 4
      %s5744 = scalar_lea.vmem %s5741, %s5743
      %v5745 = vpack.c.bf16 %v5740, %v3921
      %5746 = vst [vmem:[%s5744] sm:$0xff] %v5745
      %s5747 = scalar_lea.vmem %s150, 15032
      %v5748 = vld [vmem:[%s5747] sm:$0xff]
      %s5749 = scalar_lea.vmem %s176, 1372
      %s5751 = ssub.s32 0, 4
      %s5752 = scalar_lea.vmem %s5749, %s5751
      %v5753 = vpack.c.bf16 %v5748, %v3924
      %5754 = vst [vmem:[%s5752] sm:$0xff] %v5753
      %s5755 = scalar_lea.vmem %s150, 8888
      %v5756 = vld [vmem:[%s5755] sm:$0xff]
      %s5757 = scalar_lea.vmem %s176, 4444
      %s5759 = ssub.s32 0, 4
      %s5760 = scalar_lea.vmem %s5757, %s5759
      %v5761 = vpack.c.bf16 %v5756, %v3927
      %5762 = vst [vmem:[%s5760] sm:$0xff] %v5761
      %s5763 = scalar_lea.vmem %s150, 2744
      %v5764 = vld [vmem:[%s5763] sm:$0xff]
      %s5765 = scalar_lea.vmem %s176, 7516
      %s5767 = ssub.s32 0, 4
      %s5768 = scalar_lea.vmem %s5765, %s5767
      %v5769 = vpack.c.bf16 %v5764, %v3930
      %5770 = vst [vmem:[%s5768] sm:$0xff] %v5769
      %s5771 = scalar_lea.vmem %s150, 12984
      %v5772 = vld [vmem:[%s5771] sm:$0xff]
      %s5773 = scalar_lea.vmem %s176, 2396
      %s5775 = ssub.s32 0, 4
      %s5776 = scalar_lea.vmem %s5773, %s5775
      %v5777 = vpack.c.bf16 %v5772, %v3933
      %5778 = vst [vmem:[%s5776] sm:$0xff] %v5777
      %s5779 = scalar_lea.vmem %s150, 6840
      %v5780 = vld [vmem:[%s5779] sm:$0xff]
      %s5781 = scalar_lea.vmem %s176, 5468
      %s5783 = ssub.s32 0, 4
      %s5784 = scalar_lea.vmem %s5781, %s5783
      %v5785 = vpack.c.bf16 %v5780, %v3936
      %5786 = vst [vmem:[%s5784] sm:$0xff] %v5785
      %s5787 = scalar_lea.vmem %s150, 696
      %v5788 = vld [vmem:[%s5787] sm:$0xff]
      %s5789 = scalar_lea.vmem %s176, 8540
      %s5791 = ssub.s32 0, 4
      %s5792 = scalar_lea.vmem %s5789, %s5791
      %v5793 = vpack.c.bf16 %v5788, %v3939
      %5794 = vst [vmem:[%s5792] sm:$0xff] %v5793
      %s5795 = scalar_lea.vmem %s150, 17112
      %v5796 = vld [vmem:[%s5795] sm:$0xff]
      %s5797 = scalar_lea.vmem %s176, 364
      %s5799 = ssub.s32 0, 4
      %s5800 = scalar_lea.vmem %s5797, %s5799
      %v5801 = vpack.c.bf16 %v5796, %v3942
      %5802 = vst [vmem:[%s5800] sm:$0xff] %v5801
      %s5803 = scalar_lea.vmem %s150, 10968
      %v5804 = vld [vmem:[%s5803] sm:$0xff]
      %s5805 = scalar_lea.vmem %s176, 3436
      %s5807 = ssub.s32 0, 4
      %s5808 = scalar_lea.vmem %s5805, %s5807
      %v5809 = vpack.c.bf16 %v5804, %v3945
      %5810 = vst [vmem:[%s5808] sm:$0xff] %v5809
      %s5811 = scalar_lea.vmem %s150, 4824
      %v5812 = vld [vmem:[%s5811] sm:$0xff]
      %s5813 = scalar_lea.vmem %s176, 6508
      %s5815 = ssub.s32 0, 4
      %s5816 = scalar_lea.vmem %s5813, %s5815
      %v5817 = vpack.c.bf16 %v5812, %v3948
      %5818 = vst [vmem:[%s5816] sm:$0xff] %v5817
      %s5819 = scalar_lea.vmem %s150, 15064
      %v5820 = vld [vmem:[%s5819] sm:$0xff]
      %s5821 = scalar_lea.vmem %s176, 1388
      %s5823 = ssub.s32 0, 4
      %s5824 = scalar_lea.vmem %s5821, %s5823
      %v5825 = vpack.c.bf16 %v5820, %v3951
      %5826 = vst [vmem:[%s5824] sm:$0xff] %v5825
      %s5827 = scalar_lea.vmem %s150, 8920
      %v5828 = vld [vmem:[%s5827] sm:$0xff]
      %s5829 = scalar_lea.vmem %s176, 4460
      %s5831 = ssub.s32 0, 4
      %s5832 = scalar_lea.vmem %s5829, %s5831
      %v5833 = vpack.c.bf16 %v5828, %v3954
      %5834 = vst [vmem:[%s5832] sm:$0xff] %v5833
      %s5835 = scalar_lea.vmem %s150, 2776
      %v5836 = vld [vmem:[%s5835] sm:$0xff]
      %s5837 = scalar_lea.vmem %s176, 7532
      %s5839 = ssub.s32 0, 4
      %s5840 = scalar_lea.vmem %s5837, %s5839
      %v5841 = vpack.c.bf16 %v5836, %v3957
      %5842 = vst [vmem:[%s5840] sm:$0xff] %v5841
      %s5843 = scalar_lea.vmem %s150, 13016
      %v5844 = vld [vmem:[%s5843] sm:$0xff]
      %s5845 = scalar_lea.vmem %s176, 2412
      %s5847 = ssub.s32 0, 4
      %s5848 = scalar_lea.vmem %s5845, %s5847
      %v5849 = vpack.c.bf16 %v5844, %v3960
      %5850 = vst [vmem:[%s5848] sm:$0xff] %v5849
      %s5851 = scalar_lea.vmem %s150, 6872
      %v5852 = vld [vmem:[%s5851] sm:$0xff]
      %s5853 = scalar_lea.vmem %s176, 5484
      %s5855 = ssub.s32 0, 4
      %s5856 = scalar_lea.vmem %s5853, %s5855
      %v5857 = vpack.c.bf16 %v5852, %v3963
      %5858 = vst [vmem:[%s5856] sm:$0xff] %v5857
      %s5859 = scalar_lea.vmem %s150, 728
      %v5860 = vld [vmem:[%s5859] sm:$0xff]
      %s5861 = scalar_lea.vmem %s176, 8556
      %s5863 = ssub.s32 0, 4
      %s5864 = scalar_lea.vmem %s5861, %s5863
      %v5865 = vpack.c.bf16 %v5860, %v3966
      %5866 = vst [vmem:[%s5864] sm:$0xff] %v5865
      %s5867 = scalar_lea.vmem %s150, 17144
      %v5868 = vld [vmem:[%s5867] sm:$0xff]
      %s5869 = scalar_lea.vmem %s176, 380
      %s5871 = ssub.s32 0, 4
      %s5872 = scalar_lea.vmem %s5869, %s5871
      %v5873 = vpack.c.bf16 %v5868, %v3969
      %5874 = vst [vmem:[%s5872] sm:$0xff] %v5873
      %s5875 = scalar_lea.vmem %s150, 11000
      %v5876 = vld [vmem:[%s5875] sm:$0xff]
      %s5877 = scalar_lea.vmem %s176, 3452
      %s5879 = ssub.s32 0, 4
      %s5880 = scalar_lea.vmem %s5877, %s5879
      %v5881 = vpack.c.bf16 %v5876, %v3972
      %5882 = vst [vmem:[%s5880] sm:$0xff] %v5881
      %s5883 = scalar_lea.vmem %s150, 4856
      %v5884 = vld [vmem:[%s5883] sm:$0xff]
      %s5885 = scalar_lea.vmem %s176, 6524
      %s5887 = ssub.s32 0, 4
      %s5888 = scalar_lea.vmem %s5885, %s5887
      %v5889 = vpack.c.bf16 %v5884, %v3975
      %5890 = vst [vmem:[%s5888] sm:$0xff] %v5889
      %s5891 = scalar_lea.vmem %s150, 15096
      %v5892 = vld [vmem:[%s5891] sm:$0xff]
      %s5893 = scalar_lea.vmem %s176, 1404
      %s5895 = ssub.s32 0, 4
      %s5896 = scalar_lea.vmem %s5893, %s5895
      %v5897 = vpack.c.bf16 %v5892, %v3978
      %5898 = vst [vmem:[%s5896] sm:$0xff] %v5897
      %s5899 = scalar_lea.vmem %s150, 8952
      %v5900 = vld [vmem:[%s5899] sm:$0xff]
      %s5901 = scalar_lea.vmem %s176, 4476
      %s5903 = ssub.s32 0, 4
      %s5904 = scalar_lea.vmem %s5901, %s5903
      %v5905 = vpack.c.bf16 %v5900, %v3981
      %5906 = vst [vmem:[%s5904] sm:$0xff] %v5905
      %s5907 = scalar_lea.vmem %s150, 2808
      %v5908 = vld [vmem:[%s5907] sm:$0xff]
      %s5909 = scalar_lea.vmem %s176, 7548
      %s5911 = ssub.s32 0, 4
      %s5912 = scalar_lea.vmem %s5909, %s5911
      %v5913 = vpack.c.bf16 %v5908, %v3984
      %5914 = vst [vmem:[%s5912] sm:$0xff] %v5913
      %s5915 = scalar_lea.vmem %s150, 13048
      %v5916 = vld [vmem:[%s5915] sm:$0xff]
      %s5917 = scalar_lea.vmem %s176, 2428
      %s5919 = ssub.s32 0, 4
      %s5920 = scalar_lea.vmem %s5917, %s5919
      %v5921 = vpack.c.bf16 %v5916, %v3987
      %5922 = vst [vmem:[%s5920] sm:$0xff] %v5921
      %s5923 = scalar_lea.vmem %s150, 6904
      %v5924 = vld [vmem:[%s5923] sm:$0xff]
      %s5925 = scalar_lea.vmem %s176, 5500
      %s5927 = ssub.s32 0, 4
      %s5928 = scalar_lea.vmem %s5925, %s5927
      %v5929 = vpack.c.bf16 %v5924, %v3990
      %5930 = vst [vmem:[%s5928] sm:$0xff] %v5929
      %s5931 = scalar_lea.vmem %s150, 760
      %v5932 = vld [vmem:[%s5931] sm:$0xff]
      %s5933 = scalar_lea.vmem %s176, 8572
      %s5935 = ssub.s32 0, 4
      %s5936 = scalar_lea.vmem %s5933, %s5935
      %v5937 = vpack.c.bf16 %v5932, %v3993
      %5938 = vst [vmem:[%s5936] sm:$0xff] %v5937
      %s5939 = scalar_lea.vmem %s150, 17176
      %v5940 = vld [vmem:[%s5939] sm:$0xff]
      %s5941 = scalar_lea.vmem %s176, 396
      %s5943 = ssub.s32 0, 4
      %s5944 = scalar_lea.vmem %s5941, %s5943
      %v5945 = vpack.c.bf16 %v5940, %v3996
      %5946 = vst [vmem:[%s5944] sm:$0xff] %v5945
      %s5947 = scalar_lea.vmem %s150, 11032
      %v5948 = vld [vmem:[%s5947] sm:$0xff]
      %s5949 = scalar_lea.vmem %s176, 3468
      %s5951 = ssub.s32 0, 4
      %s5952 = scalar_lea.vmem %s5949, %s5951
      %v5953 = vpack.c.bf16 %v5948, %v3999
      %5954 = vst [vmem:[%s5952] sm:$0xff] %v5953
      %s5955 = scalar_lea.vmem %s150, 4888
      %v5956 = vld [vmem:[%s5955] sm:$0xff]
      %s5957 = scalar_lea.vmem %s176, 6540
      %s5959 = ssub.s32 0, 4
      %s5960 = scalar_lea.vmem %s5957, %s5959
      %v5961 = vpack.c.bf16 %v5956, %v4002
      %5962 = vst [vmem:[%s5960] sm:$0xff] %v5961
      %s5963 = scalar_lea.vmem %s150, 15128
      %v5964 = vld [vmem:[%s5963] sm:$0xff]
      %s5965 = scalar_lea.vmem %s176, 1420
      %s5967 = ssub.s32 0, 4
      %s5968 = scalar_lea.vmem %s5965, %s5967
      %v5969 = vpack.c.bf16 %v5964, %v4005
      %5970 = vst [vmem:[%s5968] sm:$0xff] %v5969
      %s5971 = scalar_lea.vmem %s150, 8984
      %v5972 = vld [vmem:[%s5971] sm:$0xff]
      %s5973 = scalar_lea.vmem %s176, 4492
      %s5975 = ssub.s32 0, 4
      %s5976 = scalar_lea.vmem %s5973, %s5975
      %v5977 = vpack.c.bf16 %v5972, %v4008
      %5978 = vst [vmem:[%s5976] sm:$0xff] %v5977
      %s5979 = scalar_lea.vmem %s150, 2840
      %v5980 = vld [vmem:[%s5979] sm:$0xff]
      %s5981 = scalar_lea.vmem %s176, 7564
      %s5983 = ssub.s32 0, 4
      %s5984 = scalar_lea.vmem %s5981, %s5983
      %v5985 = vpack.c.bf16 %v5980, %v4011
      %5986 = vst [vmem:[%s5984] sm:$0xff] %v5985
      %s5987 = scalar_lea.vmem %s150, 13080
      %v5988 = vld [vmem:[%s5987] sm:$0xff]
      %s5989 = scalar_lea.vmem %s176, 2444
      %s5991 = ssub.s32 0, 4
      %s5992 = scalar_lea.vmem %s5989, %s5991
      %v5993 = vpack.c.bf16 %v5988, %v4014
      %5994 = vst [vmem:[%s5992] sm:$0xff] %v5993
      %s5995 = scalar_lea.vmem %s150, 6936
      %v5996 = vld [vmem:[%s5995] sm:$0xff]
      %s5997 = scalar_lea.vmem %s176, 5516
      %s5999 = ssub.s32 0, 4
      %s6000 = scalar_lea.vmem %s5997, %s5999
      %v6001 = vpack.c.bf16 %v5996, %v4017
      %6002 = vst [vmem:[%s6000] sm:$0xff] %v6001
      %s6003 = scalar_lea.vmem %s150, 792
      %v6004 = vld [vmem:[%s6003] sm:$0xff]
      %s6005 = scalar_lea.vmem %s176, 8588
      %s6007 = ssub.s32 0, 4
      %s6008 = scalar_lea.vmem %s6005, %s6007
      %v6009 = vpack.c.bf16 %v6004, %v4020
      %6010 = vst [vmem:[%s6008] sm:$0xff] %v6009
      %s6011 = scalar_lea.vmem %s150, 17208
      %v6012 = vld [vmem:[%s6011] sm:$0xff]
      %s6013 = scalar_lea.vmem %s176, 412
      %s6015 = ssub.s32 0, 4
      %s6016 = scalar_lea.vmem %s6013, %s6015
      %v6017 = vpack.c.bf16 %v6012, %v4023
      %6018 = vst [vmem:[%s6016] sm:$0xff] %v6017
      %s6019 = scalar_lea.vmem %s150, 11064
      %v6020 = vld [vmem:[%s6019] sm:$0xff]
      %s6021 = scalar_lea.vmem %s176, 3484
      %s6023 = ssub.s32 0, 4
      %s6024 = scalar_lea.vmem %s6021, %s6023
      %v6025 = vpack.c.bf16 %v6020, %v4026
      %6026 = vst [vmem:[%s6024] sm:$0xff] %v6025
      %s6027 = scalar_lea.vmem %s150, 4920
      %v6028 = vld [vmem:[%s6027] sm:$0xff]
      %s6029 = scalar_lea.vmem %s176, 6556
      %s6031 = ssub.s32 0, 4
      %s6032 = scalar_lea.vmem %s6029, %s6031
      %v6033 = vpack.c.bf16 %v6028, %v4029
      %6034 = vst [vmem:[%s6032] sm:$0xff] %v6033
      %s6035 = scalar_lea.vmem %s150, 15160
      %v6036 = vld [vmem:[%s6035] sm:$0xff]
      %s6037 = scalar_lea.vmem %s176, 1436
      %s6039 = ssub.s32 0, 4
      %s6040 = scalar_lea.vmem %s6037, %s6039
      %v6041 = vpack.c.bf16 %v6036, %v4032
      %6042 = vst [vmem:[%s6040] sm:$0xff] %v6041
      %s6043 = scalar_lea.vmem %s150, 9016
      %v6044 = vld [vmem:[%s6043] sm:$0xff]
      %s6045 = scalar_lea.vmem %s176, 4508
      %s6047 = ssub.s32 0, 4
      %s6048 = scalar_lea.vmem %s6045, %s6047
      %v6049 = vpack.c.bf16 %v6044, %v4035
      %6050 = vst [vmem:[%s6048] sm:$0xff] %v6049
      %s6051 = scalar_lea.vmem %s150, 2872
      %v6052 = vld [vmem:[%s6051] sm:$0xff]
      %s6053 = scalar_lea.vmem %s176, 7580
      %s6055 = ssub.s32 0, 4
      %s6056 = scalar_lea.vmem %s6053, %s6055
      %v6057 = vpack.c.bf16 %v6052, %v4038
      %6058 = vst [vmem:[%s6056] sm:$0xff] %v6057
      %s6059 = scalar_lea.vmem %s150, 13112
      %v6060 = vld [vmem:[%s6059] sm:$0xff]
      %s6061 = scalar_lea.vmem %s176, 2460
      %s6063 = ssub.s32 0, 4
      %s6064 = scalar_lea.vmem %s6061, %s6063
      %v6065 = vpack.c.bf16 %v6060, %v4041
      %6066 = vst [vmem:[%s6064] sm:$0xff] %v6065
      %s6067 = scalar_lea.vmem %s150, 6968
      %v6068 = vld [vmem:[%s6067] sm:$0xff]
      %s6069 = scalar_lea.vmem %s176, 5532
      %s6071 = ssub.s32 0, 4
      %s6072 = scalar_lea.vmem %s6069, %s6071
      %v6073 = vpack.c.bf16 %v6068, %v4044
      %6074 = vst [vmem:[%s6072] sm:$0xff] %v6073
      %s6075 = scalar_lea.vmem %s150, 824
      %v6076 = vld [vmem:[%s6075] sm:$0xff]
      %s6077 = scalar_lea.vmem %s176, 8604
      %s6079 = ssub.s32 0, 4
      %s6080 = scalar_lea.vmem %s6077, %s6079
      %v6081 = vpack.c.bf16 %v6076, %v4047
      %6082 = vst [vmem:[%s6080] sm:$0xff] %v6081
      %s6083 = scalar_lea.vmem %s150, 17240
      %v6084 = vld [vmem:[%s6083] sm:$0xff]
      %s6085 = scalar_lea.vmem %s176, 428
      %s6087 = ssub.s32 0, 4
      %s6088 = scalar_lea.vmem %s6085, %s6087
      %v6089 = vpack.c.bf16 %v6084, %v4050
      %6090 = vst [vmem:[%s6088] sm:$0xff] %v6089
      %s6091 = scalar_lea.vmem %s150, 11096
      %v6092 = vld [vmem:[%s6091] sm:$0xff]
      %s6093 = scalar_lea.vmem %s176, 3500
      %s6095 = ssub.s32 0, 4
      %s6096 = scalar_lea.vmem %s6093, %s6095
      %v6097 = vpack.c.bf16 %v6092, %v4053
      %6098 = vst [vmem:[%s6096] sm:$0xff] %v6097
      %s6099 = scalar_lea.vmem %s150, 4952
      %v6100 = vld [vmem:[%s6099] sm:$0xff]
      %s6101 = scalar_lea.vmem %s176, 6572
      %s6103 = ssub.s32 0, 4
      %s6104 = scalar_lea.vmem %s6101, %s6103
      %v6105 = vpack.c.bf16 %v6100, %v4056
      %6106 = vst [vmem:[%s6104] sm:$0xff] %v6105
      %s6107 = scalar_lea.vmem %s150, 15192
      %v6108 = vld [vmem:[%s6107] sm:$0xff]
      %s6109 = scalar_lea.vmem %s176, 1452
      %s6111 = ssub.s32 0, 4
      %s6112 = scalar_lea.vmem %s6109, %s6111
      %v6113 = vpack.c.bf16 %v6108, %v4059
      %6114 = vst [vmem:[%s6112] sm:$0xff] %v6113
      %s6115 = scalar_lea.vmem %s150, 9048
      %v6116 = vld [vmem:[%s6115] sm:$0xff]
      %s6117 = scalar_lea.vmem %s176, 4524
      %s6119 = ssub.s32 0, 4
      %s6120 = scalar_lea.vmem %s6117, %s6119
      %v6121 = vpack.c.bf16 %v6116, %v4062
      %6122 = vst [vmem:[%s6120] sm:$0xff] %v6121
      %s6123 = scalar_lea.vmem %s150, 2904
      %v6124 = vld [vmem:[%s6123] sm:$0xff]
      %s6125 = scalar_lea.vmem %s176, 7596
      %s6127 = ssub.s32 0, 4
      %s6128 = scalar_lea.vmem %s6125, %s6127
      %v6129 = vpack.c.bf16 %v6124, %v4065
      %6130 = vst [vmem:[%s6128] sm:$0xff] %v6129
      %s6131 = scalar_lea.vmem %s150, 13144
      %v6132 = vld [vmem:[%s6131] sm:$0xff]
      %s6133 = scalar_lea.vmem %s176, 2476
      %s6135 = ssub.s32 0, 4
      %s6136 = scalar_lea.vmem %s6133, %s6135
      %v6137 = vpack.c.bf16 %v6132, %v4068
      %6138 = vst [vmem:[%s6136] sm:$0xff] %v6137
      %s6139 = scalar_lea.vmem %s150, 7000
      %v6140 = vld [vmem:[%s6139] sm:$0xff]
      %s6141 = scalar_lea.vmem %s176, 5548
      %s6143 = ssub.s32 0, 4
      %s6144 = scalar_lea.vmem %s6141, %s6143
      %v6145 = vpack.c.bf16 %v6140, %v4071
      %6146 = vst [vmem:[%s6144] sm:$0xff] %v6145
      %s6147 = scalar_lea.vmem %s150, 856
      %v6148 = vld [vmem:[%s6147] sm:$0xff]
      %s6149 = scalar_lea.vmem %s176, 8620
      %s6151 = ssub.s32 0, 4
      %s6152 = scalar_lea.vmem %s6149, %s6151
      %v6153 = vpack.c.bf16 %v6148, %v4074
      %6154 = vst [vmem:[%s6152] sm:$0xff] %v6153
      %s6155 = scalar_lea.vmem %s150, 17272
      %v6156 = vld [vmem:[%s6155] sm:$0xff]
      %s6157 = scalar_lea.vmem %s176, 444
      %s6159 = ssub.s32 0, 4
      %s6160 = scalar_lea.vmem %s6157, %s6159
      %v6161 = vpack.c.bf16 %v6156, %v4077
      %6162 = vst [vmem:[%s6160] sm:$0xff] %v6161
      %s6163 = scalar_lea.vmem %s150, 11128
      %v6164 = vld [vmem:[%s6163] sm:$0xff]
      %s6165 = scalar_lea.vmem %s176, 3516
      %s6167 = ssub.s32 0, 4
      %s6168 = scalar_lea.vmem %s6165, %s6167
      %v6169 = vpack.c.bf16 %v6164, %v4080
      %6170 = vst [vmem:[%s6168] sm:$0xff] %v6169
      %s6171 = scalar_lea.vmem %s150, 4984
      %v6172 = vld [vmem:[%s6171] sm:$0xff]
      %s6173 = scalar_lea.vmem %s176, 6588
      %s6175 = ssub.s32 0, 4
      %s6176 = scalar_lea.vmem %s6173, %s6175
      %v6177 = vpack.c.bf16 %v6172, %v4083
      %6178 = vst [vmem:[%s6176] sm:$0xff] %v6177
      %s6179 = scalar_lea.vmem %s150, 15224
      %v6180 = vld [vmem:[%s6179] sm:$0xff]
      %s6181 = scalar_lea.vmem %s176, 1468
      %s6183 = ssub.s32 0, 4
      %s6184 = scalar_lea.vmem %s6181, %s6183
      %v6185 = vpack.c.bf16 %v6180, %v4086
      %6186 = vst [vmem:[%s6184] sm:$0xff] %v6185
      %s6187 = scalar_lea.vmem %s150, 9080
      %v6188 = vld [vmem:[%s6187] sm:$0xff]
      %s6189 = scalar_lea.vmem %s176, 4540
      %s6191 = ssub.s32 0, 4
      %s6192 = scalar_lea.vmem %s6189, %s6191
      %v6193 = vpack.c.bf16 %v6188, %v4089
      %6194 = vst [vmem:[%s6192] sm:$0xff] %v6193
      %s6195 = scalar_lea.vmem %s150, 2936
      %v6196 = vld [vmem:[%s6195] sm:$0xff]
      %s6197 = scalar_lea.vmem %s176, 7612
      %s6199 = ssub.s32 0, 4
      %s6200 = scalar_lea.vmem %s6197, %s6199
      %v6201 = vpack.c.bf16 %v6196, %v4092
      %6202 = vst [vmem:[%s6200] sm:$0xff] %v6201
      %s6203 = scalar_lea.vmem %s150, 13176
      %v6204 = vld [vmem:[%s6203] sm:$0xff]
      %s6205 = scalar_lea.vmem %s176, 2492
      %s6207 = ssub.s32 0, 4
      %s6208 = scalar_lea.vmem %s6205, %s6207
      %v6209 = vpack.c.bf16 %v6204, %v4095
      %6210 = vst [vmem:[%s6208] sm:$0xff] %v6209
      %s6211 = scalar_lea.vmem %s150, 7032
      %v6212 = vld [vmem:[%s6211] sm:$0xff]
      %s6213 = scalar_lea.vmem %s176, 5564
      %s6215 = ssub.s32 0, 4
      %s6216 = scalar_lea.vmem %s6213, %s6215
      %v6217 = vpack.c.bf16 %v6212, %v4098
      %6218 = vst [vmem:[%s6216] sm:$0xff] %v6217
      %s6219 = scalar_lea.vmem %s150, 888
      %v6220 = vld [vmem:[%s6219] sm:$0xff]
      %s6221 = scalar_lea.vmem %s176, 8636
      %s6223 = ssub.s32 0, 4
      %s6224 = scalar_lea.vmem %s6221, %s6223
      %v6225 = vpack.c.bf16 %v6220, %v4101
      %6226 = vst [vmem:[%s6224] sm:$0xff] %v6225
      %s6227 = scalar_lea.vmem %s150, 17304
      %v6228 = vld [vmem:[%s6227] sm:$0xff]
      %s6229 = scalar_lea.vmem %s176, 460
      %s6231 = ssub.s32 0, 4
      %s6232 = scalar_lea.vmem %s6229, %s6231
      %v6233 = vpack.c.bf16 %v6228, %v4104
      %6234 = vst [vmem:[%s6232] sm:$0xff] %v6233
      %s6235 = scalar_lea.vmem %s150, 11160
      %v6236 = vld [vmem:[%s6235] sm:$0xff]
      %s6237 = scalar_lea.vmem %s176, 3532
      %s6239 = ssub.s32 0, 4
      %s6240 = scalar_lea.vmem %s6237, %s6239
      %v6241 = vpack.c.bf16 %v6236, %v4107
      %6242 = vst [vmem:[%s6240] sm:$0xff] %v6241
      %s6243 = scalar_lea.vmem %s150, 5016
      %v6244 = vld [vmem:[%s6243] sm:$0xff]
      %s6245 = scalar_lea.vmem %s176, 6604
      %s6247 = ssub.s32 0, 4
      %s6248 = scalar_lea.vmem %s6245, %s6247
      %v6249 = vpack.c.bf16 %v6244, %v4110
      %6250 = vst [vmem:[%s6248] sm:$0xff] %v6249
      %s6251 = scalar_lea.vmem %s150, 15256
      %v6252 = vld [vmem:[%s6251] sm:$0xff]
      %s6253 = scalar_lea.vmem %s176, 1484
      %s6255 = ssub.s32 0, 4
      %s6256 = scalar_lea.vmem %s6253, %s6255
      %v6257 = vpack.c.bf16 %v6252, %v4113
      %6258 = vst [vmem:[%s6256] sm:$0xff] %v6257
      %s6259 = scalar_lea.vmem %s150, 9112
      %v6260 = vld [vmem:[%s6259] sm:$0xff]
      %s6261 = scalar_lea.vmem %s176, 4556
      %s6263 = ssub.s32 0, 4
      %s6264 = scalar_lea.vmem %s6261, %s6263
      %v6265 = vpack.c.bf16 %v6260, %v4116
      %6266 = vst [vmem:[%s6264] sm:$0xff] %v6265
      %s6267 = scalar_lea.vmem %s150, 2968
      %v6268 = vld [vmem:[%s6267] sm:$0xff]
      %s6269 = scalar_lea.vmem %s176, 7628
      %s6271 = ssub.s32 0, 4
      %s6272 = scalar_lea.vmem %s6269, %s6271
      %v6273 = vpack.c.bf16 %v6268, %v4119
      %6274 = vst [vmem:[%s6272] sm:$0xff] %v6273
      %s6275 = scalar_lea.vmem %s150, 13208
      %v6276 = vld [vmem:[%s6275] sm:$0xff]
      %s6277 = scalar_lea.vmem %s176, 2508
      %s6279 = ssub.s32 0, 4
      %s6280 = scalar_lea.vmem %s6277, %s6279
      %v6281 = vpack.c.bf16 %v6276, %v4122
      %6282 = vst [vmem:[%s6280] sm:$0xff] %v6281
      %s6283 = scalar_lea.vmem %s150, 7064
      %v6284 = vld [vmem:[%s6283] sm:$0xff]
      %s6285 = scalar_lea.vmem %s176, 5580
      %s6287 = ssub.s32 0, 4
      %s6288 = scalar_lea.vmem %s6285, %s6287
      %v6289 = vpack.c.bf16 %v6284, %v4125
      %6290 = vst [vmem:[%s6288] sm:$0xff] %v6289
      %s6291 = scalar_lea.vmem %s150, 920
      %v6292 = vld [vmem:[%s6291] sm:$0xff]
      %s6293 = scalar_lea.vmem %s176, 8652
      %s6295 = ssub.s32 0, 4
      %s6296 = scalar_lea.vmem %s6293, %s6295
      %v6297 = vpack.c.bf16 %v6292, %v4128
      %6298 = vst [vmem:[%s6296] sm:$0xff] %v6297
      %s6299 = scalar_lea.vmem %s150, 17336
      %v6300 = vld [vmem:[%s6299] sm:$0xff]
      %s6301 = scalar_lea.vmem %s176, 476
      %s6303 = ssub.s32 0, 4
      %s6304 = scalar_lea.vmem %s6301, %s6303
      %v6305 = vpack.c.bf16 %v6300, %v4131
      %6306 = vst [vmem:[%s6304] sm:$0xff] %v6305
      %s6307 = scalar_lea.vmem %s150, 11192
      %v6308 = vld [vmem:[%s6307] sm:$0xff]
      %s6309 = scalar_lea.vmem %s176, 3548
      %s6311 = ssub.s32 0, 4
      %s6312 = scalar_lea.vmem %s6309, %s6311
      %v6313 = vpack.c.bf16 %v6308, %v4134
      %6314 = vst [vmem:[%s6312] sm:$0xff] %v6313
      %s6315 = scalar_lea.vmem %s150, 5048
      %v6316 = vld [vmem:[%s6315] sm:$0xff]
      %s6317 = scalar_lea.vmem %s176, 6620
      %s6319 = ssub.s32 0, 4
      %s6320 = scalar_lea.vmem %s6317, %s6319
      %v6321 = vpack.c.bf16 %v6316, %v4137
      %6322 = vst [vmem:[%s6320] sm:$0xff] %v6321
      %s6323 = scalar_lea.vmem %s150, 15288
      %v6324 = vld [vmem:[%s6323] sm:$0xff]
      %s6325 = scalar_lea.vmem %s176, 1500
      %s6327 = ssub.s32 0, 4
      %s6328 = scalar_lea.vmem %s6325, %s6327
      %v6329 = vpack.c.bf16 %v6324, %v4140
      %6330 = vst [vmem:[%s6328] sm:$0xff] %v6329
      %s6331 = scalar_lea.vmem %s150, 9144
      %v6332 = vld [vmem:[%s6331] sm:$0xff]
      %s6333 = scalar_lea.vmem %s176, 4572
      %s6335 = ssub.s32 0, 4
      %s6336 = scalar_lea.vmem %s6333, %s6335
      %v6337 = vpack.c.bf16 %v6332, %v4143
      %6338 = vst [vmem:[%s6336] sm:$0xff] %v6337
      %s6339 = scalar_lea.vmem %s150, 3000
      %v6340 = vld [vmem:[%s6339] sm:$0xff]
      %s6341 = scalar_lea.vmem %s176, 7644
      %s6343 = ssub.s32 0, 4
      %s6344 = scalar_lea.vmem %s6341, %s6343
      %v6345 = vpack.c.bf16 %v6340, %v4146
      %6346 = vst [vmem:[%s6344] sm:$0xff] %v6345
      %s6347 = scalar_lea.vmem %s150, 13240
      %v6348 = vld [vmem:[%s6347] sm:$0xff]
      %s6349 = scalar_lea.vmem %s176, 2524
      %s6351 = ssub.s32 0, 4
      %s6352 = scalar_lea.vmem %s6349, %s6351
      %v6353 = vpack.c.bf16 %v6348, %v4149
      %6354 = vst [vmem:[%s6352] sm:$0xff] %v6353
      %s6355 = scalar_lea.vmem %s150, 7096
      %v6356 = vld [vmem:[%s6355] sm:$0xff]
      %s6357 = scalar_lea.vmem %s176, 5596
      %s6359 = ssub.s32 0, 4
      %s6360 = scalar_lea.vmem %s6357, %s6359
      %v6361 = vpack.c.bf16 %v6356, %v4152
      %6362 = vst [vmem:[%s6360] sm:$0xff] %v6361
      %s6363 = scalar_lea.vmem %s150, 952
      %v6364 = vld [vmem:[%s6363] sm:$0xff]
      %s6365 = scalar_lea.vmem %s176, 8668
      %s6367 = ssub.s32 0, 4
      %s6368 = scalar_lea.vmem %s6365, %s6367
      %v6369 = vpack.c.bf16 %v6364, %v4155
      %6370 = vst [vmem:[%s6368] sm:$0xff] %v6369
      %s6371 = scalar_lea.vmem %s150, 17368
      %v6372 = vld [vmem:[%s6371] sm:$0xff]
      %s6373 = scalar_lea.vmem %s176, 492
      %s6375 = ssub.s32 0, 4
      %s6376 = scalar_lea.vmem %s6373, %s6375
      %v6377 = vpack.c.bf16 %v6372, %v4158
      %6378 = vst [vmem:[%s6376] sm:$0xff] %v6377
      %s6379 = scalar_lea.vmem %s150, 11224
      %v6380 = vld [vmem:[%s6379] sm:$0xff]
      %s6381 = scalar_lea.vmem %s176, 3564
      %s6383 = ssub.s32 0, 4
      %s6384 = scalar_lea.vmem %s6381, %s6383
      %v6385 = vpack.c.bf16 %v6380, %v4161
      %6386 = vst [vmem:[%s6384] sm:$0xff] %v6385
      %s6387 = scalar_lea.vmem %s150, 5080
      %v6388 = vld [vmem:[%s6387] sm:$0xff]
      %s6389 = scalar_lea.vmem %s176, 6636
      %s6391 = ssub.s32 0, 4
      %s6392 = scalar_lea.vmem %s6389, %s6391
      %v6393 = vpack.c.bf16 %v6388, %v4164
      %6394 = vst [vmem:[%s6392] sm:$0xff] %v6393
      %s6395 = scalar_lea.vmem %s150, 15320
      %v6396 = vld [vmem:[%s6395] sm:$0xff]
      %s6397 = scalar_lea.vmem %s176, 1516
      %s6399 = ssub.s32 0, 4
      %s6400 = scalar_lea.vmem %s6397, %s6399
      %v6401 = vpack.c.bf16 %v6396, %v4167
      %6402 = vst [vmem:[%s6400] sm:$0xff] %v6401
      %s6403 = scalar_lea.vmem %s150, 9176
      %v6404 = vld [vmem:[%s6403] sm:$0xff]
      %s6405 = scalar_lea.vmem %s176, 4588
      %s6407 = ssub.s32 0, 4
      %s6408 = scalar_lea.vmem %s6405, %s6407
      %v6409 = vpack.c.bf16 %v6404, %v4170
      %6410 = vst [vmem:[%s6408] sm:$0xff] %v6409
      %s6411 = scalar_lea.vmem %s150, 3032
      %v6412 = vld [vmem:[%s6411] sm:$0xff]
      %s6413 = scalar_lea.vmem %s176, 7660
      %s6415 = ssub.s32 0, 4
      %s6416 = scalar_lea.vmem %s6413, %s6415
      %v6417 = vpack.c.bf16 %v6412, %v4173
      %6418 = vst [vmem:[%s6416] sm:$0xff] %v6417
      %s6419 = scalar_lea.vmem %s150, 13272
      %v6420 = vld [vmem:[%s6419] sm:$0xff]
      %s6421 = scalar_lea.vmem %s176, 2540
      %s6423 = ssub.s32 0, 4
      %s6424 = scalar_lea.vmem %s6421, %s6423
      %v6425 = vpack.c.bf16 %v6420, %v4176
      %6426 = vst [vmem:[%s6424] sm:$0xff] %v6425
      %s6427 = scalar_lea.vmem %s150, 7128
      %v6428 = vld [vmem:[%s6427] sm:$0xff]
      %s6429 = scalar_lea.vmem %s176, 5612
      %s6431 = ssub.s32 0, 4
      %s6432 = scalar_lea.vmem %s6429, %s6431
      %v6433 = vpack.c.bf16 %v6428, %v4179
      %6434 = vst [vmem:[%s6432] sm:$0xff] %v6433
      %s6435 = scalar_lea.vmem %s150, 984
      %v6436 = vld [vmem:[%s6435] sm:$0xff]
      %s6437 = scalar_lea.vmem %s176, 8684
      %s6439 = ssub.s32 0, 4
      %s6440 = scalar_lea.vmem %s6437, %s6439
      %v6441 = vpack.c.bf16 %v6436, %v4182
      %6442 = vst [vmem:[%s6440] sm:$0xff] %v6441
      %s6443 = scalar_lea.vmem %s150, 17400
      %v6444 = vld [vmem:[%s6443] sm:$0xff]
      %s6445 = scalar_lea.vmem %s176, 508
      %s6447 = ssub.s32 0, 4
      %s6448 = scalar_lea.vmem %s6445, %s6447
      %v6449 = vpack.c.bf16 %v6444, %v4185
      %6450 = vst [vmem:[%s6448] sm:$0xff] %v6449
      %s6451 = scalar_lea.vmem %s150, 11256
      %v6452 = vld [vmem:[%s6451] sm:$0xff]
      %s6453 = scalar_lea.vmem %s176, 3580
      %s6455 = ssub.s32 0, 4
      %s6456 = scalar_lea.vmem %s6453, %s6455
      %v6457 = vpack.c.bf16 %v6452, %v4188
      %6458 = vst [vmem:[%s6456] sm:$0xff] %v6457
      %s6459 = scalar_lea.vmem %s150, 5112
      %v6460 = vld [vmem:[%s6459] sm:$0xff]
      %s6461 = scalar_lea.vmem %s176, 6652
      %s6463 = ssub.s32 0, 4
      %s6464 = scalar_lea.vmem %s6461, %s6463
      %v6465 = vpack.c.bf16 %v6460, %v4191
      %6466 = vst [vmem:[%s6464] sm:$0xff] %v6465
      %s6467 = scalar_lea.vmem %s150, 15352
      %v6468 = vld [vmem:[%s6467] sm:$0xff]
      %s6469 = scalar_lea.vmem %s176, 1532
      %s6471 = ssub.s32 0, 4
      %s6472 = scalar_lea.vmem %s6469, %s6471
      %v6473 = vpack.c.bf16 %v6468, %v4194
      %6474 = vst [vmem:[%s6472] sm:$0xff] %v6473
      %s6475 = scalar_lea.vmem %s150, 9208
      %v6476 = vld [vmem:[%s6475] sm:$0xff]
      %s6477 = scalar_lea.vmem %s176, 4604
      %s6479 = ssub.s32 0, 4
      %s6480 = scalar_lea.vmem %s6477, %s6479
      %v6481 = vpack.c.bf16 %v6476, %v4197
      %6482 = vst [vmem:[%s6480] sm:$0xff] %v6481
      %s6483 = scalar_lea.vmem %s150, 3064
      %v6484 = vld [vmem:[%s6483] sm:$0xff]
      %s6485 = scalar_lea.vmem %s176, 7676
      %s6487 = ssub.s32 0, 4
      %s6488 = scalar_lea.vmem %s6485, %s6487
      %v6489 = vpack.c.bf16 %v6484, %v4200
      %6490 = vst [vmem:[%s6488] sm:$0xff] %v6489
      %s6491 = scalar_lea.vmem %s150, 13304
      %v6492 = vld [vmem:[%s6491] sm:$0xff]
      %s6493 = scalar_lea.vmem %s176, 2556
      %s6495 = ssub.s32 0, 4
      %s6496 = scalar_lea.vmem %s6493, %s6495
      %v6497 = vpack.c.bf16 %v6492, %v4203
      %6498 = vst [vmem:[%s6496] sm:$0xff] %v6497
      %s6499 = scalar_lea.vmem %s150, 7160
      %v6500 = vld [vmem:[%s6499] sm:$0xff]
      %s6501 = scalar_lea.vmem %s176, 5628
      %s6503 = ssub.s32 0, 4
      %s6504 = scalar_lea.vmem %s6501, %s6503
      %v6505 = vpack.c.bf16 %v6500, %v4206
      %6506 = vst [vmem:[%s6504] sm:$0xff] %v6505
      %s6507 = scalar_lea.vmem %s150, 1016
      %v6508 = vld [vmem:[%s6507] sm:$0xff]
      %s6509 = scalar_lea.vmem %s176, 8700
      %s6511 = ssub.s32 0, 4
      %s6512 = scalar_lea.vmem %s6509, %s6511
      %v6513 = vpack.c.bf16 %v6508, %v4209
      %6514 = vst [vmem:[%s6512] sm:$0xff] %v6513
      %s6515 = smul.u32 3, %s14
      %s6516 = smul.u32 3, %s15
      %s6517 = smul.u32 32, %s16
      %s6518 = smul.u32 4, %s17
      %p6519 = scmp.lt.s32.totalorder %s6515, 2
      %s6520 = scalar_select %p6519, %s6515, 2
      %p6521 = scmp.lt.s32.totalorder %s6516, 2
      %s6522 = scalar_select %p6521, %s6516, 2
      %p6523 = scmp.lt.s32.totalorder %s6517, 63
      %s6524 = scalar_select %p6523, %s6517, 63
      %p6525 = scmp.lt.s32.totalorder %s6518, 3
      %s6526 = scalar_select %p6525, %s6518, 3
      %s6527 = smul.addr %s6524, 4
      %s6528 = sadd.s32 %s6526, %s6527
      %s6529 = smul.addr %s6522, 256
      %s6530 = sadd.s32 %s6528, %s6529
      %s6531 = smul.addr %s6520, 768
      %s6532 = sadd.s32 %s6530, %s6531
      %s6533 = smul.addr %s6532, 4
      %s6534 = scalar_lea.vmem %s1, %s6533
      %s6535 = smul.u32 3, %s14
      %s6536 = smul.u32 3, %s15
      %s6537 = smul.u32 32, %s16
      %s6538 = smul.u32 4, %s17
    $region20: #{reverse} parent=5 // pred_fallthru
      _
    %p6539 = scmp.le.s32.totalorder 2, %s3
    // Predicated region
    $region21: #{reverse} parent=5 // pred_check
      %p6540 = pneg %p6539
    $region22: #{reverse} parent=5 // pred_check_branch
      %6542 = sbr.rel (%p6540) target = $region24
    $region23: #{reverse} parent=5 // pred_region
      %s6543 = ssub.s32 %s3, 2
      %s6544 = smul.u32 3, %s18
      %s6545 = smul.u32 3, %s19
      %s6546 = smul.u32 32, %s20
      %s6547 = smul.u32 4, %s21
      %p6548 = scmp.lt.s32.totalorder %s6544, 2
      %s6549 = scalar_select %p6548, %s6544, 2
      %p6550 = scmp.lt.s32.totalorder %s6545, 2
      %s6551 = scalar_select %p6550, %s6545, 2
      %p6552 = scmp.lt.s32.totalorder %s6546, 63
      %s6553 = scalar_select %p6552, %s6546, 63
      %p6554 = scmp.lt.s32.totalorder %s6547, 3
      %s6555 = scalar_select %p6554, %s6547, 3
      %s6556 = smul.addr %s6553, 4
      %s6557 = sadd.s32 %s6555, %s6556
      %s6558 = smul.addr %s6551, 256
      %s6559 = sadd.s32 %s6557, %s6558
      %s6560 = smul.addr %s6549, 768
      %s6561 = sadd.s32 %s6559, %s6560
      %s6562 = smul.addr %s6561, 4
      %s6563 = scalar_lea.vmem %s1, %s6562
    $region24: #{reverse} parent=5 // pred_fallthru
      _
  $region6: #{reverse} parent=0 // loop_footer
    %s7 = sadd.s32 1, %s3
  $region7: #{reverse} parent=0 // loop_footer_branch
    %2 = sbr.rel target = $region3
  $region8: #{reverse} parent=0 // loop_exit
    _

// kernel: _lambda_.1
$region0: #{_lambda_.1}
  #allocation0 [shape = 'u32[]', space=smem, size = 0x4, offset = 0x4, fixed_abs, tag = 'smem constant byte address 0x4 - core index']
  #allocation1 [shape = 'u32[144,128]{1,0:T(1,128)}', space=vmem, size = 0x12000, scoped, tag = 'internal scratch']
  #allocation2 [shape = 'f32[1,1]{1,0:T(1,128)S(1)}', space=vmem, size = 0x200, scoped, tag = 'scoped memory for _lambda_.1']
  %s0 = inlined_call_operand.vmem [shape: bf16[2,16,512], index: 0, kind: input, shape index: {}]
  %s1 = inlined_call_operand.vmem [shape: bf16[9,512,128], index: 1, kind: input, shape index: {}]
  %s2 = inlined_call_operand.vmem [shape: f32[1,128], index: 2, kind: input, shape index: {}]
  %s3 = inlined_call_operand.vmem [shape: f32[1,128], index: 3, kind: input, shape index: {}]
  %s4 = inlined_call_operand.<no memory space> [shape: f32[1,1], index: 4, kind: input, shape index: {}]
  %s5 = inlined_call_operand.vmem [shape: bf16[512,128], index: 5, kind: input, shape index: {}]
  %s6 = inlined_call_operand.vmem [shape: f32[1,128], index: 6, kind: input, shape index: {}]
  %s7 = inlined_call_operand.vmem [shape: bf16[128,512], index: 7, kind: input, shape index: {}]
  %s8 = inlined_call_operand.vmem [shape: f32[1,512], index: 8, kind: input, shape index: {}]
  %s9 = inlined_call_operand.vmem [shape: bf16[512,512], index: 9, kind: input, shape index: {}]
  %s10 = inlined_call_operand.vmem [shape: f32[1,512], index: 10, kind: input, shape index: {}]
  %s11 = inlined_call_operand.vmem [shape: bf16[512,128], index: 11, kind: input, shape index: {}]
  %s12 = inlined_call_operand.vmem [shape: f32[1,128], index: 12, kind: input, shape index: {}]
  %s13 = inlined_call_operand.vmem [shape: f32[2,8,128], index: 13, kind: output, shape index: {}]
  %s14 = sld [smem:[#allocation0]]
  $region85: #{_lambda_.1} parent=0
    _
  %s16 = ssub.s32 1, %s14
  %s17 = scalar_select 0, %s16, %s14
  %v18 = vstv %s4
  %19 = vst [vmem:[#allocation2] sm:$0x1] %v18
  loop: start=0, step=1, limit=4
  $region2: #{_lambda_.1} parent=0 // loop_pre_header
    _
  $region3: #{_lambda_.1} parent=0 // loop_header
    %s21 = sphi 0, %s25
    %p22 = scmp.ge.s32.totalorder %s21, 4
    %s31 = sphi 0, %s33
    %s34 = sphi 0, %s31
    %s35 = sphi 0, %s34
    %s51 = sphi 0, %s35
    %s55 = sphi 0, %s55
    %s57 = sphi 0, %s55
    %s58 = sphi 0, %s57
    %s72 = sphi 0, %s58
    %s76 = sphi 0, %s76
    %s78 = sphi 0, %s76
    %s79 = sphi 0, %s78
    %s93 = sphi 0, %s79
    %s97 = sphi 0, %s97
    %s99 = sphi 0, %s97
    %s100 = sphi 0, %s99
    %s114 = sphi 0, %s100
    %s118 = sphi 0, %s118
    %s120 = sphi 0, %s118
    %s121 = sphi 0, %s120
    %s135 = sphi 0, %s121
    %s139 = sphi 0, %s139
    %s141 = sphi 0, %s139
    %s142 = sphi 0, %s141
    %s156 = sphi 0, %s142
    %s160 = sphi 0, %s160
    %s162 = sphi 0, %s160
    %s163 = sphi 0, %s162
    %s177 = sphi 0, %s163
    %s181 = sphi 0, %s181
    %s183 = sphi 0, %s181
    %s184 = sphi 0, %s183
    %s198 = sphi 0, %s184
    %s202 = sphi 0, %s202
    %s204 = sphi 0, %s202
    %s205 = sphi 0, %s204
    %s219 = sphi 0, %s205
    %s223 = sphi 0, %s223
    %s225 = sphi 0, %s223
    %s226 = sphi 0, %s225
    %s240 = sphi 0, %s226
    %s244 = sphi 0, %s244
    %s246 = sphi 0, %s244
    %s247 = sphi 0, %s246
    %s261 = sphi 0, %s247
    %s265 = sphi 0, %s265
    %s267 = sphi 0, %s265
    %s268 = sphi 0, %s267
    %s282 = sphi 0, %s268
    %s286 = sphi 0, %s286
    %s288 = sphi 0, %s286
    %s289 = sphi 0, %s288
    %s303 = sphi 0, %s289
    %s309 = sphi 0, %s311
    %s312 = sphi 0, %s309
    %s313 = sphi 0, %s312
    %s329 = sphi 0, %s313
  $region4: #{_lambda_.1} parent=0 // loop_header_branch
    %24 = sbr.rel (%p22) target = $region8
  $region5: #{_lambda_.1} parent=0 // loop_body
    %s26 = ssub.s32 %s21, 1
    %s27 = ssub.s32 %s21, 2
    %s28 = sadd.s32 %s21, 1
    %s29 = ssub.s32 %s21, %s28
    %p30 = scmp.eq.s32.totalorder %s29, 0
    %s32 = sadd.s32 %s31, 1
    %s33 = scalar_select %p30, %s31, %s32
    %p36 = pneg %p30
    %p37 = scmp.eq.s32.totalorder %s21, 1
    %p38 = por %p36, %p37
    %p39 = scmp.ne.s32.totalorder %s31, %s34
    %p40 = scmp.eq.s32.totalorder %s21, 0
    %p41 = por %p39, %p40
    %p42 = scmp.ne.s32.totalorder %s31, %s34
    %p43 = scmp.eq.s32.totalorder %s26, 1
    %p44 = por %p42, %p43
    %p45 = scmp.ne.s32.totalorder %s34, %s35
    %p46 = scmp.eq.s32.totalorder %s26, 0
    %p47 = por %p45, %p46
    %p48 = scmp.ne.s32.totalorder %s34, %s35
    %p49 = scmp.eq.s32.totalorder %s27, 1
    %p50 = por %p48, %p49
    %p52 = scmp.ne.s32.totalorder %s35, %s51
    %p53 = scmp.eq.s32.totalorder %s27, 0
    %p54 = por %p52, %p53
    %s56 = sadd.s32 %s55, 1
    %p59 = scmp.eq.s32.totalorder %s21, 1
    %p60 = scmp.ne.s32.totalorder %s55, %s57
    %p61 = scmp.eq.s32.totalorder %s21, 0
    %p62 = por %p60, %p61
    %p63 = scmp.ne.s32.totalorder %s55, %s57
    %p64 = scmp.eq.s32.totalorder %s26, 1
    %p65 = por %p63, %p64
    %p66 = scmp.ne.s32.totalorder %s57, %s58
    %p67 = scmp.eq.s32.totalorder %s26, 0
    %p68 = por %p66, %p67
    %p69 = scmp.ne.s32.totalorder %s57, %s58
    %p70 = scmp.eq.s32.totalorder %s27, 1
    %p71 = por %p69, %p70
    %p73 = scmp.ne.s32.totalorder %s58, %s72
    %p74 = scmp.eq.s32.totalorder %s27, 0
    %p75 = por %p73, %p74
    %s77 = sadd.s32 %s76, 1
    %p80 = scmp.eq.s32.totalorder %s21, 1
    %p81 = scmp.ne.s32.totalorder %s76, %s78
    %p82 = scmp.eq.s32.totalorder %s21, 0
    %p83 = por %p81, %p82
    %p84 = scmp.ne.s32.totalorder %s76, %s78
    %p85 = scmp.eq.s32.totalorder %s26, 1
    %p86 = por %p84, %p85
    %p87 = scmp.ne.s32.totalorder %s78, %s79
    %p88 = scmp.eq.s32.totalorder %s26, 0
    %p89 = por %p87, %p88
    %p90 = scmp.ne.s32.totalorder %s78, %s79
    %p91 = scmp.eq.s32.totalorder %s27, 1
    %p92 = por %p90, %p91
    %p94 = scmp.ne.s32.totalorder %s79, %s93
    %p95 = scmp.eq.s32.totalorder %s27, 0
    %p96 = por %p94, %p95
    %s98 = sadd.s32 %s97, 1
    %p101 = scmp.eq.s32.totalorder %s21, 1
    %p102 = scmp.ne.s32.totalorder %s97, %s99
    %p103 = scmp.eq.s32.totalorder %s21, 0
    %p104 = por %p102, %p103
    %p105 = scmp.ne.s32.totalorder %s97, %s99
    %p106 = scmp.eq.s32.totalorder %s26, 1
    %p107 = por %p105, %p106
    %p108 = scmp.ne.s32.totalorder %s99, %s100
    %p109 = scmp.eq.s32.totalorder %s26, 0
    %p110 = por %p108, %p109
    %p111 = scmp.ne.s32.totalorder %s99, %s100
    %p112 = scmp.eq.s32.totalorder %s27, 1
    %p113 = por %p111, %p112
    %p115 = scmp.ne.s32.totalorder %s100, %s114
    %p116 = scmp.eq.s32.totalorder %s27, 0
    %p117 = por %p115, %p116
    %s119 = sadd.s32 %s118, 1
    %p122 = scmp.eq.s32.totalorder %s21, 1
    %p123 = scmp.ne.s32.totalorder %s118, %s120
    %p124 = scmp.eq.s32.totalorder %s21, 0
    %p125 = por %p123, %p124
    %p126 = scmp.ne.s32.totalorder %s118, %s120
    %p127 = scmp.eq.s32.totalorder %s26, 1
    %p128 = por %p126, %p127
    %p129 = scmp.ne.s32.totalorder %s120, %s121
    %p130 = scmp.eq.s32.totalorder %s26, 0
    %p131 = por %p129, %p130
    %p132 = scmp.ne.s32.totalorder %s120, %s121
    %p133 = scmp.eq.s32.totalorder %s27, 1
    %p134 = por %p132, %p133
    %p136 = scmp.ne.s32.totalorder %s121, %s135
    %p137 = scmp.eq.s32.totalorder %s27, 0
    %p138 = por %p136, %p137
    %s140 = sadd.s32 %s139, 1
    %p143 = scmp.eq.s32.totalorder %s21, 1
    %p144 = scmp.ne.s32.totalorder %s139, %s141
    %p145 = scmp.eq.s32.totalorder %s21, 0
    %p146 = por %p144, %p145
    %p147 = scmp.ne.s32.totalorder %s139, %s141
    %p148 = scmp.eq.s32.totalorder %s26, 1
    %p149 = por %p147, %p148
    %p150 = scmp.ne.s32.totalorder %s141, %s142
    %p151 = scmp.eq.s32.totalorder %s26, 0
    %p152 = por %p150, %p151
    %p153 = scmp.ne.s32.totalorder %s141, %s142
    %p154 = scmp.eq.s32.totalorder %s27, 1
    %p155 = por %p153, %p154
    %p157 = scmp.ne.s32.totalorder %s142, %s156
    %p158 = scmp.eq.s32.totalorder %s27, 0
    %p159 = por %p157, %p158
    %s161 = sadd.s32 %s160, 1
    %p164 = scmp.eq.s32.totalorder %s21, 1
    %p165 = scmp.ne.s32.totalorder %s160, %s162
    %p166 = scmp.eq.s32.totalorder %s21, 0
    %p167 = por %p165, %p166
    %p168 = scmp.ne.s32.totalorder %s160, %s162
    %p169 = scmp.eq.s32.totalorder %s26, 1
    %p170 = por %p168, %p169
    %p171 = scmp.ne.s32.totalorder %s162, %s163
    %p172 = scmp.eq.s32.totalorder %s26, 0
    %p173 = por %p171, %p172
    %p174 = scmp.ne.s32.totalorder %s162, %s163
    %p175 = scmp.eq.s32.totalorder %s27, 1
    %p176 = por %p174, %p175
    %p178 = scmp.ne.s32.totalorder %s163, %s177
    %p179 = scmp.eq.s32.totalorder %s27, 0
    %p180 = por %p178, %p179
    %s182 = sadd.s32 %s181, 1
    %p185 = scmp.eq.s32.totalorder %s21, 1
    %p186 = scmp.ne.s32.totalorder %s181, %s183
    %p187 = scmp.eq.s32.totalorder %s21, 0
    %p188 = por %p186, %p187
    %p189 = scmp.ne.s32.totalorder %s181, %s183
    %p190 = scmp.eq.s32.totalorder %s26, 1
    %p191 = por %p189, %p190
    %p192 = scmp.ne.s32.totalorder %s183, %s184
    %p193 = scmp.eq.s32.totalorder %s26, 0
    %p194 = por %p192, %p193
    %p195 = scmp.ne.s32.totalorder %s183, %s184
    %p196 = scmp.eq.s32.totalorder %s27, 1
    %p197 = por %p195, %p196
    %p199 = scmp.ne.s32.totalorder %s184, %s198
    %p200 = scmp.eq.s32.totalorder %s27, 0
    %p201 = por %p199, %p200
    %s203 = sadd.s32 %s202, 1
    %p206 = scmp.eq.s32.totalorder %s21, 1
    %p207 = scmp.ne.s32.totalorder %s202, %s204
    %p208 = scmp.eq.s32.totalorder %s21, 0
    %p209 = por %p207, %p208
    %p210 = scmp.ne.s32.totalorder %s202, %s204
    %p211 = scmp.eq.s32.totalorder %s26, 1
    %p212 = por %p210, %p211
    %p213 = scmp.ne.s32.totalorder %s204, %s205
    %p214 = scmp.eq.s32.totalorder %s26, 0
    %p215 = por %p213, %p214
    %p216 = scmp.ne.s32.totalorder %s204, %s205
    %p217 = scmp.eq.s32.totalorder %s27, 1
    %p218 = por %p216, %p217
    %p220 = scmp.ne.s32.totalorder %s205, %s219
    %p221 = scmp.eq.s32.totalorder %s27, 0
    %p222 = por %p220, %p221
    %s224 = sadd.s32 %s223, 1
    %p227 = scmp.eq.s32.totalorder %s21, 1
    %p228 = scmp.ne.s32.totalorder %s223, %s225
    %p229 = scmp.eq.s32.totalorder %s21, 0
    %p230 = por %p228, %p229
    %p231 = scmp.ne.s32.totalorder %s223, %s225
    %p232 = scmp.eq.s32.totalorder %s26, 1
    %p233 = por %p231, %p232
    %p234 = scmp.ne.s32.totalorder %s225, %s226
    %p235 = scmp.eq.s32.totalorder %s26, 0
    %p236 = por %p234, %p235
    %p237 = scmp.ne.s32.totalorder %s225, %s226
    %p238 = scmp.eq.s32.totalorder %s27, 1
    %p239 = por %p237, %p238
    %p241 = scmp.ne.s32.totalorder %s226, %s240
    %p242 = scmp.eq.s32.totalorder %s27, 0
    %p243 = por %p241, %p242
    %s245 = sadd.s32 %s244, 1
    %p248 = scmp.eq.s32.totalorder %s21, 1
    %p249 = scmp.ne.s32.totalorder %s244, %s246
    %p250 = scmp.eq.s32.totalorder %s21, 0
    %p251 = por %p249, %p250
    %p252 = scmp.ne.s32.totalorder %s244, %s246
    %p253 = scmp.eq.s32.totalorder %s26, 1
    %p254 = por %p252, %p253
    %p255 = scmp.ne.s32.totalorder %s246, %s247
    %p256 = scmp.eq.s32.totalorder %s26, 0
    %p257 = por %p255, %p256
    %p258 = scmp.ne.s32.totalorder %s246, %s247
    %p259 = scmp.eq.s32.totalorder %s27, 1
    %p260 = por %p258, %p259
    %p262 = scmp.ne.s32.totalorder %s247, %s261
    %p263 = scmp.eq.s32.totalorder %s27, 0
    %p264 = por %p262, %p263
    %s266 = sadd.s32 %s265, 1
    %p269 = scmp.eq.s32.totalorder %s21, 1
    %p270 = scmp.ne.s32.totalorder %s265, %s267
    %p271 = scmp.eq.s32.totalorder %s21, 0
    %p272 = por %p270, %p271
    %p273 = scmp.ne.s32.totalorder %s265, %s267
    %p274 = scmp.eq.s32.totalorder %s26, 1
    %p275 = por %p273, %p274
    %p276 = scmp.ne.s32.totalorder %s267, %s268
    %p277 = scmp.eq.s32.totalorder %s26, 0
    %p278 = por %p276, %p277
    %p279 = scmp.ne.s32.totalorder %s267, %s268
    %p280 = scmp.eq.s32.totalorder %s27, 1
    %p281 = por %p279, %p280
    %p283 = scmp.ne.s32.totalorder %s268, %s282
    %p284 = scmp.eq.s32.totalorder %s27, 0
    %p285 = por %p283, %p284
    %s287 = sadd.s32 %s286, 1
    %p290 = scmp.eq.s32.totalorder %s21, 1
    %p291 = scmp.ne.s32.totalorder %s286, %s288
    %p292 = scmp.eq.s32.totalorder %s21, 0
    %p293 = por %p291, %p292
    %p294 = scmp.ne.s32.totalorder %s286, %s288
    %p295 = scmp.eq.s32.totalorder %s26, 1
    %p296 = por %p294, %p295
    %p297 = scmp.ne.s32.totalorder %s288, %s289
    %p298 = scmp.eq.s32.totalorder %s26, 0
    %p299 = por %p297, %p298
    %p300 = scmp.ne.s32.totalorder %s288, %s289
    %p301 = scmp.eq.s32.totalorder %s27, 1
    %p302 = por %p300, %p301
    %p304 = scmp.ne.s32.totalorder %s289, %s303
    %p305 = scmp.eq.s32.totalorder %s27, 0
    %p306 = por %p304, %p305
    %s307 = ssub.s32 %s21, %s28
    %p308 = scmp.eq.s32.totalorder %s307, 0
    %s310 = sadd.s32 %s309, 1
    %s311 = scalar_select %p308, %s309, %s310
    %p314 = pneg %p308
    %p315 = scmp.eq.s32.totalorder %s21, 1
    %p316 = por %p314, %p315
    %p317 = scmp.ne.s32.totalorder %s309, %s312
    %p318 = scmp.eq.s32.totalorder %s21, 0
    %p319 = por %p317, %p318
    %p320 = scmp.ne.s32.totalorder %s309, %s312
    %p321 = scmp.eq.s32.totalorder %s26, 1
    %p322 = por %p320, %p321
    %p323 = scmp.ne.s32.totalorder %s312, %s313
    %p324 = scmp.eq.s32.totalorder %s26, 0
    %p325 = por %p323, %p324
    %p326 = scmp.ne.s32.totalorder %s312, %s313
    %p327 = scmp.eq.s32.totalorder %s27, 1
    %p328 = por %p326, %p327
    %p330 = scmp.ne.s32.totalorder %s313, %s329
    %p331 = scmp.eq.s32.totalorder %s27, 0
    %p332 = por %p330, %p331
    %p333 = scmp.le.s32.totalorder 1, %s21
    %p334 = scmp.lt.s32.totalorder %s21, 3
    %p335 = pnand %p333, %p334
    %p336 = pneg %p335
    // Predicated region
    $region9: #{_lambda_.1} parent=5 // pred_check
      _
    $region10: #{_lambda_.1} parent=5 // pred_check_branch
      %338 = sbr.rel (%p335) target = $region12
    $region11: #{_lambda_.1} parent=5 // pred_region
      %s339 = ssub.s32 %s21, 1
      // Predicated region
      $region13: #{_lambda_.1} parent=11 // pred_check
        %p340 = pneg %p68
      $region14: #{_lambda_.1} parent=11 // pred_check_branch
        %342 = sbr.rel (%p340) target = $region16
      $region15: #{_lambda_.1} parent=11 // pred_region
        _
      $region16: #{_lambda_.1} parent=11 // pred_fallthru
        _
      // Predicated region
      $region17: #{_lambda_.1} parent=11 // pred_check
        %p343 = pneg %p89
      $region18: #{_lambda_.1} parent=11 // pred_check_branch
        %345 = sbr.rel (%p343) target = $region20
      $region19: #{_lambda_.1} parent=11 // pred_region
        _
      $region20: #{_lambda_.1} parent=11 // pred_fallthru
        _
      // Predicated region
      $region21: #{_lambda_.1} parent=11 // pred_check
        %p346 = pneg %p110
      $region22: #{_lambda_.1} parent=11 // pred_check_branch
        %348 = sbr.rel (%p346) target = $region24
      $region23: #{_lambda_.1} parent=11 // pred_region
        _
      $region24: #{_lambda_.1} parent=11 // pred_fallthru
        _
      // Predicated region
      $region25: #{_lambda_.1} parent=11 // pred_check
        %p349 = pneg %p131
      $region26: #{_lambda_.1} parent=11 // pred_check_branch
        %351 = sbr.rel (%p349) target = $region28
      $region27: #{_lambda_.1} parent=11 // pred_region
        _
      $region28: #{_lambda_.1} parent=11 // pred_fallthru
        _
      // Predicated region
      $region29: #{_lambda_.1} parent=11 // pred_check
        %p352 = pneg %p152
      $region30: #{_lambda_.1} parent=11 // pred_check_branch
        %354 = sbr.rel (%p352) target = $region32
      $region31: #{_lambda_.1} parent=11 // pred_region
        _
      $region32: #{_lambda_.1} parent=11 // pred_fallthru
        _
      // Predicated region
      $region33: #{_lambda_.1} parent=11 // pred_check
        %p355 = pneg %p173
      $region34: #{_lambda_.1} parent=11 // pred_check_branch
        %357 = sbr.rel (%p355) target = $region36
      $region35: #{_lambda_.1} parent=11 // pred_region
        _
      $region36: #{_lambda_.1} parent=11 // pred_fallthru
        _
      // Predicated region
      $region37: #{_lambda_.1} parent=11 // pred_check
        %p358 = pneg %p194
      $region38: #{_lambda_.1} parent=11 // pred_check_branch
        %360 = sbr.rel (%p358) target = $region40
      $region39: #{_lambda_.1} parent=11 // pred_region
        _
      $region40: #{_lambda_.1} parent=11 // pred_fallthru
        _
      // Predicated region
      $region41: #{_lambda_.1} parent=11 // pred_check
        %p361 = pneg %p215
      $region42: #{_lambda_.1} parent=11 // pred_check_branch
        %363 = sbr.rel (%p361) target = $region44
      $region43: #{_lambda_.1} parent=11 // pred_region
        _
      $region44: #{_lambda_.1} parent=11 // pred_fallthru
        _
      // Predicated region
      $region45: #{_lambda_.1} parent=11 // pred_check
        %p364 = pneg %p236
      $region46: #{_lambda_.1} parent=11 // pred_check_branch
        %366 = sbr.rel (%p364) target = $region48
      $region47: #{_lambda_.1} parent=11 // pred_region
        _
      $region48: #{_lambda_.1} parent=11 // pred_fallthru
        _
      // Predicated region
      $region49: #{_lambda_.1} parent=11 // pred_check
        %p367 = pneg %p257
      $region50: #{_lambda_.1} parent=11 // pred_check_branch
        %369 = sbr.rel (%p367) target = $region52
      $region51: #{_lambda_.1} parent=11 // pred_region
        _
      $region52: #{_lambda_.1} parent=11 // pred_fallthru
        _
      // Predicated region
      $region53: #{_lambda_.1} parent=11 // pred_check
        %p370 = pneg %p278
      $region54: #{_lambda_.1} parent=11 // pred_check_branch
        %372 = sbr.rel (%p370) target = $region56
      $region55: #{_lambda_.1} parent=11 // pred_region
        _
      $region56: #{_lambda_.1} parent=11 // pred_fallthru
        _
      // Predicated region
      $region57: #{_lambda_.1} parent=11 // pred_check
        %p373 = pneg %p299
      $region58: #{_lambda_.1} parent=11 // pred_check_branch
        %375 = sbr.rel (%p373) target = $region60
      $region59: #{_lambda_.1} parent=11 // pred_region
        _
      $region60: #{_lambda_.1} parent=11 // pred_fallthru
        _
    $region12: #{_lambda_.1} parent=5 // pred_fallthru
      _
    %p376 = scmp.lt.s32.totalorder %s21, 2
    // Predicated region
    $region61: #{_lambda_.1} parent=5 // pred_check
      %p377 = pneg %p376
    $region62: #{_lambda_.1} parent=5 // pred_check_branch
      %379 = sbr.rel (%p377) target = $region64
    $region63: #{_lambda_.1} parent=5 // pred_region
      // Predicated region
      $region65: #{_lambda_.1} parent=63 // pred_check
        %p380 = pneg %p41
      $region66: #{_lambda_.1} parent=63 // pred_check_branch
        %382 = sbr.rel (%p380) target = $region68
      $region67: #{_lambda_.1} parent=63 // pred_region
        %p383 = scmp.lt.s32.totalorder %s21, 1
        %s384 = scalar_select %p383, %s21, 1
        %s385 = smul.addr %s384, 8
        %s386 = smul.addr %s385, 4
        %s387 = scalar_lea.vmem %s0, %s386
      $region68: #{_lambda_.1} parent=63 // pred_fallthru
        _
    $region64: #{_lambda_.1} parent=5 // pred_fallthru
      _
    %p388 = scmp.le.s32.totalorder 1, %s21
    %p389 = scmp.lt.s32.totalorder %s21, 3
    %p390 = pnand %p388, %p389
    %p391 = pneg %p390
    // Predicated region
    $region69: #{_lambda_.1} parent=5 // pred_check
      _
    $region70: #{_lambda_.1} parent=5 // pred_check_branch
      %393 = sbr.rel (%p390) target = $region72
    $region71: #{_lambda_.1} parent=5 // pred_region
      %s394 = ssub.s32 %s21, 1
      %p395 = scmp.lt.s32.totalorder %s26, 1
      %s396 = scalar_select %p395, %s26, 1
      %s397 = smul.addr %s396, 8
      %s398 = smul.addr %s397, 4
      %s399 = scalar_lea.vmem %s0, %s398
      %p400 = pneg %p47
      %p401 = pneg %p44
      %p402 = pneg %p68
      %p403 = pneg %p65
      %p404 = pneg %p89
      %p405 = pneg %p86
      %p406 = pneg %p110
      %p407 = pneg %p107
      %p408 = pneg %p131
      %p409 = pneg %p128
      %p410 = pneg %p152
      %p411 = pneg %p149
      %p412 = pneg %p173
      %p413 = pneg %p170
      %p414 = pneg %p194
      %p415 = pneg %p191
      %p416 = pneg %p215
      %p417 = pneg %p212
      %p418 = pneg %p236
      %p419 = pneg %p233
      %p420 = pneg %p257
      %p421 = pneg %p254
      %p422 = pneg %p278
      %p423 = pneg %p275
      %p424 = pneg %p299
      %p425 = pneg %p296
      %p426 = pneg %p325
      %p427 = pneg %p322
      %p428 = scmp.lt.s32.totalorder %s26, 1
      %s429 = scalar_select %p428, %s26, 1
      %s430 = smul.addr %s429, 8
      %s431 = scalar_lea.vmem %s13, %s430
      %p432 = scmp.lt.s32.totalorder %s26, 1
      %s433 = scalar_select %p432, %s26, 1
      %s434 = smul.addr %s433, 8
      %s435 = smul.addr %s434, 4
      %s436 = scalar_lea.vmem %s0, %s435
      %p437 = scmp.lt.s32.totalorder %s26, 1
      %s438 = scalar_select %p437, %s26, 1
      %s439 = smul.addr %s438, 8
      %s440 = scalar_lea.vmem %s13, %s439
      %v442 = vld [vmem:[%s436] sm:$0x77]
      %v443 = vld [vmem:[%s436 + $0x8] sm:$0x77]
      %v444 = vld [vmem:[%s1] sm:$0xf]
      %v445 = vld [vmem:[%s1 + $0x4] sm:$0xf]
      %v446 = vld [vmem:[%s1 + $0x8] sm:$0xf]
      %v447 = vld [vmem:[%s1 + $0xc] sm:$0xf]
      %v448 = vld [vmem:[%s1 + $0x10] sm:$0xf]
      %v449 = vld [vmem:[%s1 + $0x14] sm:$0xf]
      %v450 = vld [vmem:[%s1 + $0x18] sm:$0xf]
      %v451 = vld [vmem:[%s1 + $0x1c] sm:$0xf]
      %v452 = vld [vmem:[%s1 + $0x20] sm:$0xf]
      %v453 = vld [vmem:[%s1 + $0x24] sm:$0xf]
      %v454 = vld [vmem:[%s1 + $0x28] sm:$0xf]
      %v455 = vld [vmem:[%s1 + $0x2c] sm:$0xf]
      %v456 = vld [vmem:[%s1 + $0x30] sm:$0xf]
      %v457 = vld [vmem:[%s1 + $0x34] sm:$0xf]
      %v458 = vld [vmem:[%s1 + $0x38] sm:$0xf]
      %v459 = vld [vmem:[%s1 + $0x3c] sm:$0xf]
      %v460 = vld [vmem:[%s1 + $0x40] sm:$0xf]
      %v461 = vld [vmem:[%s1 + $0x44] sm:$0xf]
      %v462 = vld [vmem:[%s1 + $0x48] sm:$0xf]
      %v463 = vld [vmem:[%s1 + $0x4c] sm:$0xf]
      %v464 = vld [vmem:[%s1 + $0x50] sm:$0xf]
      %v465 = vld [vmem:[%s1 + $0x54] sm:$0xf]
      %v466 = vld [vmem:[%s1 + $0x58] sm:$0xf]
      %v467 = vld [vmem:[%s1 + $0x5c] sm:$0xf]
      %v468 = vld [vmem:[%s1 + $0x60] sm:$0xf]
      %v469 = vld [vmem:[%s1 + $0x64] sm:$0xf]
      %v470 = vld [vmem:[%s1 + $0x68] sm:$0xf]
      %v471 = vld [vmem:[%s1 + $0x6c] sm:$0xf]
      %v472 = vld [vmem:[%s1 + $0x70] sm:$0xf]
      %v473 = vld [vmem:[%s1 + $0x74] sm:$0xf]
      %v474 = vld [vmem:[%s1 + $0x78] sm:$0xf]
      %v475 = vld [vmem:[%s1 + $0x7c] sm:$0xf]
      %v476 = vld [vmem:[%s1 + $0x80] sm:$0xf]
      %v477 = vld [vmem:[%s1 + $0x84] sm:$0xf]
      %v478 = vld [vmem:[%s1 + $0x88] sm:$0xf]
      %v479 = vld [vmem:[%s1 + $0x8c] sm:$0xf]
      %v480 = vld [vmem:[%s1 + $0x90] sm:$0xf]
      %v481 = vld [vmem:[%s1 + $0x94] sm:$0xf]
      %v482 = vld [vmem:[%s1 + $0x98] sm:$0xf]
      %v483 = vld [vmem:[%s1 + $0x9c] sm:$0xf]
      %v484 = vld [vmem:[%s1 + $0xa0] sm:$0xf]
      %v485 = vld [vmem:[%s1 + $0xa4] sm:$0xf]
      %v486 = vld [vmem:[%s1 + $0xa8] sm:$0xf]
      %v487 = vld [vmem:[%s1 + $0xac] sm:$0xf]
      %v488 = vld [vmem:[%s1 + $0xb0] sm:$0xf]
      %v489 = vld [vmem:[%s1 + $0xb4] sm:$0xf]
      %v490 = vld [vmem:[%s1 + $0xb8] sm:$0xf]
      %v491 = vld [vmem:[%s1 + $0xbc] sm:$0xf]
      %v492 = vld [vmem:[%s1 + $0xc0] sm:$0xf]
      %v493 = vld [vmem:[%s1 + $0xc4] sm:$0xf]
      %v494 = vld [vmem:[%s1 + $0xc8] sm:$0xf]
      %v495 = vld [vmem:[%s1 + $0xcc] sm:$0xf]
      %v496 = vld [vmem:[%s1 + $0xd0] sm:$0xf]
      %v497 = vld [vmem:[%s1 + $0xd4] sm:$0xf]
      %v498 = vld [vmem:[%s1 + $0xd8] sm:$0xf]
      %v499 = vld [vmem:[%s1 + $0xdc] sm:$0xf]
      %v500 = vld [vmem:[%s1 + $0xe0] sm:$0xf]
      %v501 = vld [vmem:[%s1 + $0xe4] sm:$0xf]
      %v502 = vld [vmem:[%s1 + $0xe8] sm:$0xf]
      %v503 = vld [vmem:[%s1 + $0xec] sm:$0xf]
      %v504 = vld [vmem:[%s1 + $0xf0] sm:$0xf]
      %v505 = vld [vmem:[%s1 + $0xf4] sm:$0xf]
      %v506 = vld [vmem:[%s1 + $0xf8] sm:$0xf]
      %v507 = vld [vmem:[%s1 + $0xfc] sm:$0xf]
      %v508 = vld [vmem:[%s436] sm:$0xff]
      %v509 = vld [vmem:[%s436 + $0x8] sm:$0xff]
      %s510 = scalar_lea.vmem %s1, 256
      %v511 = vld [vmem:[%s510] sm:$0xf]
      %v512 = vld [vmem:[%s510 + $0x4] sm:$0xf]
      %v513 = vld [vmem:[%s510 + $0x8] sm:$0xf]
      %v514 = vld [vmem:[%s510 + $0xc] sm:$0xf]
      %v515 = vld [vmem:[%s510 + $0x10] sm:$0xf]
      %v516 = vld [vmem:[%s510 + $0x14] sm:$0xf]
      %v517 = vld [vmem:[%s510 + $0x18] sm:$0xf]
      %v518 = vld [vmem:[%s510 + $0x1c] sm:$0xf]
      %v519 = vld [vmem:[%s510 + $0x20] sm:$0xf]
      %v520 = vld [vmem:[%s510 + $0x24] sm:$0xf]
      %v521 = vld [vmem:[%s510 + $0x28] sm:$0xf]
      %v522 = vld [vmem:[%s510 + $0x2c] sm:$0xf]
      %v523 = vld [vmem:[%s510 + $0x30] sm:$0xf]
      %v524 = vld [vmem:[%s510 + $0x34] sm:$0xf]
      %v525 = vld [vmem:[%s510 + $0x38] sm:$0xf]
      %v526 = vld [vmem:[%s510 + $0x3c] sm:$0xf]
      %v527 = vld [vmem:[%s510 + $0x40] sm:$0xf]
      %v528 = vld [vmem:[%s510 + $0x44] sm:$0xf]
      %v529 = vld [vmem:[%s510 + $0x48] sm:$0xf]
      %v530 = vld [vmem:[%s510 + $0x4c] sm:$0xf]
      %v531 = vld [vmem:[%s510 + $0x50] sm:$0xf]
      %v532 = vld [vmem:[%s510 + $0x54] sm:$0xf]
      %v533 = vld [vmem:[%s510 + $0x58] sm:$0xf]
      %v534 = vld [vmem:[%s510 + $0x5c] sm:$0xf]
      %v535 = vld [vmem:[%s510 + $0x60] sm:$0xf]
      %v536 = vld [vmem:[%s510 + $0x64] sm:$0xf]
      %v537 = vld [vmem:[%s510 + $0x68] sm:$0xf]
      %v538 = vld [vmem:[%s510 + $0x6c] sm:$0xf]
      %v539 = vld [vmem:[%s510 + $0x70] sm:$0xf]
      %v540 = vld [vmem:[%s510 + $0x74] sm:$0xf]
      %v541 = vld [vmem:[%s510 + $0x78] sm:$0xf]
      %v542 = vld [vmem:[%s510 + $0x7c] sm:$0xf]
      %v543 = vld [vmem:[%s510 + $0x80] sm:$0xf]
      %v544 = vld [vmem:[%s510 + $0x84] sm:$0xf]
      %v545 = vld [vmem:[%s510 + $0x88] sm:$0xf]
      %v546 = vld [vmem:[%s510 + $0x8c] sm:$0xf]
      %v547 = vld [vmem:[%s510 + $0x90] sm:$0xf]
      %v548 = vld [vmem:[%s510 + $0x94] sm:$0xf]
      %v549 = vld [vmem:[%s510 + $0x98] sm:$0xf]
      %v550 = vld [vmem:[%s510 + $0x9c] sm:$0xf]
      %v551 = vld [vmem:[%s510 + $0xa0] sm:$0xf]
      %v552 = vld [vmem:[%s510 + $0xa4] sm:$0xf]
      %v553 = vld [vmem:[%s510 + $0xa8] sm:$0xf]
      %v554 = vld [vmem:[%s510 + $0xac] sm:$0xf]
      %v555 = vld [vmem:[%s510 + $0xb0] sm:$0xf]
      %v556 = vld [vmem:[%s510 + $0xb4] sm:$0xf]
      %v557 = vld [vmem:[%s510 + $0xb8] sm:$0xf]
      %v558 = vld [vmem:[%s510 + $0xbc] sm:$0xf]
      %v559 = vld [vmem:[%s510 + $0xc0] sm:$0xf]
      %v560 = vld [vmem:[%s510 + $0xc4] sm:$0xf]
      %v561 = vld [vmem:[%s510 + $0xc8] sm:$0xf]
      %v562 = vld [vmem:[%s510 + $0xcc] sm:$0xf]
      %v563 = vld [vmem:[%s510 + $0xd0] sm:$0xf]
      %v564 = vld [vmem:[%s510 + $0xd4] sm:$0xf]
      %v565 = vld [vmem:[%s510 + $0xd8] sm:$0xf]
      %v566 = vld [vmem:[%s510 + $0xdc] sm:$0xf]
      %v567 = vld [vmem:[%s510 + $0xe0] sm:$0xf]
      %v568 = vld [vmem:[%s510 + $0xe4] sm:$0xf]
      %v569 = vld [vmem:[%s510 + $0xe8] sm:$0xf]
      %v570 = vld [vmem:[%s510 + $0xec] sm:$0xf]
      %v571 = vld [vmem:[%s510 + $0xf0] sm:$0xf]
      %v572 = vld [vmem:[%s510 + $0xf4] sm:$0xf]
      %v573 = vld [vmem:[%s510 + $0xf8] sm:$0xf]
      %v574 = vld [vmem:[%s510 + $0xfc] sm:$0xf]
      %v577 = vunpack.c.l.b16 %v508
      %v578 = vunpack.c.h.b16 %v508
      %v579 = vunpack.c.l.b16 %v509
      %v580 = vunpack.c.h.b16 %v509
      %v581 = vpack.c.b16 %v577, %v577
      %v582 = vpack.c.b16 %v578, %v578
      %v583 = vpack.c.b16 %v579, %v579
      %v584 = vpack.c.b16 %v580, %v580
      %v586 = vshrl.u32 %v581, 16
      %v588 = vshll.u32 %v581, 16
      %v590 = vrot.slane %v588, 1
      %v591 = vor.u32 %v586, %v590
      %v593 = vshrl.u32 %v582, 16
      %v595 = vshll.u32 %v582, 16
      %v597 = vrot.slane %v595, 1
      %v598 = vor.u32 %v593, %v597
      %v600 = vshrl.u32 %v583, 16
      %v602 = vshll.u32 %v583, 16
      %v604 = vrot.slane %v602, 1
      %v605 = vor.u32 %v600, %v604
      %v607 = vshrl.u32 %v584, 16
      %v609 = vshll.u32 %v584, 16
      %v611 = vrot.slane %v609, 1
      %v612 = vor.u32 %v607, %v611
      %v681 = vunpack.c.l.b16 %v511
      %v682 = vunpack.c.l.b16 %v512
      %v683 = vunpack.c.l.b16 %v513
      %v684 = vunpack.c.l.b16 %v514
      %v685 = vunpack.c.l.b16 %v515
      %v686 = vunpack.c.l.b16 %v516
      %v687 = vunpack.c.l.b16 %v517
      %v688 = vunpack.c.l.b16 %v518
      %v689 = vunpack.c.l.b16 %v519
      %v690 = vunpack.c.l.b16 %v520
      %v691 = vunpack.c.l.b16 %v521
      %v692 = vunpack.c.l.b16 %v522
      %v693 = vunpack.c.l.b16 %v523
      %v694 = vunpack.c.l.b16 %v524
      %v695 = vunpack.c.l.b16 %v525
      %v696 = vunpack.c.l.b16 %v526
      %v697 = vunpack.c.l.b16 %v527
      %v698 = vunpack.c.l.b16 %v528
      %v699 = vunpack.c.l.b16 %v529
      %v700 = vunpack.c.l.b16 %v530
      %v701 = vunpack.c.l.b16 %v531
      %v702 = vunpack.c.l.b16 %v532
      %v703 = vunpack.c.l.b16 %v533
      %v704 = vunpack.c.l.b16 %v534
      %v705 = vunpack.c.l.b16 %v535
      %v706 = vunpack.c.l.b16 %v536
      %v707 = vunpack.c.l.b16 %v537
      %v708 = vunpack.c.l.b16 %v538
      %v709 = vunpack.c.l.b16 %v539
      %v710 = vunpack.c.l.b16 %v540
      %v711 = vunpack.c.l.b16 %v541
      %v712 = vunpack.c.l.b16 %v542
      %v713 = vunpack.c.l.b16 %v543
      %v714 = vunpack.c.l.b16 %v544
      %v715 = vunpack.c.l.b16 %v545
      %v716 = vunpack.c.l.b16 %v546
      %v717 = vunpack.c.l.b16 %v547
      %v718 = vunpack.c.l.b16 %v548
      %v719 = vunpack.c.l.b16 %v549
      %v720 = vunpack.c.l.b16 %v550
      %v721 = vunpack.c.l.b16 %v551
      %v722 = vunpack.c.l.b16 %v552
      %v723 = vunpack.c.l.b16 %v553
      %v724 = vunpack.c.l.b16 %v554
      %v725 = vunpack.c.l.b16 %v555
      %v726 = vunpack.c.l.b16 %v556
      %v727 = vunpack.c.l.b16 %v557
      %v728 = vunpack.c.l.b16 %v558
      %v729 = vunpack.c.l.b16 %v559
      %v730 = vunpack.c.l.b16 %v560
      %v731 = vunpack.c.l.b16 %v561
      %v732 = vunpack.c.l.b16 %v562
      %v733 = vunpack.c.l.b16 %v563
      %v734 = vunpack.c.l.b16 %v564
      %v735 = vunpack.c.l.b16 %v565
      %v736 = vunpack.c.l.b16 %v566
      %v737 = vunpack.c.l.b16 %v567
      %v738 = vunpack.c.l.b16 %v568
      %v739 = vunpack.c.l.b16 %v569
      %v740 = vunpack.c.l.b16 %v570
      %v741 = vunpack.c.l.b16 %v571
      %v742 = vunpack.c.l.b16 %v572
      %v743 = vunpack.c.l.b16 %v573
      %v744 = vunpack.c.l.b16 %v574
      %v745 = vpack.c.b16 %v682, %v681
      %v746 = vpack.c.b16 %v684, %v683
      %v747 = vpack.c.b16 %v686, %v685
      %v748 = vpack.c.b16 %v688, %v687
      %v749 = vpack.c.b16 %v690, %v689
      %v750 = vpack.c.b16 %v692, %v691
      %v751 = vpack.c.b16 %v694, %v693
      %v752 = vpack.c.b16 %v696, %v695
      %v753 = vpack.c.b16 %v698, %v697
      %v754 = vpack.c.b16 %v700, %v699
      %v755 = vpack.c.b16 %v702, %v701
      %v756 = vpack.c.b16 %v704, %v703
      %v757 = vpack.c.b16 %v706, %v705
      %v758 = vpack.c.b16 %v708, %v707
      %v759 = vpack.c.b16 %v710, %v709
      %v760 = vpack.c.b16 %v712, %v711
      %v761 = vpack.c.b16 %v714, %v713
      %v762 = vpack.c.b16 %v716, %v715
      %v763 = vpack.c.b16 %v718, %v717
      %v764 = vpack.c.b16 %v720, %v719
      %v765 = vpack.c.b16 %v722, %v721
      %v766 = vpack.c.b16 %v724, %v723
      %v767 = vpack.c.b16 %v726, %v725
      %v768 = vpack.c.b16 %v728, %v727
      %v769 = vpack.c.b16 %v730, %v729
      %v770 = vpack.c.b16 %v732, %v731
      %v771 = vpack.c.b16 %v734, %v733
      %v772 = vpack.c.b16 %v736, %v735
      %v773 = vpack.c.b16 %v738, %v737
      %v774 = vpack.c.b16 %v740, %v739
      %v775 = vpack.c.b16 %v742, %v741
      %v776 = vpack.c.b16 %v744, %v743
      %809 = vmatprep.subr.bf16.mxu0 0
      %810 = vmatpush1.bf16.msra.mxu0 %v745
      %811 = vmatprep.subr.bf16.mxu0 0
      %812 = vmatpush1.bf16.msra.mxu0 %v746
      %813 = vmatprep.subr.bf16.mxu0 0
      %814 = vmatpush1.bf16.msra.mxu0 %v747
      %815 = vmatprep.subr.bf16.mxu0 0
      %816 = vmatpush1.bf16.msra.mxu0 %v748
      %817 = vmatprep.subr.bf16.mxu0 0
      %818 = vmatpush1.bf16.msra.mxu0 %v749
      %819 = vmatprep.subr.bf16.mxu0 0
      %820 = vmatpush1.bf16.msra.mxu0 %v750
      %821 = vmatprep.subr.bf16.mxu0 0
      %822 = vmatpush1.bf16.msra.mxu0 %v751
      %823 = vmatprep.subr.bf16.mxu0 0
      %824 = vmatpush1.bf16.msra.mxu0 %v752
      %825 = vmatprep.subr.bf16.mxu0 0
      %826 = vmatpush1.bf16.msra.mxu0 %v753
      %827 = vmatprep.subr.bf16.mxu0 0
      %828 = vmatpush1.bf16.msra.mxu0 %v754
      %829 = vmatprep.subr.bf16.mxu0 0
      %830 = vmatpush1.bf16.msra.mxu0 %v755
      %831 = vmatprep.subr.bf16.mxu0 0
      %832 = vmatpush1.bf16.msra.mxu0 %v756
      %833 = vmatprep.subr.bf16.mxu0 0
      %834 = vmatpush1.bf16.msra.mxu0 %v757
      %835 = vmatprep.subr.bf16.mxu0 0
      %836 = vmatpush1.bf16.msra.mxu0 %v758
      %837 = vmatprep.subr.bf16.mxu0 0
      %838 = vmatpush1.bf16.msra.mxu0 %v759
      %839 = vmatprep.subr.bf16.mxu0 0
      %840 = vmatpush1.bf16.msra.mxu0 %v760
      %841 = vmatprep.mubr.bf16.mxu0 %v598
      %842 = vmatmul.mubr.bf16.gmra.mrb[0].mxu0 %v591
      %v843 = vpop.f32.mrb[0].mxu0
      %v844 = vadd.f32 0.0, %v843
      %v845 = vpop.f32.mrb[0].mxu0
      %v846 = vpop.f32.mrb[0].mxu0
      %v847 = vpop.f32.mrb[0].mxu0
      %848 = vdwg.mxu0
      %849 = vmatprep.subr.bf16.mxu0 0
      %850 = vmatpush1.bf16.msra.mxu0 %v761
      %851 = vmatprep.subr.bf16.mxu0 0
      %852 = vmatpush1.bf16.msra.mxu0 %v762
      %853 = vmatprep.subr.bf16.mxu0 0
      %854 = vmatpush1.bf16.msra.mxu0 %v763
      %855 = vmatprep.subr.bf16.mxu0 0
      %856 = vmatpush1.bf16.msra.mxu0 %v764
      %857 = vmatprep.subr.bf16.mxu0 0
      %858 = vmatpush1.bf16.msra.mxu0 %v765
      %859 = vmatprep.subr.bf16.mxu0 0
      %860 = vmatpush1.bf16.msra.mxu0 %v766
      %861 = vmatprep.subr.bf16.mxu0 0
      %862 = vmatpush1.bf16.msra.mxu0 %v767
      %863 = vmatprep.subr.bf16.mxu0 0
      %864 = vmatpush1.bf16.msra.mxu0 %v768
      %865 = vmatprep.subr.bf16.mxu0 0
      %866 = vmatpush1.bf16.msra.mxu0 %v769
      %867 = vmatprep.subr.bf16.mxu0 0
      %868 = vmatpush1.bf16.msra.mxu0 %v770
      %869 = vmatprep.subr.bf16.mxu0 0
      %870 = vmatpush1.bf16.msra.mxu0 %v771
      %871 = vmatprep.subr.bf16.mxu0 0
      %872 = vmatpush1.bf16.msra.mxu0 %v772
      %873 = vmatprep.subr.bf16.mxu0 0
      %874 = vmatpush1.bf16.msra.mxu0 %v773
      %875 = vmatprep.subr.bf16.mxu0 0
      %876 = vmatpush1.bf16.msra.mxu0 %v774
      %877 = vmatprep.subr.bf16.mxu0 0
      %878 = vmatpush1.bf16.msra.mxu0 %v775
      %879 = vmatprep.subr.bf16.mxu0 0
      %880 = vmatpush1.bf16.msra.mxu0 %v776
      %881 = vmatprep.mubr.bf16.mxu0 %v612
      %882 = vmatmul.mubr.bf16.gmra.mrb[0].mxu0 %v605
      %v883 = vpop.f32.mrb[0].mxu0
      %v884 = vadd.f32 %v844, %v883
      %v885 = vpop.f32.mrb[0].mxu0
      %v886 = vpop.f32.mrb[0].mxu0
      %v887 = vpop.f32.mrb[0].mxu0
      %888 = vdwg.mxu0
      %v891 = vunpack.c.l.b16 %v442
      %v892 = vunpack.c.h.b16 %v442
      %v893 = vunpack.c.l.b16 %v443
      %v894 = vunpack.c.h.b16 %v443
      %v895 = vpack.c.b16 %v891, %v891
      %v896 = vpack.c.b16 %v892, %v892
      %v897 = vpack.c.b16 %v893, %v893
      %v898 = vpack.c.b16 %v894, %v894
      %v967 = vunpack.c.l.b16 %v444
      %v968 = vunpack.c.l.b16 %v445
      %v969 = vunpack.c.l.b16 %v446
      %v970 = vunpack.c.l.b16 %v447
      %v971 = vunpack.c.l.b16 %v448
      %v972 = vunpack.c.l.b16 %v449
      %v973 = vunpack.c.l.b16 %v450
      %v974 = vunpack.c.l.b16 %v451
      %v975 = vunpack.c.l.b16 %v452
      %v976 = vunpack.c.l.b16 %v453
      %v977 = vunpack.c.l.b16 %v454
      %v978 = vunpack.c.l.b16 %v455
      %v979 = vunpack.c.l.b16 %v456
      %v980 = vunpack.c.l.b16 %v457
      %v981 = vunpack.c.l.b16 %v458
      %v982 = vunpack.c.l.b16 %v459
      %v983 = vunpack.c.l.b16 %v460
      %v984 = vunpack.c.l.b16 %v461
      %v985 = vunpack.c.l.b16 %v462
      %v986 = vunpack.c.l.b16 %v463
      %v987 = vunpack.c.l.b16 %v464
      %v988 = vunpack.c.l.b16 %v465
      %v989 = vunpack.c.l.b16 %v466
      %v990 = vunpack.c.l.b16 %v467
      %v991 = vunpack.c.l.b16 %v468
      %v992 = vunpack.c.l.b16 %v469
      %v993 = vunpack.c.l.b16 %v470
      %v994 = vunpack.c.l.b16 %v471
      %v995 = vunpack.c.l.b16 %v472
      %v996 = vunpack.c.l.b16 %v473
      %v997 = vunpack.c.l.b16 %v474
      %v998 = vunpack.c.l.b16 %v475
      %v999 = vunpack.c.l.b16 %v476
      %v1000 = vunpack.c.l.b16 %v477
      %v1001 = vunpack.c.l.b16 %v478
      %v1002 = vunpack.c.l.b16 %v479
      %v1003 = vunpack.c.l.b16 %v480
      %v1004 = vunpack.c.l.b16 %v481
      %v1005 = vunpack.c.l.b16 %v482
      %v1006 = vunpack.c.l.b16 %v483
      %v1007 = vunpack.c.l.b16 %v484
      %v1008 = vunpack.c.l.b16 %v485
      %v1009 = vunpack.c.l.b16 %v486
      %v1010 = vunpack.c.l.b16 %v487
      %v1011 = vunpack.c.l.b16 %v488
      %v1012 = vunpack.c.l.b16 %v489
      %v1013 = vunpack.c.l.b16 %v490
      %v1014 = vunpack.c.l.b16 %v491
      %v1015 = vunpack.c.l.b16 %v492
      %v1016 = vunpack.c.l.b16 %v493
      %v1017 = vunpack.c.l.b16 %v494
      %v1018 = vunpack.c.l.b16 %v495
      %v1019 = vunpack.c.l.b16 %v496
      %v1020 = vunpack.c.l.b16 %v497
      %v1021 = vunpack.c.l.b16 %v498
      %v1022 = vunpack.c.l.b16 %v499
      %v1023 = vunpack.c.l.b16 %v500
      %v1024 = vunpack.c.l.b16 %v501
      %v1025 = vunpack.c.l.b16 %v502
      %v1026 = vunpack.c.l.b16 %v503
      %v1027 = vunpack.c.l.b16 %v504
      %v1028 = vunpack.c.l.b16 %v505
      %v1029 = vunpack.c.l.b16 %v506
      %v1030 = vunpack.c.l.b16 %v507
      %v1031 = vpack.c.b16 %v968, %v967
      %v1032 = vpack.c.b16 %v970, %v969
      %v1033 = vpack.c.b16 %v972, %v971
      %v1034 = vpack.c.b16 %v974, %v973
      %v1035 = vpack.c.b16 %v976, %v975
      %v1036 = vpack.c.b16 %v978, %v977
      %v1037 = vpack.c.b16 %v980, %v979
      %v1038 = vpack.c.b16 %v982, %v981
      %v1039 = vpack.c.b16 %v984, %v983
      %v1040 = vpack.c.b16 %v986, %v985
      %v1041 = vpack.c.b16 %v988, %v987
      %v1042 = vpack.c.b16 %v990, %v989
      %v1043 = vpack.c.b16 %v992, %v991
      %v1044 = vpack.c.b16 %v994, %v993
      %v1045 = vpack.c.b16 %v996, %v995
      %v1046 = vpack.c.b16 %v998, %v997
      %v1047 = vpack.c.b16 %v1000, %v999
      %v1048 = vpack.c.b16 %v1002, %v1001
      %v1049 = vpack.c.b16 %v1004, %v1003
      %v1050 = vpack.c.b16 %v1006, %v1005
      %v1051 = vpack.c.b16 %v1008, %v1007
      %v1052 = vpack.c.b16 %v1010, %v1009
      %v1053 = vpack.c.b16 %v1012, %v1011
      %v1054 = vpack.c.b16 %v1014, %v1013
      %v1055 = vpack.c.b16 %v1016, %v1015
      %v1056 = vpack.c.b16 %v1018, %v1017
      %v1057 = vpack.c.b16 %v1020, %v1019
      %v1058 = vpack.c.b16 %v1022, %v1021
      %v1059 = vpack.c.b16 %v1024, %v1023
      %v1060 = vpack.c.b16 %v1026, %v1025
      %v1061 = vpack.c.b16 %v1028, %v1027
      %v1062 = vpack.c.b16 %v1030, %v1029
      %1095 = vmatprep.subr.bf16.mxu0 0
      %1096 = vmatpush1.bf16.msra.mxu0 %v1031
      %1097 = vmatprep.subr.bf16.mxu0 0
      %1098 = vmatpush1.bf16.msra.mxu0 %v1032
      %1099 = vmatprep.subr.bf16.mxu0 0
      %1100 = vmatpush1.bf16.msra.mxu0 %v1033
      %1101 = vmatprep.subr.bf16.mxu0 0
      %1102 = vmatpush1.bf16.msra.mxu0 %v1034
      %1103 = vmatprep.subr.bf16.mxu0 0
      %1104 = vmatpush1.bf16.msra.mxu0 %v1035
      %1105 = vmatprep.subr.bf16.mxu0 0
      %1106 = vmatpush1.bf16.msra.mxu0 %v1036
      %1107 = vmatprep.subr.bf16.mxu0 0
      %1108 = vmatpush1.bf16.msra.mxu0 %v1037
      %1109 = vmatprep.subr.bf16.mxu0 0
      %1110 = vmatpush1.bf16.msra.mxu0 %v1038
      %1111 = vmatprep.subr.bf16.mxu0 0
      %1112 = vmatpush1.bf16.msra.mxu0 %v1039
      %1113 = vmatprep.subr.bf16.mxu0 0
      %1114 = vmatpush1.bf16.msra.mxu0 %v1040
      %1115 = vmatprep.subr.bf16.mxu0 0
      %1116 = vmatpush1.bf16.msra.mxu0 %v1041
      %1117 = vmatprep.subr.bf16.mxu0 0
      %1118 = vmatpush1.bf16.msra.mxu0 %v1042
      %1119 = vmatprep.subr.bf16.mxu0 0
      %1120 = vmatpush1.bf16.msra.mxu0 %v1043
      %1121 = vmatprep.subr.bf16.mxu0 0
      %1122 = vmatpush1.bf16.msra.mxu0 %v1044
      %1123 = vmatprep.subr.bf16.mxu0 0
      %1124 = vmatpush1.bf16.msra.mxu0 %v1045
      %1125 = vmatprep.subr.bf16.mxu0 0
      %1126 = vmatpush1.bf16.msra.mxu0 %v1046
      %1127 = vmatprep.mubr.bf16.mxu0 %v896
      %1128 = vmatmul.mubr.bf16.gmra.mrb[0].mxu0 %v895
      %v1129 = vpop.f32.mrb[0].mxu0
      %v1130 = vadd.f32 %v884, %v1129
      %v1131 = vpop.f32.mrb[0].mxu0
      %v1132 = vpop.f32.mrb[0].mxu0
      %v1133 = vpop.f32.mrb[0].mxu0
      %1134 = vdwg.mxu0
      %1135 = vmatprep.subr.bf16.mxu0 0
      %1136 = vmatpush1.bf16.msra.mxu0 %v1047
      %1137 = vmatprep.subr.bf16.mxu0 0
      %1138 = vmatpush1.bf16.msra.mxu0 %v1048
      %1139 = vmatprep.subr.bf16.mxu0 0
      %1140 = vmatpush1.bf16.msra.mxu0 %v1049
      %1141 = vmatprep.subr.bf16.mxu0 0
      %1142 = vmatpush1.bf16.msra.mxu0 %v1050
      %1143 = vmatprep.subr.bf16.mxu0 0
      %1144 = vmatpush1.bf16.msra.mxu0 %v1051
      %1145 = vmatprep.subr.bf16.mxu0 0
      %1146 = vmatpush1.bf16.msra.mxu0 %v1052
      %1147 = vmatprep.subr.bf16.mxu0 0
      %1148 = vmatpush1.bf16.msra.mxu0 %v1053
      %1149 = vmatprep.subr.bf16.mxu0 0
      %1150 = vmatpush1.bf16.msra.mxu0 %v1054
      %1151 = vmatprep.subr.bf16.mxu0 0
      %1152 = vmatpush1.bf16.msra.mxu0 %v1055
      %1153 = vmatprep.subr.bf16.mxu0 0
      %1154 = vmatpush1.bf16.msra.mxu0 %v1056
      %1155 = vmatprep.subr.bf16.mxu0 0
      %1156 = vmatpush1.bf16.msra.mxu0 %v1057
      %1157 = vmatprep.subr.bf16.mxu0 0
      %1158 = vmatpush1.bf16.msra.mxu0 %v1058
      %1159 = vmatprep.subr.bf16.mxu0 0
      %1160 = vmatpush1.bf16.msra.mxu0 %v1059
      %1161 = vmatprep.subr.bf16.mxu0 0
      %1162 = vmatpush1.bf16.msra.mxu0 %v1060
      %1163 = vmatprep.subr.bf16.mxu0 0
      %1164 = vmatpush1.bf16.msra.mxu0 %v1061
      %1165 = vmatprep.subr.bf16.mxu0 0
      %1166 = vmatpush1.bf16.msra.mxu0 %v1062
      %1167 = vmatprep.mubr.bf16.mxu0 %v898
      %1168 = vmatmul.mubr.bf16.gmra.mrb[0].mxu0 %v897
      %v1169 = vpop.f32.mrb[0].mxu0
      %v1170 = vadd.f32 %v1130, %v1169
      %v1171 = vpop.f32.mrb[0].mxu0
      %v1172 = vpop.f32.mrb[0].mxu0
      %v1173 = vpop.f32.mrb[0].mxu0
      %1174 = vdwg.mxu0
      %v1175 = vld [vmem:[%s436] sm:$0xee]
      %v1176 = vld [vmem:[%s436 + $0x8] sm:$0xee]
      %s1177 = scalar_lea.vmem %s1, 512
      %v1178 = vld [vmem:[%s1177] sm:$0xf]
      %v1179 = vld [vmem:[%s1177 + $0x4] sm:$0xf]
      %v1180 = vld [vmem:[%s1177 + $0x8] sm:$0xf]
      %v1181 = vld [vmem:[%s1177 + $0xc] sm:$0xf]
      %v1182 = vld [vmem:[%s1177 + $0x10] sm:$0xf]
      %v1183 = vld [vmem:[%s1177 + $0x14] sm:$0xf]
      %v1184 = vld [vmem:[%s1177 + $0x18] sm:$0xf]
      %v1185 = vld [vmem:[%s1177 + $0x1c] sm:$0xf]
      %v1186 = vld [vmem:[%s1177 + $0x20] sm:$0xf]
      %v1187 = vld [vmem:[%s1177 + $0x24] sm:$0xf]
      %v1188 = vld [vmem:[%s1177 + $0x28] sm:$0xf]
      %v1189 = vld [vmem:[%s1177 + $0x2c] sm:$0xf]
      %v1190 = vld [vmem:[%s1177 + $0x30] sm:$0xf]
      %v1191 = vld [vmem:[%s1177 + $0x34] sm:$0xf]
      %v1192 = vld [vmem:[%s1177 + $0x38] sm:$0xf]
      %v1193 = vld [vmem:[%s1177 + $0x3c] sm:$0xf]
      %v1194 = vld [vmem:[%s1177 + $0x40] sm:$0xf]
      %v1195 = vld [vmem:[%s1177 + $0x44] sm:$0xf]
      %v1196 = vld [vmem:[%s1177 + $0x48] sm:$0xf]
      %v1197 = vld [vmem:[%s1177 + $0x4c] sm:$0xf]
      %v1198 = vld [vmem:[%s1177 + $0x50] sm:$0xf]
      %v1199 = vld [vmem:[%s1177 + $0x54] sm:$0xf]
      %v1200 = vld [vmem:[%s1177 + $0x58] sm:$0xf]
      %v1201 = vld [vmem:[%s1177 + $0x5c] sm:$0xf]
      %v1202 = vld [vmem:[%s1177 + $0x60] sm:$0xf]
      %v1203 = vld [vmem:[%s1177 + $0x64] sm:$0xf]
      %v1204 = vld [vmem:[%s1177 + $0x68] sm:$0xf]
      %v1205 = vld [vmem:[%s1177 + $0x6c] sm:$0xf]
      %v1206 = vld [vmem:[%s1177 + $0x70] sm:$0xf]
      %v1207 = vld [vmem:[%s1177 + $0x74] sm:$0xf]
      %v1208 = vld [vmem:[%s1177 + $0x78] sm:$0xf]
      %v1209 = vld [vmem:[%s1177 + $0x7c] sm:$0xf]
      %v1210 = vld [vmem:[%s1177 + $0x80] sm:$0xf]
      %v1211 = vld [vmem:[%s1177 + $0x84] sm:$0xf]
      %v1212 = vld [vmem:[%s1177 + $0x88] sm:$0xf]
      %v1213 = vld [vmem:[%s1177 + $0x8c] sm:$0xf]
      %v1214 = vld [vmem:[%s1177 + $0x90] sm:$0xf]
      %v1215 = vld [vmem:[%s1177 + $0x94] sm:$0xf]
      %v1216 = vld [vmem:[%s1177 + $0x98] sm:$0xf]
      %v1217 = vld [vmem:[%s1177 + $0x9c] sm:$0xf]
      %v1218 = vld [vmem:[%s1177 + $0xa0] sm:$0xf]
      %v1219 = vld [vmem:[%s1177 + $0xa4] sm:$0xf]
      %v1220 = vld [vmem:[%s1177 + $0xa8] sm:$0xf]
      %v1221 = vld [vmem:[%s1177 + $0xac] sm:$0xf]
      %v1222 = vld [vmem:[%s1177 + $0xb0] sm:$0xf]
      %v1223 = vld [vmem:[%s1177 + $0xb4] sm:$0xf]
      %v1224 = vld [vmem:[%s1177 + $0xb8] sm:$0xf]
      %v1225 = vld [vmem:[%s1177 + $0xbc] sm:$0xf]
      %v1226 = vld [vmem:[%s1177 + $0xc0] sm:$0xf]
      %v1227 = vld [vmem:[%s1177 + $0xc4] sm:$0xf]
      %v1228 = vld [vmem:[%s1177 + $0xc8] sm:$0xf]
      %v1229 = vld [vmem:[%s1177 + $0xcc] sm:$0xf]
      %v1230 = vld [vmem:[%s1177 + $0xd0] sm:$0xf]
      %v1231 = vld [vmem:[%s1177 + $0xd4] sm:$0xf]
      %v1232 = vld [vmem:[%s1177 + $0xd8] sm:$0xf]
      %v1233 = vld [vmem:[%s1177 + $0xdc] sm:$0xf]
      %v1234 = vld [vmem:[%s1177 + $0xe0] sm:$0xf]
      %v1235 = vld [vmem:[%s1177 + $0xe4] sm:$0xf]
      %v1236 = vld [vmem:[%s1177 + $0xe8] sm:$0xf]
      %v1237 = vld [vmem:[%s1177 + $0xec] sm:$0xf]
      %v1238 = vld [vmem:[%s1177 + $0xf0] sm:$0xf]
      %v1239 = vld [vmem:[%s1177 + $0xf4] sm:$0xf]
      %v1240 = vld [vmem:[%s1177 + $0xf8] sm:$0xf]
      %v1241 = vld [vmem:[%s1177 + $0xfc] sm:$0xf]
      %v1244 = vunpack.c.l.b16 %v1175
      %v1245 = vunpack.c.h.b16 %v1175
      %v1246 = vunpack.c.l.b16 %v1176
      %v1247 = vunpack.c.h.b16 %v1176
      %v1248 = vpack.c.b16 %v1244, %v1244
      %v1249 = vpack.c.b16 %v1245, %v1245
      %v1250 = vpack.c.b16 %v1246, %v1246
      %v1251 = vpack.c.b16 %v1247, %v1247
      %v1252 = vrot.slane %v1248, 1
      %v1253 = vrot.slane %v1249, 1
      %v1254 = vrot.slane %v1250, 1
      %v1255 = vrot.slane %v1251, 1
      %v1324 = vunpack.c.l.b16 %v1178
      %v1325 = vunpack.c.l.b16 %v1179
      %v1326 = vunpack.c.l.b16 %v1180
      %v1327 = vunpack.c.l.b16 %v1181
      %v1328 = vunpack.c.l.b16 %v1182
      %v1329 = vunpack.c.l.b16 %v1183
      %v1330 = vunpack.c.l.b16 %v1184
      %v1331 = vunpack.c.l.b16 %v1185
      %v1332 = vunpack.c.l.b16 %v1186
      %v1333 = vunpack.c.l.b16 %v1187
      %v1334 = vunpack.c.l.b16 %v1188
      %v1335 = vunpack.c.l.b16 %v1189
      %v1336 = vunpack.c.l.b16 %v1190
      %v1337 = vunpack.c.l.b16 %v1191
      %v1338 = vunpack.c.l.b16 %v1192
      %v1339 = vunpack.c.l.b16 %v1193
      %v1340 = vunpack.c.l.b16 %v1194
      %v1341 = vunpack.c.l.b16 %v1195
      %v1342 = vunpack.c.l.b16 %v1196
      %v1343 = vunpack.c.l.b16 %v1197
      %v1344 = vunpack.c.l.b16 %v1198
      %v1345 = vunpack.c.l.b16 %v1199
      %v1346 = vunpack.c.l.b16 %v1200
      %v1347 = vunpack.c.l.b16 %v1201
      %v1348 = vunpack.c.l.b16 %v1202
      %v1349 = vunpack.c.l.b16 %v1203
      %v1350 = vunpack.c.l.b16 %v1204
      %v1351 = vunpack.c.l.b16 %v1205
      %v1352 = vunpack.c.l.b16 %v1206
      %v1353 = vunpack.c.l.b16 %v1207
      %v1354 = vunpack.c.l.b16 %v1208
      %v1355 = vunpack.c.l.b16 %v1209
      %v1356 = vunpack.c.l.b16 %v1210
      %v1357 = vunpack.c.l.b16 %v1211
      %v1358 = vunpack.c.l.b16 %v1212
      %v1359 = vunpack.c.l.b16 %v1213
      %v1360 = vunpack.c.l.b16 %v1214
      %v1361 = vunpack.c.l.b16 %v1215
      %v1362 = vunpack.c.l.b16 %v1216
      %v1363 = vunpack.c.l.b16 %v1217
      %v1364 = vunpack.c.l.b16 %v1218
      %v1365 = vunpack.c.l.b16 %v1219
      %v1366 = vunpack.c.l.b16 %v1220
      %v1367 = vunpack.c.l.b16 %v1221
      %v1368 = vunpack.c.l.b16 %v1222
      %v1369 = vunpack.c.l.b16 %v1223
      %v1370 = vunpack.c.l.b16 %v1224
      %v1371 = vunpack.c.l.b16 %v1225
      %v1372 = vunpack.c.l.b16 %v1226
      %v1373 = vunpack.c.l.b16 %v1227
      %v1374 = vunpack.c.l.b16 %v1228
      %v1375 = vunpack.c.l.b16 %v1229
      %v1376 = vunpack.c.l.b16 %v1230
      %v1377 = vunpack.c.l.b16 %v1231
      %v1378 = vunpack.c.l.b16 %v1232
      %v1379 = vunpack.c.l.b16 %v1233
      %v1380 = vunpack.c.l.b16 %v1234
      %v1381 = vunpack.c.l.b16 %v1235
      %v1382 = vunpack.c.l.b16 %v1236
      %v1383 = vunpack.c.l.b16 %v1237
      %v1384 = vunpack.c.l.b16 %v1238
      %v1385 = vunpack.c.l.b16 %v1239
      %v1386 = vunpack.c.l.b16 %v1240
      %v1387 = vunpack.c.l.b16 %v1241
      %v1388 = vpack.c.b16 %v1325, %v1324
      %v1389 = vpack.c.b16 %v1327, %v1326
      %v1390 = vpack.c.b16 %v1329, %v1328
      %v1391 = vpack.c.b16 %v1331, %v1330
      %v1392 = vpack.c.b16 %v1333, %v1332
      %v1393 = vpack.c.b16 %v1335, %v1334
      %v1394 = vpack.c.b16 %v1337, %v1336
      %v1395 = vpack.c.b16 %v1339, %v1338
      %v1396 = vpack.c.b16 %v1341, %v1340
      %v1397 = vpack.c.b16 %v1343, %v1342
      %v1398 = vpack.c.b16 %v1345, %v1344
      %v1399 = vpack.c.b16 %v1347, %v1346
      %v1400 = vpack.c.b16 %v1349, %v1348
      %v1401 = vpack.c.b16 %v1351, %v1350
      %v1402 = vpack.c.b16 %v1353, %v1352
      %v1403 = vpack.c.b16 %v1355, %v1354
      %v1404 = vpack.c.b16 %v1357, %v1356
      %v1405 = vpack.c.b16 %v1359, %v1358
      %v1406 = vpack.c.b16 %v1361, %v1360
      %v1407 = vpack.c.b16 %v1363, %v1362
      %v1408 = vpack.c.b16 %v1365, %v1364
      %v1409 = vpack.c.b16 %v1367, %v1366
      %v1410 = vpack.c.b16 %v1369, %v1368
      %v1411 = vpack.c.b16 %v1371, %v1370
      %v1412 = vpack.c.b16 %v1373, %v1372
      %v1413 = vpack.c.b16 %v1375, %v1374
      %v1414 = vpack.c.b16 %v1377, %v1376
      %v1415 = vpack.c.b16 %v1379, %v1378
      %v1416 = vpack.c.b16 %v1381, %v1380
      %v1417 = vpack.c.b16 %v1383, %v1382
      %v1418 = vpack.c.b16 %v1385, %v1384
      %v1419 = vpack.c.b16 %v1387, %v1386
      %1452 = vmatprep.subr.bf16.mxu0 0
      %1453 = vmatpush1.bf16.msra.mxu0 %v1388
      %1454 = vmatprep.subr.bf16.mxu0 0
      %1455 = vmatpush1.bf16.msra.mxu0 %v1389
      %1456 = vmatprep.subr.bf16.mxu0 0
      %1457 = vmatpush1.bf16.msra.mxu0 %v1390
      %1458 = vmatprep.subr.bf16.mxu0 0
      %1459 = vmatpush1.bf16.msra.mxu0 %v1391
      %1460 = vmatprep.subr.bf16.mxu0 0
      %1461 = vmatpush1.bf16.msra.mxu0 %v1392
      %1462 = vmatprep.subr.bf16.mxu0 0
      %1463 = vmatpush1.bf16.msra.mxu0 %v1393
      %1464 = vmatprep.subr.bf16.mxu0 0
      %1465 = vmatpush1.bf16.msra.mxu0 %v1394
      %1466 = vmatprep.subr.bf16.mxu0 0
      %1467 = vmatpush1.bf16.msra.mxu0 %v1395
      %1468 = vmatprep.subr.bf16.mxu0 0
      %1469 = vmatpush1.bf16.msra.mxu0 %v1396
      %1470 = vmatprep.subr.bf16.mxu0 0
      %1471 = vmatpush1.bf16.msra.mxu0 %v1397
      %1472 = vmatprep.subr.bf16.mxu0 0
      %1473 = vmatpush1.bf16.msra.mxu0 %v1398
      %1474 = vmatprep.subr.bf16.mxu0 0
      %1475 = vmatpush1.bf16.msra.mxu0 %v1399
      %1476 = vmatprep.subr.bf16.mxu0 0
      %1477 = vmatpush1.bf16.msra.mxu0 %v1400
      %1478 = vmatprep.subr.bf16.mxu0 0
      %1479 = vmatpush1.bf16.msra.mxu0 %v1401
      %1480 = vmatprep.subr.bf16.mxu0 0
      %1481 = vmatpush1.bf16.msra.mxu0 %v1402
      %1482 = vmatprep.subr.bf16.mxu0 0
      %1483 = vmatpush1.bf16.msra.mxu0 %v1403
      %1484 = vmatprep.mubr.bf16.mxu0 %v1253
      %1485 = vmatmul.mubr.bf16.gmra.mrb[0].mxu0 %v1252
      %v1486 = vpop.f32.mrb[0].mxu0
      %v1487 = vadd.f32 0.0, %v1486
      %v1488 = vpop.f32.mrb[0].mxu0
      %v1489 = vpop.f32.mrb[0].mxu0
      %v1490 = vpop.f32.mrb[0].mxu0
      %1491 = vdwg.mxu0
      %1492 = vmatprep.subr.bf16.mxu0 0
      %1493 = vmatpush1.bf16.msra.mxu0 %v1404
      %1494 = vmatprep.subr.bf16.mxu0 0
      %1495 = vmatpush1.bf16.msra.mxu0 %v1405
      %1496 = vmatprep.subr.bf16.mxu0 0
      %1497 = vmatpush1.bf16.msra.mxu0 %v1406
      %1498 = vmatprep.subr.bf16.mxu0 0
      %1499 = vmatpush1.bf16.msra.mxu0 %v1407
      %1500 = vmatprep.subr.bf16.mxu0 0
      %1501 = vmatpush1.bf16.msra.mxu0 %v1408
      %1502 = vmatprep.subr.bf16.mxu0 0
      %1503 = vmatpush1.bf16.msra.mxu0 %v1409
      %1504 = vmatprep.subr.bf16.mxu0 0
      %1505 = vmatpush1.bf16.msra.mxu0 %v1410
      %1506 = vmatprep.subr.bf16.mxu0 0
      %1507 = vmatpush1.bf16.msra.mxu0 %v1411
      %1508 = vmatprep.subr.bf16.mxu0 0
      %1509 = vmatpush1.bf16.msra.mxu0 %v1412
      %1510 = vmatprep.subr.bf16.mxu0 0
      %1511 = vmatpush1.bf16.msra.mxu0 %v1413
      %1512 = vmatprep.subr.bf16.mxu0 0
      %1513 = vmatpush1.bf16.msra.mxu0 %v1414
      %1514 = vmatprep.subr.bf16.mxu0 0
      %1515 = vmatpush1.bf16.msra.mxu0 %v1415
      %1516 = vmatprep.subr.bf16.mxu0 0
      %1517 = vmatpush1.bf16.msra.mxu0 %v1416
      %1518 = vmatprep.subr.bf16.mxu0 0
      %1519 = vmatpush1.bf16.msra.mxu0 %v1417
      %1520 = vmatprep.subr.bf16.mxu0 0
      %1521 = vmatpush1.bf16.msra.mxu0 %v1418
      %1522 = vmatprep.subr.bf16.mxu0 0
      %1523 = vmatpush1.bf16.msra.mxu0 %v1419
      %1524 = vmatprep.mubr.bf16.mxu0 %v1255
      %1525 = vmatmul.mubr.bf16.gmra.mrb[0].mxu0 %v1254
      %v1526 = vpop.f32.mrb[0].mxu0
      %v1527 = vadd.f32 %v1487, %v1526
      %v1528 = vpop.f32.mrb[0].mxu0
      %v1529 = vpop.f32.mrb[0].mxu0
      %v1530 = vpop.f32.mrb[0].mxu0
      %1531 = vdwg.mxu0
      %v1532 = vadd.f32 %v1170, %v1527
      %v1533 = vld [vmem:[%s436] sm:$0xcc]
      %v1534 = vld [vmem:[%s436 + $0x8] sm:$0xcc]
      %v1535 = vld [vmem:[%s436 + $0x10] sm:$0x11]
      %v1536 = vld [vmem:[%s436 + $0x18] sm:$0x11]
      %s1537 = scalar_lea.vmem %s1, 768
      %v1538 = vld [vmem:[%s1537] sm:$0xf]
      %v1539 = vld [vmem:[%s1537 + $0x4] sm:$0xf]
      %v1540 = vld [vmem:[%s1537 + $0x8] sm:$0xf]
      %v1541 = vld [vmem:[%s1537 + $0xc] sm:$0xf]
      %v1542 = vld [vmem:[%s1537 + $0x10] sm:$0xf]
      %v1543 = vld [vmem:[%s1537 + $0x14] sm:$0xf]
      %v1544 = vld [vmem:[%s1537 + $0x18] sm:$0xf]
      %v1545 = vld [vmem:[%s1537 + $0x1c] sm:$0xf]
      %v1546 = vld [vmem:[%s1537 + $0x20] sm:$0xf]
      %v1547 = vld [vmem:[%s1537 + $0x24] sm:$0xf]
      %v1548 = vld [vmem:[%s1537 + $0x28] sm:$0xf]
      %v1549 = vld [vmem:[%s1537 + $0x2c] sm:$0xf]
      %v1550 = vld [vmem:[%s1537 + $0x30] sm:$0xf]
      %v1551 = vld [vmem:[%s1537 + $0x34] sm:$0xf]
      %v1552 = vld [vmem:[%s1537 + $0x38] sm:$0xf]
      %v1553 = vld [vmem:[%s1537 + $0x3c] sm:$0xf]
      %v1554 = vld [vmem:[%s1537 + $0x40] sm:$0xf]
      %v1555 = vld [vmem:[%s1537 + $0x44] sm:$0xf]
      %v1556 = vld [vmem:[%s1537 + $0x48] sm:$0xf]
      %v1557 = vld [vmem:[%s1537 + $0x4c] sm:$0xf]
      %v1558 = vld [vmem:[%s1537 + $0x50] sm:$0xf]
      %v1559 = vld [vmem:[%s1537 + $0x54] sm:$0xf]
      %v1560 = vld [vmem:[%s1537 + $0x58] sm:$0xf]
      %v1561 = vld [vmem:[%s1537 + $0x5c] sm:$0xf]
      %v1562 = vld [vmem:[%s1537 + $0x60] sm:$0xf]
      %v1563 = vld [vmem:[%s1537 + $0x64] sm:$0xf]
      %v1564 = vld [vmem:[%s1537 + $0x68] sm:$0xf]
      %v1565 = vld [vmem:[%s1537 + $0x6c] sm:$0xf]
      %v1566 = vld [vmem:[%s1537 + $0x70] sm:$0xf]
      %v1567 = vld [vmem:[%s1537 + $0x74] sm:$0xf]
      %v1568 = vld [vmem:[%s1537 + $0x78] sm:$0xf]
      %v1569 = vld [vmem:[%s1537 + $0x7c] sm:$0xf]
      %v1570 = vld [vmem:[%s1537 + $0x80] sm:$0xf]
      %v1571 = vld [vmem:[%s1537 + $0x84] sm:$0xf]
      %v1572 = vld [vmem:[%s1537 + $0x88] sm:$0xf]
      %v1573 = vld [vmem:[%s1537 + $0x8c] sm:$0xf]
      %v1574 = vld [vmem:[%s1537 + $0x90] sm:$0xf]
      %v1575 = vld [vmem:[%s1537 + $0x94] sm:$0xf]
      %v1576 = vld [vmem:[%s1537 + $0x98] sm:$0xf]
      %v1577 = vld [vmem:[%s1537 + $0x9c] sm:$0xf]
      %v1578 = vld [vmem:[%s1537 + $0xa0] sm:$0xf]
      %v1579 = vld [vmem:[%s1537 + $0xa4] sm:$0xf]
      %v1580 = vld [vmem:[%s1537 + $0xa8] sm:$0xf]
      %v1581 = vld [vmem:[%s1537 + $0xac] sm:$0xf]
      %v1582 = vld [vmem:[%s1537 + $0xb0] sm:$0xf]
      %v1583 = vld [vmem:[%s1537 + $0xb4] sm:$0xf]
      %v1584 = vld [vmem:[%s1537 + $0xb8] sm:$0xf]
      %v1585 = vld [vmem:[%s1537 + $0xbc] sm:$0xf]
      %v1586 = vld [vmem:[%s1537 + $0xc0] sm:$0xf]
      %v1587 = vld [vmem:[%s1537 + $0xc4] sm:$0xf]
      %v1588 = vld [vmem:[%s1537 + $0xc8] sm:$0xf]
      %v1589 = vld [vmem:[%s1537 + $0xcc] sm:$0xf]
      %v1590 = vld [vmem:[%s1537 + $0xd0] sm:$0xf]
      %v1591 = vld [vmem:[%s1537 + $0xd4] sm:$0xf]
      %v1592 = vld [vmem:[%s1537 + $0xd8] sm:$0xf]
      %v1593 = vld [vmem:[%s1537 + $0xdc] sm:$0xf]
      %v1594 = vld [vmem:[%s1537 + $0xe0] sm:$0xf]
      %v1595 = vld [vmem:[%s1537 + $0xe4] sm:$0xf]
      %v1596 = vld [vmem:[%s1537 + $0xe8] sm:$0xf]
      %v1597 = vld [vmem:[%s1537 + $0xec] sm:$0xf]
      %v1598 = vld [vmem:[%s1537 + $0xf0] sm:$0xf]
      %v1599 = vld [vmem:[%s1537 + $0xf4] sm:$0xf]
      %v1600 = vld [vmem:[%s1537 + $0xf8] sm:$0xf]
      %v1601 = vld [vmem:[%s1537 + $0xfc] sm:$0xf]
      %v1606 = vunpack.c.l.b16 %v1533
      %v1607 = vunpack.c.h.b16 %v1533
      %v1608 = vunpack.c.l.b16 %v1534
      %v1609 = vunpack.c.h.b16 %v1534
      %v1610 = vunpack.c.l.b16 %v1535
      %v1611 = vunpack.c.h.b16 %v1535
      %v1612 = vunpack.c.l.b16 %v1536
      %v1613 = vunpack.c.h.b16 %v1536
      %v1614 = vpack.c.b16 %v1610, %v1606
      %v1615 = vpack.c.b16 %v1611, %v1607
      %v1616 = vpack.c.b16 %v1612, %v1608
      %v1617 = vpack.c.b16 %v1613, %v1609
      %v1618 = vrot.slane %v1614, 2
      %v1619 = vrot.slane %v1615, 2
      %v1620 = vrot.slane %v1616, 2
      %v1621 = vrot.slane %v1617, 2
      %v1690 = vunpack.c.l.b16 %v1538
      %v1691 = vunpack.c.l.b16 %v1539
      %v1692 = vunpack.c.l.b16 %v1540
      %v1693 = vunpack.c.l.b16 %v1541
      %v1694 = vunpack.c.l.b16 %v1542
      %v1695 = vunpack.c.l.b16 %v1543
      %v1696 = vunpack.c.l.b16 %v1544
      %v1697 = vunpack.c.l.b16 %v1545
      %v1698 = vunpack.c.l.b16 %v1546
      %v1699 = vunpack.c.l.b16 %v1547
      %v1700 = vunpack.c.l.b16 %v1548
      %v1701 = vunpack.c.l.b16 %v1549
      %v1702 = vunpack.c.l.b16 %v1550
      %v1703 = vunpack.c.l.b16 %v1551
      %v1704 = vunpack.c.l.b16 %v1552
      %v1705 = vunpack.c.l.b16 %v1553
      %v1706 = vunpack.c.l.b16 %v1554
      %v1707 = vunpack.c.l.b16 %v1555
      %v1708 = vunpack.c.l.b16 %v1556
      %v1709 = vunpack.c.l.b16 %v1557
      %v1710 = vunpack.c.l.b16 %v1558
      %v1711 = vunpack.c.l.b16 %v1559
      %v1712 = vunpack.c.l.b16 %v1560
      %v1713 = vunpack.c.l.b16 %v1561
      %v1714 = vunpack.c.l.b16 %v1562
      %v1715 = vunpack.c.l.b16 %v1563
      %v1716 = vunpack.c.l.b16 %v1564
      %v1717 = vunpack.c.l.b16 %v1565
      %v1718 = vunpack.c.l.b16 %v1566
      %v1719 = vunpack.c.l.b16 %v1567
      %v1720 = vunpack.c.l.b16 %v1568
      %v1721 = vunpack.c.l.b16 %v1569
      %v1722 = vunpack.c.l.b16 %v1570
      %v1723 = vunpack.c.l.b16 %v1571
      %v1724 = vunpack.c.l.b16 %v1572
      %v1725 = vunpack.c.l.b16 %v1573
      %v1726 = vunpack.c.l.b16 %v1574
      %v1727 = vunpack.c.l.b16 %v1575
      %v1728 = vunpack.c.l.b16 %v1576
      %v1729 = vunpack.c.l.b16 %v1577
      %v1730 = vunpack.c.l.b16 %v1578
      %v1731 = vunpack.c.l.b16 %v1579
      %v1732 = vunpack.c.l.b16 %v1580
      %v1733 = vunpack.c.l.b16 %v1581
      %v1734 = vunpack.c.l.b16 %v1582
      %v1735 = vunpack.c.l.b16 %v1583
      %v1736 = vunpack.c.l.b16 %v1584
      %v1737 = vunpack.c.l.b16 %v1585
      %v1738 = vunpack.c.l.b16 %v1586
      %v1739 = vunpack.c.l.b16 %v1587
      %v1740 = vunpack.c.l.b16 %v1588
      %v1741 = vunpack.c.l.b16 %v1589
      %v1742 = vunpack.c.l.b16 %v1590
      %v1743 = vunpack.c.l.b16 %v1591
      %v1744 = vunpack.c.l.b16 %v1592
      %v1745 = vunpack.c.l.b16 %v1593
      %v1746 = vunpack.c.l.b16 %v1594
      %v1747 = vunpack.c.l.b16 %v1595
      %v1748 = vunpack.c.l.b16 %v1596
      %v1749 = vunpack.c.l.b16 %v1597
      %v1750 = vunpack.c.l.b16 %v1598
      %v1751 = vunpack.c.l.b16 %v1599
      %v1752 = vunpack.c.l.b16 %v1600
      %v1753 = vunpack.c.l.b16 %v1601
      %v1754 = vpack.c.b16 %v1691, %v1690
      %v1755 = vpack.c.b16 %v1693, %v1692
      %v1756 = vpack.c.b16 %v1695, %v1694
      %v1757 = vpack.c.b16 %v1697, %v1696
      %v1758 = vpack.c.b16 %v1699, %v1698
      %v1759 = vpack.c.b16 %v1701, %v1700
      %v1760 = vpack.c.b16 %v1703, %v1702
      %v1761 = vpack.c.b16 %v1705, %v1704
      %v1762 = vpack.c.b16 %v1707, %v1706
      %v1763 = vpack.c.b16 %v1709, %v1708
      %v1764 = vpack.c.b16 %v1711, %v1710
      %v1765 = vpack.c.b16 %v1713, %v1712
      %v1766 = vpack.c.b16 %v1715, %v1714
      %v1767 = vpack.c.b16 %v1717, %v1716
      %v1768 = vpack.c.b16 %v1719, %v1718
      %v1769 = vpack.c.b16 %v1721, %v1720
      %v1770 = vpack.c.b16 %v1723, %v1722
      %v1771 = vpack.c.b16 %v1725, %v1724
      %v1772 = vpack.c.b16 %v1727, %v1726
      %v1773 = vpack.c.b16 %v1729, %v1728
      %v1774 = vpack.c.b16 %v1731, %v1730
      %v1775 = vpack.c.b16 %v1733, %v1732
      %v1776 = vpack.c.b16 %v1735, %v1734
      %v1777 = vpack.c.b16 %v1737, %v1736
      %v1778 = vpack.c.b16 %v1739, %v1738
      %v1779 = vpack.c.b16 %v1741, %v1740
      %v1780 = vpack.c.b16 %v1743, %v1742
      %v1781 = vpack.c.b16 %v1745, %v1744
      %v1782 = vpack.c.b16 %v1747, %v1746
      %v1783 = vpack.c.b16 %v1749, %v1748
      %v1784 = vpack.c.b16 %v1751, %v1750
      %v1785 = vpack.c.b16 %v1753, %v1752
      %1818 = vmatprep.subr.bf16.mxu0 0
      %1819 = vmatpush1.bf16.msra.mxu0 %v1754
      %1820 = vmatprep.subr.bf16.mxu0 0
      %1821 = vmatpush1.bf16.msra.mxu0 %v1755
      %1822 = vmatprep.subr.bf16.mxu0 0
      %1823 = vmatpush1.bf16.msra.mxu0 %v1756
      %1824 = vmatprep.subr.bf16.mxu0 0
      %1825 = vmatpush1.bf16.msra.mxu0 %v1757
      %1826 = vmatprep.subr.bf16.mxu0 0
      %1827 = vmatpush1.bf16.msra.mxu0 %v1758
      %1828 = vmatprep.subr.bf16.mxu0 0
      %1829 = vmatpush1.bf16.msra.mxu0 %v1759
      %1830 = vmatprep.subr.bf16.mxu0 0
      %1831 = vmatpush1.bf16.msra.mxu0 %v1760
      %1832 = vmatprep.subr.bf16.mxu0 0
      %1833 = vmatpush1.bf16.msra.mxu0 %v1761
      %1834 = vmatprep.subr.bf16.mxu0 0
      %1835 = vmatpush1.bf16.msra.mxu0 %v1762
      %1836 = vmatprep.subr.bf16.mxu0 0
      %1837 = vmatpush1.bf16.msra.mxu0 %v1763
      %1838 = vmatprep.subr.bf16.mxu0 0
      %1839 = vmatpush1.bf16.msra.mxu0 %v1764
      %1840 = vmatprep.subr.bf16.mxu0 0
      %1841 = vmatpush1.bf16.msra.mxu0 %v1765
      %1842 = vmatprep.subr.bf16.mxu0 0
      %1843 = vmatpush1.bf16.msra.mxu0 %v1766
      %1844 = vmatprep.subr.bf16.mxu0 0
      %1845 = vmatpush1.bf16.msra.mxu0 %v1767
      %1846 = vmatprep.subr.bf16.mxu0 0
      %1847 = vmatpush1.bf16.msra.mxu0 %v1768
      %1848 = vmatprep.subr.bf16.mxu0 0
      %1849 = vmatpush1.bf16.msra.mxu0 %v1769
      %1850 = vmatprep.mubr.bf16.mxu0 %v1619
      %1851 = vmatmul.mubr.bf16.gmra.mrb[0].mxu0 %v1618
      %v1852 = vpop.f32.mrb[0].mxu0
      %v1853 = vadd.f32 0.0, %v1852
      %v1854 = vpop.f32.mrb[0].mxu0
      %v1855 = vpop.f32.mrb[0].mxu0
      %v1856 = vpop.f32.mrb[0].mxu0
      %1857 = vdwg.mxu0
      %1858 = vmatprep.subr.bf16.mxu0 0
      %1859 = vmatpush1.bf16.msra.mxu0 %v1770
      %1860 = vmatprep.subr.bf16.mxu0 0
      %1861 = vmatpush1.bf16.msra.mxu0 %v1771
      %1862 = vmatprep.subr.bf16.mxu0 0
      %1863 = vmatpush1.bf16.msra.mxu0 %v1772
      %1864 = vmatprep.subr.bf16.mxu0 0
      %1865 = vmatpush1.bf16.msra.mxu0 %v1773
      %1866 = vmatprep.subr.bf16.mxu0 0
      %1867 = vmatpush1.bf16.msra.mxu0 %v1774
      %1868 = vmatprep.subr.bf16.mxu0 0
      %1869 = vmatpush1.bf16.msra.mxu0 %v1775
      %1870 = vmatprep.subr.bf16.mxu0 0
      %1871 = vmatpush1.bf16.msra.mxu0 %v1776
      %1872 = vmatprep.subr.bf16.mxu0 0
      %1873 = vmatpush1.bf16.msra.mxu0 %v1777
      %1874 = vmatprep.subr.bf16.mxu0 0
      %1875 = vmatpush1.bf16.msra.mxu0 %v1778
      %1876 = vmatprep.subr.bf16.mxu0 0
      %1877 = vmatpush1.bf16.msra.mxu0 %v1779
      %1878 = vmatprep.subr.bf16.mxu0 0
      %1879 = vmatpush1.bf16.msra.mxu0 %v1780
      %1880 = vmatprep.subr.bf16.mxu0 0
      %1881 = vmatpush1.bf16.msra.mxu0 %v1781
      %1882 = vmatprep.subr.bf16.mxu0 0
      %1883 = vmatpush1.bf16.msra.mxu0 %v1782
      %1884 = vmatprep.subr.bf16.mxu0 0
      %1885 = vmatpush1.bf16.msra.mxu0 %v1783
      %1886 = vmatprep.subr.bf16.mxu0 0
      %1887 = vmatpush1.bf16.msra.mxu0 %v1784
      %1888 = vmatprep.subr.bf16.mxu0 0
      %1889 = vmatpush1.bf16.msra.mxu0 %v1785
      %1890 = vmatprep.mubr.bf16.mxu0 %v1621
      %1891 = vmatmul.mubr.bf16.gmra.mrb[0].mxu0 %v1620
      %v1892 = vpop.f32.mrb[0].mxu0
      %v1893 = vadd.f32 %v1853, %v1892
      %v1894 = vpop.f32.mrb[0].mxu0
      %v1895 = vpop.f32.mrb[0].mxu0
      %v1896 = vpop.f32.mrb[0].mxu0
      %1897 = vdwg.mxu0
      %v1898 = vadd.f32 %v1532, %v1893
      %v1899 = vld [vmem:[%s436 + $0x10] sm:$0x33]
      %v1900 = vld [vmem:[%s436 + $0x18] sm:$0x33]
      %s1901 = scalar_lea.vmem %s1, 1024
      %v1902 = vld [vmem:[%s1901] sm:$0xf]
      %v1903 = vld [vmem:[%s1901 + $0x4] sm:$0xf]
      %v1904 = vld [vmem:[%s1901 + $0x8] sm:$0xf]
      %v1905 = vld [vmem:[%s1901 + $0xc] sm:$0xf]
      %v1906 = vld [vmem:[%s1901 + $0x10] sm:$0xf]
      %v1907 = vld [vmem:[%s1901 + $0x14] sm:$0xf]
      %v1908 = vld [vmem:[%s1901 + $0x18] sm:$0xf]
      %v1909 = vld [vmem:[%s1901 + $0x1c] sm:$0xf]
      %v1910 = vld [vmem:[%s1901 + $0x20] sm:$0xf]
      %v1911 = vld [vmem:[%s1901 + $0x24] sm:$0xf]
      %v1912 = vld [vmem:[%s1901 + $0x28] sm:$0xf]
      %v1913 = vld [vmem:[%s1901 + $0x2c] sm:$0xf]
      %v1914 = vld [vmem:[%s1901 + $0x30] sm:$0xf]
      %v1915 = vld [vmem:[%s1901 + $0x34] sm:$0xf]
      %v1916 = vld [vmem:[%s1901 + $0x38] sm:$0xf]
      %v1917 = vld [vmem:[%s1901 + $0x3c] sm:$0xf]
      %v1918 = vld [vmem:[%s1901 + $0x40] sm:$0xf]
      %v1919 = vld [vmem:[%s1901 + $0x44] sm:$0xf]
      %v1920 = vld [vmem:[%s1901 + $0x48] sm:$0xf]
      %v1921 = vld [vmem:[%s1901 + $0x4c] sm:$0xf]
      %v1922 = vld [vmem:[%s1901 + $0x50] sm:$0xf]
      %v1923 = vld [vmem:[%s1901 + $0x54] sm:$0xf]
      %v1924 = vld [vmem:[%s1901 + $0x58] sm:$0xf]
      %v1925 = vld [vmem:[%s1901 + $0x5c] sm:$0xf]
      %v1926 = vld [vmem:[%s1901 + $0x60] sm:$0xf]
      %v1927 = vld [vmem:[%s1901 + $0x64] sm:$0xf]
      %v1928 = vld [vmem:[%s1901 + $0x68] sm:$0xf]
      %v1929 = vld [vmem:[%s1901 + $0x6c] sm:$0xf]
      %v1930 = vld [vmem:[%s1901 + $0x70] sm:$0xf]
      %v1931 = vld [vmem:[%s1901 + $0x74] sm:$0xf]
      %v1932 = vld [vmem:[%s1901 + $0x78] sm:$0xf]
      %v1933 = vld [vmem:[%s1901 + $0x7c] sm:$0xf]
      %v1934 = vld [vmem:[%s1901 + $0x80] sm:$0xf]
      %v1935 = vld [vmem:[%s1901 + $0x84] sm:$0xf]
      %v1936 = vld [vmem:[%s1901 + $0x88] sm:$0xf]
      %v1937 = vld [vmem:[%s1901 + $0x8c] sm:$0xf]
      %v1938 = vld [vmem:[%s1901 + $0x90] sm:$0xf]
      %v1939 = vld [vmem:[%s1901 + $0x94] sm:$0xf]
      %v1940 = vld [vmem:[%s1901 + $0x98] sm:$0xf]
      %v1941 = vld [vmem:[%s1901 + $0x9c] sm:$0xf]
      %v1942 = vld [vmem:[%s1901 + $0xa0] sm:$0xf]
      %v1943 = vld [vmem:[%s1901 + $0xa4] sm:$0xf]
      %v1944 = vld [vmem:[%s1901 + $0xa8] sm:$0xf]
      %v1945 = vld [vmem:[%s1901 + $0xac] sm:$0xf]
      %v1946 = vld [vmem:[%s1901 + $0xb0] sm:$0xf]
      %v1947 = vld [vmem:[%s1901 + $0xb4] sm:$0xf]
      %v1948 = vld [vmem:[%s1901 + $0xb8] sm:$0xf]
      %v1949 = vld [vmem:[%s1901 + $0xbc] sm:$0xf]
      %v1950 = vld [vmem:[%s1901 + $0xc0] sm:$0xf]
      %v1951 = vld [vmem:[%s1901 + $0xc4] sm:$0xf]
      %v1952 = vld [vmem:[%s1901 + $0xc8] sm:$0xf]
      %v1953 = vld [vmem:[%s1901 + $0xcc] sm:$0xf]
      %v1954 = vld [vmem:[%s1901 + $0xd0] sm:$0xf]
      %v1955 = vld [vmem:[%s1901 + $0xd4] sm:$0xf]
      %v1956 = vld [vmem:[%s1901 + $0xd8] sm:$0xf]
      %v1957 = vld [vmem:[%s1901 + $0xdc] sm:$0xf]
      %v1958 = vld [vmem:[%s1901 + $0xe0] sm:$0xf]
      %v1959 = vld [vmem:[%s1901 + $0xe4] sm:$0xf]
      %v1960 = vld [vmem:[%s1901 + $0xe8] sm:$0xf]
      %v1961 = vld [vmem:[%s1901 + $0xec] sm:$0xf]
      %v1962 = vld [vmem:[%s1901 + $0xf0] sm:$0xf]
      %v1963 = vld [vmem:[%s1901 + $0xf4] sm:$0xf]
      %v1964 = vld [vmem:[%s1901 + $0xf8] sm:$0xf]
      %v1965 = vld [vmem:[%s1901 + $0xfc] sm:$0xf]
      %v1968 = vunpack.c.l.b16 %v1899
      %v1969 = vunpack.c.h.b16 %v1899
      %v1970 = vunpack.c.l.b16 %v1900
      %v1971 = vunpack.c.h.b16 %v1900
      %v1972 = vpack.c.b16 %v1968, %v1606
      %v1973 = vpack.c.b16 %v1969, %v1607
      %v1974 = vpack.c.b16 %v1970, %v1608
      %v1975 = vpack.c.b16 %v1971, %v1609
      %v1977 = vshrl.u32 %v1972, 16
      %v1979 = vrot.slane %v1977, 2
      %v1980 = vshll.u32 %v1972, 16
      %v1982 = vrot.slane %v1980, 3
      %v1983 = vor.u32 %v1979, %v1982
      %v1985 = vshrl.u32 %v1973, 16
      %v1987 = vrot.slane %v1985, 2
      %v1988 = vshll.u32 %v1973, 16
      %v1990 = vrot.slane %v1988, 3
      %v1991 = vor.u32 %v1987, %v1990
      %v1993 = vshrl.u32 %v1974, 16
      %v1995 = vrot.slane %v1993, 2
      %v1996 = vshll.u32 %v1974, 16
      %v1998 = vrot.slane %v1996, 3
      %v1999 = vor.u32 %v1995, %v1998
      %v2001 = vshrl.u32 %v1975, 16
      %v2003 = vrot.slane %v2001, 2
      %v2004 = vshll.u32 %v1975, 16
      %v2006 = vrot.slane %v2004, 3
      %v2007 = vor.u32 %v2003, %v2006
      %v2076 = vunpack.c.l.b16 %v1902
      %v2077 = vunpack.c.l.b16 %v1903
      %v2078 = vunpack.c.l.b16 %v1904
      %v2079 = vunpack.c.l.b16 %v1905
      %v2080 = vunpack.c.l.b16 %v1906
      %v2081 = vunpack.c.l.b16 %v1907
      %v2082 = vunpack.c.l.b16 %v1908
      %v2083 = vunpack.c.l.b16 %v1909
      %v2084 = vunpack.c.l.b16 %v1910
      %v2085 = vunpack.c.l.b16 %v1911
      %v2086 = vunpack.c.l.b16 %v1912
      %v2087 = vunpack.c.l.b16 %v1913
      %v2088 = vunpack.c.l.b16 %v1914
      %v2089 = vunpack.c.l.b16 %v1915
      %v2090 = vunpack.c.l.b16 %v1916
      %v2091 = vunpack.c.l.b16 %v1917
      %v2092 = vunpack.c.l.b16 %v1918
      %v2093 = vunpack.c.l.b16 %v1919
      %v2094 = vunpack.c.l.b16 %v1920
      %v2095 = vunpack.c.l.b16 %v1921
      %v2096 = vunpack.c.l.b16 %v1922
      %v2097 = vunpack.c.l.b16 %v1923
      %v2098 = vunpack.c.l.b16 %v1924
      %v2099 = vunpack.c.l.b16 %v1925
      %v2100 = vunpack.c.l.b16 %v1926
      %v2101 = vunpack.c.l.b16 %v1927
      %v2102 = vunpack.c.l.b16 %v1928
      %v2103 = vunpack.c.l.b16 %v1929
      %v2104 = vunpack.c.l.b16 %v1930
      %v2105 = vunpack.c.l.b16 %v1931
      %v2106 = vunpack.c.l.b16 %v1932
      %v2107 = vunpack.c.l.b16 %v1933
      %v2108 = vunpack.c.l.b16 %v1934
      %v2109 = vunpack.c.l.b16 %v1935
      %v2110 = vunpack.c.l.b16 %v1936
      %v2111 = vunpack.c.l.b16 %v1937
      %v2112 = vunpack.c.l.b16 %v1938
      %v2113 = vunpack.c.l.b16 %v1939
      %v2114 = vunpack.c.l.b16 %v1940
      %v2115 = vunpack.c.l.b16 %v1941
      %v2116 = vunpack.c.l.b16 %v1942
      %v2117 = vunpack.c.l.b16 %v1943
      %v2118 = vunpack.c.l.b16 %v1944
      %v2119 = vunpack.c.l.b16 %v1945
      %v2120 = vunpack.c.l.b16 %v1946
      %v2121 = vunpack.c.l.b16 %v1947
      %v2122 = vunpack.c.l.b16 %v1948
      %v2123 = vunpack.c.l.b16 %v1949
      %v2124 = vunpack.c.l.b16 %v1950
      %v2125 = vunpack.c.l.b16 %v1951
      %v2126 = vunpack.c.l.b16 %v1952
      %v2127 = vunpack.c.l.b16 %v1953
      %v2128 = vunpack.c.l.b16 %v1954
      %v2129 = vunpack.c.l.b16 %v1955
      %v2130 = vunpack.c.l.b16 %v1956
      %v2131 = vunpack.c.l.b16 %v1957
      %v2132 = vunpack.c.l.b16 %v1958
      %v2133 = vunpack.c.l.b16 %v1959
      %v2134 = vunpack.c.l.b16 %v1960
      %v2135 = vunpack.c.l.b16 %v1961
      %v2136 = vunpack.c.l.b16 %v1962
      %v2137 = vunpack.c.l.b16 %v1963
      %v2138 = vunpack.c.l.b16 %v1964
      %v2139 = vunpack.c.l.b16 %v1965
      %v2140 = vpack.c.b16 %v2077, %v2076
      %v2141 = vpack.c.b16 %v2079, %v2078
      %v2142 = vpack.c.b16 %v2081, %v2080
      %v2143 = vpack.c.b16 %v2083, %v2082
      %v2144 = vpack.c.b16 %v2085, %v2084
      %v2145 = vpack.c.b16 %v2087, %v2086
      %v2146 = vpack.c.b16 %v2089, %v2088
      %v2147 = vpack.c.b16 %v2091, %v2090
      %v2148 = vpack.c.b16 %v2093, %v2092
      %v2149 = vpack.c.b16 %v2095, %v2094
      %v2150 = vpack.c.b16 %v2097, %v2096
      %v2151 = vpack.c.b16 %v2099, %v2098
      %v2152 = vpack.c.b16 %v2101, %v2100
      %v2153 = vpack.c.b16 %v2103, %v2102
      %v2154 = vpack.c.b16 %v2105, %v2104
      %v2155 = vpack.c.b16 %v2107, %v2106
      %v2156 = vpack.c.b16 %v2109, %v2108
      %v2157 = vpack.c.b16 %v2111, %v2110
      %v2158 = vpack.c.b16 %v2113, %v2112
      %v2159 = vpack.c.b16 %v2115, %v2114
      %v2160 = vpack.c.b16 %v2117, %v2116
      %v2161 = vpack.c.b16 %v2119, %v2118
      %v2162 = vpack.c.b16 %v2121, %v2120
      %v2163 = vpack.c.b16 %v2123, %v2122
      %v2164 = vpack.c.b16 %v2125, %v2124
      %v2165 = vpack.c.b16 %v2127, %v2126
      %v2166 = vpack.c.b16 %v2129, %v2128
      %v2167 = vpack.c.b16 %v2131, %v2130
      %v2168 = vpack.c.b16 %v2133, %v2132
      %v2169 = vpack.c.b16 %v2135, %v2134
      %v2170 = vpack.c.b16 %v2137, %v2136
      %v2171 = vpack.c.b16 %v2139, %v2138
      %2204 = vmatprep.subr.bf16.mxu0 0
      %2205 = vmatpush1.bf16.msra.mxu0 %v2140
      %2206 = vmatprep.subr.bf16.mxu0 0
      %2207 = vmatpush1.bf16.msra.mxu0 %v2141
      %2208 = vmatprep.subr.bf16.mxu0 0
      %2209 = vmatpush1.bf16.msra.mxu0 %v2142
      %2210 = vmatprep.subr.bf16.mxu0 0
      %2211 = vmatpush1.bf16.msra.mxu0 %v2143
      %2212 = vmatprep.subr.bf16.mxu0 0
      %2213 = vmatpush1.bf16.msra.mxu0 %v2144
      %2214 = vmatprep.subr.bf16.mxu0 0
      %2215 = vmatpush1.bf16.msra.mxu0 %v2145
      %2216 = vmatprep.subr.bf16.mxu0 0
      %2217 = vmatpush1.bf16.msra.mxu0 %v2146
      %2218 = vmatprep.subr.bf16.mxu0 0
      %2219 = vmatpush1.bf16.msra.mxu0 %v2147
      %2220 = vmatprep.subr.bf16.mxu0 0
      %2221 = vmatpush1.bf16.msra.mxu0 %v2148
      %2222 = vmatprep.subr.bf16.mxu0 0
      %2223 = vmatpush1.bf16.msra.mxu0 %v2149
      %2224 = vmatprep.subr.bf16.mxu0 0
      %2225 = vmatpush1.bf16.msra.mxu0 %v2150
      %2226 = vmatprep.subr.bf16.mxu0 0
      %2227 = vmatpush1.bf16.msra.mxu0 %v2151
      %2228 = vmatprep.subr.bf16.mxu0 0
      %2229 = vmatpush1.bf16.msra.mxu0 %v2152
      %2230 = vmatprep.subr.bf16.mxu0 0
      %2231 = vmatpush1.bf16.msra.mxu0 %v2153
      %2232 = vmatprep.subr.bf16.mxu0 0
      %2233 = vmatpush1.bf16.msra.mxu0 %v2154
      %2234 = vmatprep.subr.bf16.mxu0 0
      %2235 = vmatpush1.bf16.msra.mxu0 %v2155
      %2236 = vmatprep.mubr.bf16.mxu0 %v1991
      %2237 = vmatmul.mubr.bf16.gmra.mrb[0].mxu0 %v1983
      %v2238 = vpop.f32.mrb[0].mxu0
      %v2239 = vadd.f32 0.0, %v2238
      %v2240 = vpop.f32.mrb[0].mxu0
      %v2241 = vpop.f32.mrb[0].mxu0
      %v2242 = vpop.f32.mrb[0].mxu0
      %2243 = vdwg.mxu0
      %2244 = vmatprep.subr.bf16.mxu0 0
      %2245 = vmatpush1.bf16.msra.mxu0 %v2156
      %2246 = vmatprep.subr.bf16.mxu0 0
      %2247 = vmatpush1.bf16.msra.mxu0 %v2157
      %2248 = vmatprep.subr.bf16.mxu0 0
      %2249 = vmatpush1.bf16.msra.mxu0 %v2158
      %2250 = vmatprep.subr.bf16.mxu0 0
      %2251 = vmatpush1.bf16.msra.mxu0 %v2159
      %2252 = vmatprep.subr.bf16.mxu0 0
      %2253 = vmatpush1.bf16.msra.mxu0 %v2160
      %2254 = vmatprep.subr.bf16.mxu0 0
      %2255 = vmatpush1.bf16.msra.mxu0 %v2161
      %2256 = vmatprep.subr.bf16.mxu0 0
      %2257 = vmatpush1.bf16.msra.mxu0 %v2162
      %2258 = vmatprep.subr.bf16.mxu0 0
      %2259 = vmatpush1.bf16.msra.mxu0 %v2163
      %2260 = vmatprep.subr.bf16.mxu0 0
      %2261 = vmatpush1.bf16.msra.mxu0 %v2164
      %2262 = vmatprep.subr.bf16.mxu0 0
      %2263 = vmatpush1.bf16.msra.mxu0 %v2165
      %2264 = vmatprep.subr.bf16.mxu0 0
      %2265 = vmatpush1.bf16.msra.mxu0 %v2166
      %2266 = vmatprep.subr.bf16.mxu0 0
      %2267 = vmatpush1.bf16.msra.mxu0 %v2167
      %2268 = vmatprep.subr.bf16.mxu0 0
      %2269 = vmatpush1.bf16.msra.mxu0 %v2168
      %2270 = vmatprep.subr.bf16.mxu0 0
      %2271 = vmatpush1.bf16.msra.mxu0 %v2169
      %2272 = vmatprep.subr.bf16.mxu0 0
      %2273 = vmatpush1.bf16.msra.mxu0 %v2170
      %2274 = vmatprep.subr.bf16.mxu0 0
      %2275 = vmatpush1.bf16.msra.mxu0 %v2171
      %2276 = vmatprep.mubr.bf16.mxu0 %v2007
      %2277 = vmatmul.mubr.bf16.gmra.mrb[0].mxu0 %v1999
      %v2278 = vpop.f32.mrb[0].mxu0
      %v2279 = vadd.f32 %v2239, %v2278
      %v2280 = vpop.f32.mrb[0].mxu0
      %v2281 = vpop.f32.mrb[0].mxu0
      %v2282 = vpop.f32.mrb[0].mxu0
      %2283 = vdwg.mxu0
      %v2284 = vadd.f32 %v1898, %v2279
      %v2285 = vld [vmem:[%s436] sm:$0x88]
      %v2286 = vld [vmem:[%s436 + $0x8] sm:$0x88]
      %s2287 = scalar_lea.vmem %s1, 1280
      %v2288 = vld [vmem:[%s2287] sm:$0xf]
      %v2289 = vld [vmem:[%s2287 + $0x4] sm:$0xf]
      %v2290 = vld [vmem:[%s2287 + $0x8] sm:$0xf]
      %v2291 = vld [vmem:[%s2287 + $0xc] sm:$0xf]
      %v2292 = vld [vmem:[%s2287 + $0x10] sm:$0xf]
      %v2293 = vld [vmem:[%s2287 + $0x14] sm:$0xf]
      %v2294 = vld [vmem:[%s2287 + $0x18] sm:$0xf]
      %v2295 = vld [vmem:[%s2287 + $0x1c] sm:$0xf]
      %v2296 = vld [vmem:[%s2287 + $0x20] sm:$0xf]
      %v2297 = vld [vmem:[%s2287 + $0x24] sm:$0xf]
      %v2298 = vld [vmem:[%s2287 + $0x28] sm:$0xf]
      %v2299 = vld [vmem:[%s2287 + $0x2c] sm:$0xf]
      %v2300 = vld [vmem:[%s2287 + $0x30] sm:$0xf]
      %v2301 = vld [vmem:[%s2287 + $0x34] sm:$0xf]
      %v2302 = vld [vmem:[%s2287 + $0x38] sm:$0xf]
      %v2303 = vld [vmem:[%s2287 + $0x3c] sm:$0xf]
      %v2304 = vld [vmem:[%s2287 + $0x40] sm:$0xf]
      %v2305 = vld [vmem:[%s2287 + $0x44] sm:$0xf]
      %v2306 = vld [vmem:[%s2287 + $0x48] sm:$0xf]
      %v2307 = vld [vmem:[%s2287 + $0x4c] sm:$0xf]
      %v2308 = vld [vmem:[%s2287 + $0x50] sm:$0xf]
      %v2309 = vld [vmem:[%s2287 + $0x54] sm:$0xf]
      %v2310 = vld [vmem:[%s2287 + $0x58] sm:$0xf]
      %v2311 = vld [vmem:[%s2287 + $0x5c] sm:$0xf]
      %v2312 = vld [vmem:[%s2287 + $0x60] sm:$0xf]
      %v2313 = vld [vmem:[%s2287 + $0x64] sm:$0xf]
      %v2314 = vld [vmem:[%s2287 + $0x68] sm:$0xf]
      %v2315 = vld [vmem:[%s2287 + $0x6c] sm:$0xf]
      %v2316 = vld [vmem:[%s2287 + $0x70] sm:$0xf]
      %v2317 = vld [vmem:[%s2287 + $0x74] sm:$0xf]
      %v2318 = vld [vmem:[%s2287 + $0x78] sm:$0xf]
      %v2319 = vld [vmem:[%s2287 + $0x7c] sm:$0xf]
      %v2320 = vld [vmem:[%s2287 + $0x80] sm:$0xf]
      %v2321 = vld [vmem:[%s2287 + $0x84] sm:$0xf]
      %v2322 = vld [vmem:[%s2287 + $0x88] sm:$0xf]
      %v2323 = vld [vmem:[%s2287 + $0x8c] sm:$0xf]
      %v2324 = vld [vmem:[%s2287 + $0x90] sm:$0xf]
      %v2325 = vld [vmem:[%s2287 + $0x94] sm:$0xf]
      %v2326 = vld [vmem:[%s2287 + $0x98] sm:$0xf]
      %v2327 = vld [vmem:[%s2287 + $0x9c] sm:$0xf]
      %v2328 = vld [vmem:[%s2287 + $0xa0] sm:$0xf]
      %v2329 = vld [vmem:[%s2287 + $0xa4] sm:$0xf]
      %v2330 = vld [vmem:[%s2287 + $0xa8] sm:$0xf]
      %v2331 = vld [vmem:[%s2287 + $0xac] sm:$0xf]
      %v2332 = vld [vmem:[%s2287 + $0xb0] sm:$0xf]
      %v2333 = vld [vmem:[%s2287 + $0xb4] sm:$0xf]
      %v2334 = vld [vmem:[%s2287 + $0xb8] sm:$0xf]
      %v2335 = vld [vmem:[%s2287 + $0xbc] sm:$0xf]
      %v2336 = vld [vmem:[%s2287 + $0xc0] sm:$0xf]
      %v2337 = vld [vmem:[%s2287 + $0xc4] sm:$0xf]
      %v2338 = vld [vmem:[%s2287 + $0xc8] sm:$0xf]
      %v2339 = vld [vmem:[%s2287 + $0xcc] sm:$0xf]
      %v2340 = vld [vmem:[%s2287 + $0xd0] sm:$0xf]
      %v2341 = vld [vmem:[%s2287 + $0xd4] sm:$0xf]
      %v2342 = vld [vmem:[%s2287 + $0xd8] sm:$0xf]
      %v2343 = vld [vmem:[%s2287 + $0xdc] sm:$0xf]
      %v2344 = vld [vmem:[%s2287 + $0xe0] sm:$0xf]
      %v2345 = vld [vmem:[%s2287 + $0xe4] sm:$0xf]
      %v2346 = vld [vmem:[%s2287 + $0xe8] sm:$0xf]
      %v2347 = vld [vmem:[%s2287 + $0xec] sm:$0xf]
      %v2348 = vld [vmem:[%s2287 + $0xf0] sm:$0xf]
      %v2349 = vld [vmem:[%s2287 + $0xf4] sm:$0xf]
      %v2350 = vld [vmem:[%s2287 + $0xf8] sm:$0xf]
      %v2351 = vld [vmem:[%s2287 + $0xfc] sm:$0xf]
      %v2354 = vunpack.c.l.b16 %v2285
      %v2355 = vunpack.c.h.b16 %v2285
      %v2356 = vunpack.c.l.b16 %v2286
      %v2357 = vunpack.c.h.b16 %v2286
      %v2358 = vpack.c.b16 %v1968, %v2354
      %v2359 = vpack.c.b16 %v1969, %v2355
      %v2360 = vpack.c.b16 %v1970, %v2356
      %v2361 = vpack.c.b16 %v1971, %v2357
      %v2362 = vrot.slane %v2358, 3
      %v2363 = vrot.slane %v2359, 3
      %v2364 = vrot.slane %v2360, 3
      %v2365 = vrot.slane %v2361, 3
      %v2434 = vunpack.c.l.b16 %v2288
      %v2435 = vunpack.c.l.b16 %v2289
      %v2436 = vunpack.c.l.b16 %v2290
      %v2437 = vunpack.c.l.b16 %v2291
      %v2438 = vunpack.c.l.b16 %v2292
      %v2439 = vunpack.c.l.b16 %v2293
      %v2440 = vunpack.c.l.b16 %v2294
      %v2441 = vunpack.c.l.b16 %v2295
      %v2442 = vunpack.c.l.b16 %v2296
      %v2443 = vunpack.c.l.b16 %v2297
      %v2444 = vunpack.c.l.b16 %v2298
      %v2445 = vunpack.c.l.b16 %v2299
      %v2446 = vunpack.c.l.b16 %v2300
      %v2447 = vunpack.c.l.b16 %v2301
      %v2448 = vunpack.c.l.b16 %v2302
      %v2449 = vunpack.c.l.b16 %v2303
      %v2450 = vunpack.c.l.b16 %v2304
      %v2451 = vunpack.c.l.b16 %v2305
      %v2452 = vunpack.c.l.b16 %v2306
      %v2453 = vunpack.c.l.b16 %v2307
      %v2454 = vunpack.c.l.b16 %v2308
      %v2455 = vunpack.c.l.b16 %v2309
      %v2456 = vunpack.c.l.b16 %v2310
      %v2457 = vunpack.c.l.b16 %v2311
      %v2458 = vunpack.c.l.b16 %v2312
      %v2459 = vunpack.c.l.b16 %v2313
      %v2460 = vunpack.c.l.b16 %v2314
      %v2461 = vunpack.c.l.b16 %v2315
      %v2462 = vunpack.c.l.b16 %v2316
      %v2463 = vunpack.c.l.b16 %v2317
      %v2464 = vunpack.c.l.b16 %v2318
      %v2465 = vunpack.c.l.b16 %v2319
      %v2466 = vunpack.c.l.b16 %v2320
      %v2467 = vunpack.c.l.b16 %v2321
      %v2468 = vunpack.c.l.b16 %v2322
      %v2469 = vunpack.c.l.b16 %v2323
      %v2470 = vunpack.c.l.b16 %v2324
      %v2471 = vunpack.c.l.b16 %v2325
      %v2472 = vunpack.c.l.b16 %v2326
      %v2473 = vunpack.c.l.b16 %v2327
      %v2474 = vunpack.c.l.b16 %v2328
      %v2475 = vunpack.c.l.b16 %v2329
      %v2476 = vunpack.c.l.b16 %v2330
      %v2477 = vunpack.c.l.b16 %v2331
      %v2478 = vunpack.c.l.b16 %v2332
      %v2479 = vunpack.c.l.b16 %v2333
      %v2480 = vunpack.c.l.b16 %v2334
      %v2481 = vunpack.c.l.b16 %v2335
      %v2482 = vunpack.c.l.b16 %v2336
      %v2483 = vunpack.c.l.b16 %v2337
      %v2484 = vunpack.c.l.b16 %v2338
      %v2485 = vunpack.c.l.b16 %v2339
      %v2486 = vunpack.c.l.b16 %v2340
      %v2487 = vunpack.c.l.b16 %v2341
      %v2488 = vunpack.c.l.b16 %v2342
      %v2489 = vunpack.c.l.b16 %v2343
      %v2490 = vunpack.c.l.b16 %v2344
      %v2491 = vunpack.c.l.b16 %v2345
      %v2492 = vunpack.c.l.b16 %v2346
      %v2493 = vunpack.c.l.b16 %v2347
      %v2494 = vunpack.c.l.b16 %v2348
      %v2495 = vunpack.c.l.b16 %v2349
      %v2496 = vunpack.c.l.b16 %v2350
      %v2497 = vunpack.c.l.b16 %v2351
      %v2498 = vpack.c.b16 %v2435, %v2434
      %v2499 = vpack.c.b16 %v2437, %v2436
      %v2500 = vpack.c.b16 %v2439, %v2438
      %v2501 = vpack.c.b16 %v2441, %v2440
      %v2502 = vpack.c.b16 %v2443, %v2442
      %v2503 = vpack.c.b16 %v2445, %v2444
      %v2504 = vpack.c.b16 %v2447, %v2446
      %v2505 = vpack.c.b16 %v2449, %v2448
      %v2506 = vpack.c.b16 %v2451, %v2450
      %v2507 = vpack.c.b16 %v2453, %v2452
      %v2508 = vpack.c.b16 %v2455, %v2454
      %v2509 = vpack.c.b16 %v2457, %v2456
      %v2510 = vpack.c.b16 %v2459, %v2458
      %v2511 = vpack.c.b16 %v2461, %v2460
      %v2512 = vpack.c.b16 %v2463, %v2462
      %v2513 = vpack.c.b16 %v2465, %v2464
      %v2514 = vpack.c.b16 %v2467, %v2466
      %v2515 = vpack.c.b16 %v2469, %v2468
      %v2516 = vpack.c.b16 %v2471, %v2470
      %v2517 = vpack.c.b16 %v2473, %v2472
      %v2518 = vpack.c.b16 %v2475, %v2474
      %v2519 = vpack.c.b16 %v2477, %v2476
      %v2520 = vpack.c.b16 %v2479, %v2478
      %v2521 = vpack.c.b16 %v2481, %v2480
      %v2522 = vpack.c.b16 %v2483, %v2482
      %v2523 = vpack.c.b16 %v2485, %v2484
      %v2524 = vpack.c.b16 %v2487, %v2486
      %v2525 = vpack.c.b16 %v2489, %v2488
      %v2526 = vpack.c.b16 %v2491, %v2490
      %v2527 = vpack.c.b16 %v2493, %v2492
      %v2528 = vpack.c.b16 %v2495, %v2494
      %v2529 = vpack.c.b16 %v2497, %v2496
      %2562 = vmatprep.subr.bf16.mxu0 0
      %2563 = vmatpush1.bf16.msra.mxu0 %v2498
      %2564 = vmatprep.subr.bf16.mxu0 0
      %2565 = vmatpush1.bf16.msra.mxu0 %v2499
      %2566 = vmatprep.subr.bf16.mxu0 0
      %2567 = vmatpush1.bf16.msra.mxu0 %v2500
      %2568 = vmatprep.subr.bf16.mxu0 0
      %2569 = vmatpush1.bf16.msra.mxu0 %v2501
      %2570 = vmatprep.subr.bf16.mxu0 0
      %2571 = vmatpush1.bf16.msra.mxu0 %v2502
      %2572 = vmatprep.subr.bf16.mxu0 0
      %2573 = vmatpush1.bf16.msra.mxu0 %v2503
      %2574 = vmatprep.subr.bf16.mxu0 0
      %2575 = vmatpush1.bf16.msra.mxu0 %v2504
      %2576 = vmatprep.subr.bf16.mxu0 0
      %2577 = vmatpush1.bf16.msra.mxu0 %v2505
      %2578 = vmatprep.subr.bf16.mxu0 0
      %2579 = vmatpush1.bf16.msra.mxu0 %v2506
      %2580 = vmatprep.subr.bf16.mxu0 0
      %2581 = vmatpush1.bf16.msra.mxu0 %v2507
      %2582 = vmatprep.subr.bf16.mxu0 0
      %2583 = vmatpush1.bf16.msra.mxu0 %v2508
      %2584 = vmatprep.subr.bf16.mxu0 0
      %2585 = vmatpush1.bf16.msra.mxu0 %v2509
      %2586 = vmatprep.subr.bf16.mxu0 0
      %2587 = vmatpush1.bf16.msra.mxu0 %v2510
      %2588 = vmatprep.subr.bf16.mxu0 0
      %2589 = vmatpush1.bf16.msra.mxu0 %v2511
      %2590 = vmatprep.subr.bf16.mxu0 0
      %2591 = vmatpush1.bf16.msra.mxu0 %v2512
      %2592 = vmatprep.subr.bf16.mxu0 0
      %2593 = vmatpush1.bf16.msra.mxu0 %v2513
      %2594 = vmatprep.mubr.bf16.mxu0 %v2363
      %2595 = vmatmul.mubr.bf16.gmra.mrb[0].mxu0 %v2362
      %v2596 = vpop.f32.mrb[0].mxu0
      %v2597 = vadd.f32 0.0, %v2596
      %v2598 = vpop.f32.mrb[0].mxu0
      %v2599 = vpop.f32.mrb[0].mxu0
      %v2600 = vpop.f32.mrb[0].mxu0
      %2601 = vdwg.mxu0
      %2602 = vmatprep.subr.bf16.mxu0 0
      %2603 = vmatpush1.bf16.msra.mxu0 %v2514
      %2604 = vmatprep.subr.bf16.mxu0 0
      %2605 = vmatpush1.bf16.msra.mxu0 %v2515
      %2606 = vmatprep.subr.bf16.mxu0 0
      %2607 = vmatpush1.bf16.msra.mxu0 %v2516
      %2608 = vmatprep.subr.bf16.mxu0 0
      %2609 = vmatpush1.bf16.msra.mxu0 %v2517
      %2610 = vmatprep.subr.bf16.mxu0 0
      %2611 = vmatpush1.bf16.msra.mxu0 %v2518
      %2612 = vmatprep.subr.bf16.mxu0 0
      %2613 = vmatpush1.bf16.msra.mxu0 %v2519
      %2614 = vmatprep.subr.bf16.mxu0 0
      %2615 = vmatpush1.bf16.msra.mxu0 %v2520
      %2616 = vmatprep.subr.bf16.mxu0 0
      %2617 = vmatpush1.bf16.msra.mxu0 %v2521
      %2618 = vmatprep.subr.bf16.mxu0 0
      %2619 = vmatpush1.bf16.msra.mxu0 %v2522
      %2620 = vmatprep.subr.bf16.mxu0 0
      %2621 = vmatpush1.bf16.msra.mxu0 %v2523
      %2622 = vmatprep.subr.bf16.mxu0 0
      %2623 = vmatpush1.bf16.msra.mxu0 %v2524
      %2624 = vmatprep.subr.bf16.mxu0 0
      %2625 = vmatpush1.bf16.msra.mxu0 %v2525
      %2626 = vmatprep.subr.bf16.mxu0 0
      %2627 = vmatpush1.bf16.msra.mxu0 %v2526
      %2628 = vmatprep.subr.bf16.mxu0 0
      %2629 = vmatpush1.bf16.msra.mxu0 %v2527
      %2630 = vmatprep.subr.bf16.mxu0 0
      %2631 = vmatpush1.bf16.msra.mxu0 %v2528
      %2632 = vmatprep.subr.bf16.mxu0 0
      %2633 = vmatpush1.bf16.msra.mxu0 %v2529
      %2634 = vmatprep.mubr.bf16.mxu0 %v2365
      %2635 = vmatmul.mubr.bf16.gmra.mrb[0].mxu0 %v2364
      %v2636 = vpop.f32.mrb[0].mxu0
      %v2637 = vadd.f32 %v2597, %v2636
      %v2638 = vpop.f32.mrb[0].mxu0
      %v2639 = vpop.f32.mrb[0].mxu0
      %v2640 = vpop.f32.mrb[0].mxu0
      %2641 = vdwg.mxu0
      %v2642 = vadd.f32 %v2284, %v2637
      %v2643 = vld [vmem:[%s436 + $0x10] sm:$0x77]
      %v2644 = vld [vmem:[%s436 + $0x18] sm:$0x77]
      %s2645 = scalar_lea.vmem %s1, 1536
      %v2646 = vld [vmem:[%s2645] sm:$0xf]
      %v2647 = vld [vmem:[%s2645 + $0x4] sm:$0xf]
      %v2648 = vld [vmem:[%s2645 + $0x8] sm:$0xf]
      %v2649 = vld [vmem:[%s2645 + $0xc] sm:$0xf]
      %v2650 = vld [vmem:[%s2645 + $0x10] sm:$0xf]
      %v2651 = vld [vmem:[%s2645 + $0x14] sm:$0xf]
      %v2652 = vld [vmem:[%s2645 + $0x18] sm:$0xf]
      %v2653 = vld [vmem:[%s2645 + $0x1c] sm:$0xf]
      %v2654 = vld [vmem:[%s2645 + $0x20] sm:$0xf]
      %v2655 = vld [vmem:[%s2645 + $0x24] sm:$0xf]
      %v2656 = vld [vmem:[%s2645 + $0x28] sm:$0xf]
      %v2657 = vld [vmem:[%s2645 + $0x2c] sm:$0xf]
      %v2658 = vld [vmem:[%s2645 + $0x30] sm:$0xf]
      %v2659 = vld [vmem:[%s2645 + $0x34] sm:$0xf]
      %v2660 = vld [vmem:[%s2645 + $0x38] sm:$0xf]
      %v2661 = vld [vmem:[%s2645 + $0x3c] sm:$0xf]
      %v2662 = vld [vmem:[%s2645 + $0x40] sm:$0xf]
      %v2663 = vld [vmem:[%s2645 + $0x44] sm:$0xf]
      %v2664 = vld [vmem:[%s2645 + $0x48] sm:$0xf]
      %v2665 = vld [vmem:[%s2645 + $0x4c] sm:$0xf]
      %v2666 = vld [vmem:[%s2645 + $0x50] sm:$0xf]
      %v2667 = vld [vmem:[%s2645 + $0x54] sm:$0xf]
      %v2668 = vld [vmem:[%s2645 + $0x58] sm:$0xf]
      %v2669 = vld [vmem:[%s2645 + $0x5c] sm:$0xf]
      %v2670 = vld [vmem:[%s2645 + $0x60] sm:$0xf]
      %v2671 = vld [vmem:[%s2645 + $0x64] sm:$0xf]
      %v2672 = vld [vmem:[%s2645 + $0x68] sm:$0xf]
      %v2673 = vld [vmem:[%s2645 + $0x6c] sm:$0xf]
      %v2674 = vld [vmem:[%s2645 + $0x70] sm:$0xf]
      %v2675 = vld [vmem:[%s2645 + $0x74] sm:$0xf]
      %v2676 = vld [vmem:[%s2645 + $0x78] sm:$0xf]
      %v2677 = vld [vmem:[%s2645 + $0x7c] sm:$0xf]
      %v2678 = vld [vmem:[%s2645 + $0x80] sm:$0xf]
      %v2679 = vld [vmem:[%s2645 + $0x84] sm:$0xf]
      %v2680 = vld [vmem:[%s2645 + $0x88] sm:$0xf]
      %v2681 = vld [vmem:[%s2645 + $0x8c] sm:$0xf]
      %v2682 = vld [vmem:[%s2645 + $0x90] sm:$0xf]
      %v2683 = vld [vmem:[%s2645 + $0x94] sm:$0xf]
      %v2684 = vld [vmem:[%s2645 + $0x98] sm:$0xf]
      %v2685 = vld [vmem:[%s2645 + $0x9c] sm:$0xf]
      %v2686 = vld [vmem:[%s2645 + $0xa0] sm:$0xf]
      %v2687 = vld [vmem:[%s2645 + $0xa4] sm:$0xf]
      %v2688 = vld [vmem:[%s2645 + $0xa8] sm:$0xf]
      %v2689 = vld [vmem:[%s2645 + $0xac] sm:$0xf]
      %v2690 = vld [vmem:[%s2645 + $0xb0] sm:$0xf]
      %v2691 = vld [vmem:[%s2645 + $0xb4] sm:$0xf]
      %v2692 = vld [vmem:[%s2645 + $0xb8] sm:$0xf]
      %v2693 = vld [vmem:[%s2645 + $0xbc] sm:$0xf]
      %v2694 = vld [vmem:[%s2645 + $0xc0] sm:$0xf]
      %v2695 = vld [vmem:[%s2645 + $0xc4] sm:$0xf]
      %v2696 = vld [vmem:[%s2645 + $0xc8] sm:$0xf]
      %v2697 = vld [vmem:[%s2645 + $0xcc] sm:$0xf]
      %v2698 = vld [vmem:[%s2645 + $0xd0] sm:$0xf]
      %v2699 = vld [vmem:[%s2645 + $0xd4] sm:$0xf]
      %v2700 = vld [vmem:[%s2645 + $0xd8] sm:$0xf]
      %v2701 = vld [vmem:[%s2645 + $0xdc] sm:$0xf]
      %v2702 = vld [vmem:[%s2645 + $0xe0] sm:$0xf]
      %v2703 = vld [vmem:[%s2645 + $0xe4] sm:$0xf]
      %v2704 = vld [vmem:[%s2645 + $0xe8] sm:$0xf]
      %v2705 = vld [vmem:[%s2645 + $0xec] sm:$0xf]
      %v2706 = vld [vmem:[%s2645 + $0xf0] sm:$0xf]
      %v2707 = vld [vmem:[%s2645 + $0xf4] sm:$0xf]
      %v2708 = vld [vmem:[%s2645 + $0xf8] sm:$0xf]
      %v2709 = vld [vmem:[%s2645 + $0xfc] sm:$0xf]
      %v2712 = vunpack.c.l.b16 %v2643
      %v2713 = vunpack.c.h.b16 %v2643
      %v2714 = vunpack.c.l.b16 %v2644
      %v2715 = vunpack.c.h.b16 %v2644
      %v2716 = vpack.c.b16 %v2712, %v2712
      %v2717 = vpack.c.b16 %v2713, %v2713
      %v2718 = vpack.c.b16 %v2714, %v2714
      %v2719 = vpack.c.b16 %v2715, %v2715
      %v2788 = vunpack.c.l.b16 %v2646
      %v2789 = vunpack.c.l.b16 %v2647
      %v2790 = vunpack.c.l.b16 %v2648
      %v2791 = vunpack.c.l.b16 %v2649
      %v2792 = vunpack.c.l.b16 %v2650
      %v2793 = vunpack.c.l.b16 %v2651
      %v2794 = vunpack.c.l.b16 %v2652
      %v2795 = vunpack.c.l.b16 %v2653
      %v2796 = vunpack.c.l.b16 %v2654
      %v2797 = vunpack.c.l.b16 %v2655
      %v2798 = vunpack.c.l.b16 %v2656
      %v2799 = vunpack.c.l.b16 %v2657
      %v2800 = vunpack.c.l.b16 %v2658
      %v2801 = vunpack.c.l.b16 %v2659
      %v2802 = vunpack.c.l.b16 %v2660
      %v2803 = vunpack.c.l.b16 %v2661
      %v2804 = vunpack.c.l.b16 %v2662
      %v2805 = vunpack.c.l.b16 %v2663
      %v2806 = vunpack.c.l.b16 %v2664
      %v2807 = vunpack.c.l.b16 %v2665
      %v2808 = vunpack.c.l.b16 %v2666
      %v2809 = vunpack.c.l.b16 %v2667
      %v2810 = vunpack.c.l.b16 %v2668
      %v2811 = vunpack.c.l.b16 %v2669
      %v2812 = vunpack.c.l.b16 %v2670
      %v2813 = vunpack.c.l.b16 %v2671
      %v2814 = vunpack.c.l.b16 %v2672
      %v2815 = vunpack.c.l.b16 %v2673
      %v2816 = vunpack.c.l.b16 %v2674
      %v2817 = vunpack.c.l.b16 %v2675
      %v2818 = vunpack.c.l.b16 %v2676
      %v2819 = vunpack.c.l.b16 %v2677
      %v2820 = vunpack.c.l.b16 %v2678
      %v2821 = vunpack.c.l.b16 %v2679
      %v2822 = vunpack.c.l.b16 %v2680
      %v2823 = vunpack.c.l.b16 %v2681
      %v2824 = vunpack.c.l.b16 %v2682
      %v2825 = vunpack.c.l.b16 %v2683
      %v2826 = vunpack.c.l.b16 %v2684
      %v2827 = vunpack.c.l.b16 %v2685
      %v2828 = vunpack.c.l.b16 %v2686
      %v2829 = vunpack.c.l.b16 %v2687
      %v2830 = vunpack.c.l.b16 %v2688
      %v2831 = vunpack.c.l.b16 %v2689
      %v2832 = vunpack.c.l.b16 %v2690
      %v2833 = vunpack.c.l.b16 %v2691
      %v2834 = vunpack.c.l.b16 %v2692
      %v2835 = vunpack.c.l.b16 %v2693
      %v2836 = vunpack.c.l.b16 %v2694
      %v2837 = vunpack.c.l.b16 %v2695
      %v2838 = vunpack.c.l.b16 %v2696
      %v2839 = vunpack.c.l.b16 %v2697
      %v2840 = vunpack.c.l.b16 %v2698
      %v2841 = vunpack.c.l.b16 %v2699
      %v2842 = vunpack.c.l.b16 %v2700
      %v2843 = vunpack.c.l.b16 %v2701
      %v2844 = vunpack.c.l.b16 %v2702
      %v2845 = vunpack.c.l.b16 %v2703
      %v2846 = vunpack.c.l.b16 %v2704
      %v2847 = vunpack.c.l.b16 %v2705
      %v2848 = vunpack.c.l.b16 %v2706
      %v2849 = vunpack.c.l.b16 %v2707
      %v2850 = vunpack.c.l.b16 %v2708
      %v2851 = vunpack.c.l.b16 %v2709
      %v2852 = vpack.c.b16 %v2789, %v2788
      %v2853 = vpack.c.b16 %v2791, %v2790
      %v2854 = vpack.c.b16 %v2793, %v2792
      %v2855 = vpack.c.b16 %v2795, %v2794
      %v2856 = vpack.c.b16 %v2797, %v2796
      %v2857 = vpack.c.b16 %v2799, %v2798
      %v2858 = vpack.c.b16 %v2801, %v2800
      %v2859 = vpack.c.b16 %v2803, %v2802
      %v2860 = vpack.c.b16 %v2805, %v2804
      %v2861 = vpack.c.b16 %v2807, %v2806
      %v2862 = vpack.c.b16 %v2809, %v2808
      %v2863 = vpack.c.b16 %v2811, %v2810
      %v2864 = vpack.c.b16 %v2813, %v2812
      %v2865 = vpack.c.b16 %v2815, %v2814
      %v2866 = vpack.c.b16 %v2817, %v2816
      %v2867 = vpack.c.b16 %v2819, %v2818
      %v2868 = vpack.c.b16 %v2821, %v2820
      %v2869 = vpack.c.b16 %v2823, %v2822
      %v2870 = vpack.c.b16 %v2825, %v2824
      %v2871 = vpack.c.b16 %v2827, %v2826
      %v2872 = vpack.c.b16 %v2829, %v2828
      %v2873 = vpack.c.b16 %v2831, %v2830
      %v2874 = vpack.c.b16 %v2833, %v2832
      %v2875 = vpack.c.b16 %v2835, %v2834
      %v2876 = vpack.c.b16 %v2837, %v2836
      %v2877 = vpack.c.b16 %v2839, %v2838
      %v2878 = vpack.c.b16 %v2841, %v2840
      %v2879 = vpack.c.b16 %v2843, %v2842
      %v2880 = vpack.c.b16 %v2845, %v2844
      %v2881 = vpack.c.b16 %v2847, %v2846
      %v2882 = vpack.c.b16 %v2849, %v2848
      %v2883 = vpack.c.b16 %v2851, %v2850
      %2916 = vmatprep.subr.bf16.mxu0 0
      %2917 = vmatpush1.bf16.msra.mxu0 %v2852
      %2918 = vmatprep.subr.bf16.mxu0 0
      %2919 = vmatpush1.bf16.msra.mxu0 %v2853
      %2920 = vmatprep.subr.bf16.mxu0 0
      %2921 = vmatpush1.bf16.msra.mxu0 %v2854
      %2922 = vmatprep.subr.bf16.mxu0 0
      %2923 = vmatpush1.bf16.msra.mxu0 %v2855
      %2924 = vmatprep.subr.bf16.mxu0 0
      %2925 = vmatpush1.bf16.msra.mxu0 %v2856
      %2926 = vmatprep.subr.bf16.mxu0 0
      %2927 = vmatpush1.bf16.msra.mxu0 %v2857
      %2928 = vmatprep.subr.bf16.mxu0 0
      %2929 = vmatpush1.bf16.msra.mxu0 %v2858
      %2930 = vmatprep.subr.bf16.mxu0 0
      %2931 = vmatpush1.bf16.msra.mxu0 %v2859
      %2932 = vmatprep.subr.bf16.mxu0 0
      %2933 = vmatpush1.bf16.msra.mxu0 %v2860
      %2934 = vmatprep.subr.bf16.mxu0 0
      %2935 = vmatpush1.bf16.msra.mxu0 %v2861
      %2936 = vmatprep.subr.bf16.mxu0 0
      %2937 = vmatpush1.bf16.msra.mxu0 %v2862
      %2938 = vmatprep.subr.bf16.mxu0 0
      %2939 = vmatpush1.bf16.msra.mxu0 %v2863
      %2940 = vmatprep.subr.bf16.mxu0 0
      %2941 = vmatpush1.bf16.msra.mxu0 %v2864
      %2942 = vmatprep.subr.bf16.mxu0 0
      %2943 = vmatpush1.bf16.msra.mxu0 %v2865
      %2944 = vmatprep.subr.bf16.mxu0 0
      %2945 = vmatpush1.bf16.msra.mxu0 %v2866
      %2946 = vmatprep.subr.bf16.mxu0 0
      %2947 = vmatpush1.bf16.msra.mxu0 %v2867
      %2948 = vmatprep.mubr.bf16.mxu0 %v2717
      %2949 = vmatmul.mubr.bf16.gmra.mrb[0].mxu0 %v2716
      %v2950 = vpop.f32.mrb[0].mxu0
      %v2951 = vadd.f32 0.0, %v2950
      %v2952 = vpop.f32.mrb[0].mxu0
      %v2953 = vpop.f32.mrb[0].mxu0
      %v2954 = vpop.f32.mrb[0].mxu0
      %2955 = vdwg.mxu0
      %2956 = vmatprep.subr.bf16.mxu0 0
      %2957 = vmatpush1.bf16.msra.mxu0 %v2868
      %2958 = vmatprep.subr.bf16.mxu0 0
      %2959 = vmatpush1.bf16.msra.mxu0 %v2869
      %2960 = vmatprep.subr.bf16.mxu0 0
      %2961 = vmatpush1.bf16.msra.mxu0 %v2870
      %2962 = vmatprep.subr.bf16.mxu0 0
      %2963 = vmatpush1.bf16.msra.mxu0 %v2871
      %2964 = vmatprep.subr.bf16.mxu0 0
      %2965 = vmatpush1.bf16.msra.mxu0 %v2872
      %2966 = vmatprep.subr.bf16.mxu0 0
      %2967 = vmatpush1.bf16.msra.mxu0 %v2873
      %2968 = vmatprep.subr.bf16.mxu0 0
      %2969 = vmatpush1.bf16.msra.mxu0 %v2874
      %2970 = vmatprep.subr.bf16.mxu0 0
      %2971 = vmatpush1.bf16.msra.mxu0 %v2875
      %2972 = vmatprep.subr.bf16.mxu0 0
      %2973 = vmatpush1.bf16.msra.mxu0 %v2876
      %2974 = vmatprep.subr.bf16.mxu0 0
      %2975 = vmatpush1.bf16.msra.mxu0 %v2877
      %2976 = vmatprep.subr.bf16.mxu0 0
      %2977 = vmatpush1.bf16.msra.mxu0 %v2878
      %2978 = vmatprep.subr.bf16.mxu0 0
      %2979 = vmatpush1.bf16.msra.mxu0 %v2879
      %2980 = vmatprep.subr.bf16.mxu0 0
      %2981 = vmatpush1.bf16.msra.mxu0 %v2880
      %2982 = vmatprep.subr.bf16.mxu0 0
      %2983 = vmatpush1.bf16.msra.mxu0 %v2881
      %2984 = vmatprep.subr.bf16.mxu0 0
      %2985 = vmatpush1.bf16.msra.mxu0 %v2882
      %2986 = vmatprep.subr.bf16.mxu0 0
      %2987 = vmatpush1.bf16.msra.mxu0 %v2883
      %2988 = vmatprep.mubr.bf16.mxu0 %v2719
      %2989 = vmatmul.mubr.bf16.gmra.mrb[0].mxu0 %v2718
      %v2990 = vpop.f32.mrb[0].mxu0
      %v2991 = vadd.f32 %v2951, %v2990
      %v2992 = vpop.f32.mrb[0].mxu0
      %v2993 = vpop.f32.mrb[0].mxu0
      %v2994 = vpop.f32.mrb[0].mxu0
      %2995 = vdwg.mxu0
      %v2996 = vadd.f32 %v2642, %v2991
      %v2997 = vld [vmem:[%s436 + $0x10] sm:$0xff]
      %v2998 = vld [vmem:[%s436 + $0x18] sm:$0xff]
      %s2999 = scalar_lea.vmem %s1, 1792
      %v3000 = vld [vmem:[%s2999] sm:$0xf]
      %v3001 = vld [vmem:[%s2999 + $0x4] sm:$0xf]
      %v3002 = vld [vmem:[%s2999 + $0x8] sm:$0xf]
      %v3003 = vld [vmem:[%s2999 + $0xc] sm:$0xf]
      %v3004 = vld [vmem:[%s2999 + $0x10] sm:$0xf]
      %v3005 = vld [vmem:[%s2999 + $0x14] sm:$0xf]
      %v3006 = vld [vmem:[%s2999 + $0x18] sm:$0xf]
      %v3007 = vld [vmem:[%s2999 + $0x1c] sm:$0xf]
      %v3008 = vld [vmem:[%s2999 + $0x20] sm:$0xf]
      %v3009 = vld [vmem:[%s2999 + $0x24] sm:$0xf]
      %v3010 = vld [vmem:[%s2999 + $0x28] sm:$0xf]
      %v3011 = vld [vmem:[%s2999 + $0x2c] sm:$0xf]
      %v3012 = vld [vmem:[%s2999 + $0x30] sm:$0xf]
      %v3013 = vld [vmem:[%s2999 + $0x34] sm:$0xf]
      %v3014 = vld [vmem:[%s2999 + $0x38] sm:$0xf]
      %v3015 = vld [vmem:[%s2999 + $0x3c] sm:$0xf]
      %v3016 = vld [vmem:[%s2999 + $0x40] sm:$0xf]
      %v3017 = vld [vmem:[%s2999 + $0x44] sm:$0xf]
      %v3018 = vld [vmem:[%s2999 + $0x48] sm:$0xf]
      %v3019 = vld [vmem:[%s2999 + $0x4c] sm:$0xf]
      %v3020 = vld [vmem:[%s2999 + $0x50] sm:$0xf]
      %v3021 = vld [vmem:[%s2999 + $0x54] sm:$0xf]
      %v3022 = vld [vmem:[%s2999 + $0x58] sm:$0xf]
      %v3023 = vld [vmem:[%s2999 + $0x5c] sm:$0xf]
      %v3024 = vld [vmem:[%s2999 + $0x60] sm:$0xf]
      %v3025 = vld [vmem:[%s2999 + $0x64] sm:$0xf]
      %v3026 = vld [vmem:[%s2999 + $0x68] sm:$0xf]
      %v3027 = vld [vmem:[%s2999 + $0x6c] sm:$0xf]
      %v3028 = vld [vmem:[%s2999 + $0x70] sm:$0xf]
      %v3029 = vld [vmem:[%s2999 + $0x74] sm:$0xf]
      %v3030 = vld [vmem:[%s2999 + $0x78] sm:$0xf]
      %v3031 = vld [vmem:[%s2999 + $0x7c] sm:$0xf]
      %v3032 = vld [vmem:[%s2999 + $0x80] sm:$0xf]
      %v3033 = vld [vmem:[%s2999 + $0x84] sm:$0xf]
      %v3034 = vld [vmem:[%s2999 + $0x88] sm:$0xf]
      %v3035 = vld [vmem:[%s2999 + $0x8c] sm:$0xf]
      %v3036 = vld [vmem:[%s2999 + $0x90] sm:$0xf]
      %v3037 = vld [vmem:[%s2999 + $0x94] sm:$0xf]
      %v3038 = vld [vmem:[%s2999 + $0x98] sm:$0xf]
      %v3039 = vld [vmem:[%s2999 + $0x9c] sm:$0xf]
      %v3040 = vld [vmem:[%s2999 + $0xa0] sm:$0xf]
      %v3041 = vld [vmem:[%s2999 + $0xa4] sm:$0xf]
      %v3042 = vld [vmem:[%s2999 + $0xa8] sm:$0xf]
      %v3043 = vld [vmem:[%s2999 + $0xac] sm:$0xf]
      %v3044 = vld [vmem:[%s2999 + $0xb0] sm:$0xf]
      %v3045 = vld [vmem:[%s2999 + $0xb4] sm:$0xf]
      %v3046 = vld [vmem:[%s2999 + $0xb8] sm:$0xf]
      %v3047 = vld [vmem:[%s2999 + $0xbc] sm:$0xf]
      %v3048 = vld [vmem:[%s2999 + $0xc0] sm:$0xf]
      %v3049 = vld [vmem:[%s2999 + $0xc4] sm:$0xf]
      %v3050 = vld [vmem:[%s2999 + $0xc8] sm:$0xf]
      %v3051 = vld [vmem:[%s2999 + $0xcc] sm:$0xf]
      %v3052 = vld [vmem:[%s2999 + $0xd0] sm:$0xf]
      %v3053 = vld [vmem:[%s2999 + $0xd4] sm:$0xf]
      %v3054 = vld [vmem:[%s2999 + $0xd8] sm:$0xf]
      %v3055 = vld [vmem:[%s2999 + $0xdc] sm:$0xf]
      %v3056 = vld [vmem:[%s2999 + $0xe0] sm:$0xf]
      %v3057 = vld [vmem:[%s2999 + $0xe4] sm:$0xf]
      %v3058 = vld [vmem:[%s2999 + $0xe8] sm:$0xf]
      %v3059 = vld [vmem:[%s2999 + $0xec] sm:$0xf]
      %v3060 = vld [vmem:[%s2999 + $0xf0] sm:$0xf]
      %v3061 = vld [vmem:[%s2999 + $0xf4] sm:$0xf]
      %v3062 = vld [vmem:[%s2999 + $0xf8] sm:$0xf]
      %v3063 = vld [vmem:[%s2999 + $0xfc] sm:$0xf]
      %v3066 = vunpack.c.l.b16 %v2997
      %v3067 = vunpack.c.h.b16 %v2997
      %v3068 = vunpack.c.l.b16 %v2998
      %v3069 = vunpack.c.h.b16 %v2998
      %v3070 = vpack.c.b16 %v3066, %v3066
      %v3071 = vpack.c.b16 %v3067, %v3067
      %v3072 = vpack.c.b16 %v3068, %v3068
      %v3073 = vpack.c.b16 %v3069, %v3069
      %v3075 = vshrl.u32 %v3070, 16
      %v3077 = vshll.u32 %v3070, 16
      %v3079 = vrot.slane %v3077, 1
      %v3080 = vor.u32 %v3075, %v3079
      %v3082 = vshrl.u32 %v3071, 16
      %v3084 = vshll.u32 %v3071, 16
      %v3086 = vrot.slane %v3084, 1
      %v3087 = vor.u32 %v3082, %v3086
      %v3089 = vshrl.u32 %v3072, 16
      %v3091 = vshll.u32 %v3072, 16
      %v3093 = vrot.slane %v3091, 1
      %v3094 = vor.u32 %v3089, %v3093
      %v3096 = vshrl.u32 %v3073, 16
      %v3098 = vshll.u32 %v3073, 16
      %v3100 = vrot.slane %v3098, 1
      %v3101 = vor.u32 %v3096, %v3100
      %v3170 = vunpack.c.l.b16 %v3000
      %v3171 = vunpack.c.l.b16 %v3001
      %v3172 = vunpack.c.l.b16 %v3002
      %v3173 = vunpack.c.l.b16 %v3003
      %v3174 = vunpack.c.l.b16 %v3004
      %v3175 = vunpack.c.l.b16 %v3005
      %v3176 = vunpack.c.l.b16 %v3006
      %v3177 = vunpack.c.l.b16 %v3007
      %v3178 = vunpack.c.l.b16 %v3008
      %v3179 = vunpack.c.l.b16 %v3009
      %v3180 = vunpack.c.l.b16 %v3010
      %v3181 = vunpack.c.l.b16 %v3011
      %v3182 = vunpack.c.l.b16 %v3012
      %v3183 = vunpack.c.l.b16 %v3013
      %v3184 = vunpack.c.l.b16 %v3014
      %v3185 = vunpack.c.l.b16 %v3015
      %v3186 = vunpack.c.l.b16 %v3016
      %v3187 = vunpack.c.l.b16 %v3017
      %v3188 = vunpack.c.l.b16 %v3018
      %v3189 = vunpack.c.l.b16 %v3019
      %v3190 = vunpack.c.l.b16 %v3020
      %v3191 = vunpack.c.l.b16 %v3021
      %v3192 = vunpack.c.l.b16 %v3022
      %v3193 = vunpack.c.l.b16 %v3023
      %v3194 = vunpack.c.l.b16 %v3024
      %v3195 = vunpack.c.l.b16 %v3025
      %v3196 = vunpack.c.l.b16 %v3026
      %v3197 = vunpack.c.l.b16 %v3027
      %v3198 = vunpack.c.l.b16 %v3028
      %v3199 = vunpack.c.l.b16 %v3029
      %v3200 = vunpack.c.l.b16 %v3030
      %v3201 = vunpack.c.l.b16 %v3031
      %v3202 = vunpack.c.l.b16 %v3032
      %v3203 = vunpack.c.l.b16 %v3033
      %v3204 = vunpack.c.l.b16 %v3034
      %v3205 = vunpack.c.l.b16 %v3035
      %v3206 = vunpack.c.l.b16 %v3036
      %v3207 = vunpack.c.l.b16 %v3037
      %v3208 = vunpack.c.l.b16 %v3038
      %v3209 = vunpack.c.l.b16 %v3039
      %v3210 = vunpack.c.l.b16 %v3040
      %v3211 = vunpack.c.l.b16 %v3041
      %v3212 = vunpack.c.l.b16 %v3042
      %v3213 = vunpack.c.l.b16 %v3043
      %v3214 = vunpack.c.l.b16 %v3044
      %v3215 = vunpack.c.l.b16 %v3045
      %v3216 = vunpack.c.l.b16 %v3046
      %v3217 = vunpack.c.l.b16 %v3047
      %v3218 = vunpack.c.l.b16 %v3048
      %v3219 = vunpack.c.l.b16 %v3049
      %v3220 = vunpack.c.l.b16 %v3050
      %v3221 = vunpack.c.l.b16 %v3051
      %v3222 = vunpack.c.l.b16 %v3052
      %v3223 = vunpack.c.l.b16 %v3053
      %v3224 = vunpack.c.l.b16 %v3054
      %v3225 = vunpack.c.l.b16 %v3055
      %v3226 = vunpack.c.l.b16 %v3056
      %v3227 = vunpack.c.l.b16 %v3057
      %v3228 = vunpack.c.l.b16 %v3058
      %v3229 = vunpack.c.l.b16 %v3059
      %v3230 = vunpack.c.l.b16 %v3060
      %v3231 = vunpack.c.l.b16 %v3061
      %v3232 = vunpack.c.l.b16 %v3062
      %v3233 = vunpack.c.l.b16 %v3063
      %v3234 = vpack.c.b16 %v3171, %v3170
      %v3235 = vpack.c.b16 %v3173, %v3172
      %v3236 = vpack.c.b16 %v3175, %v3174
      %v3237 = vpack.c.b16 %v3177, %v3176
      %v3238 = vpack.c.b16 %v3179, %v3178
      %v3239 = vpack.c.b16 %v3181, %v3180
      %v3240 = vpack.c.b16 %v3183, %v3182
      %v3241 = vpack.c.b16 %v3185, %v3184
      %v3242 = vpack.c.b16 %v3187, %v3186
      %v3243 = vpack.c.b16 %v3189, %v3188
      %v3244 = vpack.c.b16 %v3191, %v3190
      %v3245 = vpack.c.b16 %v3193, %v3192
      %v3246 = vpack.c.b16 %v3195, %v3194
      %v3247 = vpack.c.b16 %v3197, %v3196
      %v3248 = vpack.c.b16 %v3199, %v3198
      %v3249 = vpack.c.b16 %v3201, %v3200
      %v3250 = vpack.c.b16 %v3203, %v3202
      %v3251 = vpack.c.b16 %v3205, %v3204
      %v3252 = vpack.c.b16 %v3207, %v3206
      %v3253 = vpack.c.b16 %v3209, %v3208
      %v3254 = vpack.c.b16 %v3211, %v3210
      %v3255 = vpack.c.b16 %v3213, %v3212
      %v3256 = vpack.c.b16 %v3215, %v3214
      %v3257 = vpack.c.b16 %v3217, %v3216
      %v3258 = vpack.c.b16 %v3219, %v3218
      %v3259 = vpack.c.b16 %v3221, %v3220
      %v3260 = vpack.c.b16 %v3223, %v3222
      %v3261 = vpack.c.b16 %v3225, %v3224
      %v3262 = vpack.c.b16 %v3227, %v3226
      %v3263 = vpack.c.b16 %v3229, %v3228
      %v3264 = vpack.c.b16 %v3231, %v3230
      %v3265 = vpack.c.b16 %v3233, %v3232
      %3298 = vmatprep.subr.bf16.mxu0 0
      %3299 = vmatpush1.bf16.msra.mxu0 %v3234
      %3300 = vmatprep.subr.bf16.mxu0 0
      %3301 = vmatpush1.bf16.msra.mxu0 %v3235
      %3302 = vmatprep.subr.bf16.mxu0 0
      %3303 = vmatpush1.bf16.msra.mxu0 %v3236
      %3304 = vmatprep.subr.bf16.mxu0 0
      %3305 = vmatpush1.bf16.msra.mxu0 %v3237
      %3306 = vmatprep.subr.bf16.mxu0 0
      %3307 = vmatpush1.bf16.msra.mxu0 %v3238
      %3308 = vmatprep.subr.bf16.mxu0 0
      %3309 = vmatpush1.bf16.msra.mxu0 %v3239
      %3310 = vmatprep.subr.bf16.mxu0 0
      %3311 = vmatpush1.bf16.msra.mxu0 %v3240
      %3312 = vmatprep.subr.bf16.mxu0 0
      %3313 = vmatpush1.bf16.msra.mxu0 %v3241
      %3314 = vmatprep.subr.bf16.mxu0 0
      %3315 = vmatpush1.bf16.msra.mxu0 %v3242
      %3316 = vmatprep.subr.bf16.mxu0 0
      %3317 = vmatpush1.bf16.msra.mxu0 %v3243
      %3318 = vmatprep.subr.bf16.mxu0 0
      %3319 = vmatpush1.bf16.msra.mxu0 %v3244
      %3320 = vmatprep.subr.bf16.mxu0 0
      %3321 = vmatpush1.bf16.msra.mxu0 %v3245
      %3322 = vmatprep.subr.bf16.mxu0 0
      %3323 = vmatpush1.bf16.msra.mxu0 %v3246
      %3324 = vmatprep.subr.bf16.mxu0 0
      %3325 = vmatpush1.bf16.msra.mxu0 %v3247
      %3326 = vmatprep.subr.bf16.mxu0 0
      %3327 = vmatpush1.bf16.msra.mxu0 %v3248
      %3328 = vmatprep.subr.bf16.mxu0 0
      %3329 = vmatpush1.bf16.msra.mxu0 %v3249
      %3330 = vmatprep.mubr.bf16.mxu0 %v3087
      %3331 = vmatmul.mubr.bf16.gmra.mrb[0].mxu0 %v3080
      %v3332 = vpop.f32.mrb[0].mxu0
      %v3333 = vadd.f32 0.0, %v3332
      %v3334 = vpop.f32.mrb[0].mxu0
      %v3335 = vpop.f32.mrb[0].mxu0
      %v3336 = vpop.f32.mrb[0].mxu0
      %3337 = vdwg.mxu0
      %3338 = vmatprep.subr.bf16.mxu0 0
      %3339 = vmatpush1.bf16.msra.mxu0 %v3250
      %3340 = vmatprep.subr.bf16.mxu0 0
      %3341 = vmatpush1.bf16.msra.mxu0 %v3251
      %3342 = vmatprep.subr.bf16.mxu0 0
      %3343 = vmatpush1.bf16.msra.mxu0 %v3252
      %3344 = vmatprep.subr.bf16.mxu0 0
      %3345 = vmatpush1.bf16.msra.mxu0 %v3253
      %3346 = vmatprep.subr.bf16.mxu0 0
      %3347 = vmatpush1.bf16.msra.mxu0 %v3254
      %3348 = vmatprep.subr.bf16.mxu0 0
      %3349 = vmatpush1.bf16.msra.mxu0 %v3255
      %3350 = vmatprep.subr.bf16.mxu0 0
      %3351 = vmatpush1.bf16.msra.mxu0 %v3256
      %3352 = vmatprep.subr.bf16.mxu0 0
      %3353 = vmatpush1.bf16.msra.mxu0 %v3257
      %3354 = vmatprep.subr.bf16.mxu0 0
      %3355 = vmatpush1.bf16.msra.mxu0 %v3258
      %3356 = vmatprep.subr.bf16.mxu0 0
      %3357 = vmatpush1.bf16.msra.mxu0 %v3259
      %3358 = vmatprep.subr.bf16.mxu0 0
      %3359 = vmatpush1.bf16.msra.mxu0 %v3260
      %3360 = vmatprep.subr.bf16.mxu0 0
      %3361 = vmatpush1.bf16.msra.mxu0 %v3261
      %3362 = vmatprep.subr.bf16.mxu0 0
      %3363 = vmatpush1.bf16.msra.mxu0 %v3262
      %3364 = vmatprep.subr.bf16.mxu0 0
      %3365 = vmatpush1.bf16.msra.mxu0 %v3263
      %3366 = vmatprep.subr.bf16.mxu0 0
      %3367 = vmatpush1.bf16.msra.mxu0 %v3264
      %3368 = vmatprep.subr.bf16.mxu0 0
      %3369 = vmatpush1.bf16.msra.mxu0 %v3265
      %3370 = vmatprep.mubr.bf16.mxu0 %v3101
      %3371 = vmatmul.mubr.bf16.gmra.mrb[0].mxu0 %v3094
      %v3372 = vpop.f32.mrb[0].mxu0
      %v3373 = vadd.f32 %v3333, %v3372
      %v3374 = vpop.f32.mrb[0].mxu0
      %v3375 = vpop.f32.mrb[0].mxu0
      %v3376 = vpop.f32.mrb[0].mxu0
      %3377 = vdwg.mxu0
      %v3378 = vadd.f32 %v2996, %v3373
      %v3379 = vld [vmem:[%s436 + $0x10] sm:$0xee]
      %v3380 = vld [vmem:[%s436 + $0x18] sm:$0xee]
      %s3381 = scalar_lea.vmem %s1, 2048
      %v3382 = vld [vmem:[%s3381] sm:$0xf]
      %v3383 = vld [vmem:[%s3381 + $0x4] sm:$0xf]
      %v3384 = vld [vmem:[%s3381 + $0x8] sm:$0xf]
      %v3385 = vld [vmem:[%s3381 + $0xc] sm:$0xf]
      %v3386 = vld [vmem:[%s3381 + $0x10] sm:$0xf]
      %v3387 = vld [vmem:[%s3381 + $0x14] sm:$0xf]
      %v3388 = vld [vmem:[%s3381 + $0x18] sm:$0xf]
      %v3389 = vld [vmem:[%s3381 + $0x1c] sm:$0xf]
      %v3390 = vld [vmem:[%s3381 + $0x20] sm:$0xf]
      %v3391 = vld [vmem:[%s3381 + $0x24] sm:$0xf]
      %v3392 = vld [vmem:[%s3381 + $0x28] sm:$0xf]
      %v3393 = vld [vmem:[%s3381 + $0x2c] sm:$0xf]
      %v3394 = vld [vmem:[%s3381 + $0x30] sm:$0xf]
      %v3395 = vld [vmem:[%s3381 + $0x34] sm:$0xf]
      %v3396 = vld [vmem:[%s3381 + $0x38] sm:$0xf]
      %v3397 = vld [vmem:[%s3381 + $0x3c] sm:$0xf]
      %v3398 = vld [vmem:[%s3381 + $0x40] sm:$0xf]
      %v3399 = vld [vmem:[%s3381 + $0x44] sm:$0xf]
      %v3400 = vld [vmem:[%s3381 + $0x48] sm:$0xf]
      %v3401 = vld [vmem:[%s3381 + $0x4c] sm:$0xf]
      %v3402 = vld [vmem:[%s3381 + $0x50] sm:$0xf]
      %v3403 = vld [vmem:[%s3381 + $0x54] sm:$0xf]
      %v3404 = vld [vmem:[%s3381 + $0x58] sm:$0xf]
      %v3405 = vld [vmem:[%s3381 + $0x5c] sm:$0xf]
      %v3406 = vld [vmem:[%s3381 + $0x60] sm:$0xf]
      %v3407 = vld [vmem:[%s3381 + $0x64] sm:$0xf]
      %v3408 = vld [vmem:[%s3381 + $0x68] sm:$0xf]
      %v3409 = vld [vmem:[%s3381 + $0x6c] sm:$0xf]
      %v3410 = vld [vmem:[%s3381 + $0x70] sm:$0xf]
      %v3411 = vld [vmem:[%s3381 + $0x74] sm:$0xf]
      %v3412 = vld [vmem:[%s3381 + $0x78] sm:$0xf]
      %v3413 = vld [vmem:[%s3381 + $0x7c] sm:$0xf]
      %v3414 = vld [vmem:[%s3381 + $0x80] sm:$0xf]
      %v3415 = vld [vmem:[%s3381 + $0x84] sm:$0xf]
      %v3416 = vld [vmem:[%s3381 + $0x88] sm:$0xf]
      %v3417 = vld [vmem:[%s3381 + $0x8c] sm:$0xf]
      %v3418 = vld [vmem:[%s3381 + $0x90] sm:$0xf]
      %v3419 = vld [vmem:[%s3381 + $0x94] sm:$0xf]
      %v3420 = vld [vmem:[%s3381 + $0x98] sm:$0xf]
      %v3421 = vld [vmem:[%s3381 + $0x9c] sm:$0xf]
      %v3422 = vld [vmem:[%s3381 + $0xa0] sm:$0xf]
      %v3423 = vld [vmem:[%s3381 + $0xa4] sm:$0xf]
      %v3424 = vld [vmem:[%s3381 + $0xa8] sm:$0xf]
      %v3425 = vld [vmem:[%s3381 + $0xac] sm:$0xf]
      %v3426 = vld [vmem:[%s3381 + $0xb0] sm:$0xf]
      %v3427 = vld [vmem:[%s3381 + $0xb4] sm:$0xf]
      %v3428 = vld [vmem:[%s3381 + $0xb8] sm:$0xf]
      %v3429 = vld [vmem:[%s3381 + $0xbc] sm:$0xf]
      %v3430 = vld [vmem:[%s3381 + $0xc0] sm:$0xf]
      %v3431 = vld [vmem:[%s3381 + $0xc4] sm:$0xf]
      %v3432 = vld [vmem:[%s3381 + $0xc8] sm:$0xf]
      %v3433 = vld [vmem:[%s3381 + $0xcc] sm:$0xf]
      %v3434 = vld [vmem:[%s3381 + $0xd0] sm:$0xf]
      %v3435 = vld [vmem:[%s3381 + $0xd4] sm:$0xf]
      %v3436 = vld [vmem:[%s3381 + $0xd8] sm:$0xf]
      %v3437 = vld [vmem:[%s3381 + $0xdc] sm:$0xf]
      %v3438 = vld [vmem:[%s3381 + $0xe0] sm:$0xf]
      %v3439 = vld [vmem:[%s3381 + $0xe4] sm:$0xf]
      %v3440 = vld [vmem:[%s3381 + $0xe8] sm:$0xf]
      %v3441 = vld [vmem:[%s3381 + $0xec] sm:$0xf]
      %v3442 = vld [vmem:[%s3381 + $0xf0] sm:$0xf]
      %v3443 = vld [vmem:[%s3381 + $0xf4] sm:$0xf]
      %v3444 = vld [vmem:[%s3381 + $0xf8] sm:$0xf]
      %v3445 = vld [vmem:[%s3381 + $0xfc] sm:$0xf]
      %v3448 = vunpack.c.l.b16 %v3379
      %v3449 = vunpack.c.h.b16 %v3379
      %v3450 = vunpack.c.l.b16 %v3380
      %v3451 = vunpack.c.h.b16 %v3380
      %v3452 = vpack.c.b16 %v3448, %v3448
      %v3453 = vpack.c.b16 %v3449, %v3449
      %v3454 = vpack.c.b16 %v3450, %v3450
      %v3455 = vpack.c.b16 %v3451, %v3451
      %v3456 = vrot.slane %v3452, 1
      %v3457 = vrot.slane %v3453, 1
      %v3458 = vrot.slane %v3454, 1
      %v3459 = vrot.slane %v3455, 1
      %v3528 = vunpack.c.l.b16 %v3382
      %v3529 = vunpack.c.l.b16 %v3383
      %v3530 = vunpack.c.l.b16 %v3384
      %v3531 = vunpack.c.l.b16 %v3385
      %v3532 = vunpack.c.l.b16 %v3386
      %v3533 = vunpack.c.l.b16 %v3387
      %v3534 = vunpack.c.l.b16 %v3388
      %v3535 = vunpack.c.l.b16 %v3389
      %v3536 = vunpack.c.l.b16 %v3390
      %v3537 = vunpack.c.l.b16 %v3391
      %v3538 = vunpack.c.l.b16 %v3392
      %v3539 = vunpack.c.l.b16 %v3393
      %v3540 = vunpack.c.l.b16 %v3394
      %v3541 = vunpack.c.l.b16 %v3395
      %v3542 = vunpack.c.l.b16 %v3396
      %v3543 = vunpack.c.l.b16 %v3397
      %v3544 = vunpack.c.l.b16 %v3398
      %v3545 = vunpack.c.l.b16 %v3399
      %v3546 = vunpack.c.l.b16 %v3400
      %v3547 = vunpack.c.l.b16 %v3401
      %v3548 = vunpack.c.l.b16 %v3402
      %v3549 = vunpack.c.l.b16 %v3403
      %v3550 = vunpack.c.l.b16 %v3404
      %v3551 = vunpack.c.l.b16 %v3405
      %v3552 = vunpack.c.l.b16 %v3406
      %v3553 = vunpack.c.l.b16 %v3407
      %v3554 = vunpack.c.l.b16 %v3408
      %v3555 = vunpack.c.l.b16 %v3409
      %v3556 = vunpack.c.l.b16 %v3410
      %v3557 = vunpack.c.l.b16 %v3411
      %v3558 = vunpack.c.l.b16 %v3412
      %v3559 = vunpack.c.l.b16 %v3413
      %v3560 = vunpack.c.l.b16 %v3414
      %v3561 = vunpack.c.l.b16 %v3415
      %v3562 = vunpack.c.l.b16 %v3416
      %v3563 = vunpack.c.l.b16 %v3417
      %v3564 = vunpack.c.l.b16 %v3418
      %v3565 = vunpack.c.l.b16 %v3419
      %v3566 = vunpack.c.l.b16 %v3420
      %v3567 = vunpack.c.l.b16 %v3421
      %v3568 = vunpack.c.l.b16 %v3422
      %v3569 = vunpack.c.l.b16 %v3423
      %v3570 = vunpack.c.l.b16 %v3424
      %v3571 = vunpack.c.l.b16 %v3425
      %v3572 = vunpack.c.l.b16 %v3426
      %v3573 = vunpack.c.l.b16 %v3427
      %v3574 = vunpack.c.l.b16 %v3428
      %v3575 = vunpack.c.l.b16 %v3429
      %v3576 = vunpack.c.l.b16 %v3430
      %v3577 = vunpack.c.l.b16 %v3431
      %v3578 = vunpack.c.l.b16 %v3432
      %v3579 = vunpack.c.l.b16 %v3433
      %v3580 = vunpack.c.l.b16 %v3434
      %v3581 = vunpack.c.l.b16 %v3435
      %v3582 = vunpack.c.l.b16 %v3436
      %v3583 = vunpack.c.l.b16 %v3437
      %v3584 = vunpack.c.l.b16 %v3438
      %v3585 = vunpack.c.l.b16 %v3439
      %v3586 = vunpack.c.l.b16 %v3440
      %v3587 = vunpack.c.l.b16 %v3441
      %v3588 = vunpack.c.l.b16 %v3442
      %v3589 = vunpack.c.l.b16 %v3443
      %v3590 = vunpack.c.l.b16 %v3444
      %v3591 = vunpack.c.l.b16 %v3445
      %v3592 = vpack.c.b16 %v3529, %v3528
      %v3593 = vpack.c.b16 %v3531, %v3530
      %v3594 = vpack.c.b16 %v3533, %v3532
      %v3595 = vpack.c.b16 %v3535, %v3534
      %v3596 = vpack.c.b16 %v3537, %v3536
      %v3597 = vpack.c.b16 %v3539, %v3538
      %v3598 = vpack.c.b16 %v3541, %v3540
      %v3599 = vpack.c.b16 %v3543, %v3542
      %v3600 = vpack.c.b16 %v3545, %v3544
      %v3601 = vpack.c.b16 %v3547, %v3546
      %v3602 = vpack.c.b16 %v3549, %v3548
      %v3603 = vpack.c.b16 %v3551, %v3550
      %v3604 = vpack.c.b16 %v3553, %v3552
      %v3605 = vpack.c.b16 %v3555, %v3554
      %v3606 = vpack.c.b16 %v3557, %v3556
      %v3607 = vpack.c.b16 %v3559, %v3558
      %v3608 = vpack.c.b16 %v3561, %v3560
      %v3609 = vpack.c.b16 %v3563, %v3562
      %v3610 = vpack.c.b16 %v3565, %v3564
      %v3611 = vpack.c.b16 %v3567, %v3566
      %v3612 = vpack.c.b16 %v3569, %v3568
      %v3613 = vpack.c.b16 %v3571, %v3570
      %v3614 = vpack.c.b16 %v3573, %v3572
      %v3615 = vpack.c.b16 %v3575, %v3574
      %v3616 = vpack.c.b16 %v3577, %v3576
      %v3617 = vpack.c.b16 %v3579, %v3578
      %v3618 = vpack.c.b16 %v3581, %v3580
      %v3619 = vpack.c.b16 %v3583, %v3582
      %v3620 = vpack.c.b16 %v3585, %v3584
      %v3621 = vpack.c.b16 %v3587, %v3586
      %v3622 = vpack.c.b16 %v3589, %v3588
      %v3623 = vpack.c.b16 %v3591, %v3590
      %3656 = vmatprep.subr.bf16.mxu0 0
      %3657 = vmatpush1.bf16.msra.mxu0 %v3592
      %3658 = vmatprep.subr.bf16.mxu0 0
      %3659 = vmatpush1.bf16.msra.mxu0 %v3593
      %3660 = vmatprep.subr.bf16.mxu0 0
      %3661 = vmatpush1.bf16.msra.mxu0 %v3594
      %3662 = vmatprep.subr.bf16.mxu0 0
      %3663 = vmatpush1.bf16.msra.mxu0 %v3595
      %3664 = vmatprep.subr.bf16.mxu0 0
      %3665 = vmatpush1.bf16.msra.mxu0 %v3596
      %3666 = vmatprep.subr.bf16.mxu0 0
      %3667 = vmatpush1.bf16.msra.mxu0 %v3597
      %3668 = vmatprep.subr.bf16.mxu0 0
      %3669 = vmatpush1.bf16.msra.mxu0 %v3598
      %3670 = vmatprep.subr.bf16.mxu0 0
      %3671 = vmatpush1.bf16.msra.mxu0 %v3599
      %3672 = vmatprep.subr.bf16.mxu0 0
      %3673 = vmatpush1.bf16.msra.mxu0 %v3600
      %3674 = vmatprep.subr.bf16.mxu0 0
      %3675 = vmatpush1.bf16.msra.mxu0 %v3601
      %3676 = vmatprep.subr.bf16.mxu0 0
      %3677 = vmatpush1.bf16.msra.mxu0 %v3602
      %3678 = vmatprep.subr.bf16.mxu0 0
      %3679 = vmatpush1.bf16.msra.mxu0 %v3603
      %3680 = vmatprep.subr.bf16.mxu0 0
      %3681 = vmatpush1.bf16.msra.mxu0 %v3604
      %3682 = vmatprep.subr.bf16.mxu0 0
      %3683 = vmatpush1.bf16.msra.mxu0 %v3605
      %3684 = vmatprep.subr.bf16.mxu0 0
      %3685 = vmatpush1.bf16.msra.mxu0 %v3606
      %3686 = vmatprep.subr.bf16.mxu0 0
      %3687 = vmatpush1.bf16.msra.mxu0 %v3607
      %3688 = vmatprep.mubr.bf16.mxu0 %v3457
      %3689 = vmatmul.mubr.bf16.gmra.mrb[0].mxu0 %v3456
      %v3690 = vpop.f32.mrb[0].mxu0
      %v3691 = vadd.f32 0.0, %v3690
      %v3692 = vpop.f32.mrb[0].mxu0
      %v3693 = vpop.f32.mrb[0].mxu0
      %v3694 = vpop.f32.mrb[0].mxu0
      %3695 = vdwg.mxu0
      %3696 = vmatprep.subr.bf16.mxu0 0
      %3697 = vmatpush1.bf16.msra.mxu0 %v3608
      %3698 = vmatprep.subr.bf16.mxu0 0
      %3699 = vmatpush1.bf16.msra.mxu0 %v3609
      %3700 = vmatprep.subr.bf16.mxu0 0
      %3701 = vmatpush1.bf16.msra.mxu0 %v3610
      %3702 = vmatprep.subr.bf16.mxu0 0
      %3703 = vmatpush1.bf16.msra.mxu0 %v3611
      %3704 = vmatprep.subr.bf16.mxu0 0
      %3705 = vmatpush1.bf16.msra.mxu0 %v3612
      %3706 = vmatprep.subr.bf16.mxu0 0
      %3707 = vmatpush1.bf16.msra.mxu0 %v3613
      %3708 = vmatprep.subr.bf16.mxu0 0
      %3709 = vmatpush1.bf16.msra.mxu0 %v3614
      %3710 = vmatprep.subr.bf16.mxu0 0
      %3711 = vmatpush1.bf16.msra.mxu0 %v3615
      %3712 = vmatprep.subr.bf16.mxu0 0
      %3713 = vmatpush1.bf16.msra.mxu0 %v3616
      %3714 = vmatprep.subr.bf16.mxu0 0
      %3715 = vmatpush1.bf16.msra.mxu0 %v3617
      %3716 = vmatprep.subr.bf16.mxu0 0
      %3717 = vmatpush1.bf16.msra.mxu0 %v3618
      %3718 = vmatprep.subr.bf16.mxu0 0
      %3719 = vmatpush1.bf16.msra.mxu0 %v3619
      %3720 = vmatprep.subr.bf16.mxu0 0
      %3721 = vmatpush1.bf16.msra.mxu0 %v3620
      %3722 = vmatprep.subr.bf16.mxu0 0
      %3723 = vmatpush1.bf16.msra.mxu0 %v3621
      %3724 = vmatprep.subr.bf16.mxu0 0
      %3725 = vmatpush1.bf16.msra.mxu0 %v3622
      %3726 = vmatprep.subr.bf16.mxu0 0
      %3727 = vmatpush1.bf16.msra.mxu0 %v3623
      %3728 = vmatprep.mubr.bf16.mxu0 %v3459
      %3729 = vmatmul.mubr.bf16.gmra.mrb[0].mxu0 %v3458
      %v3730 = vpop.f32.mrb[0].mxu0
      %v3731 = vadd.f32 %v3691, %v3730
      %v3732 = vpop.f32.mrb[0].mxu0
      %v3733 = vpop.f32.mrb[0].mxu0
      %v3734 = vpop.f32.mrb[0].mxu0
      %3735 = vdwg.mxu0
      %v3736 = vadd.f32 %v3378, %v3731
      %v3737 = vld [vmem:[%s2] sm:$0x1]
      %v3739 = vlaneseq
      %v3740 = vshrl.u32 %v3739, 7
      %v3741 = vsub.s32 0, %v3740
      %v3742 = vrot.slane %v3737, %v3741
      %v3744 = vadd.f32 %v3736, %v3742
      %v3745 = vmax.f32 %v3744, 0.0
      %v3746 = vld [vmem:[%s3] sm:$0x1]
      %v3748 = vlaneseq
      %v3749 = vshrl.u32 %v3748, 7
      %v3750 = vsub.s32 0, %v3749
      %v3751 = vrot.slane %v3746, %v3750
      %v3753 = vmul.f32 %v3745, %v3751
      %vm3754 = vcmask 1045504
      %v3755 = vsel %vm3754, %v3753, 0.0
      %3756 = vadd.xlane.f32.xlu0 %v3755
      %v3757 = vpop.xlane.xlu0 %3756
      %v3758 = vld [vmem:[#allocation2] sm:$0x1]
      %v3760 = vlaneseq
      %v3761 = vshrl.u32 %v3760, 7
      %v3762 = vsub.s32 0, %v3761
      %v3763 = vrot.slane %v3758, %v3762
      %v3765 = vadd.f32 %v3757, %v3763
      %v3766 = vxor.u32 %v3765, 2147483648
      %v3767 = vmul.f32 %v3766, 1.442695
      %v3768 = vpow.pop %v3767
      %v3769 = vadd.f32 %v3768, 1.0
      %v3770 = vrcp.pop %v3769
      %v3771 = vmul.f32 1.0, %v3770
      %v3772 = vunpack.c.l.bf16 %v1533
      %v3773 = vunpack.c.h.bf16 %v1533
      %v3774 = vunpack.c.l.bf16 %v1534
      %v3775 = vunpack.c.h.bf16 %v1534
      %v3776 = vunpack.c.l.bf16 %v1899
      %v3777 = vunpack.c.h.bf16 %v1899
      %v3778 = vunpack.c.l.bf16 %v1900
      %v3779 = vunpack.c.h.bf16 %v1900
      %vm3788 = vcmask 1042432
      %v3789 = vrot.slane %v3772, 5
      %v3790 = vrot.slane %v3776, 5
      %v3791 = vsel %vm3788, %v3789, %v3790
      %v3792 = vrot.slane %v3773, 5
      %v3793 = vrot.slane %v3777, 5
      %v3794 = vsel %vm3788, %v3792, %v3793
      %v3795 = vrot.slane %v3774, 5
      %v3796 = vrot.slane %v3778, 5
      %v3797 = vsel %vm3788, %v3795, %v3796
      %v3798 = vrot.slane %v3775, 5
      %v3799 = vrot.slane %v3779, 5
      %v3800 = vsel %vm3788, %v3798, %v3799
      %v3805 = vsel %vm3754, %v3791, 0.0
      %v3806 = vrot.slane %v3805, 4
      %v3807 = vadd.f32 %v3805, %v3806
      %v3808 = vrot.slane %v3807, 2
      %v3809 = vadd.f32 %v3807, %v3808
      %v3810 = vrot.slane %v3809, 1
      %v3811 = vadd.f32 %v3809, %v3810
      %v3812 = vsel %vm3754, %v3794, 0.0
      %v3813 = vrot.slane %v3812, 4
      %v3814 = vadd.f32 %v3812, %v3813
      %v3815 = vrot.slane %v3814, 2
      %v3816 = vadd.f32 %v3814, %v3815
      %v3817 = vrot.slane %v3816, 1
      %v3818 = vadd.f32 %v3816, %v3817
      %v3819 = vsel %vm3754, %v3797, 0.0
      %v3820 = vrot.slane %v3819, 4
      %v3821 = vadd.f32 %v3819, %v3820
      %v3822 = vrot.slane %v3821, 2
      %v3823 = vadd.f32 %v3821, %v3822
      %v3824 = vrot.slane %v3823, 1
      %v3825 = vadd.f32 %v3823, %v3824
      %v3826 = vsel %vm3754, %v3800, 0.0
      %v3827 = vrot.slane %v3826, 4
      %v3828 = vadd.f32 %v3826, %v3827
      %v3829 = vrot.slane %v3828, 2
      %v3830 = vadd.f32 %v3828, %v3829
      %v3831 = vrot.slane %v3830, 1
      %v3832 = vadd.f32 %v3830, %v3831
      %v3833 = vmul.f32 %v3811, 0.25
      %v3834 = vmul.f32 %v3818, 0.25
      %v3835 = vmul.f32 %v3825, 0.25
      %v3836 = vmul.f32 %v3832, 0.25
      %v3837 = vpack.c.bf16 %v3833, %v3833
      %v3838 = vpack.c.bf16 %v3834, %v3834
      %v3839 = vpack.c.bf16 %v3835, %v3835
      %v3840 = vpack.c.bf16 %v3836, %v3836
      %v3841 = vld [vmem:[%s5] sm:$0xf]
      %v3842 = vld [vmem:[%s5 + $0x4] sm:$0xf]
      %v3843 = vld [vmem:[%s5 + $0x8] sm:$0xf]
      %v3844 = vld [vmem:[%s5 + $0xc] sm:$0xf]
      %v3845 = vld [vmem:[%s5 + $0x10] sm:$0xf]
      %v3846 = vld [vmem:[%s5 + $0x14] sm:$0xf]
      %v3847 = vld [vmem:[%s5 + $0x18] sm:$0xf]
      %v3848 = vld [vmem:[%s5 + $0x1c] sm:$0xf]
      %v3849 = vld [vmem:[%s5 + $0x20] sm:$0xf]
      %v3850 = vld [vmem:[%s5 + $0x24] sm:$0xf]
      %v3851 = vld [vmem:[%s5 + $0x28] sm:$0xf]
      %v3852 = vld [vmem:[%s5 + $0x2c] sm:$0xf]
      %v3853 = vld [vmem:[%s5 + $0x30] sm:$0xf]
      %v3854 = vld [vmem:[%s5 + $0x34] sm:$0xf]
      %v3855 = vld [vmem:[%s5 + $0x38] sm:$0xf]
      %v3856 = vld [vmem:[%s5 + $0x3c] sm:$0xf]
      %v3857 = vld [vmem:[%s5 + $0x40] sm:$0xf]
      %v3858 = vld [vmem:[%s5 + $0x44] sm:$0xf]
      %v3859 = vld [vmem:[%s5 + $0x48] sm:$0xf]
      %v3860 = vld [vmem:[%s5 + $0x4c] sm:$0xf]
      %v3861 = vld [vmem:[%s5 + $0x50] sm:$0xf]
      %v3862 = vld [vmem:[%s5 + $0x54] sm:$0xf]
      %v3863 = vld [vmem:[%s5 + $0x58] sm:$0xf]
      %v3864 = vld [vmem:[%s5 + $0x5c] sm:$0xf]
      %v3865 = vld [vmem:[%s5 + $0x60] sm:$0xf]
      %v3866 = vld [vmem:[%s5 + $0x64] sm:$0xf]
      %v3867 = vld [vmem:[%s5 + $0x68] sm:$0xf]
      %v3868 = vld [vmem:[%s5 + $0x6c] sm:$0xf]
      %v3869 = vld [vmem:[%s5 + $0x70] sm:$0xf]
      %v3870 = vld [vmem:[%s5 + $0x74] sm:$0xf]
      %v3871 = vld [vmem:[%s5 + $0x78] sm:$0xf]
      %v3872 = vld [vmem:[%s5 + $0x7c] sm:$0xf]
      %v3873 = vld [vmem:[%s5 + $0x80] sm:$0xf]
      %v3874 = vld [vmem:[%s5 + $0x84] sm:$0xf]
      %v3875 = vld [vmem:[%s5 + $0x88] sm:$0xf]
      %v3876 = vld [vmem:[%s5 + $0x8c] sm:$0xf]
      %v3877 = vld [vmem:[%s5 + $0x90] sm:$0xf]
      %v3878 = vld [vmem:[%s5 + $0x94] sm:$0xf]
      %v3879 = vld [vmem:[%s5 + $0x98] sm:$0xf]
      %v3880 = vld [vmem:[%s5 + $0x9c] sm:$0xf]
      %v3881 = vld [vmem:[%s5 + $0xa0] sm:$0xf]
      %v3882 = vld [vmem:[%s5 + $0xa4] sm:$0xf]
      %v3883 = vld [vmem:[%s5 + $0xa8] sm:$0xf]
      %v3884 = vld [vmem:[%s5 + $0xac] sm:$0xf]
      %v3885 = vld [vmem:[%s5 + $0xb0] sm:$0xf]
      %v3886 = vld [vmem:[%s5 + $0xb4] sm:$0xf]
      %v3887 = vld [vmem:[%s5 + $0xb8] sm:$0xf]
      %v3888 = vld [vmem:[%s5 + $0xbc] sm:$0xf]
      %v3889 = vld [vmem:[%s5 + $0xc0] sm:$0xf]
      %v3890 = vld [vmem:[%s5 + $0xc4] sm:$0xf]
      %v3891 = vld [vmem:[%s5 + $0xc8] sm:$0xf]
      %v3892 = vld [vmem:[%s5 + $0xcc] sm:$0xf]
      %v3893 = vld [vmem:[%s5 + $0xd0] sm:$0xf]
      %v3894 = vld [vmem:[%s5 + $0xd4] sm:$0xf]
      %v3895 = vld [vmem:[%s5 + $0xd8] sm:$0xf]
      %v3896 = vld [vmem:[%s5 + $0xdc] sm:$0xf]
      %v3897 = vld [vmem:[%s5 + $0xe0] sm:$0xf]
      %v3898 = vld [vmem:[%s5 + $0xe4] sm:$0xf]
      %v3899 = vld [vmem:[%s5 + $0xe8] sm:$0xf]
      %v3900 = vld [vmem:[%s5 + $0xec] sm:$0xf]
      %v3901 = vld [vmem:[%s5 + $0xf0] sm:$0xf]
      %v3902 = vld [vmem:[%s5 + $0xf4] sm:$0xf]
      %v3903 = vld [vmem:[%s5 + $0xf8] sm:$0xf]
      %v3904 = vld [vmem:[%s5 + $0xfc] sm:$0xf]
      %v3905 = vld [vmem:[%s6] sm:$0x1]
      %v3970 = vunpack.c.l.b16 %v3841
      %v3971 = vunpack.c.l.b16 %v3842
      %v3972 = vunpack.c.l.b16 %v3843
      %v3973 = vunpack.c.l.b16 %v3844
      %v3974 = vunpack.c.l.b16 %v3845
      %v3975 = vunpack.c.l.b16 %v3846
      %v3976 = vunpack.c.l.b16 %v3847
      %v3977 = vunpack.c.l.b16 %v3848
      %v3978 = vunpack.c.l.b16 %v3849
      %v3979 = vunpack.c.l.b16 %v3850
      %v3980 = vunpack.c.l.b16 %v3851
      %v3981 = vunpack.c.l.b16 %v3852
      %v3982 = vunpack.c.l.b16 %v3853
      %v3983 = vunpack.c.l.b16 %v3854
      %v3984 = vunpack.c.l.b16 %v3855
      %v3985 = vunpack.c.l.b16 %v3856
      %v3986 = vunpack.c.l.b16 %v3857
      %v3987 = vunpack.c.l.b16 %v3858
      %v3988 = vunpack.c.l.b16 %v3859
      %v3989 = vunpack.c.l.b16 %v3860
      %v3990 = vunpack.c.l.b16 %v3861
      %v3991 = vunpack.c.l.b16 %v3862
      %v3992 = vunpack.c.l.b16 %v3863
      %v3993 = vunpack.c.l.b16 %v3864
      %v3994 = vunpack.c.l.b16 %v3865
      %v3995 = vunpack.c.l.b16 %v3866
      %v3996 = vunpack.c.l.b16 %v3867
      %v3997 = vunpack.c.l.b16 %v3868
      %v3998 = vunpack.c.l.b16 %v3869
      %v3999 = vunpack.c.l.b16 %v3870
      %v4000 = vunpack.c.l.b16 %v3871
      %v4001 = vunpack.c.l.b16 %v3872
      %v4002 = vunpack.c.l.b16 %v3873
      %v4003 = vunpack.c.l.b16 %v3874
      %v4004 = vunpack.c.l.b16 %v3875
      %v4005 = vunpack.c.l.b16 %v3876
      %v4006 = vunpack.c.l.b16 %v3877
      %v4007 = vunpack.c.l.b16 %v3878
      %v4008 = vunpack.c.l.b16 %v3879
      %v4009 = vunpack.c.l.b16 %v3880
      %v4010 = vunpack.c.l.b16 %v3881
      %v4011 = vunpack.c.l.b16 %v3882
      %v4012 = vunpack.c.l.b16 %v3883
      %v4013 = vunpack.c.l.b16 %v3884
      %v4014 = vunpack.c.l.b16 %v3885
      %v4015 = vunpack.c.l.b16 %v3886
      %v4016 = vunpack.c.l.b16 %v3887
      %v4017 = vunpack.c.l.b16 %v3888
      %v4018 = vunpack.c.l.b16 %v3889
      %v4019 = vunpack.c.l.b16 %v3890
      %v4020 = vunpack.c.l.b16 %v3891
      %v4021 = vunpack.c.l.b16 %v3892
      %v4022 = vunpack.c.l.b16 %v3893
      %v4023 = vunpack.c.l.b16 %v3894
      %v4024 = vunpack.c.l.b16 %v3895
      %v4025 = vunpack.c.l.b16 %v3896
      %v4026 = vunpack.c.l.b16 %v3897
      %v4027 = vunpack.c.l.b16 %v3898
      %v4028 = vunpack.c.l.b16 %v3899
      %v4029 = vunpack.c.l.b16 %v3900
      %v4030 = vunpack.c.l.b16 %v3901
      %v4031 = vunpack.c.l.b16 %v3902
      %v4032 = vunpack.c.l.b16 %v3903
      %v4033 = vunpack.c.l.b16 %v3904
      %v4034 = vpack.c.b16 %v3971, %v3970
      %v4035 = vpack.c.b16 %v3973, %v3972
      %v4036 = vpack.c.b16 %v3975, %v3974
      %v4037 = vpack.c.b16 %v3977, %v3976
      %v4038 = vpack.c.b16 %v3979, %v3978
      %v4039 = vpack.c.b16 %v3981, %v3980
      %v4040 = vpack.c.b16 %v3983, %v3982
      %v4041 = vpack.c.b16 %v3985, %v3984
      %v4042 = vpack.c.b16 %v3987, %v3986
      %v4043 = vpack.c.b16 %v3989, %v3988
      %v4044 = vpack.c.b16 %v3991, %v3990
      %v4045 = vpack.c.b16 %v3993, %v3992
      %v4046 = vpack.c.b16 %v3995, %v3994
      %v4047 = vpack.c.b16 %v3997, %v3996
      %v4048 = vpack.c.b16 %v3999, %v3998
      %v4049 = vpack.c.b16 %v4001, %v4000
      %v4050 = vpack.c.b16 %v4003, %v4002
      %v4051 = vpack.c.b16 %v4005, %v4004
      %v4052 = vpack.c.b16 %v4007, %v4006
      %v4053 = vpack.c.b16 %v4009, %v4008
      %v4054 = vpack.c.b16 %v4011, %v4010
      %v4055 = vpack.c.b16 %v4013, %v4012
      %v4056 = vpack.c.b16 %v4015, %v4014
      %v4057 = vpack.c.b16 %v4017, %v4016
      %v4058 = vpack.c.b16 %v4019, %v4018
      %v4059 = vpack.c.b16 %v4021, %v4020
      %v4060 = vpack.c.b16 %v4023, %v4022
      %v4061 = vpack.c.b16 %v4025, %v4024
      %v4062 = vpack.c.b16 %v4027, %v4026
      %v4063 = vpack.c.b16 %v4029, %v4028
      %v4064 = vpack.c.b16 %v4031, %v4030
      %v4065 = vpack.c.b16 %v4033, %v4032
      %4098 = vmatprep.subr.bf16.mxu0 0
      %4099 = vmatpush1.bf16.msra.mxu0 %v4034
      %4100 = vmatprep.subr.bf16.mxu0 0
      %4101 = vmatpush1.bf16.msra.mxu0 %v4035
      %4102 = vmatprep.subr.bf16.mxu0 0
      %4103 = vmatpush1.bf16.msra.mxu0 %v4036
      %4104 = vmatprep.subr.bf16.mxu0 0
      %4105 = vmatpush1.bf16.msra.mxu0 %v4037
      %4106 = vmatprep.subr.bf16.mxu0 0
      %4107 = vmatpush1.bf16.msra.mxu0 %v4038
      %4108 = vmatprep.subr.bf16.mxu0 0
      %4109 = vmatpush1.bf16.msra.mxu0 %v4039
      %4110 = vmatprep.subr.bf16.mxu0 0
      %4111 = vmatpush1.bf16.msra.mxu0 %v4040
      %4112 = vmatprep.subr.bf16.mxu0 0
      %4113 = vmatpush1.bf16.msra.mxu0 %v4041
      %4114 = vmatprep.subr.bf16.mxu0 0
      %4115 = vmatpush1.bf16.msra.mxu0 %v4042
      %4116 = vmatprep.subr.bf16.mxu0 0
      %4117 = vmatpush1.bf16.msra.mxu0 %v4043
      %4118 = vmatprep.subr.bf16.mxu0 0
      %4119 = vmatpush1.bf16.msra.mxu0 %v4044
      %4120 = vmatprep.subr.bf16.mxu0 0
      %4121 = vmatpush1.bf16.msra.mxu0 %v4045
      %4122 = vmatprep.subr.bf16.mxu0 0
      %4123 = vmatpush1.bf16.msra.mxu0 %v4046
      %4124 = vmatprep.subr.bf16.mxu0 0
      %4125 = vmatpush1.bf16.msra.mxu0 %v4047
      %4126 = vmatprep.subr.bf16.mxu0 0
      %4127 = vmatpush1.bf16.msra.mxu0 %v4048
      %4128 = vmatprep.subr.bf16.mxu0 0
      %4129 = vmatpush1.bf16.msra.mxu0 %v4049
      %4130 = vmatprep.mubr.bf16.mxu0 %v3838
      %4131 = vmatmul.mubr.bf16.gmra.mrb[0].mxu0 %v3837
      %v4132 = vpop.f32.mrb[0].mxu0
      %v4133 = vadd.f32 %v3905, %v4132
      %v4134 = vpop.f32.mrb[0].mxu0
      %v4135 = vpop.f32.mrb[0].mxu0
      %v4136 = vpop.f32.mrb[0].mxu0
      %4137 = vdwg.mxu0
      %4138 = vmatprep.subr.bf16.mxu0 0
      %4139 = vmatpush1.bf16.msra.mxu0 %v4050
      %4140 = vmatprep.subr.bf16.mxu0 0
      %4141 = vmatpush1.bf16.msra.mxu0 %v4051
      %4142 = vmatprep.subr.bf16.mxu0 0
      %4143 = vmatpush1.bf16.msra.mxu0 %v4052
      %4144 = vmatprep.subr.bf16.mxu0 0
      %4145 = vmatpush1.bf16.msra.mxu0 %v4053
      %4146 = vmatprep.subr.bf16.mxu0 0
      %4147 = vmatpush1.bf16.msra.mxu0 %v4054
      %4148 = vmatprep.subr.bf16.mxu0 0
      %4149 = vmatpush1.bf16.msra.mxu0 %v4055
      %4150 = vmatprep.subr.bf16.mxu0 0
      %4151 = vmatpush1.bf16.msra.mxu0 %v4056
      %4152 = vmatprep.subr.bf16.mxu0 0
      %4153 = vmatpush1.bf16.msra.mxu0 %v4057
      %4154 = vmatprep.subr.bf16.mxu0 0
      %4155 = vmatpush1.bf16.msra.mxu0 %v4058
      %4156 = vmatprep.subr.bf16.mxu0 0
      %4157 = vmatpush1.bf16.msra.mxu0 %v4059
      %4158 = vmatprep.subr.bf16.mxu0 0
      %4159 = vmatpush1.bf16.msra.mxu0 %v4060
      %4160 = vmatprep.subr.bf16.mxu0 0
      %4161 = vmatpush1.bf16.msra.mxu0 %v4061
      %4162 = vmatprep.subr.bf16.mxu0 0
      %4163 = vmatpush1.bf16.msra.mxu0 %v4062
      %4164 = vmatprep.subr.bf16.mxu0 0
      %4165 = vmatpush1.bf16.msra.mxu0 %v4063
      %4166 = vmatprep.subr.bf16.mxu0 0
      %4167 = vmatpush1.bf16.msra.mxu0 %v4064
      %4168 = vmatprep.subr.bf16.mxu0 0
      %4169 = vmatpush1.bf16.msra.mxu0 %v4065
      %4170 = vmatprep.mubr.bf16.mxu0 %v3840
      %4171 = vmatmul.mubr.bf16.gmra.mrb[0].mxu0 %v3839
      %v4172 = vpop.f32.mrb[0].mxu0
      %v4173 = vadd.f32 %v4133, %v4172
      %v4174 = vpop.f32.mrb[0].mxu0
      %v4175 = vpop.f32.mrb[0].mxu0
      %v4176 = vpop.f32.mrb[0].mxu0
      %4177 = vdwg.mxu0
      %v4178 = vmax.f32 %v4173, 0.0
      %v4179 = vpack.c.bf16 %v4178, %v4178
      %v4180 = vld [vmem:[%s7] sm:$0xff]
      %v4181 = vld [vmem:[%s7 + $0x8] sm:$0xff]
      %v4182 = vld [vmem:[%s7 + $0x10] sm:$0xff]
      %v4183 = vld [vmem:[%s7 + $0x18] sm:$0xff]
      %v4184 = vld [vmem:[%s7 + $0x20] sm:$0xff]
      %v4185 = vld [vmem:[%s7 + $0x28] sm:$0xff]
      %v4186 = vld [vmem:[%s7 + $0x30] sm:$0xff]
      %v4187 = vld [vmem:[%s7 + $0x38] sm:$0xff]
      %v4188 = vld [vmem:[%s7 + $0x40] sm:$0xff]
      %v4189 = vld [vmem:[%s7 + $0x48] sm:$0xff]
      %v4190 = vld [vmem:[%s7 + $0x50] sm:$0xff]
      %v4191 = vld [vmem:[%s7 + $0x58] sm:$0xff]
      %v4192 = vld [vmem:[%s7 + $0x60] sm:$0xff]
      %v4193 = vld [vmem:[%s7 + $0x68] sm:$0xff]
      %v4194 = vld [vmem:[%s7 + $0x70] sm:$0xff]
      %v4195 = vld [vmem:[%s7 + $0x78] sm:$0xff]
      %v4196 = vld [vmem:[%s7 + $0x80] sm:$0xff]
      %v4197 = vld [vmem:[%s7 + $0x88] sm:$0xff]
      %v4198 = vld [vmem:[%s7 + $0x90] sm:$0xff]
      %v4199 = vld [vmem:[%s7 + $0x98] sm:$0xff]
      %v4200 = vld [vmem:[%s7 + $0xa0] sm:$0xff]
      %v4201 = vld [vmem:[%s7 + $0xa8] sm:$0xff]
      %v4202 = vld [vmem:[%s7 + $0xb0] sm:$0xff]
      %v4203 = vld [vmem:[%s7 + $0xb8] sm:$0xff]
      %v4204 = vld [vmem:[%s7 + $0xc0] sm:$0xff]
      %v4205 = vld [vmem:[%s7 + $0xc8] sm:$0xff]
      %v4206 = vld [vmem:[%s7 + $0xd0] sm:$0xff]
      %v4207 = vld [vmem:[%s7 + $0xd8] sm:$0xff]
      %v4208 = vld [vmem:[%s7 + $0xe0] sm:$0xff]
      %v4209 = vld [vmem:[%s7 + $0xe8] sm:$0xff]
      %v4210 = vld [vmem:[%s7 + $0xf0] sm:$0xff]
      %v4211 = vld [vmem:[%s7 + $0xf8] sm:$0xff]
      %v4212 = vld [vmem:[%s8] sm:$0xf]
      %v4245 = vunpack.c.l.b16 %v4180
      %v4246 = vunpack.c.h.b16 %v4180
      %v4247 = vunpack.c.l.b16 %v4181
      %v4248 = vunpack.c.h.b16 %v4181
      %v4249 = vunpack.c.l.b16 %v4182
      %v4250 = vunpack.c.h.b16 %v4182
      %v4251 = vunpack.c.l.b16 %v4183
      %v4252 = vunpack.c.h.b16 %v4183
      %v4253 = vunpack.c.l.b16 %v4184
      %v4254 = vunpack.c.h.b16 %v4184
      %v4255 = vunpack.c.l.b16 %v4185
      %v4256 = vunpack.c.h.b16 %v4185
      %v4257 = vunpack.c.l.b16 %v4186
      %v4258 = vunpack.c.h.b16 %v4186
      %v4259 = vunpack.c.l.b16 %v4187
      %v4260 = vunpack.c.h.b16 %v4187
      %v4261 = vunpack.c.l.b16 %v4188
      %v4262 = vunpack.c.h.b16 %v4188
      %v4263 = vunpack.c.l.b16 %v4189
      %v4264 = vunpack.c.h.b16 %v4189
      %v4265 = vunpack.c.l.b16 %v4190
      %v4266 = vunpack.c.h.b16 %v4190
      %v4267 = vunpack.c.l.b16 %v4191
      %v4268 = vunpack.c.h.b16 %v4191
      %v4269 = vunpack.c.l.b16 %v4192
      %v4270 = vunpack.c.h.b16 %v4192
      %v4271 = vunpack.c.l.b16 %v4193
      %v4272 = vunpack.c.h.b16 %v4193
      %v4273 = vunpack.c.l.b16 %v4194
      %v4274 = vunpack.c.h.b16 %v4194
      %v4275 = vunpack.c.l.b16 %v4195
      %v4276 = vunpack.c.h.b16 %v4195
      %v4277 = vunpack.c.l.b16 %v4196
      %v4278 = vunpack.c.h.b16 %v4196
      %v4279 = vunpack.c.l.b16 %v4197
      %v4280 = vunpack.c.h.b16 %v4197
      %v4281 = vunpack.c.l.b16 %v4198
      %v4282 = vunpack.c.h.b16 %v4198
      %v4283 = vunpack.c.l.b16 %v4199
      %v4284 = vunpack.c.h.b16 %v4199
      %v4285 = vunpack.c.l.b16 %v4200
      %v4286 = vunpack.c.h.b16 %v4200
      %v4287 = vunpack.c.l.b16 %v4201
      %v4288 = vunpack.c.h.b16 %v4201
      %v4289 = vunpack.c.l.b16 %v4202
      %v4290 = vunpack.c.h.b16 %v4202
      %v4291 = vunpack.c.l.b16 %v4203
      %v4292 = vunpack.c.h.b16 %v4203
      %v4293 = vunpack.c.l.b16 %v4204
      %v4294 = vunpack.c.h.b16 %v4204
      %v4295 = vunpack.c.l.b16 %v4205
      %v4296 = vunpack.c.h.b16 %v4205
      %v4297 = vunpack.c.l.b16 %v4206
      %v4298 = vunpack.c.h.b16 %v4206
      %v4299 = vunpack.c.l.b16 %v4207
      %v4300 = vunpack.c.h.b16 %v4207
      %v4301 = vunpack.c.l.b16 %v4208
      %v4302 = vunpack.c.h.b16 %v4208
      %v4303 = vunpack.c.l.b16 %v4209
      %v4304 = vunpack.c.h.b16 %v4209
      %v4305 = vunpack.c.l.b16 %v4210
      %v4306 = vunpack.c.h.b16 %v4210
      %v4307 = vunpack.c.l.b16 %v4211
      %v4308 = vunpack.c.h.b16 %v4211
      %v4309 = vpack.c.b16 %v4249, %v4245
      %v4310 = vpack.c.b16 %v4250, %v4246
      %v4311 = vpack.c.b16 %v4251, %v4247
      %v4312 = vpack.c.b16 %v4252, %v4248
      %v4313 = vpack.c.b16 %v4257, %v4253
      %v4314 = vpack.c.b16 %v4258, %v4254
      %v4315 = vpack.c.b16 %v4259, %v4255
      %v4316 = vpack.c.b16 %v4260, %v4256
      %v4317 = vpack.c.b16 %v4265, %v4261
      %v4318 = vpack.c.b16 %v4266, %v4262
      %v4319 = vpack.c.b16 %v4267, %v4263
      %v4320 = vpack.c.b16 %v4268, %v4264
      %v4321 = vpack.c.b16 %v4273, %v4269
      %v4322 = vpack.c.b16 %v4274, %v4270
      %v4323 = vpack.c.b16 %v4275, %v4271
      %v4324 = vpack.c.b16 %v4276, %v4272
      %v4325 = vpack.c.b16 %v4281, %v4277
      %v4326 = vpack.c.b16 %v4282, %v4278
      %v4327 = vpack.c.b16 %v4283, %v4279
      %v4328 = vpack.c.b16 %v4284, %v4280
      %v4329 = vpack.c.b16 %v4289, %v4285
      %v4330 = vpack.c.b16 %v4290, %v4286
      %v4331 = vpack.c.b16 %v4291, %v4287
      %v4332 = vpack.c.b16 %v4292, %v4288
      %v4333 = vpack.c.b16 %v4297, %v4293
      %v4334 = vpack.c.b16 %v4298, %v4294
      %v4335 = vpack.c.b16 %v4299, %v4295
      %v4336 = vpack.c.b16 %v4300, %v4296
      %v4337 = vpack.c.b16 %v4305, %v4301
      %v4338 = vpack.c.b16 %v4306, %v4302
      %v4339 = vpack.c.b16 %v4307, %v4303
      %v4340 = vpack.c.b16 %v4308, %v4304
      %v4374 = vlaneseq
      %v4375 = vshrl.u32 %v4374, 7
      %v4376 = vsub.s32 0, %v4375
      %v4377 = vrot.slane %v4212, %v4376
      %v4378 = vlaneseq
      %v4379 = vshrl.u32 %v4378, 7
      %v4380 = vsub.s32 1, %v4379
      %v4381 = vrot.slane %v4212, %v4380
      %v4382 = vlaneseq
      %v4383 = vshrl.u32 %v4382, 7
      %v4384 = vsub.s32 2, %v4383
      %v4385 = vrot.slane %v4212, %v4384
      %v4386 = vlaneseq
      %v4387 = vshrl.u32 %v4386, 7
      %v4388 = vsub.s32 3, %v4387
      %v4389 = vrot.slane %v4212, %v4388
      %4394 = vmatprep.subr.bf16.mxu0 %v4310
      %4395 = vmatpush1.bf16.msra.mxu0 %v4309
      %4396 = vmatprep.subr.bf16.mxu0 %v4314
      %4397 = vmatpush1.bf16.msra.mxu0 %v4313
      %4398 = vmatprep.subr.bf16.mxu0 %v4318
      %4399 = vmatpush1.bf16.msra.mxu0 %v4317
      %4400 = vmatprep.subr.bf16.mxu0 %v4322
      %4401 = vmatpush1.bf16.msra.mxu0 %v4321
      %4402 = vmatprep.subr.bf16.mxu0 %v4326
      %4403 = vmatpush1.bf16.msra.mxu0 %v4325
      %4404 = vmatprep.subr.bf16.mxu0 %v4330
      %4405 = vmatpush1.bf16.msra.mxu0 %v4329
      %4406 = vmatprep.subr.bf16.mxu0 %v4334
      %4407 = vmatpush1.bf16.msra.mxu0 %v4333
      %4408 = vmatprep.subr.bf16.mxu0 %v4338
      %4409 = vmatpush1.bf16.msra.mxu0 %v4337
      %4410 = vmatprep.subr.bf16.mxu0 0
      %4411 = vmatpush1.bf16.msra.mxu0 0
      %4412 = vmatprep.subr.bf16.mxu0 0
      %4413 = vmatpush1.bf16.msra.mxu0 0
      %4414 = vmatprep.subr.bf16.mxu0 0
      %4415 = vmatpush1.bf16.msra.mxu0 0
      %4416 = vmatprep.subr.bf16.mxu0 0
      %4417 = vmatpush1.bf16.msra.mxu0 0
      %4418 = vmatprep.subr.bf16.mxu0 0
      %4419 = vmatpush1.bf16.msra.mxu0 0
      %4420 = vmatprep.subr.bf16.mxu0 0
      %4421 = vmatpush1.bf16.msra.mxu0 0
      %4422 = vmatprep.subr.bf16.mxu0 0
      %4423 = vmatpush1.bf16.msra.mxu0 0
      %4424 = vmatprep.subr.bf16.mxu0 0
      %4425 = vmatpush1.bf16.msra.mxu0 0
      %4426 = vmatprep.mubr.bf16.mxu0 0
      %4427 = vmatmul.mubr.bf16.gmra.mrb[0].mxu0 %v4179
      %v4428 = vpop.f32.mrb[0].mxu0
      %v4429 = vadd.f32 %v4377, %v4428
      %v4430 = vpop.f32.mrb[0].mxu0
      %v4431 = vadd.f32 %v4381, %v4430
      %v4432 = vpop.f32.mrb[0].mxu0
      %v4433 = vpop.f32.mrb[0].mxu0
      %4434 = vdwg.mxu0
      %4435 = vmatprep.subr.bf16.mxu0 %v4312
      %4436 = vmatpush1.bf16.msra.mxu0 %v4311
      %4437 = vmatprep.subr.bf16.mxu0 %v4316
      %4438 = vmatpush1.bf16.msra.mxu0 %v4315
      %4439 = vmatprep.subr.bf16.mxu0 %v4320
      %4440 = vmatpush1.bf16.msra.mxu0 %v4319
      %4441 = vmatprep.subr.bf16.mxu0 %v4324
      %4442 = vmatpush1.bf16.msra.mxu0 %v4323
      %4443 = vmatprep.subr.bf16.mxu0 %v4328
      %4444 = vmatpush1.bf16.msra.mxu0 %v4327
      %4445 = vmatprep.subr.bf16.mxu0 %v4332
      %4446 = vmatpush1.bf16.msra.mxu0 %v4331
      %4447 = vmatprep.subr.bf16.mxu0 %v4336
      %4448 = vmatpush1.bf16.msra.mxu0 %v4335
      %4449 = vmatprep.subr.bf16.mxu0 %v4340
      %4450 = vmatpush1.bf16.msra.mxu0 %v4339
      %4451 = vmatprep.subr.bf16.mxu0 0
      %4452 = vmatpush1.bf16.msra.mxu0 0
      %4453 = vmatprep.subr.bf16.mxu0 0
      %4454 = vmatpush1.bf16.msra.mxu0 0
      %4455 = vmatprep.subr.bf16.mxu0 0
      %4456 = vmatpush1.bf16.msra.mxu0 0
      %4457 = vmatprep.subr.bf16.mxu0 0
      %4458 = vmatpush1.bf16.msra.mxu0 0
      %4459 = vmatprep.subr.bf16.mxu0 0
      %4460 = vmatpush1.bf16.msra.mxu0 0
      %4461 = vmatprep.subr.bf16.mxu0 0
      %4462 = vmatpush1.bf16.msra.mxu0 0
      %4463 = vmatprep.subr.bf16.mxu0 0
      %4464 = vmatpush1.bf16.msra.mxu0 0
      %4465 = vmatprep.subr.bf16.mxu0 0
      %4466 = vmatpush1.bf16.msra.mxu0 0
      %4467 = vmatprep.mubr.bf16.mxu0 0
      %4468 = vmatmul.mubr.bf16.gmra.mrb[0].mxu0 %v4179
      %v4469 = vpop.f32.mrb[0].mxu0
      %v4470 = vadd.f32 %v4385, %v4469
      %v4471 = vpop.f32.mrb[0].mxu0
      %v4472 = vadd.f32 %v4389, %v4471
      %v4473 = vpop.f32.mrb[0].mxu0
      %v4474 = vpop.f32.mrb[0].mxu0
      %4475 = vdwg.mxu0
      %v4476 = vxor.u32 %v4429, 2147483648
      %v4477 = vxor.u32 %v4431, 2147483648
      %v4478 = vxor.u32 %v4470, 2147483648
      %v4479 = vxor.u32 %v4472, 2147483648
      %v4480 = vmul.f32 %v4476, 1.442695
      %v4481 = vpow.pop %v4480
      %v4482 = vmul.f32 %v4477, 1.442695
      %v4483 = vpow.pop %v4482
      %v4484 = vmul.f32 %v4478, 1.442695
      %v4485 = vpow.pop %v4484
      %v4486 = vmul.f32 %v4479, 1.442695
      %v4487 = vpow.pop %v4486
      %v4488 = vadd.f32 %v4481, 1.0
      %v4489 = vadd.f32 %v4483, 1.0
      %v4490 = vadd.f32 %v4485, 1.0
      %v4491 = vadd.f32 %v4487, 1.0
      %v4492 = vrcp.pop %v4488
      %v4493 = vmul.f32 1.0, %v4492
      %v4494 = vrcp.pop %v4489
      %v4495 = vmul.f32 1.0, %v4494
      %v4496 = vrcp.pop %v4490
      %v4497 = vmul.f32 1.0, %v4496
      %v4498 = vrcp.pop %v4491
      %v4499 = vmul.f32 1.0, %v4498
      %4501 = vset.pattern.permute.xlu0 0
      %4502 = vperm.xlu0 %4501, %v3771
      %v4503 = vpop.permute.xlu0 %4502
      %v4504 = vrot.slane %v4503, 3
      %v4506 = vmul.f32 %v3772, %v4504
      %v4507 = vmul.f32 %v3773, %v4504
      %v4508 = vmul.f32 %v3774, %v4504
      %v4509 = vmul.f32 %v3775, %v4504
      %v4510 = vmul.f32 %v3776, %v4504
      %v4511 = vmul.f32 %v3777, %v4504
      %v4512 = vmul.f32 %v3778, %v4504
      %v4513 = vmul.f32 %v3779, %v4504
      %v4522 = vrot.slane %v4506, 5
      %v4523 = vrot.slane %v4510, 5
      %v4524 = vsel %vm3788, %v4522, %v4523
      %v4525 = vrot.slane %v4507, 5
      %v4526 = vrot.slane %v4511, 5
      %v4527 = vsel %vm3788, %v4525, %v4526
      %v4528 = vrot.slane %v4508, 5
      %v4529 = vrot.slane %v4512, 5
      %v4530 = vsel %vm3788, %v4528, %v4529
      %v4531 = vrot.slane %v4509, 5
      %v4532 = vrot.slane %v4513, 5
      %v4533 = vsel %vm3788, %v4531, %v4532
      %v4538 = vsel %vm3754, %v4524, 0.0
      %v4539 = vrot.slane %v4538, 4
      %v4540 = vadd.f32 %v4538, %v4539
      %v4541 = vrot.slane %v4540, 2
      %v4542 = vadd.f32 %v4540, %v4541
      %v4543 = vrot.slane %v4542, 1
      %v4544 = vadd.f32 %v4542, %v4543
      %v4545 = vsel %vm3754, %v4527, 0.0
      %v4546 = vrot.slane %v4545, 4
      %v4547 = vadd.f32 %v4545, %v4546
      %v4548 = vrot.slane %v4547, 2
      %v4549 = vadd.f32 %v4547, %v4548
      %v4550 = vrot.slane %v4549, 1
      %v4551 = vadd.f32 %v4549, %v4550
      %v4552 = vsel %vm3754, %v4530, 0.0
      %v4553 = vrot.slane %v4552, 4
      %v4554 = vadd.f32 %v4552, %v4553
      %v4555 = vrot.slane %v4554, 2
      %v4556 = vadd.f32 %v4554, %v4555
      %v4557 = vrot.slane %v4556, 1
      %v4558 = vadd.f32 %v4556, %v4557
      %v4559 = vsel %vm3754, %v4533, 0.0
      %v4560 = vrot.slane %v4559, 4
      %v4561 = vadd.f32 %v4559, %v4560
      %v4562 = vrot.slane %v4561, 2
      %v4563 = vadd.f32 %v4561, %v4562
      %v4564 = vrot.slane %v4563, 1
      %v4565 = vadd.f32 %v4563, %v4564
      %v4566 = vmul.f32 %v4544, 0.25
      %v4567 = vmul.f32 %v4551, 0.25
      %v4568 = vmul.f32 %v4558, 0.25
      %v4569 = vmul.f32 %v4565, 0.25
      %v4570 = vmul.f32 %v4566, %v4493
      %v4571 = vmul.f32 %v4567, %v4495
      %v4572 = vmul.f32 %v4568, %v4497
      %v4573 = vmul.f32 %v4569, %v4499
      %v4574 = vpack.c.bf16 %v4570, %v4570
      %v4575 = vpack.c.bf16 %v4571, %v4571
      %v4576 = vpack.c.bf16 %v4572, %v4572
      %v4577 = vpack.c.bf16 %v4573, %v4573
      %v4578 = vld [vmem:[%s9] sm:$0xff]
      %v4579 = vld [vmem:[%s9 + $0x8] sm:$0xff]
      %v4580 = vld [vmem:[%s9 + $0x10] sm:$0xff]
      %v4581 = vld [vmem:[%s9 + $0x18] sm:$0xff]
      %v4582 = vld [vmem:[%s9 + $0x20] sm:$0xff]
      %v4583 = vld [vmem:[%s9 + $0x28] sm:$0xff]
      %v4584 = vld [vmem:[%s9 + $0x30] sm:$0xff]
      %v4585 = vld [vmem:[%s9 + $0x38] sm:$0xff]
      %v4586 = vld [vmem:[%s9 + $0x40] sm:$0xff]
      %v4587 = vld [vmem:[%s9 + $0x48] sm:$0xff]
      %v4588 = vld [vmem:[%s9 + $0x50] sm:$0xff]
      %v4589 = vld [vmem:[%s9 + $0x58] sm:$0xff]
      %v4590 = vld [vmem:[%s9 + $0x60] sm:$0xff]
      %v4591 = vld [vmem:[%s9 + $0x68] sm:$0xff]
      %v4592 = vld [vmem:[%s9 + $0x70] sm:$0xff]
      %v4593 = vld [vmem:[%s9 + $0x78] sm:$0xff]
      %v4594 = vld [vmem:[%s9 + $0x80] sm:$0xff]
      %v4595 = vld [vmem:[%s9 + $0x88] sm:$0xff]
      %v4596 = vld [vmem:[%s9 + $0x90] sm:$0xff]
      %v4597 = vld [vmem:[%s9 + $0x98] sm:$0xff]
      %v4598 = vld [vmem:[%s9 + $0xa0] sm:$0xff]
      %v4599 = vld [vmem:[%s9 + $0xa8] sm:$0xff]
      %v4600 = vld [vmem:[%s9 + $0xb0] sm:$0xff]
      %v4601 = vld [vmem:[%s9 + $0xb8] sm:$0xff]
      %v4602 = vld [vmem:[%s9 + $0xc0] sm:$0xff]
      %v4603 = vld [vmem:[%s9 + $0xc8] sm:$0xff]
      %v4604 = vld [vmem:[%s9 + $0xd0] sm:$0xff]
      %v4605 = vld [vmem:[%s9 + $0xd8] sm:$0xff]
      %v4606 = vld [vmem:[%s9 + $0xe0] sm:$0xff]
      %v4607 = vld [vmem:[%s9 + $0xe8] sm:$0xff]
      %v4608 = vld [vmem:[%s9 + $0xf0] sm:$0xff]
      %v4609 = vld [vmem:[%s9 + $0xf8] sm:$0xff]
      %v4610 = vld [vmem:[%s9 + $0x100] sm:$0xff]
      %v4611 = vld [vmem:[%s9 + $0x108] sm:$0xff]
      %v4612 = vld [vmem:[%s9 + $0x110] sm:$0xff]
      %v4613 = vld [vmem:[%s9 + $0x118] sm:$0xff]
      %v4614 = vld [vmem:[%s9 + $0x120] sm:$0xff]
      %v4615 = vld [vmem:[%s9 + $0x128] sm:$0xff]
      %v4616 = vld [vmem:[%s9 + $0x130] sm:$0xff]
      %v4617 = vld [vmem:[%s9 + $0x138] sm:$0xff]
      %v4618 = vld [vmem:[%s9 + $0x140] sm:$0xff]
      %v4619 = vld [vmem:[%s9 + $0x148] sm:$0xff]
      %v4620 = vld [vmem:[%s9 + $0x150] sm:$0xff]
      %v4621 = vld [vmem:[%s9 + $0x158] sm:$0xff]
      %v4622 = vld [vmem:[%s9 + $0x160] sm:$0xff]
      %v4623 = vld [vmem:[%s9 + $0x168] sm:$0xff]
      %v4624 = vld [vmem:[%s9 + $0x170] sm:$0xff]
      %v4625 = vld [vmem:[%s9 + $0x178] sm:$0xff]
      %v4626 = vld [vmem:[%s9 + $0x180] sm:$0xff]
      %v4627 = vld [vmem:[%s9 + $0x188] sm:$0xff]
      %v4628 = vld [vmem:[%s9 + $0x190] sm:$0xff]
      %v4629 = vld [vmem:[%s9 + $0x198] sm:$0xff]
      %v4630 = vld [vmem:[%s9 + $0x1a0] sm:$0xff]
      %v4631 = vld [vmem:[%s9 + $0x1a8] sm:$0xff]
      %v4632 = vld [vmem:[%s9 + $0x1b0] sm:$0xff]
      %v4633 = vld [vmem:[%s9 + $0x1b8] sm:$0xff]
      %v4634 = vld [vmem:[%s9 + $0x1c0] sm:$0xff]
      %v4635 = vld [vmem:[%s9 + $0x1c8] sm:$0xff]
      %v4636 = vld [vmem:[%s9 + $0x1d0] sm:$0xff]
      %v4637 = vld [vmem:[%s9 + $0x1d8] sm:$0xff]
      %v4638 = vld [vmem:[%s9 + $0x1e0] sm:$0xff]
      %v4639 = vld [vmem:[%s9 + $0x1e8] sm:$0xff]
      %v4640 = vld [vmem:[%s9 + $0x1f0] sm:$0xff]
      %v4641 = vld [vmem:[%s9 + $0x1f8] sm:$0xff]
      %v4642 = vld [vmem:[%s9 + $0x200] sm:$0xff]
      %v4643 = vld [vmem:[%s9 + $0x208] sm:$0xff]
      %v4644 = vld [vmem:[%s9 + $0x210] sm:$0xff]
      %v4645 = vld [vmem:[%s9 + $0x218] sm:$0xff]
      %v4646 = vld [vmem:[%s9 + $0x220] sm:$0xff]
      %v4647 = vld [vmem:[%s9 + $0x228] sm:$0xff]
      %v4648 = vld [vmem:[%s9 + $0x230] sm:$0xff]
      %v4649 = vld [vmem:[%s9 + $0x238] sm:$0xff]
      %v4650 = vld [vmem:[%s9 + $0x240] sm:$0xff]
      %v4651 = vld [vmem:[%s9 + $0x248] sm:$0xff]
      %v4652 = vld [vmem:[%s9 + $0x250] sm:$0xff]
      %v4653 = vld [vmem:[%s9 + $0x258] sm:$0xff]
      %v4654 = vld [vmem:[%s9 + $0x260] sm:$0xff]
      %v4655 = vld [vmem:[%s9 + $0x268] sm:$0xff]
      %v4656 = vld [vmem:[%s9 + $0x270] sm:$0xff]
      %v4657 = vld [vmem:[%s9 + $0x278] sm:$0xff]
      %v4658 = vld [vmem:[%s9 + $0x280] sm:$0xff]
      %v4659 = vld [vmem:[%s9 + $0x288] sm:$0xff]
      %v4660 = vld [vmem:[%s9 + $0x290] sm:$0xff]
      %v4661 = vld [vmem:[%s9 + $0x298] sm:$0xff]
      %v4662 = vld [vmem:[%s9 + $0x2a0] sm:$0xff]
      %v4663 = vld [vmem:[%s9 + $0x2a8] sm:$0xff]
      %v4664 = vld [vmem:[%s9 + $0x2b0] sm:$0xff]
      %v4665 = vld [vmem:[%s9 + $0x2b8] sm:$0xff]
      %v4666 = vld [vmem:[%s9 + $0x2c0] sm:$0xff]
      %v4667 = vld [vmem:[%s9 + $0x2c8] sm:$0xff]
      %v4668 = vld [vmem:[%s9 + $0x2d0] sm:$0xff]
      %v4669 = vld [vmem:[%s9 + $0x2d8] sm:$0xff]
      %v4670 = vld [vmem:[%s9 + $0x2e0] sm:$0xff]
      %v4671 = vld [vmem:[%s9 + $0x2e8] sm:$0xff]
      %v4672 = vld [vmem:[%s9 + $0x2f0] sm:$0xff]
      %v4673 = vld [vmem:[%s9 + $0x2f8] sm:$0xff]
      %v4674 = vld [vmem:[%s9 + $0x300] sm:$0xff]
      %v4675 = vld [vmem:[%s9 + $0x308] sm:$0xff]
      %v4676 = vld [vmem:[%s9 + $0x310] sm:$0xff]
      %v4677 = vld [vmem:[%s9 + $0x318] sm:$0xff]
      %v4678 = vld [vmem:[%s9 + $0x320] sm:$0xff]
      %v4679 = vld [vmem:[%s9 + $0x328] sm:$0xff]
      %v4680 = vld [vmem:[%s9 + $0x330] sm:$0xff]
      %v4681 = vld [vmem:[%s9 + $0x338] sm:$0xff]
      %v4682 = vld [vmem:[%s9 + $0x340] sm:$0xff]
      %v4683 = vld [vmem:[%s9 + $0x348] sm:$0xff]
      %v4684 = vld [vmem:[%s9 + $0x350] sm:$0xff]
      %v4685 = vld [vmem:[%s9 + $0x358] sm:$0xff]
      %v4686 = vld [vmem:[%s9 + $0x360] sm:$0xff]
      %v4687 = vld [vmem:[%s9 + $0x368] sm:$0xff]
      %v4688 = vld [vmem:[%s9 + $0x370] sm:$0xff]
      %v4689 = vld [vmem:[%s9 + $0x378] sm:$0xff]
      %v4690 = vld [vmem:[%s9 + $0x380] sm:$0xff]
      %v4691 = vld [vmem:[%s9 + $0x388] sm:$0xff]
      %v4692 = vld [vmem:[%s9 + $0x390] sm:$0xff]
      %v4693 = vld [vmem:[%s9 + $0x398] sm:$0xff]
      %v4694 = vld [vmem:[%s9 + $0x3a0] sm:$0xff]
      %v4695 = vld [vmem:[%s9 + $0x3a8] sm:$0xff]
      %v4696 = vld [vmem:[%s9 + $0x3b0] sm:$0xff]
      %v4697 = vld [vmem:[%s9 + $0x3b8] sm:$0xff]
      %v4698 = vld [vmem:[%s9 + $0x3c0] sm:$0xff]
      %v4699 = vld [vmem:[%s9 + $0x3c8] sm:$0xff]
      %v4700 = vld [vmem:[%s9 + $0x3d0] sm:$0xff]
      %v4701 = vld [vmem:[%s9 + $0x3d8] sm:$0xff]
      %v4702 = vld [vmem:[%s9 + $0x3e0] sm:$0xff]
      %v4703 = vld [vmem:[%s9 + $0x3e8] sm:$0xff]
      %v4704 = vld [vmem:[%s9 + $0x3f0] sm:$0xff]
      %v4705 = vld [vmem:[%s9 + $0x3f8] sm:$0xff]
      %v4706 = vld [vmem:[%s10] sm:$0xf]
      %v4835 = vunpack.c.l.b16 %v4578
      %v4836 = vunpack.c.h.b16 %v4578
      %v4837 = vunpack.c.l.b16 %v4579
      %v4838 = vunpack.c.h.b16 %v4579
      %v4839 = vunpack.c.l.b16 %v4580
      %v4840 = vunpack.c.h.b16 %v4580
      %v4841 = vunpack.c.l.b16 %v4581
      %v4842 = vunpack.c.h.b16 %v4581
      %v4843 = vunpack.c.l.b16 %v4582
      %v4844 = vunpack.c.h.b16 %v4582
      %v4845 = vunpack.c.l.b16 %v4583
      %v4846 = vunpack.c.h.b16 %v4583
      %v4847 = vunpack.c.l.b16 %v4584
      %v4848 = vunpack.c.h.b16 %v4584
      %v4849 = vunpack.c.l.b16 %v4585
      %v4850 = vunpack.c.h.b16 %v4585
      %v4851 = vunpack.c.l.b16 %v4586
      %v4852 = vunpack.c.h.b16 %v4586
      %v4853 = vunpack.c.l.b16 %v4587
      %v4854 = vunpack.c.h.b16 %v4587
      %v4855 = vunpack.c.l.b16 %v4588
      %v4856 = vunpack.c.h.b16 %v4588
      %v4857 = vunpack.c.l.b16 %v4589
      %v4858 = vunpack.c.h.b16 %v4589
      %v4859 = vunpack.c.l.b16 %v4590
      %v4860 = vunpack.c.h.b16 %v4590
      %v4861 = vunpack.c.l.b16 %v4591
      %v4862 = vunpack.c.h.b16 %v4591
      %v4863 = vunpack.c.l.b16 %v4592
      %v4864 = vunpack.c.h.b16 %v4592
      %v4865 = vunpack.c.l.b16 %v4593
      %v4866 = vunpack.c.h.b16 %v4593
      %v4867 = vunpack.c.l.b16 %v4594
      %v4868 = vunpack.c.h.b16 %v4594
      %v4869 = vunpack.c.l.b16 %v4595
      %v4870 = vunpack.c.h.b16 %v4595
      %v4871 = vunpack.c.l.b16 %v4596
      %v4872 = vunpack.c.h.b16 %v4596
      %v4873 = vunpack.c.l.b16 %v4597
      %v4874 = vunpack.c.h.b16 %v4597
      %v4875 = vunpack.c.l.b16 %v4598
      %v4876 = vunpack.c.h.b16 %v4598
      %v4877 = vunpack.c.l.b16 %v4599
      %v4878 = vunpack.c.h.b16 %v4599
      %v4879 = vunpack.c.l.b16 %v4600
      %v4880 = vunpack.c.h.b16 %v4600
      %v4881 = vunpack.c.l.b16 %v4601
      %v4882 = vunpack.c.h.b16 %v4601
      %v4883 = vunpack.c.l.b16 %v4602
      %v4884 = vunpack.c.h.b16 %v4602
      %v4885 = vunpack.c.l.b16 %v4603
      %v4886 = vunpack.c.h.b16 %v4603
      %v4887 = vunpack.c.l.b16 %v4604
      %v4888 = vunpack.c.h.b16 %v4604
      %v4889 = vunpack.c.l.b16 %v4605
      %v4890 = vunpack.c.h.b16 %v4605
      %v4891 = vunpack.c.l.b16 %v4606
      %v4892 = vunpack.c.h.b16 %v4606
      %v4893 = vunpack.c.l.b16 %v4607
      %v4894 = vunpack.c.h.b16 %v4607
      %v4895 = vunpack.c.l.b16 %v4608
      %v4896 = vunpack.c.h.b16 %v4608
      %v4897 = vunpack.c.l.b16 %v4609
      %v4898 = vunpack.c.h.b16 %v4609
      %v4899 = vunpack.c.l.b16 %v4610
      %v4900 = vunpack.c.h.b16 %v4610
      %v4901 = vunpack.c.l.b16 %v4611
      %v4902 = vunpack.c.h.b16 %v4611
      %v4903 = vunpack.c.l.b16 %v4612
      %v4904 = vunpack.c.h.b16 %v4612
      %v4905 = vunpack.c.l.b16 %v4613
      %v4906 = vunpack.c.h.b16 %v4613
      %v4907 = vunpack.c.l.b16 %v4614
      %v4908 = vunpack.c.h.b16 %v4614
      %v4909 = vunpack.c.l.b16 %v4615
      %v4910 = vunpack.c.h.b16 %v4615
      %v4911 = vunpack.c.l.b16 %v4616
      %v4912 = vunpack.c.h.b16 %v4616
      %v4913 = vunpack.c.l.b16 %v4617
      %v4914 = vunpack.c.h.b16 %v4617
      %v4915 = vunpack.c.l.b16 %v4618
      %v4916 = vunpack.c.h.b16 %v4618
      %v4917 = vunpack.c.l.b16 %v4619
      %v4918 = vunpack.c.h.b16 %v4619
      %v4919 = vunpack.c.l.b16 %v4620
      %v4920 = vunpack.c.h.b16 %v4620
      %v4921 = vunpack.c.l.b16 %v4621
      %v4922 = vunpack.c.h.b16 %v4621
      %v4923 = vunpack.c.l.b16 %v4622
      %v4924 = vunpack.c.h.b16 %v4622
      %v4925 = vunpack.c.l.b16 %v4623
      %v4926 = vunpack.c.h.b16 %v4623
      %v4927 = vunpack.c.l.b16 %v4624
      %v4928 = vunpack.c.h.b16 %v4624
      %v4929 = vunpack.c.l.b16 %v4625
      %v4930 = vunpack.c.h.b16 %v4625
      %v4931 = vunpack.c.l.b16 %v4626
      %v4932 = vunpack.c.h.b16 %v4626
      %v4933 = vunpack.c.l.b16 %v4627
      %v4934 = vunpack.c.h.b16 %v4627
      %v4935 = vunpack.c.l.b16 %v4628
      %v4936 = vunpack.c.h.b16 %v4628
      %v4937 = vunpack.c.l.b16 %v4629
      %v4938 = vunpack.c.h.b16 %v4629
      %v4939 = vunpack.c.l.b16 %v4630
      %v4940 = vunpack.c.h.b16 %v4630
      %v4941 = vunpack.c.l.b16 %v4631
      %v4942 = vunpack.c.h.b16 %v4631
      %v4943 = vunpack.c.l.b16 %v4632
      %v4944 = vunpack.c.h.b16 %v4632
      %v4945 = vunpack.c.l.b16 %v4633
      %v4946 = vunpack.c.h.b16 %v4633
      %v4947 = vunpack.c.l.b16 %v4634
      %v4948 = vunpack.c.h.b16 %v4634
      %v4949 = vunpack.c.l.b16 %v4635
      %v4950 = vunpack.c.h.b16 %v4635
      %v4951 = vunpack.c.l.b16 %v4636
      %v4952 = vunpack.c.h.b16 %v4636
      %v4953 = vunpack.c.l.b16 %v4637
      %v4954 = vunpack.c.h.b16 %v4637
      %v4955 = vunpack.c.l.b16 %v4638
      %v4956 = vunpack.c.h.b16 %v4638
      %v4957 = vunpack.c.l.b16 %v4639
      %v4958 = vunpack.c.h.b16 %v4639
      %v4959 = vunpack.c.l.b16 %v4640
      %v4960 = vunpack.c.h.b16 %v4640
      %v4961 = vunpack.c.l.b16 %v4641
      %v4962 = vunpack.c.h.b16 %v4641
      %v4963 = vunpack.c.l.b16 %v4642
      %v4964 = vunpack.c.h.b16 %v4642
      %v4965 = vunpack.c.l.b16 %v4643
      %v4966 = vunpack.c.h.b16 %v4643
      %v4967 = vunpack.c.l.b16 %v4644
      %v4968 = vunpack.c.h.b16 %v4644
      %v4969 = vunpack.c.l.b16 %v4645
      %v4970 = vunpack.c.h.b16 %v4645
      %v4971 = vunpack.c.l.b16 %v4646
      %v4972 = vunpack.c.h.b16 %v4646
      %v4973 = vunpack.c.l.b16 %v4647
      %v4974 = vunpack.c.h.b16 %v4647
      %v4975 = vunpack.c.l.b16 %v4648
      %v4976 = vunpack.c.h.b16 %v4648
      %v4977 = vunpack.c.l.b16 %v4649
      %v4978 = vunpack.c.h.b16 %v4649
      %v4979 = vunpack.c.l.b16 %v4650
      %v4980 = vunpack.c.h.b16 %v4650
      %v4981 = vunpack.c.l.b16 %v4651
      %v4982 = vunpack.c.h.b16 %v4651
      %v4983 = vunpack.c.l.b16 %v4652
      %v4984 = vunpack.c.h.b16 %v4652
      %v4985 = vunpack.c.l.b16 %v4653
      %v4986 = vunpack.c.h.b16 %v4653
      %v4987 = vunpack.c.l.b16 %v4654
      %v4988 = vunpack.c.h.b16 %v4654
      %v4989 = vunpack.c.l.b16 %v4655
      %v4990 = vunpack.c.h.b16 %v4655
      %v4991 = vunpack.c.l.b16 %v4656
      %v4992 = vunpack.c.h.b16 %v4656
      %v4993 = vunpack.c.l.b16 %v4657
      %v4994 = vunpack.c.h.b16 %v4657
      %v4995 = vunpack.c.l.b16 %v4658
      %v4996 = vunpack.c.h.b16 %v4658
      %v4997 = vunpack.c.l.b16 %v4659
      %v4998 = vunpack.c.h.b16 %v4659
      %v4999 = vunpack.c.l.b16 %v4660
      %v5000 = vunpack.c.h.b16 %v4660
      %v5001 = vunpack.c.l.b16 %v4661
      %v5002 = vunpack.c.h.b16 %v4661
      %v5003 = vunpack.c.l.b16 %v4662
      %v5004 = vunpack.c.h.b16 %v4662
      %v5005 = vunpack.c.l.b16 %v4663
      %v5006 = vunpack.c.h.b16 %v4663
      %v5007 = vunpack.c.l.b16 %v4664
      %v5008 = vunpack.c.h.b16 %v4664
      %v5009 = vunpack.c.l.b16 %v4665
      %v5010 = vunpack.c.h.b16 %v4665
      %v5011 = vunpack.c.l.b16 %v4666
      %v5012 = vunpack.c.h.b16 %v4666
      %v5013 = vunpack.c.l.b16 %v4667
      %v5014 = vunpack.c.h.b16 %v4667
      %v5015 = vunpack.c.l.b16 %v4668
      %v5016 = vunpack.c.h.b16 %v4668
      %v5017 = vunpack.c.l.b16 %v4669
      %v5018 = vunpack.c.h.b16 %v4669
      %v5019 = vunpack.c.l.b16 %v4670
      %v5020 = vunpack.c.h.b16 %v4670
      %v5021 = vunpack.c.l.b16 %v4671
      %v5022 = vunpack.c.h.b16 %v4671
      %v5023 = vunpack.c.l.b16 %v4672
      %v5024 = vunpack.c.h.b16 %v4672
      %v5025 = vunpack.c.l.b16 %v4673
      %v5026 = vunpack.c.h.b16 %v4673
      %v5027 = vunpack.c.l.b16 %v4674
      %v5028 = vunpack.c.h.b16 %v4674
      %v5029 = vunpack.c.l.b16 %v4675
      %v5030 = vunpack.c.h.b16 %v4675
      %v5031 = vunpack.c.l.b16 %v4676
      %v5032 = vunpack.c.h.b16 %v4676
      %v5033 = vunpack.c.l.b16 %v4677
      %v5034 = vunpack.c.h.b16 %v4677
      %v5035 = vunpack.c.l.b16 %v4678
      %v5036 = vunpack.c.h.b16 %v4678
      %v5037 = vunpack.c.l.b16 %v4679
      %v5038 = vunpack.c.h.b16 %v4679
      %v5039 = vunpack.c.l.b16 %v4680
      %v5040 = vunpack.c.h.b16 %v4680
      %v5041 = vunpack.c.l.b16 %v4681
      %v5042 = vunpack.c.h.b16 %v4681
      %v5043 = vunpack.c.l.b16 %v4682
      %v5044 = vunpack.c.h.b16 %v4682
      %v5045 = vunpack.c.l.b16 %v4683
      %v5046 = vunpack.c.h.b16 %v4683
      %v5047 = vunpack.c.l.b16 %v4684
      %v5048 = vunpack.c.h.b16 %v4684
      %v5049 = vunpack.c.l.b16 %v4685
      %v5050 = vunpack.c.h.b16 %v4685
      %v5051 = vunpack.c.l.b16 %v4686
      %v5052 = vunpack.c.h.b16 %v4686
      %v5053 = vunpack.c.l.b16 %v4687
      %v5054 = vunpack.c.h.b16 %v4687
      %v5055 = vunpack.c.l.b16 %v4688
      %v5056 = vunpack.c.h.b16 %v4688
      %v5057 = vunpack.c.l.b16 %v4689
      %v5058 = vunpack.c.h.b16 %v4689
      %v5059 = vunpack.c.l.b16 %v4690
      %v5060 = vunpack.c.h.b16 %v4690
      %v5061 = vunpack.c.l.b16 %v4691
      %v5062 = vunpack.c.h.b16 %v4691
      %v5063 = vunpack.c.l.b16 %v4692
      %v5064 = vunpack.c.h.b16 %v4692
      %v5065 = vunpack.c.l.b16 %v4693
      %v5066 = vunpack.c.h.b16 %v4693
      %v5067 = vunpack.c.l.b16 %v4694
      %v5068 = vunpack.c.h.b16 %v4694
      %v5069 = vunpack.c.l.b16 %v4695
      %v5070 = vunpack.c.h.b16 %v4695
      %v5071 = vunpack.c.l.b16 %v4696
      %v5072 = vunpack.c.h.b16 %v4696
      %v5073 = vunpack.c.l.b16 %v4697
      %v5074 = vunpack.c.h.b16 %v4697
      %v5075 = vunpack.c.l.b16 %v4698
      %v5076 = vunpack.c.h.b16 %v4698
      %v5077 = vunpack.c.l.b16 %v4699
      %v5078 = vunpack.c.h.b16 %v4699
      %v5079 = vunpack.c.l.b16 %v4700
      %v5080 = vunpack.c.h.b16 %v4700
      %v5081 = vunpack.c.l.b16 %v4701
      %v5082 = vunpack.c.h.b16 %v4701
      %v5083 = vunpack.c.l.b16 %v4702
      %v5084 = vunpack.c.h.b16 %v4702
      %v5085 = vunpack.c.l.b16 %v4703
      %v5086 = vunpack.c.h.b16 %v4703
      %v5087 = vunpack.c.l.b16 %v4704
      %v5088 = vunpack.c.h.b16 %v4704
      %v5089 = vunpack.c.l.b16 %v4705
      %v5090 = vunpack.c.h.b16 %v4705
      %v5091 = vpack.c.b16 %v4839, %v4835
      %v5092 = vpack.c.b16 %v4840, %v4836
      %v5093 = vpack.c.b16 %v4841, %v4837
      %v5094 = vpack.c.b16 %v4842, %v4838
      %v5095 = vpack.c.b16 %v4847, %v4843
      %v5096 = vpack.c.b16 %v4848, %v4844
      %v5097 = vpack.c.b16 %v4849, %v4845
      %v5098 = vpack.c.b16 %v4850, %v4846
      %v5099 = vpack.c.b16 %v4855, %v4851
      %v5100 = vpack.c.b16 %v4856, %v4852
      %v5101 = vpack.c.b16 %v4857, %v4853
      %v5102 = vpack.c.b16 %v4858, %v4854
      %v5103 = vpack.c.b16 %v4863, %v4859
      %v5104 = vpack.c.b16 %v4864, %v4860
      %v5105 = vpack.c.b16 %v4865, %v4861
      %v5106 = vpack.c.b16 %v4866, %v4862
      %v5107 = vpack.c.b16 %v4871, %v4867
      %v5108 = vpack.c.b16 %v4872, %v4868
      %v5109 = vpack.c.b16 %v4873, %v4869
      %v5110 = vpack.c.b16 %v4874, %v4870
      %v5111 = vpack.c.b16 %v4879, %v4875
      %v5112 = vpack.c.b16 %v4880, %v4876
      %v5113 = vpack.c.b16 %v4881, %v4877
      %v5114 = vpack.c.b16 %v4882, %v4878
      %v5115 = vpack.c.b16 %v4887, %v4883
      %v5116 = vpack.c.b16 %v4888, %v4884
      %v5117 = vpack.c.b16 %v4889, %v4885
      %v5118 = vpack.c.b16 %v4890, %v4886
      %v5119 = vpack.c.b16 %v4895, %v4891
      %v5120 = vpack.c.b16 %v4896, %v4892
      %v5121 = vpack.c.b16 %v4897, %v4893
      %v5122 = vpack.c.b16 %v4898, %v4894
      %v5123 = vpack.c.b16 %v4903, %v4899
      %v5124 = vpack.c.b16 %v4904, %v4900
      %v5125 = vpack.c.b16 %v4905, %v4901
      %v5126 = vpack.c.b16 %v4906, %v4902
      %v5127 = vpack.c.b16 %v4911, %v4907
      %v5128 = vpack.c.b16 %v4912, %v4908
      %v5129 = vpack.c.b16 %v4913, %v4909
      %v5130 = vpack.c.b16 %v4914, %v4910
      %v5131 = vpack.c.b16 %v4919, %v4915
      %v5132 = vpack.c.b16 %v4920, %v4916
      %v5133 = vpack.c.b16 %v4921, %v4917
      %v5134 = vpack.c.b16 %v4922, %v4918
      %v5135 = vpack.c.b16 %v4927, %v4923
      %v5136 = vpack.c.b16 %v4928, %v4924
      %v5137 = vpack.c.b16 %v4929, %v4925
      %v5138 = vpack.c.b16 %v4930, %v4926
      %v5139 = vpack.c.b16 %v4935, %v4931
      %v5140 = vpack.c.b16 %v4936, %v4932
      %v5141 = vpack.c.b16 %v4937, %v4933
      %v5142 = vpack.c.b16 %v4938, %v4934
      %v5143 = vpack.c.b16 %v4943, %v4939
      %v5144 = vpack.c.b16 %v4944, %v4940
      %v5145 = vpack.c.b16 %v4945, %v4941
      %v5146 = vpack.c.b16 %v4946, %v4942
      %v5147 = vpack.c.b16 %v4951, %v4947
      %v5148 = vpack.c.b16 %v4952, %v4948
      %v5149 = vpack.c.b16 %v4953, %v4949
      %v5150 = vpack.c.b16 %v4954, %v4950
      %v5151 = vpack.c.b16 %v4959, %v4955
      %v5152 = vpack.c.b16 %v4960, %v4956
      %v5153 = vpack.c.b16 %v4961, %v4957
      %v5154 = vpack.c.b16 %v4962, %v4958
      %v5155 = vpack.c.b16 %v4967, %v4963
      %v5156 = vpack.c.b16 %v4968, %v4964
      %v5157 = vpack.c.b16 %v4969, %v4965
      %v5158 = vpack.c.b16 %v4970, %v4966
      %v5159 = vpack.c.b16 %v4975, %v4971
      %v5160 = vpack.c.b16 %v4976, %v4972
      %v5161 = vpack.c.b16 %v4977, %v4973
      %v5162 = vpack.c.b16 %v4978, %v4974
      %v5163 = vpack.c.b16 %v4983, %v4979
      %v5164 = vpack.c.b16 %v4984, %v4980
      %v5165 = vpack.c.b16 %v4985, %v4981
      %v5166 = vpack.c.b16 %v4986, %v4982
      %v5167 = vpack.c.b16 %v4991, %v4987
      %v5168 = vpack.c.b16 %v4992, %v4988
      %v5169 = vpack.c.b16 %v4993, %v4989
      %v5170 = vpack.c.b16 %v4994, %v4990
      %v5171 = vpack.c.b16 %v4999, %v4995
      %v5172 = vpack.c.b16 %v5000, %v4996
      %v5173 = vpack.c.b16 %v5001, %v4997
      %v5174 = vpack.c.b16 %v5002, %v4998
      %v5175 = vpack.c.b16 %v5007, %v5003
      %v5176 = vpack.c.b16 %v5008, %v5004
      %v5177 = vpack.c.b16 %v5009, %v5005
      %v5178 = vpack.c.b16 %v5010, %v5006
      %v5179 = vpack.c.b16 %v5015, %v5011
      %v5180 = vpack.c.b16 %v5016, %v5012
      %v5181 = vpack.c.b16 %v5017, %v5013
      %v5182 = vpack.c.b16 %v5018, %v5014
      %v5183 = vpack.c.b16 %v5023, %v5019
      %v5184 = vpack.c.b16 %v5024, %v5020
      %v5185 = vpack.c.b16 %v5025, %v5021
      %v5186 = vpack.c.b16 %v5026, %v5022
      %v5187 = vpack.c.b16 %v5031, %v5027
      %v5188 = vpack.c.b16 %v5032, %v5028
      %v5189 = vpack.c.b16 %v5033, %v5029
      %v5190 = vpack.c.b16 %v5034, %v5030
      %v5191 = vpack.c.b16 %v5039, %v5035
      %v5192 = vpack.c.b16 %v5040, %v5036
      %v5193 = vpack.c.b16 %v5041, %v5037
      %v5194 = vpack.c.b16 %v5042, %v5038
      %v5195 = vpack.c.b16 %v5047, %v5043
      %v5196 = vpack.c.b16 %v5048, %v5044
      %v5197 = vpack.c.b16 %v5049, %v5045
      %v5198 = vpack.c.b16 %v5050, %v5046
      %v5199 = vpack.c.b16 %v5055, %v5051
      %v5200 = vpack.c.b16 %v5056, %v5052
      %v5201 = vpack.c.b16 %v5057, %v5053
      %v5202 = vpack.c.b16 %v5058, %v5054
      %v5203 = vpack.c.b16 %v5063, %v5059
      %v5204 = vpack.c.b16 %v5064, %v5060
      %v5205 = vpack.c.b16 %v5065, %v5061
      %v5206 = vpack.c.b16 %v5066, %v5062
      %v5207 = vpack.c.b16 %v5071, %v5067
      %v5208 = vpack.c.b16 %v5072, %v5068
      %v5209 = vpack.c.b16 %v5073, %v5069
      %v5210 = vpack.c.b16 %v5074, %v5070
      %v5211 = vpack.c.b16 %v5079, %v5075
      %v5212 = vpack.c.b16 %v5080, %v5076
      %v5213 = vpack.c.b16 %v5081, %v5077
      %v5214 = vpack.c.b16 %v5082, %v5078
      %v5215 = vpack.c.b16 %v5087, %v5083
      %v5216 = vpack.c.b16 %v5088, %v5084
      %v5217 = vpack.c.b16 %v5089, %v5085
      %v5218 = vpack.c.b16 %v5090, %v5086
      %v5348 = vlaneseq
      %v5349 = vshrl.u32 %v5348, 7
      %v5350 = vsub.s32 0, %v5349
      %v5351 = vrot.slane %v4706, %v5350
      %v5352 = vlaneseq
      %v5353 = vshrl.u32 %v5352, 7
      %v5354 = vsub.s32 1, %v5353
      %v5355 = vrot.slane %v4706, %v5354
      %v5356 = vlaneseq
      %v5357 = vshrl.u32 %v5356, 7
      %v5358 = vsub.s32 2, %v5357
      %v5359 = vrot.slane %v4706, %v5358
      %v5360 = vlaneseq
      %v5361 = vshrl.u32 %v5360, 7
      %v5362 = vsub.s32 3, %v5361
      %v5363 = vrot.slane %v4706, %v5362
      %5368 = vmatprep.subr.bf16.mxu0 %v5092
      %5369 = vmatpush1.bf16.msra.mxu0 %v5091
      %5370 = vmatprep.subr.bf16.mxu0 %v5096
      %5371 = vmatpush1.bf16.msra.mxu0 %v5095
      %5372 = vmatprep.subr.bf16.mxu0 %v5100
      %5373 = vmatpush1.bf16.msra.mxu0 %v5099
      %5374 = vmatprep.subr.bf16.mxu0 %v5104
      %5375 = vmatpush1.bf16.msra.mxu0 %v5103
      %5376 = vmatprep.subr.bf16.mxu0 %v5108
      %5377 = vmatpush1.bf16.msra.mxu0 %v5107
      %5378 = vmatprep.subr.bf16.mxu0 %v5112
      %5379 = vmatpush1.bf16.msra.mxu0 %v5111
      %5380 = vmatprep.subr.bf16.mxu0 %v5116
      %5381 = vmatpush1.bf16.msra.mxu0 %v5115
      %5382 = vmatprep.subr.bf16.mxu0 %v5120
      %5383 = vmatpush1.bf16.msra.mxu0 %v5119
      %5384 = vmatprep.subr.bf16.mxu0 %v5124
      %5385 = vmatpush1.bf16.msra.mxu0 %v5123
      %5386 = vmatprep.subr.bf16.mxu0 %v5128
      %5387 = vmatpush1.bf16.msra.mxu0 %v5127
      %5388 = vmatprep.subr.bf16.mxu0 %v5132
      %5389 = vmatpush1.bf16.msra.mxu0 %v5131
      %5390 = vmatprep.subr.bf16.mxu0 %v5136
      %5391 = vmatpush1.bf16.msra.mxu0 %v5135
      %5392 = vmatprep.subr.bf16.mxu0 %v5140
      %5393 = vmatpush1.bf16.msra.mxu0 %v5139
      %5394 = vmatprep.subr.bf16.mxu0 %v5144
      %5395 = vmatpush1.bf16.msra.mxu0 %v5143
      %5396 = vmatprep.subr.bf16.mxu0 %v5148
      %5397 = vmatpush1.bf16.msra.mxu0 %v5147
      %5398 = vmatprep.subr.bf16.mxu0 %v5152
      %5399 = vmatpush1.bf16.msra.mxu0 %v5151
      %5400 = vmatprep.mubr.bf16.mxu0 %v4575
      %5401 = vmatmul.mubr.bf16.gmra.mrb[0].mxu0 %v4574
      %v5402 = vpop.f32.mrb[0].mxu0
      %v5403 = vadd.f32 %v5351, %v5402
      %v5404 = vpop.f32.mrb[0].mxu0
      %v5405 = vadd.f32 %v5355, %v5404
      %v5406 = vpop.f32.mrb[0].mxu0
      %v5407 = vpop.f32.mrb[0].mxu0
      %5408 = vdwg.mxu0
      %5409 = vmatprep.subr.bf16.mxu0 %v5156
      %5410 = vmatpush1.bf16.msra.mxu0 %v5155
      %5411 = vmatprep.subr.bf16.mxu0 %v5160
      %5412 = vmatpush1.bf16.msra.mxu0 %v5159
      %5413 = vmatprep.subr.bf16.mxu0 %v5164
      %5414 = vmatpush1.bf16.msra.mxu0 %v5163
      %5415 = vmatprep.subr.bf16.mxu0 %v5168
      %5416 = vmatpush1.bf16.msra.mxu0 %v5167
      %5417 = vmatprep.subr.bf16.mxu0 %v5172
      %5418 = vmatpush1.bf16.msra.mxu0 %v5171
      %5419 = vmatprep.subr.bf16.mxu0 %v5176
      %5420 = vmatpush1.bf16.msra.mxu0 %v5175
      %5421 = vmatprep.subr.bf16.mxu0 %v5180
      %5422 = vmatpush1.bf16.msra.mxu0 %v5179
      %5423 = vmatprep.subr.bf16.mxu0 %v5184
      %5424 = vmatpush1.bf16.msra.mxu0 %v5183
      %5425 = vmatprep.subr.bf16.mxu0 %v5188
      %5426 = vmatpush1.bf16.msra.mxu0 %v5187
      %5427 = vmatprep.subr.bf16.mxu0 %v5192
      %5428 = vmatpush1.bf16.msra.mxu0 %v5191
      %5429 = vmatprep.subr.bf16.mxu0 %v5196
      %5430 = vmatpush1.bf16.msra.mxu0 %v5195
      %5431 = vmatprep.subr.bf16.mxu0 %v5200
      %5432 = vmatpush1.bf16.msra.mxu0 %v5199
      %5433 = vmatprep.subr.bf16.mxu0 %v5204
      %5434 = vmatpush1.bf16.msra.mxu0 %v5203
      %5435 = vmatprep.subr.bf16.mxu0 %v5208
      %5436 = vmatpush1.bf16.msra.mxu0 %v5207
      %5437 = vmatprep.subr.bf16.mxu0 %v5212
      %5438 = vmatpush1.bf16.msra.mxu0 %v5211
      %5439 = vmatprep.subr.bf16.mxu0 %v5216
      %5440 = vmatpush1.bf16.msra.mxu0 %v5215
      %5441 = vmatprep.mubr.bf16.mxu0 %v4577
      %5442 = vmatmul.mubr.bf16.gmra.mrb[0].mxu0 %v4576
      %v5443 = vpop.f32.mrb[0].mxu0
      %v5444 = vadd.f32 %v5403, %v5443
      %v5445 = vpop.f32.mrb[0].mxu0
      %v5446 = vadd.f32 %v5405, %v5445
      %v5447 = vpop.f32.mrb[0].mxu0
      %v5448 = vpop.f32.mrb[0].mxu0
      %5449 = vdwg.mxu0
      %5450 = vmatprep.subr.bf16.mxu0 %v5094
      %5451 = vmatpush1.bf16.msra.mxu0 %v5093
      %5452 = vmatprep.subr.bf16.mxu0 %v5098
      %5453 = vmatpush1.bf16.msra.mxu0 %v5097
      %5454 = vmatprep.subr.bf16.mxu0 %v5102
      %5455 = vmatpush1.bf16.msra.mxu0 %v5101
      %5456 = vmatprep.subr.bf16.mxu0 %v5106
      %5457 = vmatpush1.bf16.msra.mxu0 %v5105
      %5458 = vmatprep.subr.bf16.mxu0 %v5110
      %5459 = vmatpush1.bf16.msra.mxu0 %v5109
      %5460 = vmatprep.subr.bf16.mxu0 %v5114
      %5461 = vmatpush1.bf16.msra.mxu0 %v5113
      %5462 = vmatprep.subr.bf16.mxu0 %v5118
      %5463 = vmatpush1.bf16.msra.mxu0 %v5117
      %5464 = vmatprep.subr.bf16.mxu0 %v5122
      %5465 = vmatpush1.bf16.msra.mxu0 %v5121
      %5466 = vmatprep.subr.bf16.mxu0 %v5126
      %5467 = vmatpush1.bf16.msra.mxu0 %v5125
      %5468 = vmatprep.subr.bf16.mxu0 %v5130
      %5469 = vmatpush1.bf16.msra.mxu0 %v5129
      %5470 = vmatprep.subr.bf16.mxu0 %v5134
      %5471 = vmatpush1.bf16.msra.mxu0 %v5133
      %5472 = vmatprep.subr.bf16.mxu0 %v5138
      %5473 = vmatpush1.bf16.msra.mxu0 %v5137
      %5474 = vmatprep.subr.bf16.mxu0 %v5142
      %5475 = vmatpush1.bf16.msra.mxu0 %v5141
      %5476 = vmatprep.subr.bf16.mxu0 %v5146
      %5477 = vmatpush1.bf16.msra.mxu0 %v5145
      %5478 = vmatprep.subr.bf16.mxu0 %v5150
      %5479 = vmatpush1.bf16.msra.mxu0 %v5149
      %5480 = vmatprep.subr.bf16.mxu0 %v5154
      %5481 = vmatpush1.bf16.msra.mxu0 %v5153
      %5482 = vmatprep.mubr.bf16.mxu0 %v4575
      %5483 = vmatmul.mubr.bf16.gmra.mrb[0].mxu0 %v4574
      %v5484 = vpop.f32.mrb[0].mxu0
      %v5485 = vadd.f32 %v5359, %v5484
      %v5486 = vpop.f32.mrb[0].mxu0
      %v5487 = vadd.f32 %v5363, %v5486
      %v5488 = vpop.f32.mrb[0].mxu0
      %v5489 = vpop.f32.mrb[0].mxu0
      %5490 = vdwg.mxu0
      %5491 = vmatprep.subr.bf16.mxu0 %v5158
      %5492 = vmatpush1.bf16.msra.mxu0 %v5157
      %5493 = vmatprep.subr.bf16.mxu0 %v5162
      %5494 = vmatpush1.bf16.msra.mxu0 %v5161
      %5495 = vmatprep.subr.bf16.mxu0 %v5166
      %5496 = vmatpush1.bf16.msra.mxu0 %v5165
      %5497 = vmatprep.subr.bf16.mxu0 %v5170
      %5498 = vmatpush1.bf16.msra.mxu0 %v5169
      %5499 = vmatprep.subr.bf16.mxu0 %v5174
      %5500 = vmatpush1.bf16.msra.mxu0 %v5173
      %5501 = vmatprep.subr.bf16.mxu0 %v5178
      %5502 = vmatpush1.bf16.msra.mxu0 %v5177
      %5503 = vmatprep.subr.bf16.mxu0 %v5182
      %5504 = vmatpush1.bf16.msra.mxu0 %v5181
      %5505 = vmatprep.subr.bf16.mxu0 %v5186
      %5506 = vmatpush1.bf16.msra.mxu0 %v5185
      %5507 = vmatprep.subr.bf16.mxu0 %v5190
      %5508 = vmatpush1.bf16.msra.mxu0 %v5189
      %5509 = vmatprep.subr.bf16.mxu0 %v5194
      %5510 = vmatpush1.bf16.msra.mxu0 %v5193
      %5511 = vmatprep.subr.bf16.mxu0 %v5198
      %5512 = vmatpush1.bf16.msra.mxu0 %v5197
      %5513 = vmatprep.subr.bf16.mxu0 %v5202
      %5514 = vmatpush1.bf16.msra.mxu0 %v5201
      %5515 = vmatprep.subr.bf16.mxu0 %v5206
      %5516 = vmatpush1.bf16.msra.mxu0 %v5205
      %5517 = vmatprep.subr.bf16.mxu0 %v5210
      %5518 = vmatpush1.bf16.msra.mxu0 %v5209
      %5519 = vmatprep.subr.bf16.mxu0 %v5214
      %5520 = vmatpush1.bf16.msra.mxu0 %v5213
      %5521 = vmatprep.subr.bf16.mxu0 %v5218
      %5522 = vmatpush1.bf16.msra.mxu0 %v5217
      %5523 = vmatprep.mubr.bf16.mxu0 %v4577
      %5524 = vmatmul.mubr.bf16.gmra.mrb[0].mxu0 %v4576
      %v5525 = vpop.f32.mrb[0].mxu0
      %v5526 = vadd.f32 %v5485, %v5525
      %v5527 = vpop.f32.mrb[0].mxu0
      %v5528 = vadd.f32 %v5487, %v5527
      %v5529 = vpop.f32.mrb[0].mxu0
      %v5530 = vpop.f32.mrb[0].mxu0
      %5531 = vdwg.mxu0
      %v5532 = vmax.f32 %v5444, 0.0
      %v5533 = vmax.f32 %v5446, 0.0
      %v5534 = vmax.f32 %v5526, 0.0
      %v5535 = vmax.f32 %v5528, 0.0
      %v5536 = vpack.c.bf16 %v5532, %v5532
      %v5537 = vpack.c.bf16 %v5533, %v5533
      %v5538 = vpack.c.bf16 %v5534, %v5534
      %v5539 = vpack.c.bf16 %v5535, %v5535
      %v5540 = vld [vmem:[%s11] sm:$0xf]
      %v5541 = vld [vmem:[%s11 + $0x4] sm:$0xf]
      %v5542 = vld [vmem:[%s11 + $0x8] sm:$0xf]
      %v5543 = vld [vmem:[%s11 + $0xc] sm:$0xf]
      %v5544 = vld [vmem:[%s11 + $0x10] sm:$0xf]
      %v5545 = vld [vmem:[%s11 + $0x14] sm:$0xf]
      %v5546 = vld [vmem:[%s11 + $0x18] sm:$0xf]
      %v5547 = vld [vmem:[%s11 + $0x1c] sm:$0xf]
      %v5548 = vld [vmem:[%s11 + $0x20] sm:$0xf]
      %v5549 = vld [vmem:[%s11 + $0x24] sm:$0xf]
      %v5550 = vld [vmem:[%s11 + $0x28] sm:$0xf]
      %v5551 = vld [vmem:[%s11 + $0x2c] sm:$0xf]
      %v5552 = vld [vmem:[%s11 + $0x30] sm:$0xf]
      %v5553 = vld [vmem:[%s11 + $0x34] sm:$0xf]
      %v5554 = vld [vmem:[%s11 + $0x38] sm:$0xf]
      %v5555 = vld [vmem:[%s11 + $0x3c] sm:$0xf]
      %v5556 = vld [vmem:[%s11 + $0x40] sm:$0xf]
      %v5557 = vld [vmem:[%s11 + $0x44] sm:$0xf]
      %v5558 = vld [vmem:[%s11 + $0x48] sm:$0xf]
      %v5559 = vld [vmem:[%s11 + $0x4c] sm:$0xf]
      %v5560 = vld [vmem:[%s11 + $0x50] sm:$0xf]
      %v5561 = vld [vmem:[%s11 + $0x54] sm:$0xf]
      %v5562 = vld [vmem:[%s11 + $0x58] sm:$0xf]
      %v5563 = vld [vmem:[%s11 + $0x5c] sm:$0xf]
      %v5564 = vld [vmem:[%s11 + $0x60] sm:$0xf]
      %v5565 = vld [vmem:[%s11 + $0x64] sm:$0xf]
      %v5566 = vld [vmem:[%s11 + $0x68] sm:$0xf]
      %v5567 = vld [vmem:[%s11 + $0x6c] sm:$0xf]
      %v5568 = vld [vmem:[%s11 + $0x70] sm:$0xf]
      %v5569 = vld [vmem:[%s11 + $0x74] sm:$0xf]
      %v5570 = vld [vmem:[%s11 + $0x78] sm:$0xf]
      %v5571 = vld [vmem:[%s11 + $0x7c] sm:$0xf]
      %v5572 = vld [vmem:[%s11 + $0x80] sm:$0xf]
      %v5573 = vld [vmem:[%s11 + $0x84] sm:$0xf]
      %v5574 = vld [vmem:[%s11 + $0x88] sm:$0xf]
      %v5575 = vld [vmem:[%s11 + $0x8c] sm:$0xf]
      %v5576 = vld [vmem:[%s11 + $0x90] sm:$0xf]
      %v5577 = vld [vmem:[%s11 + $0x94] sm:$0xf]
      %v5578 = vld [vmem:[%s11 + $0x98] sm:$0xf]
      %v5579 = vld [vmem:[%s11 + $0x9c] sm:$0xf]
      %v5580 = vld [vmem:[%s11 + $0xa0] sm:$0xf]
      %v5581 = vld [vmem:[%s11 + $0xa4] sm:$0xf]
      %v5582 = vld [vmem:[%s11 + $0xa8] sm:$0xf]
      %v5583 = vld [vmem:[%s11 + $0xac] sm:$0xf]
      %v5584 = vld [vmem:[%s11 + $0xb0] sm:$0xf]
      %v5585 = vld [vmem:[%s11 + $0xb4] sm:$0xf]
      %v5586 = vld [vmem:[%s11 + $0xb8] sm:$0xf]
      %v5587 = vld [vmem:[%s11 + $0xbc] sm:$0xf]
      %v5588 = vld [vmem:[%s11 + $0xc0] sm:$0xf]
      %v5589 = vld [vmem:[%s11 + $0xc4] sm:$0xf]
      %v5590 = vld [vmem:[%s11 + $0xc8] sm:$0xf]
      %v5591 = vld [vmem:[%s11 + $0xcc] sm:$0xf]
      %v5592 = vld [vmem:[%s11 + $0xd0] sm:$0xf]
      %v5593 = vld [vmem:[%s11 + $0xd4] sm:$0xf]
      %v5594 = vld [vmem:[%s11 + $0xd8] sm:$0xf]
      %v5595 = vld [vmem:[%s11 + $0xdc] sm:$0xf]
      %v5596 = vld [vmem:[%s11 + $0xe0] sm:$0xf]
      %v5597 = vld [vmem:[%s11 + $0xe4] sm:$0xf]
      %v5598 = vld [vmem:[%s11 + $0xe8] sm:$0xf]
      %v5599 = vld [vmem:[%s11 + $0xec] sm:$0xf]
      %v5600 = vld [vmem:[%s11 + $0xf0] sm:$0xf]
      %v5601 = vld [vmem:[%s11 + $0xf4] sm:$0xf]
      %v5602 = vld [vmem:[%s11 + $0xf8] sm:$0xf]
      %v5603 = vld [vmem:[%s11 + $0xfc] sm:$0xf]
      %v5604 = vld [vmem:[%s12] sm:$0x1]
      %v5669 = vunpack.c.l.b16 %v5540
      %v5670 = vunpack.c.l.b16 %v5541
      %v5671 = vunpack.c.l.b16 %v5542
      %v5672 = vunpack.c.l.b16 %v5543
      %v5673 = vunpack.c.l.b16 %v5544
      %v5674 = vunpack.c.l.b16 %v5545
      %v5675 = vunpack.c.l.b16 %v5546
      %v5676 = vunpack.c.l.b16 %v5547
      %v5677 = vunpack.c.l.b16 %v5548
      %v5678 = vunpack.c.l.b16 %v5549
      %v5679 = vunpack.c.l.b16 %v5550
      %v5680 = vunpack.c.l.b16 %v5551
      %v5681 = vunpack.c.l.b16 %v5552
      %v5682 = vunpack.c.l.b16 %v5553
      %v5683 = vunpack.c.l.b16 %v5554
      %v5684 = vunpack.c.l.b16 %v5555
      %v5685 = vunpack.c.l.b16 %v5556
      %v5686 = vunpack.c.l.b16 %v5557
      %v5687 = vunpack.c.l.b16 %v5558
      %v5688 = vunpack.c.l.b16 %v5559
      %v5689 = vunpack.c.l.b16 %v5560
      %v5690 = vunpack.c.l.b16 %v5561
      %v5691 = vunpack.c.l.b16 %v5562
      %v5692 = vunpack.c.l.b16 %v5563
      %v5693 = vunpack.c.l.b16 %v5564
      %v5694 = vunpack.c.l.b16 %v5565
      %v5695 = vunpack.c.l.b16 %v5566
      %v5696 = vunpack.c.l.b16 %v5567
      %v5697 = vunpack.c.l.b16 %v5568
      %v5698 = vunpack.c.l.b16 %v5569
      %v5699 = vunpack.c.l.b16 %v5570
      %v5700 = vunpack.c.l.b16 %v5571
      %v5701 = vunpack.c.l.b16 %v5572
      %v5702 = vunpack.c.l.b16 %v5573
      %v5703 = vunpack.c.l.b16 %v5574
      %v5704 = vunpack.c.l.b16 %v5575
      %v5705 = vunpack.c.l.b16 %v5576
      %v5706 = vunpack.c.l.b16 %v5577
      %v5707 = vunpack.c.l.b16 %v5578
      %v5708 = vunpack.c.l.b16 %v5579
      %v5709 = vunpack.c.l.b16 %v5580
      %v5710 = vunpack.c.l.b16 %v5581
      %v5711 = vunpack.c.l.b16 %v5582
      %v5712 = vunpack.c.l.b16 %v5583
      %v5713 = vunpack.c.l.b16 %v5584
      %v5714 = vunpack.c.l.b16 %v5585
      %v5715 = vunpack.c.l.b16 %v5586
      %v5716 = vunpack.c.l.b16 %v5587
      %v5717 = vunpack.c.l.b16 %v5588
      %v5718 = vunpack.c.l.b16 %v5589
      %v5719 = vunpack.c.l.b16 %v5590
      %v5720 = vunpack.c.l.b16 %v5591
      %v5721 = vunpack.c.l.b16 %v5592
      %v5722 = vunpack.c.l.b16 %v5593
      %v5723 = vunpack.c.l.b16 %v5594
      %v5724 = vunpack.c.l.b16 %v5595
      %v5725 = vunpack.c.l.b16 %v5596
      %v5726 = vunpack.c.l.b16 %v5597
      %v5727 = vunpack.c.l.b16 %v5598
      %v5728 = vunpack.c.l.b16 %v5599
      %v5729 = vunpack.c.l.b16 %v5600
      %v5730 = vunpack.c.l.b16 %v5601
      %v5731 = vunpack.c.l.b16 %v5602
      %v5732 = vunpack.c.l.b16 %v5603
      %v5733 = vpack.c.b16 %v5670, %v5669
      %v5734 = vpack.c.b16 %v5672, %v5671
      %v5735 = vpack.c.b16 %v5674, %v5673
      %v5736 = vpack.c.b16 %v5676, %v5675
      %v5737 = vpack.c.b16 %v5678, %v5677
      %v5738 = vpack.c.b16 %v5680, %v5679
      %v5739 = vpack.c.b16 %v5682, %v5681
      %v5740 = vpack.c.b16 %v5684, %v5683
      %v5741 = vpack.c.b16 %v5686, %v5685
      %v5742 = vpack.c.b16 %v5688, %v5687
      %v5743 = vpack.c.b16 %v5690, %v5689
      %v5744 = vpack.c.b16 %v5692, %v5691
      %v5745 = vpack.c.b16 %v5694, %v5693
      %v5746 = vpack.c.b16 %v5696, %v5695
      %v5747 = vpack.c.b16 %v5698, %v5697
      %v5748 = vpack.c.b16 %v5700, %v5699
      %v5749 = vpack.c.b16 %v5702, %v5701
      %v5750 = vpack.c.b16 %v5704, %v5703
      %v5751 = vpack.c.b16 %v5706, %v5705
      %v5752 = vpack.c.b16 %v5708, %v5707
      %v5753 = vpack.c.b16 %v5710, %v5709
      %v5754 = vpack.c.b16 %v5712, %v5711
      %v5755 = vpack.c.b16 %v5714, %v5713
      %v5756 = vpack.c.b16 %v5716, %v5715
      %v5757 = vpack.c.b16 %v5718, %v5717
      %v5758 = vpack.c.b16 %v5720, %v5719
      %v5759 = vpack.c.b16 %v5722, %v5721
      %v5760 = vpack.c.b16 %v5724, %v5723
      %v5761 = vpack.c.b16 %v5726, %v5725
      %v5762 = vpack.c.b16 %v5728, %v5727
      %v5763 = vpack.c.b16 %v5730, %v5729
      %v5764 = vpack.c.b16 %v5732, %v5731
      %5797 = vmatprep.subr.bf16.mxu0 0
      %5798 = vmatpush1.bf16.msra.mxu0 %v5733
      %5799 = vmatprep.subr.bf16.mxu0 0
      %5800 = vmatpush1.bf16.msra.mxu0 %v5734
      %5801 = vmatprep.subr.bf16.mxu0 0
      %5802 = vmatpush1.bf16.msra.mxu0 %v5735
      %5803 = vmatprep.subr.bf16.mxu0 0
      %5804 = vmatpush1.bf16.msra.mxu0 %v5736
      %5805 = vmatprep.subr.bf16.mxu0 0
      %5806 = vmatpush1.bf16.msra.mxu0 %v5737
      %5807 = vmatprep.subr.bf16.mxu0 0
      %5808 = vmatpush1.bf16.msra.mxu0 %v5738
      %5809 = vmatprep.subr.bf16.mxu0 0
      %5810 = vmatpush1.bf16.msra.mxu0 %v5739
      %5811 = vmatprep.subr.bf16.mxu0 0
      %5812 = vmatpush1.bf16.msra.mxu0 %v5740
      %5813 = vmatprep.subr.bf16.mxu0 0
      %5814 = vmatpush1.bf16.msra.mxu0 %v5741
      %5815 = vmatprep.subr.bf16.mxu0 0
      %5816 = vmatpush1.bf16.msra.mxu0 %v5742
      %5817 = vmatprep.subr.bf16.mxu0 0
      %5818 = vmatpush1.bf16.msra.mxu0 %v5743
      %5819 = vmatprep.subr.bf16.mxu0 0
      %5820 = vmatpush1.bf16.msra.mxu0 %v5744
      %5821 = vmatprep.subr.bf16.mxu0 0
      %5822 = vmatpush1.bf16.msra.mxu0 %v5745
      %5823 = vmatprep.subr.bf16.mxu0 0
      %5824 = vmatpush1.bf16.msra.mxu0 %v5746
      %5825 = vmatprep.subr.bf16.mxu0 0
      %5826 = vmatpush1.bf16.msra.mxu0 %v5747
      %5827 = vmatprep.subr.bf16.mxu0 0
      %5828 = vmatpush1.bf16.msra.mxu0 %v5748
      %5829 = vmatprep.mubr.bf16.mxu0 %v5537
      %5830 = vmatmul.mubr.bf16.gmra.mrb[0].mxu0 %v5536
      %v5831 = vpop.f32.mrb[0].mxu0
      %v5832 = vadd.f32 %v5604, %v5831
      %v5833 = vpop.f32.mrb[0].mxu0
      %v5834 = vpop.f32.mrb[0].mxu0
      %v5835 = vpop.f32.mrb[0].mxu0
      %5836 = vdwg.mxu0
      %5837 = vmatprep.subr.bf16.mxu0 0
      %5838 = vmatpush1.bf16.msra.mxu0 %v5749
      %5839 = vmatprep.subr.bf16.mxu0 0
      %5840 = vmatpush1.bf16.msra.mxu0 %v5750
      %5841 = vmatprep.subr.bf16.mxu0 0
      %5842 = vmatpush1.bf16.msra.mxu0 %v5751
      %5843 = vmatprep.subr.bf16.mxu0 0
      %5844 = vmatpush1.bf16.msra.mxu0 %v5752
      %5845 = vmatprep.subr.bf16.mxu0 0
      %5846 = vmatpush1.bf16.msra.mxu0 %v5753
      %5847 = vmatprep.subr.bf16.mxu0 0
      %5848 = vmatpush1.bf16.msra.mxu0 %v5754
      %5849 = vmatprep.subr.bf16.mxu0 0
      %5850 = vmatpush1.bf16.msra.mxu0 %v5755
      %5851 = vmatprep.subr.bf16.mxu0 0
      %5852 = vmatpush1.bf16.msra.mxu0 %v5756
      %5853 = vmatprep.subr.bf16.mxu0 0
      %5854 = vmatpush1.bf16.msra.mxu0 %v5757
      %5855 = vmatprep.subr.bf16.mxu0 0
      %5856 = vmatpush1.bf16.msra.mxu0 %v5758
      %5857 = vmatprep.subr.bf16.mxu0 0
      %5858 = vmatpush1.bf16.msra.mxu0 %v5759
      %5859 = vmatprep.subr.bf16.mxu0 0
      %5860 = vmatpush1.bf16.msra.mxu0 %v5760
      %5861 = vmatprep.subr.bf16.mxu0 0
      %5862 = vmatpush1.bf16.msra.mxu0 %v5761
      %5863 = vmatprep.subr.bf16.mxu0 0
      %5864 = vmatpush1.bf16.msra.mxu0 %v5762
      %5865 = vmatprep.subr.bf16.mxu0 0
      %5866 = vmatpush1.bf16.msra.mxu0 %v5763
      %5867 = vmatprep.subr.bf16.mxu0 0
      %5868 = vmatpush1.bf16.msra.mxu0 %v5764
      %5869 = vmatprep.mubr.bf16.mxu0 %v5539
      %5870 = vmatmul.mubr.bf16.gmra.mrb[0].mxu0 %v5538
      %v5871 = vpop.f32.mrb[0].mxu0
      %v5872 = vadd.f32 %v5832, %v5871
      %v5873 = vpop.f32.mrb[0].mxu0
      %v5874 = vpop.f32.mrb[0].mxu0
      %v5875 = vpop.f32.mrb[0].mxu0
      %5876 = vdwg.mxu0
      %v5877 = vlaneseq
      %v5878 = vshrl.u32 %v5877, 7
      %v5879 = vsub.s32 0, %v5878
      %v5880 = vrot.slane %v5872, %v5879
      %5881 = vst [vmem:[%s440] sm:$0xff] %v5880
      %p5882 = scmp.lt.s32.totalorder %s26, 1
      %s5883 = scalar_select %p5882, %s26, 1
      %s5884 = smul.addr %s5883, 8
      %s5885 = scalar_lea.vmem %s13, %s5884
      // Predicated region
      $region73: #{_lambda_.1} parent=71 // pred_check
        %p5886 = pneg %p322
      $region74: #{_lambda_.1} parent=71 // pred_check_branch
        %5888 = sbr.rel (%p5886) target = $region76
      $region75: #{_lambda_.1} parent=71 // pred_region
        _
      $region76: #{_lambda_.1} parent=71 // pred_fallthru
        _
    $region72: #{_lambda_.1} parent=5 // pred_fallthru
      _
    %p5889 = scmp.le.s32.totalorder 2, %s21
    // Predicated region
    $region77: #{_lambda_.1} parent=5 // pred_check
      %p5890 = pneg %p5889
    $region78: #{_lambda_.1} parent=5 // pred_check_branch
      %5892 = sbr.rel (%p5890) target = $region80
    $region79: #{_lambda_.1} parent=5 // pred_region
      %s5893 = ssub.s32 %s21, 2
      // Predicated region
      $region81: #{_lambda_.1} parent=79 // pred_check
        %p5894 = pneg %p328
      $region82: #{_lambda_.1} parent=79 // pred_check_branch
        %5896 = sbr.rel (%p5894) target = $region84
      $region83: #{_lambda_.1} parent=79 // pred_region
        %p5897 = scmp.lt.s32.totalorder %s27, 1
        %s5898 = scalar_select %p5897, %s27, 1
        %s5899 = smul.addr %s5898, 8
        %s5900 = scalar_lea.vmem %s13, %s5899
      $region84: #{_lambda_.1} parent=79 // pred_fallthru
        _
    $region80: #{_lambda_.1} parent=5 // pred_fallthru
      _
  $region6: #{_lambda_.1} parent=0 // loop_footer
    %s25 = sadd.s32 1, %s21
  $region7: #{_lambda_.1} parent=0 // loop_footer_branch
    %20 = sbr.rel target = $region3
  $region8: #{_lambda_.1} parent=0 // loop_exit
    _

</llo_original>
